<compile_context>
chip_gen: v7x
topology: tpu7x:2x2x1
jax: 0.10.0
libtpu: 0.0.40
codegen_flags: <defaults>
</compile_context>

<pallas_src>
import math

import jax
import jax.numpy as jnp
from jax.experimental import pallas as pl
from jax.experimental.pallas import tpu as pltpu

# ----------------------- small-config "BERT" hyperparameters -----------------
VOCAB = 100
HIDDEN = 32
NUM_LAYERS = 3
NUM_HEADS = 4
HEAD_DIM = HIDDEN // NUM_HEADS
INTERMEDIATE = 64
MAX_POS = 16
NUM_CLASSES = 5
LN_EPS = 1e-12

# Row indices inside the packed per-layer vector tensor [L, 6, H].
_BO, _LN1G, _LN1B, _BO2, _LN2G, _LN2B = range(6)


# ----------------------------- in-kernel helpers ------------------------------
def _layernorm(x, g, b, eps=LN_EPS):
    mu = jnp.mean(x, axis=-1, keepdims=True)
    var = jnp.mean(jnp.square(x - mu), axis=-1, keepdims=True)
    return (x - mu) * jax.lax.rsqrt(var + eps) * g + b


def _gelu(x):
    # TODO(synk): HF BERT uses the exact erf-based GELU; tanh approximation used here
    # for guaranteed Mosaic lowering (EUP tanh).
    return 0.5 * x * (1.0 + jnp.tanh(0.7978845608028654 * (x + 0.044715 * x * x * x)))


# --------------------------- fully fused forward kernel -----------------------
def bert_kernel(emb_ref, addm_ref, embln_ref,
                wqkv_ref, bqkv_ref, wo_ref, vecs_ref,
                wi_ref, bi_ref, wo2_ref, wc_ref, bc_ref, out_ref):
    # Static shapes (all from block shapes).
    B, S, H = emb_ref.shape
    L, NB, _, HD3 = wqkv_ref.shape            # NB = NUM_HEADS * B (weights pre-replicated)
    NH = NB // B
    HD = HD3 // 3
    scale = 1.0 / math.sqrt(HD)

    # Embedding LayerNorm (dropout = identity in eval mode); work on flattened [B*S, H].
    embln = embln_ref[...]                                        # [2, H]
    h = _layernorm(emb_ref[...].reshape(B * S, H), embln[0:1], embln[1:2])

    # Head-replicated additive key-padding mask, hoisted out of the layer loop.
    # Head-batch index order is (head, batch): nb = n * B + b.
    addm = jnp.broadcast_to(addm_ref[...][None], (NH, B, 1, S)).reshape(NB, 1, S)

    # Running sum over all (L+1) hidden states and all seq positions -> pooled mean.
    acc = jnp.sum(h.reshape(B, S, H), axis=1)                     # [B, H]

    for l in range(L):                                            # static unrolled layer loop
        vecs = vecs_ref[l]                                        # [6, H] packed small params

        # ----- self attention: one head-batch of size NH*B, no activation transposes -----
        hb = jnp.broadcast_to(h.reshape(B, S, H)[None], (NH, B, S, H)).reshape(NB, S, H)
        qkv = jnp.einsum('nsk,nkd->nsd', hb, wqkv_ref[l],
                         preferred_element_type=jnp.float32) + bqkv_ref[l]   # [NB, S, 3*HD]
        q = qkv[:, :, :HD]
        k = qkv[:, :, HD:2 * HD]
        v = qkv[:, :, 2 * HD:]

        scores = jnp.einsum('nqd,nkd->nqk', q, k,
                            preferred_element_type=jnp.float32) * scale      # [NB, S, S]
        scores = scores + addm
        scores = scores - jnp.max(scores, axis=-1, keepdims=True)
        p = jnp.exp(scores)
        p = p * pl.reciprocal(jnp.sum(p, axis=-1, keepdims=True), approx=True)

        ctx = jnp.einsum('nqk,nkd->nqd', p, v,
                         preferred_element_type=jnp.float32)                  # [NB, S, HD]
        attn = jnp.einsum('nsd,ndh->nsh', ctx, wo_ref[l],
                          preferred_element_type=jnp.float32)                 # [NB, S, H]
        attn = jnp.sum(attn.reshape(NH, B, S, H), axis=0).reshape(B * S, H)   # sum over heads
        attn = attn + vecs[_BO:_BO + 1]
        h1 = _layernorm(h + attn, vecs[_LN1G:_LN1G + 1], vecs[_LN1B:_LN1B + 1])

        # ----- feed-forward on all B*S rows at once -----
        inter = jnp.dot(h1, wi_ref[l], preferred_element_type=jnp.float32) + bi_ref[l]
        inter = _gelu(inter)
        ffn = jnp.dot(inter, wo2_ref[l], preferred_element_type=jnp.float32)
        ffn = ffn + vecs[_BO2:_BO2 + 1]
        h = _layernorm(h1 + ffn, vecs[_LN2G:_LN2G + 1], vecs[_LN2B:_LN2B + 1])

        acc = acc + jnp.sum(h.reshape(B, S, H), axis=1)

    # cls_output = cat(hidden_states, dim=1).mean(dim=1) == acc / ((L+1)*S)
    pooled = acc * (1.0 / ((L + 1) * S))                                      # [B, H]
    out_ref[...] = jnp.dot(pooled, wc_ref[...],
                           preferred_element_type=jnp.float32) + bc_ref[...]  # [B, C]


# ------------------------------ parameter init --------------------------------
def init_params(key):
    def dense(k, shape):
        return 0.02 * jax.random.normal(k, shape, jnp.float32)

    keys = jax.random.split(key, 8)
    L, H, I, NH, HD = NUM_LAYERS, HIDDEN, INTERMEDIATE, NUM_HEADS, HEAD_DIM

    ones = jnp.ones((H,), jnp.float32)
    zeros = jnp.zeros((H,), jnp.float32)
    # Packed per-layer [6, H] vectors; row order matches _BO.._LN2B:
    # (attn-out bias, ln1 gamma, ln1 beta, ffn-out bias, ln2 gamma, ln2 beta)
    layer_vecs = jnp.broadcast_to(
        jnp.stack([zeros, ones, zeros, zeros, ones, zeros])[None], (L, 6, H))

    return {
        "word_emb": dense(keys[0], (VOCAB, H)),
        "pos_emb": dense(keys[1], (MAX_POS, H)),
        "type_emb": dense(keys[2], (2, H)),
        "emb_ln": jnp.stack([ones, zeros]),                 # [2, H]: (gamma, beta)
        # Per-head Q/K/V and attention output projection weights (head-batched layout).
        "wqkv": dense(keys[3], (L, NH, H, 3 * HD)),
        "bqkv": jnp.zeros((L, NH, 1, 3 * HD), jnp.float32),
        "wo": dense(keys[4], (L, NH, HD, H)),
        "vecs": jnp.asarray(layer_vecs, jnp.float32),       # [L, 6, H]
        "wi": dense(keys[5], (L, H, I)),
        "bi": jnp.zeros((L, 1, I), jnp.float32),
        "wo2": dense(keys[6], (L, I, H)),
        "cls_w": dense(keys[7], (H, NUM_CLASSES)),
        "cls_b": jnp.zeros((1, NUM_CLASSES), jnp.float32),
    }


def _rep_heads(w, batch):
    """[L, NH, ...] -> [L, NH*batch, ...]: replicate each head's weight `batch` times
    so the kernel's head-batch (index order n*B + b) needs no interior broadcasts."""
    L, NH = w.shape[0], w.shape[1]
    rest = w.shape[2:]
    return jnp.broadcast_to(w[:, :, None], (L, NH, batch) + rest).reshape(
        (L, NH * batch) + rest)


# ------------------------------ forward pass -----------------------------------
@jax.jit
def bert_forward(params, ids):
    """ids: [B, S] int32 token ids.  Returns logits [B, NUM_CLASSES]."""
    B, S = ids.shape
    assert S <= MAX_POS, "sequence length exceeds position-embedding table"

    L, NH, H, HD3 = params["wqkv"].shape
    HD = HD3 // 3
    I = params["wi"].shape[2]
    C = params["cls_w"].shape[1]
    NB = NH * B

    # attention_mask = (x != 0).float()  ->  additive mask (1 - m) * -10000
    mask_f = (ids != 0).astype(jnp.float32)
    addm = ((1.0 - mask_f) * -10000.0).reshape(B, 1, S)

    # Embedding gathers stay in JAX glue; token_type_ids=None -> zeros,
    # position_ids=None -> arange, head_mask=None -> no masking.
    positions = jnp.arange(S)
    emb = (params["word_emb"][ids]
           + params["pos_emb"][positions][None, :, :]
           + params["type_emb"][0][None, None, :])

    # Replicate per-head attention weights across the batch (tiny; DMA'd once).
    wqkv = _rep_heads(params["wqkv"], B)          # [L, NB, H, 3*HD]
    bqkv = _rep_heads(params["bqkv"], B)          # [L, NB, 1, 3*HD]
    wo = _rep_heads(params["wo"], B)              # [L, NB, HD, H]

    def full(ndim):
        return lambda i: (0,) * ndim

    out = pl.pallas_call(
        bert_kernel,
        out_shape=jax.ShapeDtypeStruct((B, C), jnp.float32),
        grid_spec=pltpu.PrefetchScalarGridSpec(
            num_scalar_prefetch=0,
            grid=(1,),                                   # whole batch in one step
            in_specs=[
                pl.BlockSpec((B, S, H), full(3)),        # embeddings
                pl.BlockSpec((B, 1, S), full(3)),        # additive mask
                pl.BlockSpec((2, H), full(2)),           # emb LN (gamma, beta)
                pl.BlockSpec((L, NB, H, HD3), full(4)),  # qkv weights (per head x batch)
                pl.BlockSpec((L, NB, 1, HD3), full(4)),  # qkv biases
                pl.BlockSpec((L, NB, HD, H), full(4)),   # attn out proj
                pl.BlockSpec((L, 6, H), full(3)),        # packed per-layer vectors
                pl.BlockSpec((L, H, I), full(3)),        # ffn in
                pl.BlockSpec((L, 1, I), full(3)),        # ffn in bias
                pl.BlockSpec((L, I, H), full(3)),        # ffn out
                pl.BlockSpec((H, C), full(2)),           # classifier weight
                pl.BlockSpec((1, C), full(2)),           # classifier bias
            ],
            out_specs=pl.BlockSpec((B, C), full(2)),
        ),
        compiler_params=pltpu.CompilerParams(
            dimension_semantics=("arbitrary",)),
    )(emb, addm, params["emb_ln"], wqkv, bqkv, wo, params["vecs"],
      params["wi"], params["bi"], params["wo2"], params["cls_w"], params["cls_b"])

    return out


if __name__ == "__main__":
    key = jax.random.PRNGKey(0)
    pkey, xkey = jax.random.split(key)

    params = init_params(pkey)

    B, S = 2, 8
    ids = jax.random.randint(xkey, (B, S), 1, VOCAB, dtype=jnp.int32)
    ids = ids.at[1, 6:].set(0)               # padding -> exercises (x != 0) mask

    logits = bert_forward(params, ids)
    jax.block_until_ready(logits)
    assert logits.shape == (B, NUM_CLASSES)
    assert bool(jnp.all(jnp.isfinite(logits)))
    print("KERNEL_OK")
</pallas_src>

<mosaic_0001>
module attributes {stable_mosaic.version = 11 : i64} {
  func.func @bert_kernel(%arg0: i32, %arg1: memref<2x8x32xf32, #tpu.memory_space<vmem>>, %arg2: memref<2x1x8xf32, #tpu.memory_space<vmem>>, %arg3: memref<2x32xf32, #tpu.memory_space<vmem>>, %arg4: memref<3x8x32x24xf32, #tpu.memory_space<vmem>>, %arg5: memref<3x8x1x24xf32, #tpu.memory_space<vmem>>, %arg6: memref<3x8x8x32xf32, #tpu.memory_space<vmem>>, %arg7: memref<3x6x32xf32, #tpu.memory_space<vmem>>, %arg8: memref<3x32x64xf32, #tpu.memory_space<vmem>>, %arg9: memref<3x1x64xf32, #tpu.memory_space<vmem>>, %arg10: memref<3x64x32xf32, #tpu.memory_space<vmem>>, %arg11: memref<32x5xf32, #tpu.memory_space<vmem>>, %arg12: memref<1x5xf32, #tpu.memory_space<vmem>>, %arg13: memref<2x5xf32, #tpu.memory_space<vmem>>) attributes {dimension_semantics = [#tpu.dimension_semantics<arbitrary>], iteration_bounds = array<i64: 1>, scalar_prefetch = 0 : i64, scratch_operands = 0 : i64, tpu.core_type = #tpu.core_type<tc>, window_params = [{pipeline_mode = #tpu.pipeline_mode<synchronous>, transform_indices = @transform_0, window_bounds = array<i64: 2, 8, 32>}, {pipeline_mode = #tpu.pipeline_mode<synchronous>, transform_indices = @transform_1, window_bounds = array<i64: 2, 1, 8>}, {pipeline_mode = #tpu.pipeline_mode<synchronous>, transform_indices = @transform_2, window_bounds = array<i64: 2, 32>}, {pipeline_mode = #tpu.pipeline_mode<synchronous>, transform_indices = @transform_3, window_bounds = array<i64: 3, 8, 32, 24>}, {pipeline_mode = #tpu.pipeline_mode<synchronous>, transform_indices = @transform_4, window_bounds = array<i64: 3, 8, 1, 24>}, {pipeline_mode = #tpu.pipeline_mode<synchronous>, transform_indices = @transform_5, window_bounds = array<i64: 3, 8, 8, 32>}, {pipeline_mode = #tpu.pipeline_mode<synchronous>, transform_indices = @transform_6, window_bounds = array<i64: 3, 6, 32>}, {pipeline_mode = #tpu.pipeline_mode<synchronous>, transform_indices = @transform_7, window_bounds = array<i64: 3, 32, 64>}, {pipeline_mode = #tpu.pipeline_mode<synchronous>, transform_indices = @transform_8, window_bounds = array<i64: 3, 1, 64>}, {pipeline_mode = #tpu.pipeline_mode<synchronous>, transform_indices = @transform_9, window_bounds = array<i64: 3, 64, 32>}, {pipeline_mode = #tpu.pipeline_mode<synchronous>, transform_indices = @transform_10, window_bounds = array<i64: 32, 5>}, {pipeline_mode = #tpu.pipeline_mode<synchronous>, transform_indices = @transform_11, window_bounds = array<i64: 1, 5>}, {pipeline_mode = #tpu.pipeline_mode<synchronous>, transform_indices = @transform_12, window_bounds = array<i64: 2, 5>}]} {
    %c0 = arith.constant 0 : index
    %c0_0 = arith.constant 0 : index
    %0 = vector.load %arg3[%c0, %c0_0] : memref<2x32xf32, #tpu.memory_space<vmem>>, vector<2x32xf32>
    %c0_1 = arith.constant 0 : index
    %c0_2 = arith.constant 0 : index
    %c0_3 = arith.constant 0 : index
    %1 = vector.load %arg1[%c0_1, %c0_2, %c0_3] : memref<2x8x32xf32, #tpu.memory_space<vmem>>, vector<2x8x32xf32>
    %2 = vector.shape_cast %1 : vector<2x8x32xf32> to vector<16x32xf32>
    %3 = vector.extract_strided_slice %0 {offsets = [0, 0], sizes = [1, 32], strides = [1, 1]} : vector<2x32xf32> to vector<1x32xf32>
    %4 = vector.extract_strided_slice %0 {offsets = [1, 0], sizes = [1, 32], strides = [1, 1]} : vector<2x32xf32> to vector<1x32xf32>
    %cst = arith.constant dense<0.000000e+00> : vector<16xf32>
    %5 = vector.multi_reduction <add>, %2, %cst [1] : vector<16x32xf32> to vector<16xf32>
    %6 = vector.shape_cast %5 : vector<16xf32> to vector<16x1xf32>
    %cst_4 = arith.constant 3.200000e+01 : f32
    %7 = vector.broadcast %cst_4 : f32 to vector<16x1xf32>
    %8 = arith.divf %6, %7 : vector<16x1xf32>
    %9 = vector.broadcast %8 : vector<16x1xf32> to vector<16x32xf32>
    %10 = arith.subf %2, %9 : vector<16x32xf32>
    %11 = arith.mulf %10, %10 : vector<16x32xf32>
    %cst_5 = arith.constant dense<0.000000e+00> : vector<16xf32>
    %12 = vector.multi_reduction <add>, %11, %cst_5 [1] : vector<16x32xf32> to vector<16xf32>
    %13 = vector.shape_cast %12 : vector<16xf32> to vector<16x1xf32>
    %cst_6 = arith.constant 3.200000e+01 : f32
    %14 = vector.broadcast %cst_6 : f32 to vector<16x1xf32>
    %15 = arith.divf %13, %14 : vector<16x1xf32>
    %16 = vector.broadcast %8 : vector<16x1xf32> to vector<16x32xf32>
    %17 = arith.subf %2, %16 : vector<16x32xf32>
    %cst_7 = arith.constant 9.99999996E-13 : f32
    %18 = vector.broadcast %cst_7 : f32 to vector<16x1xf32>
    %19 = arith.addf %15, %18 : vector<16x1xf32>
    %20 = math.rsqrt %19 : vector<16x1xf32>
    %21 = vector.broadcast %20 : vector<16x1xf32> to vector<16x32xf32>
    %22 = arith.mulf %17, %21 : vector<16x32xf32>
    %23 = vector.broadcast %3 : vector<1x32xf32> to vector<16x32xf32>
    %24 = arith.mulf %22, %23 : vector<16x32xf32>
    %25 = vector.broadcast %4 : vector<1x32xf32> to vector<16x32xf32>
    %26 = arith.addf %24, %25 : vector<16x32xf32>
    %c0_8 = arith.constant 0 : index
    %c0_9 = arith.constant 0 : index
    %c0_10 = arith.constant 0 : index
    %27 = vector.load %arg2[%c0_8, %c0_9, %c0_10] : memref<2x1x8xf32, #tpu.memory_space<vmem>>, vector<2x1x8xf32>
    %28 = vector.shape_cast %27 : vector<2x1x8xf32> to vector<1x2x1x8xf32>
    %29 = vector.shape_cast %28 : vector<1x2x1x8xf32> to vector<1x2x1x8xf32>
    %30 = vector.broadcast %29 : vector<1x2x1x8xf32> to vector<4x2x1x8xf32>
    %31 = vector.shape_cast %30 : vector<4x2x1x8xf32> to vector<8x1x8xf32>
    %32 = vector.shape_cast %26 : vector<16x32xf32> to vector<2x8x32xf32>
    %cst_11 = arith.constant dense<0.000000e+00> : vector<2x32xf32>
    %33 = vector.multi_reduction <add>, %32, %cst_11 [1] : vector<2x8x32xf32> to vector<2x32xf32>
    %c0_12 = arith.constant 0 : index
    %c0_13 = arith.constant 0 : index
    %c0_14 = arith.constant 0 : index
    %34 = vector.load %arg7[%c0_12, %c0_13, %c0_14] : memref<3x6x32xf32, #tpu.memory_space<vmem>>, vector<1x6x32xf32>
    %35 = vector.shape_cast %34 : vector<1x6x32xf32> to vector<6x32xf32>
    %36 = vector.shape_cast %26 : vector<16x32xf32> to vector<2x8x32xf32>
    %37 = vector.shape_cast %36 : vector<2x8x32xf32> to vector<1x2x8x32xf32>
    %38 = vector.shape_cast %37 : vector<1x2x8x32xf32> to vector<1x2x8x32xf32>
    %39 = vector.broadcast %38 : vector<1x2x8x32xf32> to vector<4x2x8x32xf32>
    %40 = vector.shape_cast %39 : vector<4x2x8x32xf32> to vector<8x8x32xf32>
    %c0_15 = arith.constant 0 : index
    %c0_16 = arith.constant 0 : index
    %c0_17 = arith.constant 0 : index
    %c0_18 = arith.constant 0 : index
    %41 = vector.load %arg4[%c0_15, %c0_16, %c0_17, %c0_18] : memref<3x8x32x24xf32, #tpu.memory_space<vmem>>, vector<1x8x32x24xf32>
    %42 = vector.shape_cast %41 : vector<1x8x32x24xf32> to vector<8x32x24xf32>
    "tpu.trace_start"() <{level = 10 : i32, message = "nsk,nkd->nsd"}> : () -> ()
    %cst_19 = arith.constant dense<0.000000e+00> : vector<8x8x24xf32>
    %43 = tpu.matmul %40, %42, %cst_19 {dimension_numbers = #tpu.dot_dimension_numbers<[2], [1], [1], [2], [0, 0, 0, 1, 1, 2], [0], [0]>} : vector<8x8x32xf32>, vector<8x32x24xf32>, vector<8x8x24xf32> -> vector<8x8x24xf32>
    "tpu.trace_stop"() : () -> ()
    %c0_20 = arith.constant 0 : index
    %c0_21 = arith.constant 0 : index
    %c0_22 = arith.constant 0 : index
    %c0_23 = arith.constant 0 : index
    %44 = vector.load %arg5[%c0_20, %c0_21, %c0_22, %c0_23] : memref<3x8x1x24xf32, #tpu.memory_space<vmem>>, vector<1x8x1x24xf32>
    %45 = vector.shape_cast %44 : vector<1x8x1x24xf32> to vector<8x1x24xf32>
    %46 = vector.broadcast %45 : vector<8x1x24xf32> to vector<8x8x24xf32>
    %47 = arith.addf %43, %46 : vector<8x8x24xf32>
    %48 = vector.extract_strided_slice %47 {offsets = [0, 0, 0], sizes = [8, 8, 8], strides = [1, 1, 1]} : vector<8x8x24xf32> to vector<8x8x8xf32>
    %49 = vector.extract_strided_slice %47 {offsets = [0, 0, 8], sizes = [8, 8, 8], strides = [1, 1, 1]} : vector<8x8x24xf32> to vector<8x8x8xf32>
    %50 = vector.extract_strided_slice %47 {offsets = [0, 0, 16], sizes = [8, 8, 8], strides = [1, 1, 1]} : vector<8x8x24xf32> to vector<8x8x8xf32>
    "tpu.trace_start"() <{level = 10 : i32, message = "nqd,nkd->nqk"}> : () -> ()
    %cst_24 = arith.constant dense<0.000000e+00> : vector<8x8x8xf32>
    %51 = tpu.matmul %48, %49, %cst_24 {dimension_numbers = #tpu.dot_dimension_numbers<[2], [2], [1], [1], [0, 0, 0, 1, 1, 1], [0], [0]>} : vector<8x8x8xf32>, vector<8x8x8xf32>, vector<8x8x8xf32> -> vector<8x8x8xf32>
    "tpu.trace_stop"() : () -> ()
    %cst_25 = arith.constant 0.353553385 : f32
    %52 = vector.broadcast %cst_25 : f32 to vector<8x8x8xf32>
    %53 = arith.mulf %51, %52 : vector<8x8x8xf32>
    %54 = vector.broadcast %31 : vector<8x1x8xf32> to vector<8x8x8xf32>
    %55 = arith.addf %53, %54 : vector<8x8x8xf32>
    %cst_26 = arith.constant dense<0xFF800000> : vector<8x8xf32>
    %56 = vector.multi_reduction <maximumf>, %55, %cst_26 [2] : vector<8x8x8xf32> to vector<8x8xf32>
    %57 = vector.shape_cast %56 : vector<8x8xf32> to vector<8x8x1xf32>
    %58 = vector.broadcast %57 : vector<8x8x1xf32> to vector<8x8x8xf32>
    %59 = arith.subf %55, %58 : vector<8x8x8xf32>
    %60 = math.exp %59 : vector<8x8x8xf32>
    %cst_27 = arith.constant dense<0.000000e+00> : vector<8x8xf32>
    %61 = vector.multi_reduction <add>, %60, %cst_27 [2] : vector<8x8x8xf32> to vector<8x8xf32>
    %62 = vector.shape_cast %61 : vector<8x8xf32> to vector<8x8x1xf32>
    %63 = tpu.reciprocal %62 {approx = true} : vector<8x8x1xf32> -> vector<8x8x1xf32>
    %64 = vector.broadcast %63 : vector<8x8x1xf32> to vector<8x8x8xf32>
    %65 = arith.mulf %60, %64 : vector<8x8x8xf32>
    "tpu.trace_start"() <{level = 10 : i32, message = "nqk,nkd->nqd"}> : () -> ()
    %cst_28 = arith.constant dense<0.000000e+00> : vector<8x8x8xf32>
    %66 = tpu.matmul %65, %50, %cst_28 {dimension_numbers = #tpu.dot_dimension_numbers<[2], [1], [1], [2], [0, 0, 0, 1, 1, 2], [0], [0]>} : vector<8x8x8xf32>, vector<8x8x8xf32>, vector<8x8x8xf32> -> vector<8x8x8xf32>
    "tpu.trace_stop"() : () -> ()
    %c0_29 = arith.constant 0 : index
    %c0_30 = arith.constant 0 : index
    %c0_31 = arith.constant 0 : index
    %c0_32 = arith.constant 0 : index
    %67 = vector.load %arg6[%c0_29, %c0_30, %c0_31, %c0_32] : memref<3x8x8x32xf32, #tpu.memory_space<vmem>>, vector<1x8x8x32xf32>
    %68 = vector.shape_cast %67 : vector<1x8x8x32xf32> to vector<8x8x32xf32>
    "tpu.trace_start"() <{level = 10 : i32, message = "nsd,ndh->nsh"}> : () -> ()
    %cst_33 = arith.constant dense<0.000000e+00> : vector<8x8x32xf32>
    %69 = tpu.matmul %66, %68, %cst_33 {dimension_numbers = #tpu.dot_dimension_numbers<[2], [1], [1], [2], [0, 0, 0, 1, 1, 2], [0], [0]>} : vector<8x8x8xf32>, vector<8x8x32xf32>, vector<8x8x32xf32> -> vector<8x8x32xf32>
    "tpu.trace_stop"() : () -> ()
    %70 = vector.shape_cast %69 : vector<8x8x32xf32> to vector<4x2x8x32xf32>
    %cst_34 = arith.constant dense<0.000000e+00> : vector<2x8x32xf32>
    %71 = vector.multi_reduction <add>, %70, %cst_34 [0] : vector<4x2x8x32xf32> to vector<2x8x32xf32>
    %72 = vector.shape_cast %71 : vector<2x8x32xf32> to vector<16x32xf32>
    %73 = vector.extract_strided_slice %35 {offsets = [0, 0], sizes = [1, 32], strides = [1, 1]} : vector<6x32xf32> to vector<1x32xf32>
    %74 = vector.broadcast %73 : vector<1x32xf32> to vector<16x32xf32>
    %75 = arith.addf %72, %74 : vector<16x32xf32>
    %76 = arith.addf %26, %75 : vector<16x32xf32>
    %77 = vector.extract_strided_slice %35 {offsets = [1, 0], sizes = [1, 32], strides = [1, 1]} : vector<6x32xf32> to vector<1x32xf32>
    %78 = vector.extract_strided_slice %35 {offsets = [2, 0], sizes = [1, 32], strides = [1, 1]} : vector<6x32xf32> to vector<1x32xf32>
    %cst_35 = arith.constant dense<0.000000e+00> : vector<16xf32>
    %79 = vector.multi_reduction <add>, %76, %cst_35 [1] : vector<16x32xf32> to vector<16xf32>
    %80 = vector.shape_cast %79 : vector<16xf32> to vector<16x1xf32>
    %cst_36 = arith.constant 3.200000e+01 : f32
    %81 = vector.broadcast %cst_36 : f32 to vector<16x1xf32>
    %82 = arith.divf %80, %81 : vector<16x1xf32>
    %83 = vector.broadcast %82 : vector<16x1xf32> to vector<16x32xf32>
    %84 = arith.subf %76, %83 : vector<16x32xf32>
    %85 = arith.mulf %84, %84 : vector<16x32xf32>
    %cst_37 = arith.constant dense<0.000000e+00> : vector<16xf32>
    %86 = vector.multi_reduction <add>, %85, %cst_37 [1] : vector<16x32xf32> to vector<16xf32>
    %87 = vector.shape_cast %86 : vector<16xf32> to vector<16x1xf32>
    %cst_38 = arith.constant 3.200000e+01 : f32
    %88 = vector.broadcast %cst_38 : f32 to vector<16x1xf32>
    %89 = arith.divf %87, %88 : vector<16x1xf32>
    %90 = vector.broadcast %82 : vector<16x1xf32> to vector<16x32xf32>
    %91 = arith.subf %76, %90 : vector<16x32xf32>
    %cst_39 = arith.constant 9.99999996E-13 : f32
    %92 = vector.broadcast %cst_39 : f32 to vector<16x1xf32>
    %93 = arith.addf %89, %92 : vector<16x1xf32>
    %94 = math.rsqrt %93 : vector<16x1xf32>
    %95 = vector.broadcast %94 : vector<16x1xf32> to vector<16x32xf32>
    %96 = arith.mulf %91, %95 : vector<16x32xf32>
    %97 = vector.broadcast %77 : vector<1x32xf32> to vector<16x32xf32>
    %98 = arith.mulf %96, %97 : vector<16x32xf32>
    %99 = vector.broadcast %78 : vector<1x32xf32> to vector<16x32xf32>
    %100 = arith.addf %98, %99 : vector<16x32xf32>
    %c0_40 = arith.constant 0 : index
    %c0_41 = arith.constant 0 : index
    %c0_42 = arith.constant 0 : index
    %101 = vector.load %arg8[%c0_40, %c0_41, %c0_42] : memref<3x32x64xf32, #tpu.memory_space<vmem>>, vector<1x32x64xf32>
    %102 = vector.shape_cast %101 : vector<1x32x64xf32> to vector<32x64xf32>
    %cst_43 = arith.constant dense<0.000000e+00> : vector<16x64xf32>
    %103 = tpu.matmul %100, %102, %cst_43 {dimension_numbers = #tpu.dot_dimension_numbers<[1], [0], [0], [1], [0, 0, 1, 1], [], []>} : vector<16x32xf32>, vector<32x64xf32>, vector<16x64xf32> -> vector<16x64xf32>
    %c0_44 = arith.constant 0 : index
    %c0_45 = arith.constant 0 : index
    %c0_46 = arith.constant 0 : index
    %104 = vector.load %arg9[%c0_44, %c0_45, %c0_46] : memref<3x1x64xf32, #tpu.memory_space<vmem>>, vector<1x1x64xf32>
    %105 = vector.shape_cast %104 : vector<1x1x64xf32> to vector<1x64xf32>
    %106 = vector.broadcast %105 : vector<1x64xf32> to vector<16x64xf32>
    %107 = arith.addf %103, %106 : vector<16x64xf32>
    %cst_47 = arith.constant 5.000000e-01 : f32
    %108 = vector.broadcast %cst_47 : f32 to vector<16x64xf32>
    %109 = arith.mulf %108, %107 : vector<16x64xf32>
    %cst_48 = arith.constant 4.471500e-02 : f32
    %110 = vector.broadcast %cst_48 : f32 to vector<16x64xf32>
    %111 = arith.mulf %110, %107 : vector<16x64xf32>
    %112 = arith.mulf %111, %107 : vector<16x64xf32>
    %113 = arith.mulf %112, %107 : vector<16x64xf32>
    %114 = arith.addf %107, %113 : vector<16x64xf32>
    %cst_49 = arith.constant 0.797884583 : f32
    %115 = vector.broadcast %cst_49 : f32 to vector<16x64xf32>
    %116 = arith.mulf %115, %114 : vector<16x64xf32>
    %117 = math.tanh %116 : vector<16x64xf32>
    %cst_50 = arith.constant 1.000000e+00 : f32
    %118 = vector.broadcast %cst_50 : f32 to vector<16x64xf32>
    %119 = arith.addf %118, %117 : vector<16x64xf32>
    %120 = arith.mulf %109, %119 : vector<16x64xf32>
    %c0_51 = arith.constant 0 : index
    %c0_52 = arith.constant 0 : index
    %c0_53 = arith.constant 0 : index
    %121 = vector.load %arg10[%c0_51, %c0_52, %c0_53] : memref<3x64x32xf32, #tpu.memory_space<vmem>>, vector<1x64x32xf32>
    %122 = vector.shape_cast %121 : vector<1x64x32xf32> to vector<64x32xf32>
    %cst_54 = arith.constant dense<0.000000e+00> : vector<16x32xf32>
    %123 = tpu.matmul %120, %122, %cst_54 {dimension_numbers = #tpu.dot_dimension_numbers<[1], [0], [0], [1], [0, 0, 1, 1], [], []>} : vector<16x64xf32>, vector<64x32xf32>, vector<16x32xf32> -> vector<16x32xf32>
    %124 = vector.extract_strided_slice %35 {offsets = [3, 0], sizes = [1, 32], strides = [1, 1]} : vector<6x32xf32> to vector<1x32xf32>
    %125 = vector.broadcast %124 : vector<1x32xf32> to vector<16x32xf32>
    %126 = arith.addf %123, %125 : vector<16x32xf32>
    %127 = arith.addf %100, %126 : vector<16x32xf32>
    %128 = vector.extract_strided_slice %35 {offsets = [4, 0], sizes = [1, 32], strides = [1, 1]} : vector<6x32xf32> to vector<1x32xf32>
    %129 = vector.extract_strided_slice %35 {offsets = [5, 0], sizes = [1, 32], strides = [1, 1]} : vector<6x32xf32> to vector<1x32xf32>
    %cst_55 = arith.constant dense<0.000000e+00> : vector<16xf32>
    %130 = vector.multi_reduction <add>, %127, %cst_55 [1] : vector<16x32xf32> to vector<16xf32>
    %131 = vector.shape_cast %130 : vector<16xf32> to vector<16x1xf32>
    %cst_56 = arith.constant 3.200000e+01 : f32
    %132 = vector.broadcast %cst_56 : f32 to vector<16x1xf32>
    %133 = arith.divf %131, %132 : vector<16x1xf32>
    %134 = vector.broadcast %133 : vector<16x1xf32> to vector<16x32xf32>
    %135 = arith.subf %127, %134 : vector<16x32xf32>
    %136 = arith.mulf %135, %135 : vector<16x32xf32>
    %cst_57 = arith.constant dense<0.000000e+00> : vector<16xf32>
    %137 = vector.multi_reduction <add>, %136, %cst_57 [1] : vector<16x32xf32> to vector<16xf32>
    %138 = vector.shape_cast %137 : vector<16xf32> to vector<16x1xf32>
    %cst_58 = arith.constant 3.200000e+01 : f32
    %139 = vector.broadcast %cst_58 : f32 to vector<16x1xf32>
    %140 = arith.divf %138, %139 : vector<16x1xf32>
    %141 = vector.broadcast %133 : vector<16x1xf32> to vector<16x32xf32>
    %142 = arith.subf %127, %141 : vector<16x32xf32>
    %cst_59 = arith.constant 9.99999996E-13 : f32
    %143 = vector.broadcast %cst_59 : f32 to vector<16x1xf32>
    %144 = arith.addf %140, %143 : vector<16x1xf32>
    %145 = math.rsqrt %144 : vector<16x1xf32>
    %146 = vector.broadcast %145 : vector<16x1xf32> to vector<16x32xf32>
    %147 = arith.mulf %142, %146 : vector<16x32xf32>
    %148 = vector.broadcast %128 : vector<1x32xf32> to vector<16x32xf32>
    %149 = arith.mulf %147, %148 : vector<16x32xf32>
    %150 = vector.broadcast %129 : vector<1x32xf32> to vector<16x32xf32>
    %151 = arith.addf %149, %150 : vector<16x32xf32>
    %152 = vector.shape_cast %151 : vector<16x32xf32> to vector<2x8x32xf32>
    %cst_60 = arith.constant dense<0.000000e+00> : vector<2x32xf32>
    %153 = vector.multi_reduction <add>, %152, %cst_60 [1] : vector<2x8x32xf32> to vector<2x32xf32>
    %154 = arith.addf %33, %153 : vector<2x32xf32>
    %c1 = arith.constant 1 : index
    %c0_61 = arith.constant 0 : index
    %c0_62 = arith.constant 0 : index
    %155 = vector.load %arg7[%c1, %c0_61, %c0_62] : memref<3x6x32xf32, #tpu.memory_space<vmem>>, vector<1x6x32xf32>
    %156 = vector.shape_cast %155 : vector<1x6x32xf32> to vector<6x32xf32>
    %157 = vector.shape_cast %151 : vector<16x32xf32> to vector<2x8x32xf32>
    %158 = vector.shape_cast %157 : vector<2x8x32xf32> to vector<1x2x8x32xf32>
    %159 = vector.shape_cast %158 : vector<1x2x8x32xf32> to vector<1x2x8x32xf32>
    %160 = vector.broadcast %159 : vector<1x2x8x32xf32> to vector<4x2x8x32xf32>
    %161 = vector.shape_cast %160 : vector<4x2x8x32xf32> to vector<8x8x32xf32>
    %c1_63 = arith.constant 1 : index
    %c0_64 = arith.constant 0 : index
    %c0_65 = arith.constant 0 : index
    %c0_66 = arith.constant 0 : index
    %162 = vector.load %arg4[%c1_63, %c0_64, %c0_65, %c0_66] : memref<3x8x32x24xf32, #tpu.memory_space<vmem>>, vector<1x8x32x24xf32>
    %163 = vector.shape_cast %162 : vector<1x8x32x24xf32> to vector<8x32x24xf32>
    "tpu.trace_start"() <{level = 10 : i32, message = "nsk,nkd->nsd"}> : () -> ()
    %cst_67 = arith.constant dense<0.000000e+00> : vector<8x8x24xf32>
    %164 = tpu.matmul %161, %163, %cst_67 {dimension_numbers = #tpu.dot_dimension_numbers<[2], [1], [1], [2], [0, 0, 0, 1, 1, 2], [0], [0]>} : vector<8x8x32xf32>, vector<8x32x24xf32>, vector<8x8x24xf32> -> vector<8x8x24xf32>
    "tpu.trace_stop"() : () -> ()
    %c1_68 = arith.constant 1 : index
    %c0_69 = arith.constant 0 : index
    %c0_70 = arith.constant 0 : index
    %c0_71 = arith.constant 0 : index
    %165 = vector.load %arg5[%c1_68, %c0_69, %c0_70, %c0_71] : memref<3x8x1x24xf32, #tpu.memory_space<vmem>>, vector<1x8x1x24xf32>
    %166 = vector.shape_cast %165 : vector<1x8x1x24xf32> to vector<8x1x24xf32>
    %167 = vector.broadcast %166 : vector<8x1x24xf32> to vector<8x8x24xf32>
    %168 = arith.addf %164, %167 : vector<8x8x24xf32>
    %169 = vector.extract_strided_slice %168 {offsets = [0, 0, 0], sizes = [8, 8, 8], strides = [1, 1, 1]} : vector<8x8x24xf32> to vector<8x8x8xf32>
    %170 = vector.extract_strided_slice %168 {offsets = [0, 0, 8], sizes = [8, 8, 8], strides = [1, 1, 1]} : vector<8x8x24xf32> to vector<8x8x8xf32>
    %171 = vector.extract_strided_slice %168 {offsets = [0, 0, 16], sizes = [8, 8, 8], strides = [1, 1, 1]} : vector<8x8x24xf32> to vector<8x8x8xf32>
    "tpu.trace_start"() <{level = 10 : i32, message = "nqd,nkd->nqk"}> : () -> ()
    %cst_72 = arith.constant dense<0.000000e+00> : vector<8x8x8xf32>
    %172 = tpu.matmul %169, %170, %cst_72 {dimension_numbers = #tpu.dot_dimension_numbers<[2], [2], [1], [1], [0, 0, 0, 1, 1, 1], [0], [0]>} : vector<8x8x8xf32>, vector<8x8x8xf32>, vector<8x8x8xf32> -> vector<8x8x8xf32>
    "tpu.trace_stop"() : () -> ()
    %cst_73 = arith.constant 0.353553385 : f32
    %173 = vector.broadcast %cst_73 : f32 to vector<8x8x8xf32>
    %174 = arith.mulf %172, %173 : vector<8x8x8xf32>
    %175 = vector.broadcast %31 : vector<8x1x8xf32> to vector<8x8x8xf32>
    %176 = arith.addf %174, %175 : vector<8x8x8xf32>
    %cst_74 = arith.constant dense<0xFF800000> : vector<8x8xf32>
    %177 = vector.multi_reduction <maximumf>, %176, %cst_74 [2] : vector<8x8x8xf32> to vector<8x8xf32>
    %178 = vector.shape_cast %177 : vector<8x8xf32> to vector<8x8x1xf32>
    %179 = vector.broadcast %178 : vector<8x8x1xf32> to vector<8x8x8xf32>
    %180 = arith.subf %176, %179 : vector<8x8x8xf32>
    %181 = math.exp %180 : vector<8x8x8xf32>
    %cst_75 = arith.constant dense<0.000000e+00> : vector<8x8xf32>
    %182 = vector.multi_reduction <add>, %181, %cst_75 [2] : vector<8x8x8xf32> to vector<8x8xf32>
    %183 = vector.shape_cast %182 : vector<8x8xf32> to vector<8x8x1xf32>
    %184 = tpu.reciprocal %183 {approx = true} : vector<8x8x1xf32> -> vector<8x8x1xf32>
    %185 = vector.broadcast %184 : vector<8x8x1xf32> to vector<8x8x8xf32>
    %186 = arith.mulf %181, %185 : vector<8x8x8xf32>
    "tpu.trace_start"() <{level = 10 : i32, message = "nqk,nkd->nqd"}> : () -> ()
    %cst_76 = arith.constant dense<0.000000e+00> : vector<8x8x8xf32>
    %187 = tpu.matmul %186, %171, %cst_76 {dimension_numbers = #tpu.dot_dimension_numbers<[2], [1], [1], [2], [0, 0, 0, 1, 1, 2], [0], [0]>} : vector<8x8x8xf32>, vector<8x8x8xf32>, vector<8x8x8xf32> -> vector<8x8x8xf32>
    "tpu.trace_stop"() : () -> ()
    %c1_77 = arith.constant 1 : index
    %c0_78 = arith.constant 0 : index
    %c0_79 = arith.constant 0 : index
    %c0_80 = arith.constant 0 : index
    %188 = vector.load %arg6[%c1_77, %c0_78, %c0_79, %c0_80] : memref<3x8x8x32xf32, #tpu.memory_space<vmem>>, vector<1x8x8x32xf32>
    %189 = vector.shape_cast %188 : vector<1x8x8x32xf32> to vector<8x8x32xf32>
    "tpu.trace_start"() <{level = 10 : i32, message = "nsd,ndh->nsh"}> : () -> ()
    %cst_81 = arith.constant dense<0.000000e+00> : vector<8x8x32xf32>
    %190 = tpu.matmul %187, %189, %cst_81 {dimension_numbers = #tpu.dot_dimension_numbers<[2], [1], [1], [2], [0, 0, 0, 1, 1, 2], [0], [0]>} : vector<8x8x8xf32>, vector<8x8x32xf32>, vector<8x8x32xf32> -> vector<8x8x32xf32>
    "tpu.trace_stop"() : () -> ()
    %191 = vector.shape_cast %190 : vector<8x8x32xf32> to vector<4x2x8x32xf32>
    %cst_82 = arith.constant dense<0.000000e+00> : vector<2x8x32xf32>
    %192 = vector.multi_reduction <add>, %191, %cst_82 [0] : vector<4x2x8x32xf32> to vector<2x8x32xf32>
    %193 = vector.shape_cast %192 : vector<2x8x32xf32> to vector<16x32xf32>
    %194 = vector.extract_strided_slice %156 {offsets = [0, 0], sizes = [1, 32], strides = [1, 1]} : vector<6x32xf32> to vector<1x32xf32>
    %195 = vector.broadcast %194 : vector<1x32xf32> to vector<16x32xf32>
    %196 = arith.addf %193, %195 : vector<16x32xf32>
    %197 = arith.addf %151, %196 : vector<16x32xf32>
    %198 = vector.extract_strided_slice %156 {offsets = [1, 0], sizes = [1, 32], strides = [1, 1]} : vector<6x32xf32> to vector<1x32xf32>
    %199 = vector.extract_strided_slice %156 {offsets = [2, 0], sizes = [1, 32], strides = [1, 1]} : vector<6x32xf32> to vector<1x32xf32>
    %cst_83 = arith.constant dense<0.000000e+00> : vector<16xf32>
    %200 = vector.multi_reduction <add>, %197, %cst_83 [1] : vector<16x32xf32> to vector<16xf32>
    %201 = vector.shape_cast %200 : vector<16xf32> to vector<16x1xf32>
    %cst_84 = arith.constant 3.200000e+01 : f32
    %202 = vector.broadcast %cst_84 : f32 to vector<16x1xf32>
    %203 = arith.divf %201, %202 : vector<16x1xf32>
    %204 = vector.broadcast %203 : vector<16x1xf32> to vector<16x32xf32>
    %205 = arith.subf %197, %204 : vector<16x32xf32>
    %206 = arith.mulf %205, %205 : vector<16x32xf32>
    %cst_85 = arith.constant dense<0.000000e+00> : vector<16xf32>
    %207 = vector.multi_reduction <add>, %206, %cst_85 [1] : vector<16x32xf32> to vector<16xf32>
    %208 = vector.shape_cast %207 : vector<16xf32> to vector<16x1xf32>
    %cst_86 = arith.constant 3.200000e+01 : f32
    %209 = vector.broadcast %cst_86 : f32 to vector<16x1xf32>
    %210 = arith.divf %208, %209 : vector<16x1xf32>
    %211 = vector.broadcast %203 : vector<16x1xf32> to vector<16x32xf32>
    %212 = arith.subf %197, %211 : vector<16x32xf32>
    %cst_87 = arith.constant 9.99999996E-13 : f32
    %213 = vector.broadcast %cst_87 : f32 to vector<16x1xf32>
    %214 = arith.addf %210, %213 : vector<16x1xf32>
    %215 = math.rsqrt %214 : vector<16x1xf32>
    %216 = vector.broadcast %215 : vector<16x1xf32> to vector<16x32xf32>
    %217 = arith.mulf %212, %216 : vector<16x32xf32>
    %218 = vector.broadcast %198 : vector<1x32xf32> to vector<16x32xf32>
    %219 = arith.mulf %217, %218 : vector<16x32xf32>
    %220 = vector.broadcast %199 : vector<1x32xf32> to vector<16x32xf32>
    %221 = arith.addf %219, %220 : vector<16x32xf32>
    %c1_88 = arith.constant 1 : index
    %c0_89 = arith.constant 0 : index
    %c0_90 = arith.constant 0 : index
    %222 = vector.load %arg8[%c1_88, %c0_89, %c0_90] : memref<3x32x64xf32, #tpu.memory_space<vmem>>, vector<1x32x64xf32>
    %223 = vector.shape_cast %222 : vector<1x32x64xf32> to vector<32x64xf32>
    %cst_91 = arith.constant dense<0.000000e+00> : vector<16x64xf32>
    %224 = tpu.matmul %221, %223, %cst_91 {dimension_numbers = #tpu.dot_dimension_numbers<[1], [0], [0], [1], [0, 0, 1, 1], [], []>} : vector<16x32xf32>, vector<32x64xf32>, vector<16x64xf32> -> vector<16x64xf32>
    %c1_92 = arith.constant 1 : index
    %c0_93 = arith.constant 0 : index
    %c0_94 = arith.constant 0 : index
    %225 = vector.load %arg9[%c1_92, %c0_93, %c0_94] : memref<3x1x64xf32, #tpu.memory_space<vmem>>, vector<1x1x64xf32>
    %226 = vector.shape_cast %225 : vector<1x1x64xf32> to vector<1x64xf32>
    %227 = vector.broadcast %226 : vector<1x64xf32> to vector<16x64xf32>
    %228 = arith.addf %224, %227 : vector<16x64xf32>
    %cst_95 = arith.constant 5.000000e-01 : f32
    %229 = vector.broadcast %cst_95 : f32 to vector<16x64xf32>
    %230 = arith.mulf %229, %228 : vector<16x64xf32>
    %cst_96 = arith.constant 4.471500e-02 : f32
    %231 = vector.broadcast %cst_96 : f32 to vector<16x64xf32>
    %232 = arith.mulf %231, %228 : vector<16x64xf32>
    %233 = arith.mulf %232, %228 : vector<16x64xf32>
    %234 = arith.mulf %233, %228 : vector<16x64xf32>
    %235 = arith.addf %228, %234 : vector<16x64xf32>
    %cst_97 = arith.constant 0.797884583 : f32
    %236 = vector.broadcast %cst_97 : f32 to vector<16x64xf32>
    %237 = arith.mulf %236, %235 : vector<16x64xf32>
    %238 = math.tanh %237 : vector<16x64xf32>
    %cst_98 = arith.constant 1.000000e+00 : f32
    %239 = vector.broadcast %cst_98 : f32 to vector<16x64xf32>
    %240 = arith.addf %239, %238 : vector<16x64xf32>
    %241 = arith.mulf %230, %240 : vector<16x64xf32>
    %c1_99 = arith.constant 1 : index
    %c0_100 = arith.constant 0 : index
    %c0_101 = arith.constant 0 : index
    %242 = vector.load %arg10[%c1_99, %c0_100, %c0_101] : memref<3x64x32xf32, #tpu.memory_space<vmem>>, vector<1x64x32xf32>
    %243 = vector.shape_cast %242 : vector<1x64x32xf32> to vector<64x32xf32>
    %cst_102 = arith.constant dense<0.000000e+00> : vector<16x32xf32>
    %244 = tpu.matmul %241, %243, %cst_102 {dimension_numbers = #tpu.dot_dimension_numbers<[1], [0], [0], [1], [0, 0, 1, 1], [], []>} : vector<16x64xf32>, vector<64x32xf32>, vector<16x32xf32> -> vector<16x32xf32>
    %245 = vector.extract_strided_slice %156 {offsets = [3, 0], sizes = [1, 32], strides = [1, 1]} : vector<6x32xf32> to vector<1x32xf32>
    %246 = vector.broadcast %245 : vector<1x32xf32> to vector<16x32xf32>
    %247 = arith.addf %244, %246 : vector<16x32xf32>
    %248 = arith.addf %221, %247 : vector<16x32xf32>
    %249 = vector.extract_strided_slice %156 {offsets = [4, 0], sizes = [1, 32], strides = [1, 1]} : vector<6x32xf32> to vector<1x32xf32>
    %250 = vector.extract_strided_slice %156 {offsets = [5, 0], sizes = [1, 32], strides = [1, 1]} : vector<6x32xf32> to vector<1x32xf32>
    %cst_103 = arith.constant dense<0.000000e+00> : vector<16xf32>
    %251 = vector.multi_reduction <add>, %248, %cst_103 [1] : vector<16x32xf32> to vector<16xf32>
    %252 = vector.shape_cast %251 : vector<16xf32> to vector<16x1xf32>
    %cst_104 = arith.constant 3.200000e+01 : f32
    %253 = vector.broadcast %cst_104 : f32 to vector<16x1xf32>
    %254 = arith.divf %252, %253 : vector<16x1xf32>
    %255 = vector.broadcast %254 : vector<16x1xf32> to vector<16x32xf32>
    %256 = arith.subf %248, %255 : vector<16x32xf32>
    %257 = arith.mulf %256, %256 : vector<16x32xf32>
    %cst_105 = arith.constant dense<0.000000e+00> : vector<16xf32>
    %258 = vector.multi_reduction <add>, %257, %cst_105 [1] : vector<16x32xf32> to vector<16xf32>
    %259 = vector.shape_cast %258 : vector<16xf32> to vector<16x1xf32>
    %cst_106 = arith.constant 3.200000e+01 : f32
    %260 = vector.broadcast %cst_106 : f32 to vector<16x1xf32>
    %261 = arith.divf %259, %260 : vector<16x1xf32>
    %262 = vector.broadcast %254 : vector<16x1xf32> to vector<16x32xf32>
    %263 = arith.subf %248, %262 : vector<16x32xf32>
    %cst_107 = arith.constant 9.99999996E-13 : f32
    %264 = vector.broadcast %cst_107 : f32 to vector<16x1xf32>
    %265 = arith.addf %261, %264 : vector<16x1xf32>
    %266 = math.rsqrt %265 : vector<16x1xf32>
    %267 = vector.broadcast %266 : vector<16x1xf32> to vector<16x32xf32>
    %268 = arith.mulf %263, %267 : vector<16x32xf32>
    %269 = vector.broadcast %249 : vector<1x32xf32> to vector<16x32xf32>
    %270 = arith.mulf %268, %269 : vector<16x32xf32>
    %271 = vector.broadcast %250 : vector<1x32xf32> to vector<16x32xf32>
    %272 = arith.addf %270, %271 : vector<16x32xf32>
    %273 = vector.shape_cast %272 : vector<16x32xf32> to vector<2x8x32xf32>
    %cst_108 = arith.constant dense<0.000000e+00> : vector<2x32xf32>
    %274 = vector.multi_reduction <add>, %273, %cst_108 [1] : vector<2x8x32xf32> to vector<2x32xf32>
    %275 = arith.addf %154, %274 : vector<2x32xf32>
    %c2 = arith.constant 2 : index
    %c0_109 = arith.constant 0 : index
    %c0_110 = arith.constant 0 : index
    %276 = vector.load %arg7[%c2, %c0_109, %c0_110] : memref<3x6x32xf32, #tpu.memory_space<vmem>>, vector<1x6x32xf32>
    %277 = vector.shape_cast %276 : vector<1x6x32xf32> to vector<6x32xf32>
    %278 = vector.shape_cast %272 : vector<16x32xf32> to vector<2x8x32xf32>
    %279 = vector.shape_cast %278 : vector<2x8x32xf32> to vector<1x2x8x32xf32>
    %280 = vector.shape_cast %279 : vector<1x2x8x32xf32> to vector<1x2x8x32xf32>
    %281 = vector.broadcast %280 : vector<1x2x8x32xf32> to vector<4x2x8x32xf32>
    %282 = vector.shape_cast %281 : vector<4x2x8x32xf32> to vector<8x8x32xf32>
    %c2_111 = arith.constant 2 : index
    %c0_112 = arith.constant 0 : index
    %c0_113 = arith.constant 0 : index
    %c0_114 = arith.constant 0 : index
    %283 = vector.load %arg4[%c2_111, %c0_112, %c0_113, %c0_114] : memref<3x8x32x24xf32, #tpu.memory_space<vmem>>, vector<1x8x32x24xf32>
    %284 = vector.shape_cast %283 : vector<1x8x32x24xf32> to vector<8x32x24xf32>
    "tpu.trace_start"() <{level = 10 : i32, message = "nsk,nkd->nsd"}> : () -> ()
    %cst_115 = arith.constant dense<0.000000e+00> : vector<8x8x24xf32>
    %285 = tpu.matmul %282, %284, %cst_115 {dimension_numbers = #tpu.dot_dimension_numbers<[2], [1], [1], [2], [0, 0, 0, 1, 1, 2], [0], [0]>} : vector<8x8x32xf32>, vector<8x32x24xf32>, vector<8x8x24xf32> -> vector<8x8x24xf32>
    "tpu.trace_stop"() : () -> ()
    %c2_116 = arith.constant 2 : index
    %c0_117 = arith.constant 0 : index
    %c0_118 = arith.constant 0 : index
    %c0_119 = arith.constant 0 : index
    %286 = vector.load %arg5[%c2_116, %c0_117, %c0_118, %c0_119] : memref<3x8x1x24xf32, #tpu.memory_space<vmem>>, vector<1x8x1x24xf32>
    %287 = vector.shape_cast %286 : vector<1x8x1x24xf32> to vector<8x1x24xf32>
    %288 = vector.broadcast %287 : vector<8x1x24xf32> to vector<8x8x24xf32>
    %289 = arith.addf %285, %288 : vector<8x8x24xf32>
    %290 = vector.extract_strided_slice %289 {offsets = [0, 0, 0], sizes = [8, 8, 8], strides = [1, 1, 1]} : vector<8x8x24xf32> to vector<8x8x8xf32>
    %291 = vector.extract_strided_slice %289 {offsets = [0, 0, 8], sizes = [8, 8, 8], strides = [1, 1, 1]} : vector<8x8x24xf32> to vector<8x8x8xf32>
    %292 = vector.extract_strided_slice %289 {offsets = [0, 0, 16], sizes = [8, 8, 8], strides = [1, 1, 1]} : vector<8x8x24xf32> to vector<8x8x8xf32>
    "tpu.trace_start"() <{level = 10 : i32, message = "nqd,nkd->nqk"}> : () -> ()
    %cst_120 = arith.constant dense<0.000000e+00> : vector<8x8x8xf32>
    %293 = tpu.matmul %290, %291, %cst_120 {dimension_numbers = #tpu.dot_dimension_numbers<[2], [2], [1], [1], [0, 0, 0, 1, 1, 1], [0], [0]>} : vector<8x8x8xf32>, vector<8x8x8xf32>, vector<8x8x8xf32> -> vector<8x8x8xf32>
    "tpu.trace_stop"() : () -> ()
    %cst_121 = arith.constant 0.353553385 : f32
    %294 = vector.broadcast %cst_121 : f32 to vector<8x8x8xf32>
    %295 = arith.mulf %293, %294 : vector<8x8x8xf32>
    %296 = vector.broadcast %31 : vector<8x1x8xf32> to vector<8x8x8xf32>
    %297 = arith.addf %295, %296 : vector<8x8x8xf32>
    %cst_122 = arith.constant dense<0xFF800000> : vector<8x8xf32>
    %298 = vector.multi_reduction <maximumf>, %297, %cst_122 [2] : vector<8x8x8xf32> to vector<8x8xf32>
    %299 = vector.shape_cast %298 : vector<8x8xf32> to vector<8x8x1xf32>
    %300 = vector.broadcast %299 : vector<8x8x1xf32> to vector<8x8x8xf32>
    %301 = arith.subf %297, %300 : vector<8x8x8xf32>
    %302 = math.exp %301 : vector<8x8x8xf32>
    %cst_123 = arith.constant dense<0.000000e+00> : vector<8x8xf32>
    %303 = vector.multi_reduction <add>, %302, %cst_123 [2] : vector<8x8x8xf32> to vector<8x8xf32>
    %304 = vector.shape_cast %303 : vector<8x8xf32> to vector<8x8x1xf32>
    %305 = tpu.reciprocal %304 {approx = true} : vector<8x8x1xf32> -> vector<8x8x1xf32>
    %306 = vector.broadcast %305 : vector<8x8x1xf32> to vector<8x8x8xf32>
    %307 = arith.mulf %302, %306 : vector<8x8x8xf32>
    "tpu.trace_start"() <{level = 10 : i32, message = "nqk,nkd->nqd"}> : () -> ()
    %cst_124 = arith.constant dense<0.000000e+00> : vector<8x8x8xf32>
    %308 = tpu.matmul %307, %292, %cst_124 {dimension_numbers = #tpu.dot_dimension_numbers<[2], [1], [1], [2], [0, 0, 0, 1, 1, 2], [0], [0]>} : vector<8x8x8xf32>, vector<8x8x8xf32>, vector<8x8x8xf32> -> vector<8x8x8xf32>
    "tpu.trace_stop"() : () -> ()
    %c2_125 = arith.constant 2 : index
    %c0_126 = arith.constant 0 : index
    %c0_127 = arith.constant 0 : index
    %c0_128 = arith.constant 0 : index
    %309 = vector.load %arg6[%c2_125, %c0_126, %c0_127, %c0_128] : memref<3x8x8x32xf32, #tpu.memory_space<vmem>>, vector<1x8x8x32xf32>
    %310 = vector.shape_cast %309 : vector<1x8x8x32xf32> to vector<8x8x32xf32>
    "tpu.trace_start"() <{level = 10 : i32, message = "nsd,ndh->nsh"}> : () -> ()
    %cst_129 = arith.constant dense<0.000000e+00> : vector<8x8x32xf32>
    %311 = tpu.matmul %308, %310, %cst_129 {dimension_numbers = #tpu.dot_dimension_numbers<[2], [1], [1], [2], [0, 0, 0, 1, 1, 2], [0], [0]>} : vector<8x8x8xf32>, vector<8x8x32xf32>, vector<8x8x32xf32> -> vector<8x8x32xf32>
    "tpu.trace_stop"() : () -> ()
    %312 = vector.shape_cast %311 : vector<8x8x32xf32> to vector<4x2x8x32xf32>
    %cst_130 = arith.constant dense<0.000000e+00> : vector<2x8x32xf32>
    %313 = vector.multi_reduction <add>, %312, %cst_130 [0] : vector<4x2x8x32xf32> to vector<2x8x32xf32>
    %314 = vector.shape_cast %313 : vector<2x8x32xf32> to vector<16x32xf32>
    %315 = vector.extract_strided_slice %277 {offsets = [0, 0], sizes = [1, 32], strides = [1, 1]} : vector<6x32xf32> to vector<1x32xf32>
    %316 = vector.broadcast %315 : vector<1x32xf32> to vector<16x32xf32>
    %317 = arith.addf %314, %316 : vector<16x32xf32>
    %318 = arith.addf %272, %317 : vector<16x32xf32>
    %319 = vector.extract_strided_slice %277 {offsets = [1, 0], sizes = [1, 32], strides = [1, 1]} : vector<6x32xf32> to vector<1x32xf32>
    %320 = vector.extract_strided_slice %277 {offsets = [2, 0], sizes = [1, 32], strides = [1, 1]} : vector<6x32xf32> to vector<1x32xf32>
    %cst_131 = arith.constant dense<0.000000e+00> : vector<16xf32>
    %321 = vector.multi_reduction <add>, %318, %cst_131 [1] : vector<16x32xf32> to vector<16xf32>
    %322 = vector.shape_cast %321 : vector<16xf32> to vector<16x1xf32>
    %cst_132 = arith.constant 3.200000e+01 : f32
    %323 = vector.broadcast %cst_132 : f32 to vector<16x1xf32>
    %324 = arith.divf %322, %323 : vector<16x1xf32>
    %325 = vector.broadcast %324 : vector<16x1xf32> to vector<16x32xf32>
    %326 = arith.subf %318, %325 : vector<16x32xf32>
    %327 = arith.mulf %326, %326 : vector<16x32xf32>
    %cst_133 = arith.constant dense<0.000000e+00> : vector<16xf32>
    %328 = vector.multi_reduction <add>, %327, %cst_133 [1] : vector<16x32xf32> to vector<16xf32>
    %329 = vector.shape_cast %328 : vector<16xf32> to vector<16x1xf32>
    %cst_134 = arith.constant 3.200000e+01 : f32
    %330 = vector.broadcast %cst_134 : f32 to vector<16x1xf32>
    %331 = arith.divf %329, %330 : vector<16x1xf32>
    %332 = vector.broadcast %324 : vector<16x1xf32> to vector<16x32xf32>
    %333 = arith.subf %318, %332 : vector<16x32xf32>
    %cst_135 = arith.constant 9.99999996E-13 : f32
    %334 = vector.broadcast %cst_135 : f32 to vector<16x1xf32>
    %335 = arith.addf %331, %334 : vector<16x1xf32>
    %336 = math.rsqrt %335 : vector<16x1xf32>
    %337 = vector.broadcast %336 : vector<16x1xf32> to vector<16x32xf32>
    %338 = arith.mulf %333, %337 : vector<16x32xf32>
    %339 = vector.broadcast %319 : vector<1x32xf32> to vector<16x32xf32>
    %340 = arith.mulf %338, %339 : vector<16x32xf32>
    %341 = vector.broadcast %320 : vector<1x32xf32> to vector<16x32xf32>
    %342 = arith.addf %340, %341 : vector<16x32xf32>
    %c2_136 = arith.constant 2 : index
    %c0_137 = arith.constant 0 : index
    %c0_138 = arith.constant 0 : index
    %343 = vector.load %arg8[%c2_136, %c0_137, %c0_138] : memref<3x32x64xf32, #tpu.memory_space<vmem>>, vector<1x32x64xf32>
    %344 = vector.shape_cast %343 : vector<1x32x64xf32> to vector<32x64xf32>
    %cst_139 = arith.constant dense<0.000000e+00> : vector<16x64xf32>
    %345 = tpu.matmul %342, %344, %cst_139 {dimension_numbers = #tpu.dot_dimension_numbers<[1], [0], [0], [1], [0, 0, 1, 1], [], []>} : vector<16x32xf32>, vector<32x64xf32>, vector<16x64xf32> -> vector<16x64xf32>
    %c2_140 = arith.constant 2 : index
    %c0_141 = arith.constant 0 : index
    %c0_142 = arith.constant 0 : index
    %346 = vector.load %arg9[%c2_140, %c0_141, %c0_142] : memref<3x1x64xf32, #tpu.memory_space<vmem>>, vector<1x1x64xf32>
    %347 = vector.shape_cast %346 : vector<1x1x64xf32> to vector<1x64xf32>
    %348 = vector.broadcast %347 : vector<1x64xf32> to vector<16x64xf32>
    %349 = arith.addf %345, %348 : vector<16x64xf32>
    %cst_143 = arith.constant 5.000000e-01 : f32
    %350 = vector.broadcast %cst_143 : f32 to vector<16x64xf32>
    %351 = arith.mulf %350, %349 : vector<16x64xf32>
    %cst_144 = arith.constant 4.471500e-02 : f32
    %352 = vector.broadcast %cst_144 : f32 to vector<16x64xf32>
    %353 = arith.mulf %352, %349 : vector<16x64xf32>
    %354 = arith.mulf %353, %349 : vector<16x64xf32>
    %355 = arith.mulf %354, %349 : vector<16x64xf32>
    %356 = arith.addf %349, %355 : vector<16x64xf32>
    %cst_145 = arith.constant 0.797884583 : f32
    %357 = vector.broadcast %cst_145 : f32 to vector<16x64xf32>
    %358 = arith.mulf %357, %356 : vector<16x64xf32>
    %359 = math.tanh %358 : vector<16x64xf32>
    %cst_146 = arith.constant 1.000000e+00 : f32
    %360 = vector.broadcast %cst_146 : f32 to vector<16x64xf32>
    %361 = arith.addf %360, %359 : vector<16x64xf32>
    %362 = arith.mulf %351, %361 : vector<16x64xf32>
    %c2_147 = arith.constant 2 : index
    %c0_148 = arith.constant 0 : index
    %c0_149 = arith.constant 0 : index
    %363 = vector.load %arg10[%c2_147, %c0_148, %c0_149] : memref<3x64x32xf32, #tpu.memory_space<vmem>>, vector<1x64x32xf32>
    %364 = vector.shape_cast %363 : vector<1x64x32xf32> to vector<64x32xf32>
    %cst_150 = arith.constant dense<0.000000e+00> : vector<16x32xf32>
    %365 = tpu.matmul %362, %364, %cst_150 {dimension_numbers = #tpu.dot_dimension_numbers<[1], [0], [0], [1], [0, 0, 1, 1], [], []>} : vector<16x64xf32>, vector<64x32xf32>, vector<16x32xf32> -> vector<16x32xf32>
    %366 = vector.extract_strided_slice %277 {offsets = [3, 0], sizes = [1, 32], strides = [1, 1]} : vector<6x32xf32> to vector<1x32xf32>
    %367 = vector.broadcast %366 : vector<1x32xf32> to vector<16x32xf32>
    %368 = arith.addf %365, %367 : vector<16x32xf32>
    %369 = arith.addf %342, %368 : vector<16x32xf32>
    %370 = vector.extract_strided_slice %277 {offsets = [4, 0], sizes = [1, 32], strides = [1, 1]} : vector<6x32xf32> to vector<1x32xf32>
    %371 = vector.extract_strided_slice %277 {offsets = [5, 0], sizes = [1, 32], strides = [1, 1]} : vector<6x32xf32> to vector<1x32xf32>
    %cst_151 = arith.constant dense<0.000000e+00> : vector<16xf32>
    %372 = vector.multi_reduction <add>, %369, %cst_151 [1] : vector<16x32xf32> to vector<16xf32>
    %373 = vector.shape_cast %372 : vector<16xf32> to vector<16x1xf32>
    %cst_152 = arith.constant 3.200000e+01 : f32
    %374 = vector.broadcast %cst_152 : f32 to vector<16x1xf32>
    %375 = arith.divf %373, %374 : vector<16x1xf32>
    %376 = vector.broadcast %375 : vector<16x1xf32> to vector<16x32xf32>
    %377 = arith.subf %369, %376 : vector<16x32xf32>
    %378 = arith.mulf %377, %377 : vector<16x32xf32>
    %cst_153 = arith.constant dense<0.000000e+00> : vector<16xf32>
    %379 = vector.multi_reduction <add>, %378, %cst_153 [1] : vector<16x32xf32> to vector<16xf32>
    %380 = vector.shape_cast %379 : vector<16xf32> to vector<16x1xf32>
    %cst_154 = arith.constant 3.200000e+01 : f32
    %381 = vector.broadcast %cst_154 : f32 to vector<16x1xf32>
    %382 = arith.divf %380, %381 : vector<16x1xf32>
    %383 = vector.broadcast %375 : vector<16x1xf32> to vector<16x32xf32>
    %384 = arith.subf %369, %383 : vector<16x32xf32>
    %cst_155 = arith.constant 9.99999996E-13 : f32
    %385 = vector.broadcast %cst_155 : f32 to vector<16x1xf32>
    %386 = arith.addf %382, %385 : vector<16x1xf32>
    %387 = math.rsqrt %386 : vector<16x1xf32>
    %388 = vector.broadcast %387 : vector<16x1xf32> to vector<16x32xf32>
    %389 = arith.mulf %384, %388 : vector<16x32xf32>
    %390 = vector.broadcast %370 : vector<1x32xf32> to vector<16x32xf32>
    %391 = arith.mulf %389, %390 : vector<16x32xf32>
    %392 = vector.broadcast %371 : vector<1x32xf32> to vector<16x32xf32>
    %393 = arith.addf %391, %392 : vector<16x32xf32>
    %394 = vector.shape_cast %393 : vector<16x32xf32> to vector<2x8x32xf32>
    %cst_156 = arith.constant dense<0.000000e+00> : vector<2x32xf32>
    %395 = vector.multi_reduction <add>, %394, %cst_156 [1] : vector<2x8x32xf32> to vector<2x32xf32>
    %396 = arith.addf %275, %395 : vector<2x32xf32>
    %cst_157 = arith.constant 3.125000e-02 : f32
    %397 = vector.broadcast %cst_157 : f32 to vector<2x32xf32>
    %398 = arith.mulf %396, %397 : vector<2x32xf32>
    %c0_158 = arith.constant 0 : index
    %c0_159 = arith.constant 0 : index
    %399 = vector.load %arg11[%c0_158, %c0_159] : memref<32x5xf32, #tpu.memory_space<vmem>>, vector<32x5xf32>
    %cst_160 = arith.constant dense<0.000000e+00> : vector<2x5xf32>
    %400 = tpu.matmul %398, %399, %cst_160 {dimension_numbers = #tpu.dot_dimension_numbers<[1], [0], [0], [1], [0, 0, 1, 1], [], []>} : vector<2x32xf32>, vector<32x5xf32>, vector<2x5xf32> -> vector<2x5xf32>
    %c0_161 = arith.constant 0 : index
    %c0_162 = arith.constant 0 : index
    %401 = vector.load %arg12[%c0_161, %c0_162] : memref<1x5xf32, #tpu.memory_space<vmem>>, vector<1x5xf32>
    %402 = vector.broadcast %401 : vector<1x5xf32> to vector<2x5xf32>
    %403 = arith.addf %400, %402 : vector<2x5xf32>
    %c0_163 = arith.constant 0 : index
    %c0_164 = arith.constant 0 : index
    %404 = vector.load %arg13[%c0_163, %c0_164] : memref<2x5xf32, #tpu.memory_space<vmem>>, vector<2x5xf32>
    tpu.vector_store %arg13[%c0_163, %c0_164], %403 {strides = array<i32>} : memref<2x5xf32, #tpu.memory_space<vmem>>, vector<2x5xf32>,
    return
  }
  func.func @transform_0(%arg0: i32) -> (i32, i32, i32) {
    %c0_i32 = arith.constant 0 : i32
    %c0_i32_0 = arith.constant 0 : i32
    %c0_i32_1 = arith.constant 0 : i32
    %c0_i32_2 = arith.constant 0 : i32
    return %c0_i32, %c0_i32_0, %c0_i32_1 : i32, i32, i32
  }
  func.func @transform_1(%arg0: i32) -> (i32, i32, i32) {
    %c0_i32 = arith.constant 0 : i32
    %c0_i32_0 = arith.constant 0 : i32
    %c0_i32_1 = arith.constant 0 : i32
    %c0_i32_2 = arith.constant 0 : i32
    return %c0_i32, %c0_i32_0, %c0_i32_1 : i32, i32, i32
  }
  func.func @transform_2(%arg0: i32) -> (i32, i32) {
    %c0_i32 = arith.constant 0 : i32
    %c0_i32_0 = arith.constant 0 : i32
    %c0_i32_1 = arith.constant 0 : i32
    return %c0_i32, %c0_i32_0 : i32, i32
  }
  func.func @transform_3(%arg0: i32) -> (i32, i32, i32, i32) {
    %c0_i32 = arith.constant 0 : i32
    %c0_i32_0 = arith.constant 0 : i32
    %c0_i32_1 = arith.constant 0 : i32
    %c0_i32_2 = arith.constant 0 : i32
    %c0_i32_3 = arith.constant 0 : i32
    return %c0_i32, %c0_i32_0, %c0_i32_1, %c0_i32_2 : i32, i32, i32, i32
  }
  func.func @transform_4(%arg0: i32) -> (i32, i32, i32, i32) {
    %c0_i32 = arith.constant 0 : i32
    %c0_i32_0 = arith.constant 0 : i32
    %c0_i32_1 = arith.constant 0 : i32
    %c0_i32_2 = arith.constant 0 : i32
    %c0_i32_3 = arith.constant 0 : i32
    return %c0_i32, %c0_i32_0, %c0_i32_1, %c0_i32_2 : i32, i32, i32, i32
  }
  func.func @transform_5(%arg0: i32) -> (i32, i32, i32, i32) {
    %c0_i32 = arith.constant 0 : i32
    %c0_i32_0 = arith.constant 0 : i32
    %c0_i32_1 = arith.constant 0 : i32
    %c0_i32_2 = arith.constant 0 : i32
    %c0_i32_3 = arith.constant 0 : i32
    return %c0_i32, %c0_i32_0, %c0_i32_1, %c0_i32_2 : i32, i32, i32, i32
  }
  func.func @transform_6(%arg0: i32) -> (i32, i32, i32) {
    %c0_i32 = arith.constant 0 : i32
    %c0_i32_0 = arith.constant 0 : i32
    %c0_i32_1 = arith.constant 0 : i32
    %c0_i32_2 = arith.constant 0 : i32
    return %c0_i32, %c0_i32_0, %c0_i32_1 : i32, i32, i32
  }
  func.func @transform_7(%arg0: i32) -> (i32, i32, i32) {
    %c0_i32 = arith.constant 0 : i32
    %c0_i32_0 = arith.constant 0 : i32
    %c0_i32_1 = arith.constant 0 : i32
    %c0_i32_2 = arith.constant 0 : i32
    return %c0_i32, %c0_i32_0, %c0_i32_1 : i32, i32, i32
  }
  func.func @transform_8(%arg0: i32) -> (i32, i32, i32) {
    %c0_i32 = arith.constant 0 : i32
    %c0_i32_0 = arith.constant 0 : i32
    %c0_i32_1 = arith.constant 0 : i32
    %c0_i32_2 = arith.constant 0 : i32
    return %c0_i32, %c0_i32_0, %c0_i32_1 : i32, i32, i32
  }
  func.func @transform_9(%arg0: i32) -> (i32, i32, i32) {
    %c0_i32 = arith.constant 0 : i32
    %c0_i32_0 = arith.constant 0 : i32
    %c0_i32_1 = arith.constant 0 : i32
    %c0_i32_2 = arith.constant 0 : i32
    return %c0_i32, %c0_i32_0, %c0_i32_1 : i32, i32, i32
  }
  func.func @transform_10(%arg0: i32) -> (i32, i32) {
    %c0_i32 = arith.constant 0 : i32
    %c0_i32_0 = arith.constant 0 : i32
    %c0_i32_1 = arith.constant 0 : i32
    return %c0_i32, %c0_i32_0 : i32, i32
  }
  func.func @transform_11(%arg0: i32) -> (i32, i32) {
    %c0_i32 = arith.constant 0 : i32
    %c0_i32_0 = arith.constant 0 : i32
    %c0_i32_1 = arith.constant 0 : i32
    return %c0_i32, %c0_i32_0 : i32, i32
  }
  func.func @transform_12(%arg0: i32) -> (i32, i32) {
    %c0_i32 = arith.constant 0 : i32
    %c0_i32_0 = arith.constant 0 : i32
    %c0_i32_1 = arith.constant 0 : i32
    return %c0_i32, %c0_i32_0 : i32, i32
  }
}

</mosaic_0001>

<llo_original>
// kernel: bert_forward.1
$region0: #{bert_forward.1}
  #allocation0 [shape = 'u32[]', space=smem, size = 0x4, offset = 0x4, fixed_abs, tag = 'smem constant byte address 0x4 - core index']
  #allocation1 [shape = 'u32[144,128]{1,0:T(1,128)}', space=vmem, size = 0x12000, scoped, tag = 'internal scratch']
  %s0 = inlined_call_operand.vmem [shape: f32[2,8,32], index: 0, kind: input, shape index: {}]
  %s1 = inlined_call_operand.vmem [shape: f32[2,1,8], index: 1, kind: input, shape index: {}]
  %s2 = inlined_call_operand.vmem [shape: f32[2,32], index: 2, kind: input, shape index: {}]
  %s3 = inlined_call_operand.vmem [shape: f32[3,8,32,24], index: 3, kind: input, shape index: {}]
  %s4 = inlined_call_operand.vmem [shape: f32[3,8,1,24], index: 4, kind: input, shape index: {}]
  %s5 = inlined_call_operand.vmem [shape: f32[3,8,8,32], index: 5, kind: input, shape index: {}]
  %s6 = inlined_call_operand.vmem [shape: f32[3,6,32], index: 6, kind: input, shape index: {}]
  %s7 = inlined_call_operand.vmem [shape: f32[3,32,64], index: 7, kind: input, shape index: {}]
  %s8 = inlined_call_operand.vmem [shape: f32[3,1,64], index: 8, kind: input, shape index: {}]
  %s9 = inlined_call_operand.vmem [shape: f32[3,64,32], index: 9, kind: input, shape index: {}]
  %s10 = inlined_call_operand.vmem [shape: f32[32,5], index: 10, kind: input, shape index: {}]
  %s11 = inlined_call_operand.vmem [shape: f32[1,5], index: 11, kind: input, shape index: {}]
  %s12 = inlined_call_operand.hbm [shape: f32[2,5], index: 12, kind: output, shape index: {}]
  %s13 = sld [smem:[#allocation0]]
  $region58: #{bert_forward.1} parent=0
    _
  %s15 = ssub.s32 1, %s13
  %s16 = scalar_select 0, %s15, %s13
  $region1: #{bert_forward.1} parent=0
    #allocation2 [shape = 'u8[1024]{0}', space=vmem, size = 0x400, scoped, tag = 'output window, operand 0, single buffered']
    #allocation3 [shape = 's32[1]{0}', space=sflag, size = 0x4, scoped, tag = 'scoped memory for bert_forward.1']
    %17 = vsyncpa [#allocation3], 0
    // Predicated region
    $region2: #{bert_forward.1} parent=1 // pred_check
      _
    $region3: #{bert_forward.1} parent=1 // pred_check_branch
      %19 = sbr.rel (0) target = $region5
    $region4: #{bert_forward.1} parent=1 // pred_region
      _
    $region5: #{bert_forward.1} parent=1 // pred_fallthru
      _
    // Predicated region
    $region6: #{bert_forward.1} parent=1 // pred_check
      _
    $region7: #{bert_forward.1} parent=1 // pred_check_branch
      %21 = sbr.rel (0) target = $region9
    $region8: #{bert_forward.1} parent=1 // pred_region
      _
    $region9: #{bert_forward.1} parent=1 // pred_fallthru
      _
    // Predicated region
    $region10: #{bert_forward.1} parent=1 // pred_check
      _
    $region11: #{bert_forward.1} parent=1 // pred_check_branch
      %23 = sbr.rel (0) target = $region13
    $region12: #{bert_forward.1} parent=1 // pred_region
      _
    $region13: #{bert_forward.1} parent=1 // pred_fallthru
      _
    // Predicated region
    $region14: #{bert_forward.1} parent=1 // pred_check
      _
    $region15: #{bert_forward.1} parent=1 // pred_check_branch
      %25 = sbr.rel (0) target = $region17
    $region16: #{bert_forward.1} parent=1 // pred_region
      _
    $region17: #{bert_forward.1} parent=1 // pred_fallthru
      _
    // Predicated region
    $region18: #{bert_forward.1} parent=1 // pred_check
      _
    $region19: #{bert_forward.1} parent=1 // pred_check_branch
      %27 = sbr.rel (0) target = $region21
    $region20: #{bert_forward.1} parent=1 // pred_region
      _
    $region21: #{bert_forward.1} parent=1 // pred_fallthru
      _
    // Predicated region
    $region22: #{bert_forward.1} parent=1 // pred_check
      _
    $region23: #{bert_forward.1} parent=1 // pred_check_branch
      %29 = sbr.rel (0) target = $region25
    $region24: #{bert_forward.1} parent=1 // pred_region
      _
    $region25: #{bert_forward.1} parent=1 // pred_fallthru
      _
    // Predicated region
    $region26: #{bert_forward.1} parent=1 // pred_check
      _
    $region27: #{bert_forward.1} parent=1 // pred_check_branch
      %31 = sbr.rel (0) target = $region29
    $region28: #{bert_forward.1} parent=1 // pred_region
      _
    $region29: #{bert_forward.1} parent=1 // pred_fallthru
      _
    // Predicated region
    $region30: #{bert_forward.1} parent=1 // pred_check
      _
    $region31: #{bert_forward.1} parent=1 // pred_check_branch
      %33 = sbr.rel (0) target = $region33
    $region32: #{bert_forward.1} parent=1 // pred_region
      _
    $region33: #{bert_forward.1} parent=1 // pred_fallthru
      _
    // Predicated region
    $region34: #{bert_forward.1} parent=1 // pred_check
      _
    $region35: #{bert_forward.1} parent=1 // pred_check_branch
      %35 = sbr.rel (0) target = $region37
    $region36: #{bert_forward.1} parent=1 // pred_region
      _
    $region37: #{bert_forward.1} parent=1 // pred_fallthru
      _
    // Predicated region
    $region38: #{bert_forward.1} parent=1 // pred_check
      _
    $region39: #{bert_forward.1} parent=1 // pred_check_branch
      %37 = sbr.rel (0) target = $region41
    $region40: #{bert_forward.1} parent=1 // pred_region
      _
    $region41: #{bert_forward.1} parent=1 // pred_fallthru
      _
    // Predicated region
    $region42: #{bert_forward.1} parent=1 // pred_check
      _
    $region43: #{bert_forward.1} parent=1 // pred_check_branch
      %39 = sbr.rel (0) target = $region45
    $region44: #{bert_forward.1} parent=1 // pred_region
      _
    $region45: #{bert_forward.1} parent=1 // pred_fallthru
      _
    // Predicated region
    $region46: #{bert_forward.1} parent=1 // pred_check
      _
    $region47: #{bert_forward.1} parent=1 // pred_check_branch
      %41 = sbr.rel (0) target = $region49
    $region48: #{bert_forward.1} parent=1 // pred_region
      _
    $region49: #{bert_forward.1} parent=1 // pred_fallthru
      _
    %v42 = vld [vmem:[%s2] sm:$0x3]
    %v43 = vld [vmem:[%s0] sm:$0xff]
    %v44 = vld [vmem:[%s0 + $0x8] sm:$0xff]
    %vm45 = vcmask 261120
    %v46 = vsel %vm45, %v43, 0.0
    %47 = vadd.xlane.f32.xlu0 %v46
    %v48 = vpop.xlane.xlu0 %47
    %v49 = vsel %vm45, %v44, 0.0
    %50 = vadd.xlane.f32.xlu0 %v49
    %v51 = vpop.xlane.xlu0 %50
    %v52 = vrcp.pop 32.0
    %v53 = vmul.f32 %v48, %v52
    %v54 = vmul.f32 %v51, %v52
    %v55 = vsub.f32 %v43, %v53
    %v56 = vsub.f32 %v44, %v54
    %v57 = vmul.f32 %v55, %v55
    %v58 = vmul.f32 %v56, %v56
    %v59 = vsel %vm45, %v57, 0.0
    %60 = vadd.xlane.f32.xlu0 %v59
    %v61 = vpop.xlane.xlu0 %60
    %v62 = vsel %vm45, %v58, 0.0
    %63 = vadd.xlane.f32.xlu0 %v62
    %v64 = vpop.xlane.xlu0 %63
    %v65 = vmul.f32 %v61, %v52
    %v66 = vmul.f32 %v64, %v52
    %v67 = vadd.f32 %v65, 1e-12
    %v68 = vadd.f32 %v66, 1e-12
    %v69 = vrsqrt.pop %v67
    %v70 = vrsqrt.pop %v68
    %v71 = vmul.f32 %v55, %v69
    %v72 = vmul.f32 %v56, %v70
    %v73 = vlaneseq
    %v74 = vshrl.u32 %v73, 7
    %v75 = vsub.s32 0, %v74
    %v76 = vrot.slane %v42, %v75
    %v77 = vmul.f32 %v71, %v76
    %v78 = vmul.f32 %v72, %v76
    %v79 = vlaneseq
    %v80 = vshrl.u32 %v79, 7
    %v81 = vsub.s32 1, %v80
    %v82 = vrot.slane %v42, %v81
    %v83 = vadd.f32 %v77, %v82
    %v84 = vadd.f32 %v78, %v82
    %v85 = vld [vmem:[%s1] sm:$0x1]
    %v86 = vld [vmem:[%s1 + $0x1] sm:$0x1]
    %v87 = vsel %vm45, %v83, 0.0
    %v88 = vrot.slane %v87, 4
    %v89 = vadd.f32 %v87, %v88
    %v90 = vrot.slane %v89, 2
    %v91 = vadd.f32 %v89, %v90
    %v92 = vrot.slane %v91, 1
    %v93 = vadd.f32 %v91, %v92
    %v94 = vsel %vm45, %v84, 0.0
    %v95 = vrot.slane %v94, 4
    %v96 = vadd.f32 %v94, %v95
    %v97 = vrot.slane %v96, 2
    %v98 = vadd.f32 %v96, %v97
    %v99 = vrot.slane %v98, 1
    %v100 = vadd.f32 %v98, %v99
    %v101 = vld [vmem:[%s6] sm:$0x3f]
    %v102 = vld [vmem:[%s3] sm:$0xff]
    %v103 = vld [vmem:[%s3 + $0x8] sm:$0xff]
    %v104 = vld [vmem:[%s3 + $0x10] sm:$0xff]
    %v105 = vld [vmem:[%s3 + $0x18] sm:$0xff]
    %v106 = vld [vmem:[%s3 + $0x20] sm:$0xff]
    %v107 = vld [vmem:[%s3 + $0x28] sm:$0xff]
    %v108 = vld [vmem:[%s3 + $0x30] sm:$0xff]
    %v109 = vld [vmem:[%s3 + $0x38] sm:$0xff]
    %v110 = vld [vmem:[%s3 + $0x40] sm:$0xff]
    %v111 = vld [vmem:[%s3 + $0x48] sm:$0xff]
    %v112 = vld [vmem:[%s3 + $0x50] sm:$0xff]
    %v113 = vld [vmem:[%s3 + $0x58] sm:$0xff]
    %v114 = vld [vmem:[%s3 + $0x60] sm:$0xff]
    %v115 = vld [vmem:[%s3 + $0x68] sm:$0xff]
    %v116 = vld [vmem:[%s3 + $0x70] sm:$0xff]
    %v117 = vld [vmem:[%s3 + $0x78] sm:$0xff]
    %v118 = vld [vmem:[%s3 + $0x80] sm:$0xff]
    %v119 = vld [vmem:[%s3 + $0x88] sm:$0xff]
    %v120 = vld [vmem:[%s3 + $0x90] sm:$0xff]
    %v121 = vld [vmem:[%s3 + $0x98] sm:$0xff]
    %v122 = vld [vmem:[%s3 + $0xa0] sm:$0xff]
    %v123 = vld [vmem:[%s3 + $0xa8] sm:$0xff]
    %v124 = vld [vmem:[%s3 + $0xb0] sm:$0xff]
    %v125 = vld [vmem:[%s3 + $0xb8] sm:$0xff]
    %v126 = vld [vmem:[%s3 + $0xc0] sm:$0xff]
    %v127 = vld [vmem:[%s3 + $0xc8] sm:$0xff]
    %v128 = vld [vmem:[%s3 + $0xd0] sm:$0xff]
    %v129 = vld [vmem:[%s3 + $0xd8] sm:$0xff]
    %v130 = vld [vmem:[%s3 + $0xe0] sm:$0xff]
    %v131 = vld [vmem:[%s3 + $0xe8] sm:$0xff]
    %v132 = vld [vmem:[%s3 + $0xf0] sm:$0xff]
    %v133 = vld [vmem:[%s3 + $0xf8] sm:$0xff]
    %v134 = vld [vmem:[%s4] sm:$0x1]
    %v135 = vld [vmem:[%s4 + $0x1] sm:$0x1]
    %v136 = vld [vmem:[%s4 + $0x2] sm:$0x1]
    %v137 = vld [vmem:[%s4 + $0x3] sm:$0x1]
    %v138 = vld [vmem:[%s4 + $0x4] sm:$0x1]
    %v139 = vld [vmem:[%s4 + $0x5] sm:$0x1]
    %v140 = vld [vmem:[%s4 + $0x6] sm:$0x1]
    %v141 = vld [vmem:[%s4 + $0x7] sm:$0x1]
    %v150 = vlaneseq
    %v151 = vshrl.u32 %v150, 7
    %v152 = vsub.s32 0, %v151
    %v153 = vrot.slane %v134, %v152
    %v154 = vlaneseq
    %v155 = vshrl.u32 %v154, 7
    %v156 = vsub.s32 0, %v155
    %v157 = vrot.slane %v135, %v156
    %v158 = vlaneseq
    %v159 = vshrl.u32 %v158, 7
    %v160 = vsub.s32 0, %v159
    %v161 = vrot.slane %v136, %v160
    %v162 = vlaneseq
    %v163 = vshrl.u32 %v162, 7
    %v164 = vsub.s32 0, %v163
    %v165 = vrot.slane %v137, %v164
    %v166 = vlaneseq
    %v167 = vshrl.u32 %v166, 7
    %v168 = vsub.s32 0, %v167
    %v169 = vrot.slane %v138, %v168
    %v170 = vlaneseq
    %v171 = vshrl.u32 %v170, 7
    %v172 = vsub.s32 0, %v171
    %v173 = vrot.slane %v139, %v172
    %v174 = vlaneseq
    %v175 = vshrl.u32 %v174, 7
    %v176 = vsub.s32 0, %v175
    %v177 = vrot.slane %v140, %v176
    %v178 = vlaneseq
    %v179 = vshrl.u32 %v178, 7
    %v180 = vsub.s32 0, %v179
    %v181 = vrot.slane %v141, %v180
    %v191 = vsel %vm45, %v83, 0
    %193 = vmatprep.subr.mxu0 0.0
    %194 = vmatpush1.msra.mxu0 %v102
    %195 = vmatprep.subr.mxu0 0.0
    %196 = vmatpush1.msra.mxu0 %v103
    %197 = vmatprep.subr.mxu0 0.0
    %198 = vmatpush1.msra.mxu0 %v104
    %199 = vmatprep.subr.mxu0 0.0
    %200 = vmatpush1.msra.mxu0 %v105
    %201 = vmatprep.subr.mxu0 0.0
    %202 = vmatpush1.msra.mxu0 0.0
    %203 = vmatprep.subr.mxu0 0.0
    %204 = vmatpush1.msra.mxu0 0.0
    %205 = vmatprep.subr.mxu0 0.0
    %206 = vmatpush1.msra.mxu0 0.0
    %207 = vmatprep.subr.mxu0 0.0
    %208 = vmatpush1.msra.mxu0 0.0
    %209 = vmatprep.subr.mxu0 0.0
    %210 = vmatpush1.msra.mxu0 0.0
    %211 = vmatprep.subr.mxu0 0.0
    %212 = vmatpush1.msra.mxu0 0.0
    %213 = vmatprep.subr.mxu0 0.0
    %214 = vmatpush1.msra.mxu0 0.0
    %215 = vmatprep.subr.mxu0 0.0
    %216 = vmatpush1.msra.mxu0 0.0
    %217 = vmatprep.subr.mxu0 0.0
    %218 = vmatpush1.msra.mxu0 0.0
    %219 = vmatprep.subr.mxu0 0.0
    %220 = vmatpush1.msra.mxu0 0.0
    %221 = vmatprep.subr.mxu0 0.0
    %222 = vmatpush1.msra.mxu0 0.0
    %223 = vmatprep.subr.mxu0 0.0
    %224 = vmatpush1.msra.mxu0 0.0
    %225 = vmatprep.subr.mxu0 0.0
    %226 = vmatpush1.msra.mxu0 0.0
    %227 = vmatprep.subr.mxu0 0.0
    %228 = vmatpush1.msra.mxu0 0.0
    %229 = vmatprep.subr.mxu0 0.0
    %230 = vmatpush1.msra.mxu0 0.0
    %231 = vmatprep.subr.mxu0 0.0
    %232 = vmatpush1.msra.mxu0 0.0
    %233 = vmatprep.subr.mxu0 0.0
    %234 = vmatpush1.msra.mxu0 0.0
    %235 = vmatprep.subr.mxu0 0.0
    %236 = vmatpush1.msra.mxu0 0.0
    %237 = vmatprep.subr.mxu0 0.0
    %238 = vmatpush1.msra.mxu0 0.0
    %239 = vmatprep.subr.mxu0 0.0
    %240 = vmatpush1.msra.mxu0 0.0
    %241 = vmatprep.subr.mxu0 0.0
    %242 = vmatpush1.msra.mxu0 0.0
    %243 = vmatprep.subr.mxu0 0.0
    %244 = vmatpush1.msra.mxu0 0.0
    %245 = vmatprep.subr.mxu0 0.0
    %246 = vmatpush1.msra.mxu0 0.0
    %247 = vmatprep.subr.mxu0 0.0
    %248 = vmatpush1.msra.mxu0 0.0
    %249 = vmatprep.subr.mxu0 0.0
    %250 = vmatpush1.msra.mxu0 0.0
    %251 = vmatprep.subr.mxu0 0.0
    %252 = vmatpush1.msra.mxu0 0.0
    %253 = vmatprep.subr.mxu0 0.0
    %254 = vmatpush1.msra.mxu0 0.0
    %255 = vmatprep.subr.mxu0 0.0
    %256 = vmatpush1.msra.mxu0 0.0
    %257 = vmatprep.mubr.f32.mxu0 0.0
    %258 = vmatmul.mubr.f32.gmra.mrb[0].mxu0 %v191
    %v259 = vpop.f32.mrb[0].mxu0
    %v260 = vadd.f32 %v153, %v259
    %v261 = vpop.f32.mrb[0].mxu0
    %262 = vdwg.mxu0
    %v264 = vsel %vm45, %v84, 0
    %266 = vmatprep.subr.mxu0 0.0
    %267 = vmatpush1.msra.mxu0 %v106
    %268 = vmatprep.subr.mxu0 0.0
    %269 = vmatpush1.msra.mxu0 %v107
    %270 = vmatprep.subr.mxu0 0.0
    %271 = vmatpush1.msra.mxu0 %v108
    %272 = vmatprep.subr.mxu0 0.0
    %273 = vmatpush1.msra.mxu0 %v109
    %274 = vmatprep.subr.mxu0 0.0
    %275 = vmatpush1.msra.mxu0 0.0
    %276 = vmatprep.subr.mxu0 0.0
    %277 = vmatpush1.msra.mxu0 0.0
    %278 = vmatprep.subr.mxu0 0.0
    %279 = vmatpush1.msra.mxu0 0.0
    %280 = vmatprep.subr.mxu0 0.0
    %281 = vmatpush1.msra.mxu0 0.0
    %282 = vmatprep.subr.mxu0 0.0
    %283 = vmatpush1.msra.mxu0 0.0
    %284 = vmatprep.subr.mxu0 0.0
    %285 = vmatpush1.msra.mxu0 0.0
    %286 = vmatprep.subr.mxu0 0.0
    %287 = vmatpush1.msra.mxu0 0.0
    %288 = vmatprep.subr.mxu0 0.0
    %289 = vmatpush1.msra.mxu0 0.0
    %290 = vmatprep.subr.mxu0 0.0
    %291 = vmatpush1.msra.mxu0 0.0
    %292 = vmatprep.subr.mxu0 0.0
    %293 = vmatpush1.msra.mxu0 0.0
    %294 = vmatprep.subr.mxu0 0.0
    %295 = vmatpush1.msra.mxu0 0.0
    %296 = vmatprep.subr.mxu0 0.0
    %297 = vmatpush1.msra.mxu0 0.0
    %298 = vmatprep.subr.mxu0 0.0
    %299 = vmatpush1.msra.mxu0 0.0
    %300 = vmatprep.subr.mxu0 0.0
    %301 = vmatpush1.msra.mxu0 0.0
    %302 = vmatprep.subr.mxu0 0.0
    %303 = vmatpush1.msra.mxu0 0.0
    %304 = vmatprep.subr.mxu0 0.0
    %305 = vmatpush1.msra.mxu0 0.0
    %306 = vmatprep.subr.mxu0 0.0
    %307 = vmatpush1.msra.mxu0 0.0
    %308 = vmatprep.subr.mxu0 0.0
    %309 = vmatpush1.msra.mxu0 0.0
    %310 = vmatprep.subr.mxu0 0.0
    %311 = vmatpush1.msra.mxu0 0.0
    %312 = vmatprep.subr.mxu0 0.0
    %313 = vmatpush1.msra.mxu0 0.0
    %314 = vmatprep.subr.mxu0 0.0
    %315 = vmatpush1.msra.mxu0 0.0
    %316 = vmatprep.subr.mxu0 0.0
    %317 = vmatpush1.msra.mxu0 0.0
    %318 = vmatprep.subr.mxu0 0.0
    %319 = vmatpush1.msra.mxu0 0.0
    %320 = vmatprep.subr.mxu0 0.0
    %321 = vmatpush1.msra.mxu0 0.0
    %322 = vmatprep.subr.mxu0 0.0
    %323 = vmatpush1.msra.mxu0 0.0
    %324 = vmatprep.subr.mxu0 0.0
    %325 = vmatpush1.msra.mxu0 0.0
    %326 = vmatprep.subr.mxu0 0.0
    %327 = vmatpush1.msra.mxu0 0.0
    %328 = vmatprep.subr.mxu0 0.0
    %329 = vmatpush1.msra.mxu0 0.0
    %330 = vmatprep.mubr.f32.mxu0 0.0
    %331 = vmatmul.mubr.f32.gmra.mrb[0].mxu0 %v264
    %v332 = vpop.f32.mrb[0].mxu0
    %v333 = vadd.f32 %v157, %v332
    %v334 = vpop.f32.mrb[0].mxu0
    %335 = vdwg.mxu0
    %336 = vmatprep.subr.mxu0 0.0
    %337 = vmatpush1.msra.mxu0 %v110
    %338 = vmatprep.subr.mxu0 0.0
    %339 = vmatpush1.msra.mxu0 %v111
    %340 = vmatprep.subr.mxu0 0.0
    %341 = vmatpush1.msra.mxu0 %v112
    %342 = vmatprep.subr.mxu0 0.0
    %343 = vmatpush1.msra.mxu0 %v113
    %344 = vmatprep.subr.mxu0 0.0
    %345 = vmatpush1.msra.mxu0 0.0
    %346 = vmatprep.subr.mxu0 0.0
    %347 = vmatpush1.msra.mxu0 0.0
    %348 = vmatprep.subr.mxu0 0.0
    %349 = vmatpush1.msra.mxu0 0.0
    %350 = vmatprep.subr.mxu0 0.0
    %351 = vmatpush1.msra.mxu0 0.0
    %352 = vmatprep.subr.mxu0 0.0
    %353 = vmatpush1.msra.mxu0 0.0
    %354 = vmatprep.subr.mxu0 0.0
    %355 = vmatpush1.msra.mxu0 0.0
    %356 = vmatprep.subr.mxu0 0.0
    %357 = vmatpush1.msra.mxu0 0.0
    %358 = vmatprep.subr.mxu0 0.0
    %359 = vmatpush1.msra.mxu0 0.0
    %360 = vmatprep.subr.mxu0 0.0
    %361 = vmatpush1.msra.mxu0 0.0
    %362 = vmatprep.subr.mxu0 0.0
    %363 = vmatpush1.msra.mxu0 0.0
    %364 = vmatprep.subr.mxu0 0.0
    %365 = vmatpush1.msra.mxu0 0.0
    %366 = vmatprep.subr.mxu0 0.0
    %367 = vmatpush1.msra.mxu0 0.0
    %368 = vmatprep.subr.mxu0 0.0
    %369 = vmatpush1.msra.mxu0 0.0
    %370 = vmatprep.subr.mxu0 0.0
    %371 = vmatpush1.msra.mxu0 0.0
    %372 = vmatprep.subr.mxu0 0.0
    %373 = vmatpush1.msra.mxu0 0.0
    %374 = vmatprep.subr.mxu0 0.0
    %375 = vmatpush1.msra.mxu0 0.0
    %376 = vmatprep.subr.mxu0 0.0
    %377 = vmatpush1.msra.mxu0 0.0
    %378 = vmatprep.subr.mxu0 0.0
    %379 = vmatpush1.msra.mxu0 0.0
    %380 = vmatprep.subr.mxu0 0.0
    %381 = vmatpush1.msra.mxu0 0.0
    %382 = vmatprep.subr.mxu0 0.0
    %383 = vmatpush1.msra.mxu0 0.0
    %384 = vmatprep.subr.mxu0 0.0
    %385 = vmatpush1.msra.mxu0 0.0
    %386 = vmatprep.subr.mxu0 0.0
    %387 = vmatpush1.msra.mxu0 0.0
    %388 = vmatprep.subr.mxu0 0.0
    %389 = vmatpush1.msra.mxu0 0.0
    %390 = vmatprep.subr.mxu0 0.0
    %391 = vmatpush1.msra.mxu0 0.0
    %392 = vmatprep.subr.mxu0 0.0
    %393 = vmatpush1.msra.mxu0 0.0
    %394 = vmatprep.subr.mxu0 0.0
    %395 = vmatpush1.msra.mxu0 0.0
    %396 = vmatprep.subr.mxu0 0.0
    %397 = vmatpush1.msra.mxu0 0.0
    %398 = vmatprep.subr.mxu0 0.0
    %399 = vmatpush1.msra.mxu0 0.0
    %400 = vmatprep.mubr.f32.mxu0 0.0
    %401 = vmatmul.mubr.f32.gmra.mrb[0].mxu0 %v191
    %v402 = vpop.f32.mrb[0].mxu0
    %v403 = vadd.f32 %v161, %v402
    %v404 = vpop.f32.mrb[0].mxu0
    %405 = vdwg.mxu0
    %406 = vmatprep.subr.mxu0 0.0
    %407 = vmatpush1.msra.mxu0 %v114
    %408 = vmatprep.subr.mxu0 0.0
    %409 = vmatpush1.msra.mxu0 %v115
    %410 = vmatprep.subr.mxu0 0.0
    %411 = vmatpush1.msra.mxu0 %v116
    %412 = vmatprep.subr.mxu0 0.0
    %413 = vmatpush1.msra.mxu0 %v117
    %414 = vmatprep.subr.mxu0 0.0
    %415 = vmatpush1.msra.mxu0 0.0
    %416 = vmatprep.subr.mxu0 0.0
    %417 = vmatpush1.msra.mxu0 0.0
    %418 = vmatprep.subr.mxu0 0.0
    %419 = vmatpush1.msra.mxu0 0.0
    %420 = vmatprep.subr.mxu0 0.0
    %421 = vmatpush1.msra.mxu0 0.0
    %422 = vmatprep.subr.mxu0 0.0
    %423 = vmatpush1.msra.mxu0 0.0
    %424 = vmatprep.subr.mxu0 0.0
    %425 = vmatpush1.msra.mxu0 0.0
    %426 = vmatprep.subr.mxu0 0.0
    %427 = vmatpush1.msra.mxu0 0.0
    %428 = vmatprep.subr.mxu0 0.0
    %429 = vmatpush1.msra.mxu0 0.0
    %430 = vmatprep.subr.mxu0 0.0
    %431 = vmatpush1.msra.mxu0 0.0
    %432 = vmatprep.subr.mxu0 0.0
    %433 = vmatpush1.msra.mxu0 0.0
    %434 = vmatprep.subr.mxu0 0.0
    %435 = vmatpush1.msra.mxu0 0.0
    %436 = vmatprep.subr.mxu0 0.0
    %437 = vmatpush1.msra.mxu0 0.0
    %438 = vmatprep.subr.mxu0 0.0
    %439 = vmatpush1.msra.mxu0 0.0
    %440 = vmatprep.subr.mxu0 0.0
    %441 = vmatpush1.msra.mxu0 0.0
    %442 = vmatprep.subr.mxu0 0.0
    %443 = vmatpush1.msra.mxu0 0.0
    %444 = vmatprep.subr.mxu0 0.0
    %445 = vmatpush1.msra.mxu0 0.0
    %446 = vmatprep.subr.mxu0 0.0
    %447 = vmatpush1.msra.mxu0 0.0
    %448 = vmatprep.subr.mxu0 0.0
    %449 = vmatpush1.msra.mxu0 0.0
    %450 = vmatprep.subr.mxu0 0.0
    %451 = vmatpush1.msra.mxu0 0.0
    %452 = vmatprep.subr.mxu0 0.0
    %453 = vmatpush1.msra.mxu0 0.0
    %454 = vmatprep.subr.mxu0 0.0
    %455 = vmatpush1.msra.mxu0 0.0
    %456 = vmatprep.subr.mxu0 0.0
    %457 = vmatpush1.msra.mxu0 0.0
    %458 = vmatprep.subr.mxu0 0.0
    %459 = vmatpush1.msra.mxu0 0.0
    %460 = vmatprep.subr.mxu0 0.0
    %461 = vmatpush1.msra.mxu0 0.0
    %462 = vmatprep.subr.mxu0 0.0
    %463 = vmatpush1.msra.mxu0 0.0
    %464 = vmatprep.subr.mxu0 0.0
    %465 = vmatpush1.msra.mxu0 0.0
    %466 = vmatprep.subr.mxu0 0.0
    %467 = vmatpush1.msra.mxu0 0.0
    %468 = vmatprep.subr.mxu0 0.0
    %469 = vmatpush1.msra.mxu0 0.0
    %470 = vmatprep.mubr.f32.mxu0 0.0
    %471 = vmatmul.mubr.f32.gmra.mrb[0].mxu0 %v264
    %v472 = vpop.f32.mrb[0].mxu0
    %v473 = vadd.f32 %v165, %v472
    %v474 = vpop.f32.mrb[0].mxu0
    %475 = vdwg.mxu0
    %476 = vmatprep.subr.mxu0 0.0
    %477 = vmatpush1.msra.mxu0 %v118
    %478 = vmatprep.subr.mxu0 0.0
    %479 = vmatpush1.msra.mxu0 %v119
    %480 = vmatprep.subr.mxu0 0.0
    %481 = vmatpush1.msra.mxu0 %v120
    %482 = vmatprep.subr.mxu0 0.0
    %483 = vmatpush1.msra.mxu0 %v121
    %484 = vmatprep.subr.mxu0 0.0
    %485 = vmatpush1.msra.mxu0 0.0
    %486 = vmatprep.subr.mxu0 0.0
    %487 = vmatpush1.msra.mxu0 0.0
    %488 = vmatprep.subr.mxu0 0.0
    %489 = vmatpush1.msra.mxu0 0.0
    %490 = vmatprep.subr.mxu0 0.0
    %491 = vmatpush1.msra.mxu0 0.0
    %492 = vmatprep.subr.mxu0 0.0
    %493 = vmatpush1.msra.mxu0 0.0
    %494 = vmatprep.subr.mxu0 0.0
    %495 = vmatpush1.msra.mxu0 0.0
    %496 = vmatprep.subr.mxu0 0.0
    %497 = vmatpush1.msra.mxu0 0.0
    %498 = vmatprep.subr.mxu0 0.0
    %499 = vmatpush1.msra.mxu0 0.0
    %500 = vmatprep.subr.mxu0 0.0
    %501 = vmatpush1.msra.mxu0 0.0
    %502 = vmatprep.subr.mxu0 0.0
    %503 = vmatpush1.msra.mxu0 0.0
    %504 = vmatprep.subr.mxu0 0.0
    %505 = vmatpush1.msra.mxu0 0.0
    %506 = vmatprep.subr.mxu0 0.0
    %507 = vmatpush1.msra.mxu0 0.0
    %508 = vmatprep.subr.mxu0 0.0
    %509 = vmatpush1.msra.mxu0 0.0
    %510 = vmatprep.subr.mxu0 0.0
    %511 = vmatpush1.msra.mxu0 0.0
    %512 = vmatprep.subr.mxu0 0.0
    %513 = vmatpush1.msra.mxu0 0.0
    %514 = vmatprep.subr.mxu0 0.0
    %515 = vmatpush1.msra.mxu0 0.0
    %516 = vmatprep.subr.mxu0 0.0
    %517 = vmatpush1.msra.mxu0 0.0
    %518 = vmatprep.subr.mxu0 0.0
    %519 = vmatpush1.msra.mxu0 0.0
    %520 = vmatprep.subr.mxu0 0.0
    %521 = vmatpush1.msra.mxu0 0.0
    %522 = vmatprep.subr.mxu0 0.0
    %523 = vmatpush1.msra.mxu0 0.0
    %524 = vmatprep.subr.mxu0 0.0
    %525 = vmatpush1.msra.mxu0 0.0
    %526 = vmatprep.subr.mxu0 0.0
    %527 = vmatpush1.msra.mxu0 0.0
    %528 = vmatprep.subr.mxu0 0.0
    %529 = vmatpush1.msra.mxu0 0.0
    %530 = vmatprep.subr.mxu0 0.0
    %531 = vmatpush1.msra.mxu0 0.0
    %532 = vmatprep.subr.mxu0 0.0
    %533 = vmatpush1.msra.mxu0 0.0
    %534 = vmatprep.subr.mxu0 0.0
    %535 = vmatpush1.msra.mxu0 0.0
    %536 = vmatprep.subr.mxu0 0.0
    %537 = vmatpush1.msra.mxu0 0.0
    %538 = vmatprep.subr.mxu0 0.0
    %539 = vmatpush1.msra.mxu0 0.0
    %540 = vmatprep.mubr.f32.mxu0 0.0
    %541 = vmatmul.mubr.f32.gmra.mrb[0].mxu0 %v191
    %v542 = vpop.f32.mrb[0].mxu0
    %v543 = vadd.f32 %v169, %v542
    %v544 = vpop.f32.mrb[0].mxu0
    %545 = vdwg.mxu0
    %546 = vmatprep.subr.mxu0 0.0
    %547 = vmatpush1.msra.mxu0 %v122
    %548 = vmatprep.subr.mxu0 0.0
    %549 = vmatpush1.msra.mxu0 %v123
    %550 = vmatprep.subr.mxu0 0.0
    %551 = vmatpush1.msra.mxu0 %v124
    %552 = vmatprep.subr.mxu0 0.0
    %553 = vmatpush1.msra.mxu0 %v125
    %554 = vmatprep.subr.mxu0 0.0
    %555 = vmatpush1.msra.mxu0 0.0
    %556 = vmatprep.subr.mxu0 0.0
    %557 = vmatpush1.msra.mxu0 0.0
    %558 = vmatprep.subr.mxu0 0.0
    %559 = vmatpush1.msra.mxu0 0.0
    %560 = vmatprep.subr.mxu0 0.0
    %561 = vmatpush1.msra.mxu0 0.0
    %562 = vmatprep.subr.mxu0 0.0
    %563 = vmatpush1.msra.mxu0 0.0
    %564 = vmatprep.subr.mxu0 0.0
    %565 = vmatpush1.msra.mxu0 0.0
    %566 = vmatprep.subr.mxu0 0.0
    %567 = vmatpush1.msra.mxu0 0.0
    %568 = vmatprep.subr.mxu0 0.0
    %569 = vmatpush1.msra.mxu0 0.0
    %570 = vmatprep.subr.mxu0 0.0
    %571 = vmatpush1.msra.mxu0 0.0
    %572 = vmatprep.subr.mxu0 0.0
    %573 = vmatpush1.msra.mxu0 0.0
    %574 = vmatprep.subr.mxu0 0.0
    %575 = vmatpush1.msra.mxu0 0.0
    %576 = vmatprep.subr.mxu0 0.0
    %577 = vmatpush1.msra.mxu0 0.0
    %578 = vmatprep.subr.mxu0 0.0
    %579 = vmatpush1.msra.mxu0 0.0
    %580 = vmatprep.subr.mxu0 0.0
    %581 = vmatpush1.msra.mxu0 0.0
    %582 = vmatprep.subr.mxu0 0.0
    %583 = vmatpush1.msra.mxu0 0.0
    %584 = vmatprep.subr.mxu0 0.0
    %585 = vmatpush1.msra.mxu0 0.0
    %586 = vmatprep.subr.mxu0 0.0
    %587 = vmatpush1.msra.mxu0 0.0
    %588 = vmatprep.subr.mxu0 0.0
    %589 = vmatpush1.msra.mxu0 0.0
    %590 = vmatprep.subr.mxu0 0.0
    %591 = vmatpush1.msra.mxu0 0.0
    %592 = vmatprep.subr.mxu0 0.0
    %593 = vmatpush1.msra.mxu0 0.0
    %594 = vmatprep.subr.mxu0 0.0
    %595 = vmatpush1.msra.mxu0 0.0
    %596 = vmatprep.subr.mxu0 0.0
    %597 = vmatpush1.msra.mxu0 0.0
    %598 = vmatprep.subr.mxu0 0.0
    %599 = vmatpush1.msra.mxu0 0.0
    %600 = vmatprep.subr.mxu0 0.0
    %601 = vmatpush1.msra.mxu0 0.0
    %602 = vmatprep.subr.mxu0 0.0
    %603 = vmatpush1.msra.mxu0 0.0
    %604 = vmatprep.subr.mxu0 0.0
    %605 = vmatpush1.msra.mxu0 0.0
    %606 = vmatprep.subr.mxu0 0.0
    %607 = vmatpush1.msra.mxu0 0.0
    %608 = vmatprep.subr.mxu0 0.0
    %609 = vmatpush1.msra.mxu0 0.0
    %610 = vmatprep.mubr.f32.mxu0 0.0
    %611 = vmatmul.mubr.f32.gmra.mrb[0].mxu0 %v264
    %v612 = vpop.f32.mrb[0].mxu0
    %v613 = vadd.f32 %v173, %v612
    %v614 = vpop.f32.mrb[0].mxu0
    %615 = vdwg.mxu0
    %616 = vmatprep.subr.mxu0 0.0
    %617 = vmatpush1.msra.mxu0 %v126
    %618 = vmatprep.subr.mxu0 0.0
    %619 = vmatpush1.msra.mxu0 %v127
    %620 = vmatprep.subr.mxu0 0.0
    %621 = vmatpush1.msra.mxu0 %v128
    %622 = vmatprep.subr.mxu0 0.0
    %623 = vmatpush1.msra.mxu0 %v129
    %624 = vmatprep.subr.mxu0 0.0
    %625 = vmatpush1.msra.mxu0 0.0
    %626 = vmatprep.subr.mxu0 0.0
    %627 = vmatpush1.msra.mxu0 0.0
    %628 = vmatprep.subr.mxu0 0.0
    %629 = vmatpush1.msra.mxu0 0.0
    %630 = vmatprep.subr.mxu0 0.0
    %631 = vmatpush1.msra.mxu0 0.0
    %632 = vmatprep.subr.mxu0 0.0
    %633 = vmatpush1.msra.mxu0 0.0
    %634 = vmatprep.subr.mxu0 0.0
    %635 = vmatpush1.msra.mxu0 0.0
    %636 = vmatprep.subr.mxu0 0.0
    %637 = vmatpush1.msra.mxu0 0.0
    %638 = vmatprep.subr.mxu0 0.0
    %639 = vmatpush1.msra.mxu0 0.0
    %640 = vmatprep.subr.mxu0 0.0
    %641 = vmatpush1.msra.mxu0 0.0
    %642 = vmatprep.subr.mxu0 0.0
    %643 = vmatpush1.msra.mxu0 0.0
    %644 = vmatprep.subr.mxu0 0.0
    %645 = vmatpush1.msra.mxu0 0.0
    %646 = vmatprep.subr.mxu0 0.0
    %647 = vmatpush1.msra.mxu0 0.0
    %648 = vmatprep.subr.mxu0 0.0
    %649 = vmatpush1.msra.mxu0 0.0
    %650 = vmatprep.subr.mxu0 0.0
    %651 = vmatpush1.msra.mxu0 0.0
    %652 = vmatprep.subr.mxu0 0.0
    %653 = vmatpush1.msra.mxu0 0.0
    %654 = vmatprep.subr.mxu0 0.0
    %655 = vmatpush1.msra.mxu0 0.0
    %656 = vmatprep.subr.mxu0 0.0
    %657 = vmatpush1.msra.mxu0 0.0
    %658 = vmatprep.subr.mxu0 0.0
    %659 = vmatpush1.msra.mxu0 0.0
    %660 = vmatprep.subr.mxu0 0.0
    %661 = vmatpush1.msra.mxu0 0.0
    %662 = vmatprep.subr.mxu0 0.0
    %663 = vmatpush1.msra.mxu0 0.0
    %664 = vmatprep.subr.mxu0 0.0
    %665 = vmatpush1.msra.mxu0 0.0
    %666 = vmatprep.subr.mxu0 0.0
    %667 = vmatpush1.msra.mxu0 0.0
    %668 = vmatprep.subr.mxu0 0.0
    %669 = vmatpush1.msra.mxu0 0.0
    %670 = vmatprep.subr.mxu0 0.0
    %671 = vmatpush1.msra.mxu0 0.0
    %672 = vmatprep.subr.mxu0 0.0
    %673 = vmatpush1.msra.mxu0 0.0
    %674 = vmatprep.subr.mxu0 0.0
    %675 = vmatpush1.msra.mxu0 0.0
    %676 = vmatprep.subr.mxu0 0.0
    %677 = vmatpush1.msra.mxu0 0.0
    %678 = vmatprep.subr.mxu0 0.0
    %679 = vmatpush1.msra.mxu0 0.0
    %680 = vmatprep.mubr.f32.mxu0 0.0
    %681 = vmatmul.mubr.f32.gmra.mrb[0].mxu0 %v191
    %v682 = vpop.f32.mrb[0].mxu0
    %v683 = vadd.f32 %v177, %v682
    %v684 = vpop.f32.mrb[0].mxu0
    %685 = vdwg.mxu0
    %686 = vmatprep.subr.mxu0 0.0
    %687 = vmatpush1.msra.mxu0 %v130
    %688 = vmatprep.subr.mxu0 0.0
    %689 = vmatpush1.msra.mxu0 %v131
    %690 = vmatprep.subr.mxu0 0.0
    %691 = vmatpush1.msra.mxu0 %v132
    %692 = vmatprep.subr.mxu0 0.0
    %693 = vmatpush1.msra.mxu0 %v133
    %694 = vmatprep.subr.mxu0 0.0
    %695 = vmatpush1.msra.mxu0 0.0
    %696 = vmatprep.subr.mxu0 0.0
    %697 = vmatpush1.msra.mxu0 0.0
    %698 = vmatprep.subr.mxu0 0.0
    %699 = vmatpush1.msra.mxu0 0.0
    %700 = vmatprep.subr.mxu0 0.0
    %701 = vmatpush1.msra.mxu0 0.0
    %702 = vmatprep.subr.mxu0 0.0
    %703 = vmatpush1.msra.mxu0 0.0
    %704 = vmatprep.subr.mxu0 0.0
    %705 = vmatpush1.msra.mxu0 0.0
    %706 = vmatprep.subr.mxu0 0.0
    %707 = vmatpush1.msra.mxu0 0.0
    %708 = vmatprep.subr.mxu0 0.0
    %709 = vmatpush1.msra.mxu0 0.0
    %710 = vmatprep.subr.mxu0 0.0
    %711 = vmatpush1.msra.mxu0 0.0
    %712 = vmatprep.subr.mxu0 0.0
    %713 = vmatpush1.msra.mxu0 0.0
    %714 = vmatprep.subr.mxu0 0.0
    %715 = vmatpush1.msra.mxu0 0.0
    %716 = vmatprep.subr.mxu0 0.0
    %717 = vmatpush1.msra.mxu0 0.0
    %718 = vmatprep.subr.mxu0 0.0
    %719 = vmatpush1.msra.mxu0 0.0
    %720 = vmatprep.subr.mxu0 0.0
    %721 = vmatpush1.msra.mxu0 0.0
    %722 = vmatprep.subr.mxu0 0.0
    %723 = vmatpush1.msra.mxu0 0.0
    %724 = vmatprep.subr.mxu0 0.0
    %725 = vmatpush1.msra.mxu0 0.0
    %726 = vmatprep.subr.mxu0 0.0
    %727 = vmatpush1.msra.mxu0 0.0
    %728 = vmatprep.subr.mxu0 0.0
    %729 = vmatpush1.msra.mxu0 0.0
    %730 = vmatprep.subr.mxu0 0.0
    %731 = vmatpush1.msra.mxu0 0.0
    %732 = vmatprep.subr.mxu0 0.0
    %733 = vmatpush1.msra.mxu0 0.0
    %734 = vmatprep.subr.mxu0 0.0
    %735 = vmatpush1.msra.mxu0 0.0
    %736 = vmatprep.subr.mxu0 0.0
    %737 = vmatpush1.msra.mxu0 0.0
    %738 = vmatprep.subr.mxu0 0.0
    %739 = vmatpush1.msra.mxu0 0.0
    %740 = vmatprep.subr.mxu0 0.0
    %741 = vmatpush1.msra.mxu0 0.0
    %742 = vmatprep.subr.mxu0 0.0
    %743 = vmatpush1.msra.mxu0 0.0
    %744 = vmatprep.subr.mxu0 0.0
    %745 = vmatpush1.msra.mxu0 0.0
    %746 = vmatprep.subr.mxu0 0.0
    %747 = vmatpush1.msra.mxu0 0.0
    %748 = vmatprep.subr.mxu0 0.0
    %749 = vmatpush1.msra.mxu0 0.0
    %750 = vmatprep.mubr.f32.mxu0 0.0
    %751 = vmatmul.mubr.f32.gmra.mrb[0].mxu0 %v264
    %v752 = vpop.f32.mrb[0].mxu0
    %v753 = vadd.f32 %v181, %v752
    %v754 = vpop.f32.mrb[0].mxu0
    %755 = vdwg.mxu0
    %757 = vrot.lane.b32.xlu0 %v260, 120
    %v758 = vpop.permute.xlu0 %757
    %vm759 = vcmask 64512
    %v760 = vsel %vm759, %v260, 0
    %v762 = vsel %vm759, %v758, 0
    %764 = vmatprep.subr.mxu0 0.0
    %765 = vmatpush1.xpose.msra.mxu0 %v762
    %766 = vmatprep.subr.mxu0 0.0
    %767 = vmatpush1.xpose.msra.mxu0 0.0
    %768 = vmatprep.subr.mxu0 0.0
    %769 = vmatpush1.xpose.msra.mxu0 0.0
    %770 = vmatprep.subr.mxu0 0.0
    %771 = vmatpush1.xpose.msra.mxu0 0.0
    %772 = vmatprep.subr.mxu0 0.0
    %773 = vmatpush1.xpose.msra.mxu0 0.0
    %774 = vmatprep.subr.mxu0 0.0
    %775 = vmatpush1.xpose.msra.mxu0 0.0
    %776 = vmatprep.subr.mxu0 0.0
    %777 = vmatpush1.xpose.msra.mxu0 0.0
    %778 = vmatprep.subr.mxu0 0.0
    %779 = vmatpush1.xpose.msra.mxu0 0.0
    %780 = vmatprep.subr.mxu0 0.0
    %781 = vmatpush1.xpose.msra.mxu0 0.0
    %782 = vmatprep.subr.mxu0 0.0
    %783 = vmatpush1.xpose.msra.mxu0 0.0
    %784 = vmatprep.subr.mxu0 0.0
    %785 = vmatpush1.xpose.msra.mxu0 0.0
    %786 = vmatprep.subr.mxu0 0.0
    %787 = vmatpush1.xpose.msra.mxu0 0.0
    %788 = vmatprep.subr.mxu0 0.0
    %789 = vmatpush1.xpose.msra.mxu0 0.0
    %790 = vmatprep.subr.mxu0 0.0
    %791 = vmatpush1.xpose.msra.mxu0 0.0
    %792 = vmatprep.subr.mxu0 0.0
    %793 = vmatpush1.xpose.msra.mxu0 0.0
    %794 = vmatprep.subr.mxu0 0.0
    %795 = vmatpush1.xpose.msra.mxu0 0.0
    %796 = vmatprep.subr.mxu0 0.0
    %797 = vmatpush1.xpose.msra.mxu0 0.0
    %798 = vmatprep.subr.mxu0 0.0
    %799 = vmatpush1.xpose.msra.mxu0 0.0
    %800 = vmatprep.subr.mxu0 0.0
    %801 = vmatpush1.xpose.msra.mxu0 0.0
    %802 = vmatprep.subr.mxu0 0.0
    %803 = vmatpush1.xpose.msra.mxu0 0.0
    %804 = vmatprep.subr.mxu0 0.0
    %805 = vmatpush1.xpose.msra.mxu0 0.0
    %806 = vmatprep.subr.mxu0 0.0
    %807 = vmatpush1.xpose.msra.mxu0 0.0
    %808 = vmatprep.subr.mxu0 0.0
    %809 = vmatpush1.xpose.msra.mxu0 0.0
    %810 = vmatprep.subr.mxu0 0.0
    %811 = vmatpush1.xpose.msra.mxu0 0.0
    %812 = vmatprep.subr.mxu0 0.0
    %813 = vmatpush1.xpose.msra.mxu0 0.0
    %814 = vmatprep.subr.mxu0 0.0
    %815 = vmatpush1.xpose.msra.mxu0 0.0
    %816 = vmatprep.subr.mxu0 0.0
    %817 = vmatpush1.xpose.msra.mxu0 0.0
    %818 = vmatprep.subr.mxu0 0.0
    %819 = vmatpush1.xpose.msra.mxu0 0.0
    %820 = vmatprep.subr.mxu0 0.0
    %821 = vmatpush1.xpose.msra.mxu0 0.0
    %822 = vmatprep.subr.mxu0 0.0
    %823 = vmatpush1.xpose.msra.mxu0 0.0
    %824 = vmatprep.subr.mxu0 0.0
    %825 = vmatpush1.xpose.msra.mxu0 0.0
    %826 = vmatprep.subr.mxu0 0.0
    %827 = vmatpush1.xpose.msra.mxu0 0.0
    %828 = vmatprep.mubr.f32.mxu0 0.0
    %829 = vmatmul.mubr.f32.gmra.mrb[0].mxu0 %v760
    %v830 = vpop.f32.mrb[0].mxu0
    %v831 = vadd.f32 0.0, %v830
    %v832 = vpop.f32.mrb[0].mxu0
    %833 = vdwg.mxu0
    %835 = vrot.lane.b32.xlu0 %v333, 120
    %v836 = vpop.permute.xlu0 %835
    %v837 = vsel %vm759, %v333, 0
    %v839 = vsel %vm759, %v836, 0
    %841 = vmatprep.subr.mxu0 0.0
    %842 = vmatpush1.xpose.msra.mxu0 %v839
    %843 = vmatprep.subr.mxu0 0.0
    %844 = vmatpush1.xpose.msra.mxu0 0.0
    %845 = vmatprep.subr.mxu0 0.0
    %846 = vmatpush1.xpose.msra.mxu0 0.0
    %847 = vmatprep.subr.mxu0 0.0
    %848 = vmatpush1.xpose.msra.mxu0 0.0
    %849 = vmatprep.subr.mxu0 0.0
    %850 = vmatpush1.xpose.msra.mxu0 0.0
    %851 = vmatprep.subr.mxu0 0.0
    %852 = vmatpush1.xpose.msra.mxu0 0.0
    %853 = vmatprep.subr.mxu0 0.0
    %854 = vmatpush1.xpose.msra.mxu0 0.0
    %855 = vmatprep.subr.mxu0 0.0
    %856 = vmatpush1.xpose.msra.mxu0 0.0
    %857 = vmatprep.subr.mxu0 0.0
    %858 = vmatpush1.xpose.msra.mxu0 0.0
    %859 = vmatprep.subr.mxu0 0.0
    %860 = vmatpush1.xpose.msra.mxu0 0.0
    %861 = vmatprep.subr.mxu0 0.0
    %862 = vmatpush1.xpose.msra.mxu0 0.0
    %863 = vmatprep.subr.mxu0 0.0
    %864 = vmatpush1.xpose.msra.mxu0 0.0
    %865 = vmatprep.subr.mxu0 0.0
    %866 = vmatpush1.xpose.msra.mxu0 0.0
    %867 = vmatprep.subr.mxu0 0.0
    %868 = vmatpush1.xpose.msra.mxu0 0.0
    %869 = vmatprep.subr.mxu0 0.0
    %870 = vmatpush1.xpose.msra.mxu0 0.0
    %871 = vmatprep.subr.mxu0 0.0
    %872 = vmatpush1.xpose.msra.mxu0 0.0
    %873 = vmatprep.subr.mxu0 0.0
    %874 = vmatpush1.xpose.msra.mxu0 0.0
    %875 = vmatprep.subr.mxu0 0.0
    %876 = vmatpush1.xpose.msra.mxu0 0.0
    %877 = vmatprep.subr.mxu0 0.0
    %878 = vmatpush1.xpose.msra.mxu0 0.0
    %879 = vmatprep.subr.mxu0 0.0
    %880 = vmatpush1.xpose.msra.mxu0 0.0
    %881 = vmatprep.subr.mxu0 0.0
    %882 = vmatpush1.xpose.msra.mxu0 0.0
    %883 = vmatprep.subr.mxu0 0.0
    %884 = vmatpush1.xpose.msra.mxu0 0.0
    %885 = vmatprep.subr.mxu0 0.0
    %886 = vmatpush1.xpose.msra.mxu0 0.0
    %887 = vmatprep.subr.mxu0 0.0
    %888 = vmatpush1.xpose.msra.mxu0 0.0
    %889 = vmatprep.subr.mxu0 0.0
    %890 = vmatpush1.xpose.msra.mxu0 0.0
    %891 = vmatprep.subr.mxu0 0.0
    %892 = vmatpush1.xpose.msra.mxu0 0.0
    %893 = vmatprep.subr.mxu0 0.0
    %894 = vmatpush1.xpose.msra.mxu0 0.0
    %895 = vmatprep.subr.mxu0 0.0
    %896 = vmatpush1.xpose.msra.mxu0 0.0
    %897 = vmatprep.subr.mxu0 0.0
    %898 = vmatpush1.xpose.msra.mxu0 0.0
    %899 = vmatprep.subr.mxu0 0.0
    %900 = vmatpush1.xpose.msra.mxu0 0.0
    %901 = vmatprep.subr.mxu0 0.0
    %902 = vmatpush1.xpose.msra.mxu0 0.0
    %903 = vmatprep.subr.mxu0 0.0
    %904 = vmatpush1.xpose.msra.mxu0 0.0
    %905 = vmatprep.mubr.f32.mxu0 0.0
    %906 = vmatmul.mubr.f32.gmra.mrb[0].mxu0 %v837
    %v907 = vpop.f32.mrb[0].mxu0
    %v908 = vadd.f32 0.0, %v907
    %v909 = vpop.f32.mrb[0].mxu0
    %910 = vdwg.mxu0
    %912 = vrot.lane.b32.xlu0 %v403, 120
    %v913 = vpop.permute.xlu0 %912
    %v914 = vsel %vm759, %v403, 0
    %v916 = vsel %vm759, %v913, 0
    %918 = vmatprep.subr.mxu0 0.0
    %919 = vmatpush1.xpose.msra.mxu0 %v916
    %920 = vmatprep.subr.mxu0 0.0
    %921 = vmatpush1.xpose.msra.mxu0 0.0
    %922 = vmatprep.subr.mxu0 0.0
    %923 = vmatpush1.xpose.msra.mxu0 0.0
    %924 = vmatprep.subr.mxu0 0.0
    %925 = vmatpush1.xpose.msra.mxu0 0.0
    %926 = vmatprep.subr.mxu0 0.0
    %927 = vmatpush1.xpose.msra.mxu0 0.0
    %928 = vmatprep.subr.mxu0 0.0
    %929 = vmatpush1.xpose.msra.mxu0 0.0
    %930 = vmatprep.subr.mxu0 0.0
    %931 = vmatpush1.xpose.msra.mxu0 0.0
    %932 = vmatprep.subr.mxu0 0.0
    %933 = vmatpush1.xpose.msra.mxu0 0.0
    %934 = vmatprep.subr.mxu0 0.0
    %935 = vmatpush1.xpose.msra.mxu0 0.0
    %936 = vmatprep.subr.mxu0 0.0
    %937 = vmatpush1.xpose.msra.mxu0 0.0
    %938 = vmatprep.subr.mxu0 0.0
    %939 = vmatpush1.xpose.msra.mxu0 0.0
    %940 = vmatprep.subr.mxu0 0.0
    %941 = vmatpush1.xpose.msra.mxu0 0.0
    %942 = vmatprep.subr.mxu0 0.0
    %943 = vmatpush1.xpose.msra.mxu0 0.0
    %944 = vmatprep.subr.mxu0 0.0
    %945 = vmatpush1.xpose.msra.mxu0 0.0
    %946 = vmatprep.subr.mxu0 0.0
    %947 = vmatpush1.xpose.msra.mxu0 0.0
    %948 = vmatprep.subr.mxu0 0.0
    %949 = vmatpush1.xpose.msra.mxu0 0.0
    %950 = vmatprep.subr.mxu0 0.0
    %951 = vmatpush1.xpose.msra.mxu0 0.0
    %952 = vmatprep.subr.mxu0 0.0
    %953 = vmatpush1.xpose.msra.mxu0 0.0
    %954 = vmatprep.subr.mxu0 0.0
    %955 = vmatpush1.xpose.msra.mxu0 0.0
    %956 = vmatprep.subr.mxu0 0.0
    %957 = vmatpush1.xpose.msra.mxu0 0.0
    %958 = vmatprep.subr.mxu0 0.0
    %959 = vmatpush1.xpose.msra.mxu0 0.0
    %960 = vmatprep.subr.mxu0 0.0
    %961 = vmatpush1.xpose.msra.mxu0 0.0
    %962 = vmatprep.subr.mxu0 0.0
    %963 = vmatpush1.xpose.msra.mxu0 0.0
    %964 = vmatprep.subr.mxu0 0.0
    %965 = vmatpush1.xpose.msra.mxu0 0.0
    %966 = vmatprep.subr.mxu0 0.0
    %967 = vmatpush1.xpose.msra.mxu0 0.0
    %968 = vmatprep.subr.mxu0 0.0
    %969 = vmatpush1.xpose.msra.mxu0 0.0
    %970 = vmatprep.subr.mxu0 0.0
    %971 = vmatpush1.xpose.msra.mxu0 0.0
    %972 = vmatprep.subr.mxu0 0.0
    %973 = vmatpush1.xpose.msra.mxu0 0.0
    %974 = vmatprep.subr.mxu0 0.0
    %975 = vmatpush1.xpose.msra.mxu0 0.0
    %976 = vmatprep.subr.mxu0 0.0
    %977 = vmatpush1.xpose.msra.mxu0 0.0
    %978 = vmatprep.subr.mxu0 0.0
    %979 = vmatpush1.xpose.msra.mxu0 0.0
    %980 = vmatprep.subr.mxu0 0.0
    %981 = vmatpush1.xpose.msra.mxu0 0.0
    %982 = vmatprep.mubr.f32.mxu0 0.0
    %983 = vmatmul.mubr.f32.gmra.mrb[0].mxu0 %v914
    %v984 = vpop.f32.mrb[0].mxu0
    %v985 = vadd.f32 0.0, %v984
    %v986 = vpop.f32.mrb[0].mxu0
    %987 = vdwg.mxu0
    %989 = vrot.lane.b32.xlu0 %v473, 120
    %v990 = vpop.permute.xlu0 %989
    %v991 = vsel %vm759, %v473, 0
    %v993 = vsel %vm759, %v990, 0
    %995 = vmatprep.subr.mxu0 0.0
    %996 = vmatpush1.xpose.msra.mxu0 %v993
    %997 = vmatprep.subr.mxu0 0.0
    %998 = vmatpush1.xpose.msra.mxu0 0.0
    %999 = vmatprep.subr.mxu0 0.0
    %1000 = vmatpush1.xpose.msra.mxu0 0.0
    %1001 = vmatprep.subr.mxu0 0.0
    %1002 = vmatpush1.xpose.msra.mxu0 0.0
    %1003 = vmatprep.subr.mxu0 0.0
    %1004 = vmatpush1.xpose.msra.mxu0 0.0
    %1005 = vmatprep.subr.mxu0 0.0
    %1006 = vmatpush1.xpose.msra.mxu0 0.0
    %1007 = vmatprep.subr.mxu0 0.0
    %1008 = vmatpush1.xpose.msra.mxu0 0.0
    %1009 = vmatprep.subr.mxu0 0.0
    %1010 = vmatpush1.xpose.msra.mxu0 0.0
    %1011 = vmatprep.subr.mxu0 0.0
    %1012 = vmatpush1.xpose.msra.mxu0 0.0
    %1013 = vmatprep.subr.mxu0 0.0
    %1014 = vmatpush1.xpose.msra.mxu0 0.0
    %1015 = vmatprep.subr.mxu0 0.0
    %1016 = vmatpush1.xpose.msra.mxu0 0.0
    %1017 = vmatprep.subr.mxu0 0.0
    %1018 = vmatpush1.xpose.msra.mxu0 0.0
    %1019 = vmatprep.subr.mxu0 0.0
    %1020 = vmatpush1.xpose.msra.mxu0 0.0
    %1021 = vmatprep.subr.mxu0 0.0
    %1022 = vmatpush1.xpose.msra.mxu0 0.0
    %1023 = vmatprep.subr.mxu0 0.0
    %1024 = vmatpush1.xpose.msra.mxu0 0.0
    %1025 = vmatprep.subr.mxu0 0.0
    %1026 = vmatpush1.xpose.msra.mxu0 0.0
    %1027 = vmatprep.subr.mxu0 0.0
    %1028 = vmatpush1.xpose.msra.mxu0 0.0
    %1029 = vmatprep.subr.mxu0 0.0
    %1030 = vmatpush1.xpose.msra.mxu0 0.0
    %1031 = vmatprep.subr.mxu0 0.0
    %1032 = vmatpush1.xpose.msra.mxu0 0.0
    %1033 = vmatprep.subr.mxu0 0.0
    %1034 = vmatpush1.xpose.msra.mxu0 0.0
    %1035 = vmatprep.subr.mxu0 0.0
    %1036 = vmatpush1.xpose.msra.mxu0 0.0
    %1037 = vmatprep.subr.mxu0 0.0
    %1038 = vmatpush1.xpose.msra.mxu0 0.0
    %1039 = vmatprep.subr.mxu0 0.0
    %1040 = vmatpush1.xpose.msra.mxu0 0.0
    %1041 = vmatprep.subr.mxu0 0.0
    %1042 = vmatpush1.xpose.msra.mxu0 0.0
    %1043 = vmatprep.subr.mxu0 0.0
    %1044 = vmatpush1.xpose.msra.mxu0 0.0
    %1045 = vmatprep.subr.mxu0 0.0
    %1046 = vmatpush1.xpose.msra.mxu0 0.0
    %1047 = vmatprep.subr.mxu0 0.0
    %1048 = vmatpush1.xpose.msra.mxu0 0.0
    %1049 = vmatprep.subr.mxu0 0.0
    %1050 = vmatpush1.xpose.msra.mxu0 0.0
    %1051 = vmatprep.subr.mxu0 0.0
    %1052 = vmatpush1.xpose.msra.mxu0 0.0
    %1053 = vmatprep.subr.mxu0 0.0
    %1054 = vmatpush1.xpose.msra.mxu0 0.0
    %1055 = vmatprep.subr.mxu0 0.0
    %1056 = vmatpush1.xpose.msra.mxu0 0.0
    %1057 = vmatprep.subr.mxu0 0.0
    %1058 = vmatpush1.xpose.msra.mxu0 0.0
    %1059 = vmatprep.mubr.f32.mxu0 0.0
    %1060 = vmatmul.mubr.f32.gmra.mrb[0].mxu0 %v991
    %v1061 = vpop.f32.mrb[0].mxu0
    %v1062 = vadd.f32 0.0, %v1061
    %v1063 = vpop.f32.mrb[0].mxu0
    %1064 = vdwg.mxu0
    %1066 = vrot.lane.b32.xlu0 %v543, 120
    %v1067 = vpop.permute.xlu0 %1066
    %v1068 = vsel %vm759, %v543, 0
    %v1070 = vsel %vm759, %v1067, 0
    %1072 = vmatprep.subr.mxu0 0.0
    %1073 = vmatpush1.xpose.msra.mxu0 %v1070
    %1074 = vmatprep.subr.mxu0 0.0
    %1075 = vmatpush1.xpose.msra.mxu0 0.0
    %1076 = vmatprep.subr.mxu0 0.0
    %1077 = vmatpush1.xpose.msra.mxu0 0.0
    %1078 = vmatprep.subr.mxu0 0.0
    %1079 = vmatpush1.xpose.msra.mxu0 0.0
    %1080 = vmatprep.subr.mxu0 0.0
    %1081 = vmatpush1.xpose.msra.mxu0 0.0
    %1082 = vmatprep.subr.mxu0 0.0
    %1083 = vmatpush1.xpose.msra.mxu0 0.0
    %1084 = vmatprep.subr.mxu0 0.0
    %1085 = vmatpush1.xpose.msra.mxu0 0.0
    %1086 = vmatprep.subr.mxu0 0.0
    %1087 = vmatpush1.xpose.msra.mxu0 0.0
    %1088 = vmatprep.subr.mxu0 0.0
    %1089 = vmatpush1.xpose.msra.mxu0 0.0
    %1090 = vmatprep.subr.mxu0 0.0
    %1091 = vmatpush1.xpose.msra.mxu0 0.0
    %1092 = vmatprep.subr.mxu0 0.0
    %1093 = vmatpush1.xpose.msra.mxu0 0.0
    %1094 = vmatprep.subr.mxu0 0.0
    %1095 = vmatpush1.xpose.msra.mxu0 0.0
    %1096 = vmatprep.subr.mxu0 0.0
    %1097 = vmatpush1.xpose.msra.mxu0 0.0
    %1098 = vmatprep.subr.mxu0 0.0
    %1099 = vmatpush1.xpose.msra.mxu0 0.0
    %1100 = vmatprep.subr.mxu0 0.0
    %1101 = vmatpush1.xpose.msra.mxu0 0.0
    %1102 = vmatprep.subr.mxu0 0.0
    %1103 = vmatpush1.xpose.msra.mxu0 0.0
    %1104 = vmatprep.subr.mxu0 0.0
    %1105 = vmatpush1.xpose.msra.mxu0 0.0
    %1106 = vmatprep.subr.mxu0 0.0
    %1107 = vmatpush1.xpose.msra.mxu0 0.0
    %1108 = vmatprep.subr.mxu0 0.0
    %1109 = vmatpush1.xpose.msra.mxu0 0.0
    %1110 = vmatprep.subr.mxu0 0.0
    %1111 = vmatpush1.xpose.msra.mxu0 0.0
    %1112 = vmatprep.subr.mxu0 0.0
    %1113 = vmatpush1.xpose.msra.mxu0 0.0
    %1114 = vmatprep.subr.mxu0 0.0
    %1115 = vmatpush1.xpose.msra.mxu0 0.0
    %1116 = vmatprep.subr.mxu0 0.0
    %1117 = vmatpush1.xpose.msra.mxu0 0.0
    %1118 = vmatprep.subr.mxu0 0.0
    %1119 = vmatpush1.xpose.msra.mxu0 0.0
    %1120 = vmatprep.subr.mxu0 0.0
    %1121 = vmatpush1.xpose.msra.mxu0 0.0
    %1122 = vmatprep.subr.mxu0 0.0
    %1123 = vmatpush1.xpose.msra.mxu0 0.0
    %1124 = vmatprep.subr.mxu0 0.0
    %1125 = vmatpush1.xpose.msra.mxu0 0.0
    %1126 = vmatprep.subr.mxu0 0.0
    %1127 = vmatpush1.xpose.msra.mxu0 0.0
    %1128 = vmatprep.subr.mxu0 0.0
    %1129 = vmatpush1.xpose.msra.mxu0 0.0
    %1130 = vmatprep.subr.mxu0 0.0
    %1131 = vmatpush1.xpose.msra.mxu0 0.0
    %1132 = vmatprep.subr.mxu0 0.0
    %1133 = vmatpush1.xpose.msra.mxu0 0.0
    %1134 = vmatprep.subr.mxu0 0.0
    %1135 = vmatpush1.xpose.msra.mxu0 0.0
    %1136 = vmatprep.mubr.f32.mxu0 0.0
    %1137 = vmatmul.mubr.f32.gmra.mrb[0].mxu0 %v1068
    %v1138 = vpop.f32.mrb[0].mxu0
    %v1139 = vadd.f32 0.0, %v1138
    %v1140 = vpop.f32.mrb[0].mxu0
    %1141 = vdwg.mxu0
    %1143 = vrot.lane.b32.xlu0 %v613, 120
    %v1144 = vpop.permute.xlu0 %1143
    %v1145 = vsel %vm759, %v613, 0
    %v1147 = vsel %vm759, %v1144, 0
    %1149 = vmatprep.subr.mxu0 0.0
    %1150 = vmatpush1.xpose.msra.mxu0 %v1147
    %1151 = vmatprep.subr.mxu0 0.0
    %1152 = vmatpush1.xpose.msra.mxu0 0.0
    %1153 = vmatprep.subr.mxu0 0.0
    %1154 = vmatpush1.xpose.msra.mxu0 0.0
    %1155 = vmatprep.subr.mxu0 0.0
    %1156 = vmatpush1.xpose.msra.mxu0 0.0
    %1157 = vmatprep.subr.mxu0 0.0
    %1158 = vmatpush1.xpose.msra.mxu0 0.0
    %1159 = vmatprep.subr.mxu0 0.0
    %1160 = vmatpush1.xpose.msra.mxu0 0.0
    %1161 = vmatprep.subr.mxu0 0.0
    %1162 = vmatpush1.xpose.msra.mxu0 0.0
    %1163 = vmatprep.subr.mxu0 0.0
    %1164 = vmatpush1.xpose.msra.mxu0 0.0
    %1165 = vmatprep.subr.mxu0 0.0
    %1166 = vmatpush1.xpose.msra.mxu0 0.0
    %1167 = vmatprep.subr.mxu0 0.0
    %1168 = vmatpush1.xpose.msra.mxu0 0.0
    %1169 = vmatprep.subr.mxu0 0.0
    %1170 = vmatpush1.xpose.msra.mxu0 0.0
    %1171 = vmatprep.subr.mxu0 0.0
    %1172 = vmatpush1.xpose.msra.mxu0 0.0
    %1173 = vmatprep.subr.mxu0 0.0
    %1174 = vmatpush1.xpose.msra.mxu0 0.0
    %1175 = vmatprep.subr.mxu0 0.0
    %1176 = vmatpush1.xpose.msra.mxu0 0.0
    %1177 = vmatprep.subr.mxu0 0.0
    %1178 = vmatpush1.xpose.msra.mxu0 0.0
    %1179 = vmatprep.subr.mxu0 0.0
    %1180 = vmatpush1.xpose.msra.mxu0 0.0
    %1181 = vmatprep.subr.mxu0 0.0
    %1182 = vmatpush1.xpose.msra.mxu0 0.0
    %1183 = vmatprep.subr.mxu0 0.0
    %1184 = vmatpush1.xpose.msra.mxu0 0.0
    %1185 = vmatprep.subr.mxu0 0.0
    %1186 = vmatpush1.xpose.msra.mxu0 0.0
    %1187 = vmatprep.subr.mxu0 0.0
    %1188 = vmatpush1.xpose.msra.mxu0 0.0
    %1189 = vmatprep.subr.mxu0 0.0
    %1190 = vmatpush1.xpose.msra.mxu0 0.0
    %1191 = vmatprep.subr.mxu0 0.0
    %1192 = vmatpush1.xpose.msra.mxu0 0.0
    %1193 = vmatprep.subr.mxu0 0.0
    %1194 = vmatpush1.xpose.msra.mxu0 0.0
    %1195 = vmatprep.subr.mxu0 0.0
    %1196 = vmatpush1.xpose.msra.mxu0 0.0
    %1197 = vmatprep.subr.mxu0 0.0
    %1198 = vmatpush1.xpose.msra.mxu0 0.0
    %1199 = vmatprep.subr.mxu0 0.0
    %1200 = vmatpush1.xpose.msra.mxu0 0.0
    %1201 = vmatprep.subr.mxu0 0.0
    %1202 = vmatpush1.xpose.msra.mxu0 0.0
    %1203 = vmatprep.subr.mxu0 0.0
    %1204 = vmatpush1.xpose.msra.mxu0 0.0
    %1205 = vmatprep.subr.mxu0 0.0
    %1206 = vmatpush1.xpose.msra.mxu0 0.0
    %1207 = vmatprep.subr.mxu0 0.0
    %1208 = vmatpush1.xpose.msra.mxu0 0.0
    %1209 = vmatprep.subr.mxu0 0.0
    %1210 = vmatpush1.xpose.msra.mxu0 0.0
    %1211 = vmatprep.subr.mxu0 0.0
    %1212 = vmatpush1.xpose.msra.mxu0 0.0
    %1213 = vmatprep.mubr.f32.mxu0 0.0
    %1214 = vmatmul.mubr.f32.gmra.mrb[0].mxu0 %v1145
    %v1215 = vpop.f32.mrb[0].mxu0
    %v1216 = vadd.f32 0.0, %v1215
    %v1217 = vpop.f32.mrb[0].mxu0
    %1218 = vdwg.mxu0
    %1220 = vrot.lane.b32.xlu0 %v683, 120
    %v1221 = vpop.permute.xlu0 %1220
    %v1222 = vsel %vm759, %v683, 0
    %v1224 = vsel %vm759, %v1221, 0
    %1226 = vmatprep.subr.mxu0 0.0
    %1227 = vmatpush1.xpose.msra.mxu0 %v1224
    %1228 = vmatprep.subr.mxu0 0.0
    %1229 = vmatpush1.xpose.msra.mxu0 0.0
    %1230 = vmatprep.subr.mxu0 0.0
    %1231 = vmatpush1.xpose.msra.mxu0 0.0
    %1232 = vmatprep.subr.mxu0 0.0
    %1233 = vmatpush1.xpose.msra.mxu0 0.0
    %1234 = vmatprep.subr.mxu0 0.0
    %1235 = vmatpush1.xpose.msra.mxu0 0.0
    %1236 = vmatprep.subr.mxu0 0.0
    %1237 = vmatpush1.xpose.msra.mxu0 0.0
    %1238 = vmatprep.subr.mxu0 0.0
    %1239 = vmatpush1.xpose.msra.mxu0 0.0
    %1240 = vmatprep.subr.mxu0 0.0
    %1241 = vmatpush1.xpose.msra.mxu0 0.0
    %1242 = vmatprep.subr.mxu0 0.0
    %1243 = vmatpush1.xpose.msra.mxu0 0.0
    %1244 = vmatprep.subr.mxu0 0.0
    %1245 = vmatpush1.xpose.msra.mxu0 0.0
    %1246 = vmatprep.subr.mxu0 0.0
    %1247 = vmatpush1.xpose.msra.mxu0 0.0
    %1248 = vmatprep.subr.mxu0 0.0
    %1249 = vmatpush1.xpose.msra.mxu0 0.0
    %1250 = vmatprep.subr.mxu0 0.0
    %1251 = vmatpush1.xpose.msra.mxu0 0.0
    %1252 = vmatprep.subr.mxu0 0.0
    %1253 = vmatpush1.xpose.msra.mxu0 0.0
    %1254 = vmatprep.subr.mxu0 0.0
    %1255 = vmatpush1.xpose.msra.mxu0 0.0
    %1256 = vmatprep.subr.mxu0 0.0
    %1257 = vmatpush1.xpose.msra.mxu0 0.0
    %1258 = vmatprep.subr.mxu0 0.0
    %1259 = vmatpush1.xpose.msra.mxu0 0.0
    %1260 = vmatprep.subr.mxu0 0.0
    %1261 = vmatpush1.xpose.msra.mxu0 0.0
    %1262 = vmatprep.subr.mxu0 0.0
    %1263 = vmatpush1.xpose.msra.mxu0 0.0
    %1264 = vmatprep.subr.mxu0 0.0
    %1265 = vmatpush1.xpose.msra.mxu0 0.0
    %1266 = vmatprep.subr.mxu0 0.0
    %1267 = vmatpush1.xpose.msra.mxu0 0.0
    %1268 = vmatprep.subr.mxu0 0.0
    %1269 = vmatpush1.xpose.msra.mxu0 0.0
    %1270 = vmatprep.subr.mxu0 0.0
    %1271 = vmatpush1.xpose.msra.mxu0 0.0
    %1272 = vmatprep.subr.mxu0 0.0
    %1273 = vmatpush1.xpose.msra.mxu0 0.0
    %1274 = vmatprep.subr.mxu0 0.0
    %1275 = vmatpush1.xpose.msra.mxu0 0.0
    %1276 = vmatprep.subr.mxu0 0.0
    %1277 = vmatpush1.xpose.msra.mxu0 0.0
    %1278 = vmatprep.subr.mxu0 0.0
    %1279 = vmatpush1.xpose.msra.mxu0 0.0
    %1280 = vmatprep.subr.mxu0 0.0
    %1281 = vmatpush1.xpose.msra.mxu0 0.0
    %1282 = vmatprep.subr.mxu0 0.0
    %1283 = vmatpush1.xpose.msra.mxu0 0.0
    %1284 = vmatprep.subr.mxu0 0.0
    %1285 = vmatpush1.xpose.msra.mxu0 0.0
    %1286 = vmatprep.subr.mxu0 0.0
    %1287 = vmatpush1.xpose.msra.mxu0 0.0
    %1288 = vmatprep.subr.mxu0 0.0
    %1289 = vmatpush1.xpose.msra.mxu0 0.0
    %1290 = vmatprep.mubr.f32.mxu0 0.0
    %1291 = vmatmul.mubr.f32.gmra.mrb[0].mxu0 %v1222
    %v1292 = vpop.f32.mrb[0].mxu0
    %v1293 = vadd.f32 0.0, %v1292
    %v1294 = vpop.f32.mrb[0].mxu0
    %1295 = vdwg.mxu0
    %1297 = vrot.lane.b32.xlu0 %v753, 120
    %v1298 = vpop.permute.xlu0 %1297
    %v1299 = vsel %vm759, %v753, 0
    %v1301 = vsel %vm759, %v1298, 0
    %1303 = vmatprep.subr.mxu0 0.0
    %1304 = vmatpush1.xpose.msra.mxu0 %v1301
    %1305 = vmatprep.subr.mxu0 0.0
    %1306 = vmatpush1.xpose.msra.mxu0 0.0
    %1307 = vmatprep.subr.mxu0 0.0
    %1308 = vmatpush1.xpose.msra.mxu0 0.0
    %1309 = vmatprep.subr.mxu0 0.0
    %1310 = vmatpush1.xpose.msra.mxu0 0.0
    %1311 = vmatprep.subr.mxu0 0.0
    %1312 = vmatpush1.xpose.msra.mxu0 0.0
    %1313 = vmatprep.subr.mxu0 0.0
    %1314 = vmatpush1.xpose.msra.mxu0 0.0
    %1315 = vmatprep.subr.mxu0 0.0
    %1316 = vmatpush1.xpose.msra.mxu0 0.0
    %1317 = vmatprep.subr.mxu0 0.0
    %1318 = vmatpush1.xpose.msra.mxu0 0.0
    %1319 = vmatprep.subr.mxu0 0.0
    %1320 = vmatpush1.xpose.msra.mxu0 0.0
    %1321 = vmatprep.subr.mxu0 0.0
    %1322 = vmatpush1.xpose.msra.mxu0 0.0
    %1323 = vmatprep.subr.mxu0 0.0
    %1324 = vmatpush1.xpose.msra.mxu0 0.0
    %1325 = vmatprep.subr.mxu0 0.0
    %1326 = vmatpush1.xpose.msra.mxu0 0.0
    %1327 = vmatprep.subr.mxu0 0.0
    %1328 = vmatpush1.xpose.msra.mxu0 0.0
    %1329 = vmatprep.subr.mxu0 0.0
    %1330 = vmatpush1.xpose.msra.mxu0 0.0
    %1331 = vmatprep.subr.mxu0 0.0
    %1332 = vmatpush1.xpose.msra.mxu0 0.0
    %1333 = vmatprep.subr.mxu0 0.0
    %1334 = vmatpush1.xpose.msra.mxu0 0.0
    %1335 = vmatprep.subr.mxu0 0.0
    %1336 = vmatpush1.xpose.msra.mxu0 0.0
    %1337 = vmatprep.subr.mxu0 0.0
    %1338 = vmatpush1.xpose.msra.mxu0 0.0
    %1339 = vmatprep.subr.mxu0 0.0
    %1340 = vmatpush1.xpose.msra.mxu0 0.0
    %1341 = vmatprep.subr.mxu0 0.0
    %1342 = vmatpush1.xpose.msra.mxu0 0.0
    %1343 = vmatprep.subr.mxu0 0.0
    %1344 = vmatpush1.xpose.msra.mxu0 0.0
    %1345 = vmatprep.subr.mxu0 0.0
    %1346 = vmatpush1.xpose.msra.mxu0 0.0
    %1347 = vmatprep.subr.mxu0 0.0
    %1348 = vmatpush1.xpose.msra.mxu0 0.0
    %1349 = vmatprep.subr.mxu0 0.0
    %1350 = vmatpush1.xpose.msra.mxu0 0.0
    %1351 = vmatprep.subr.mxu0 0.0
    %1352 = vmatpush1.xpose.msra.mxu0 0.0
    %1353 = vmatprep.subr.mxu0 0.0
    %1354 = vmatpush1.xpose.msra.mxu0 0.0
    %1355 = vmatprep.subr.mxu0 0.0
    %1356 = vmatpush1.xpose.msra.mxu0 0.0
    %1357 = vmatprep.subr.mxu0 0.0
    %1358 = vmatpush1.xpose.msra.mxu0 0.0
    %1359 = vmatprep.subr.mxu0 0.0
    %1360 = vmatpush1.xpose.msra.mxu0 0.0
    %1361 = vmatprep.subr.mxu0 0.0
    %1362 = vmatpush1.xpose.msra.mxu0 0.0
    %1363 = vmatprep.subr.mxu0 0.0
    %1364 = vmatpush1.xpose.msra.mxu0 0.0
    %1365 = vmatprep.subr.mxu0 0.0
    %1366 = vmatpush1.xpose.msra.mxu0 0.0
    %1367 = vmatprep.mubr.f32.mxu0 0.0
    %1368 = vmatmul.mubr.f32.gmra.mrb[0].mxu0 %v1299
    %v1369 = vpop.f32.mrb[0].mxu0
    %v1370 = vadd.f32 0.0, %v1369
    %v1371 = vpop.f32.mrb[0].mxu0
    %1372 = vdwg.mxu0
    %v1373 = vmul.f32 %v831, 0.35355338
    %v1374 = vmul.f32 %v908, 0.35355338
    %v1375 = vmul.f32 %v985, 0.35355338
    %v1376 = vmul.f32 %v1062, 0.35355338
    %v1377 = vmul.f32 %v1139, 0.35355338
    %v1378 = vmul.f32 %v1216, 0.35355338
    %v1379 = vmul.f32 %v1293, 0.35355338
    %v1380 = vmul.f32 %v1370, 0.35355338
    %v1383 = vlaneseq
    %v1384 = vshrl.u32 %v1383, 7
    %v1385 = vsub.s32 0, %v1384
    %v1386 = vrot.slane %v85, %v1385
    %v1387 = vlaneseq
    %v1388 = vshrl.u32 %v1387, 7
    %v1389 = vsub.s32 0, %v1388
    %v1390 = vrot.slane %v86, %v1389
    %v1393 = vadd.f32 %v1373, %v1386
    %v1394 = vadd.f32 %v1374, %v1390
    %v1395 = vadd.f32 %v1375, %v1386
    %v1396 = vadd.f32 %v1376, %v1390
    %v1397 = vadd.f32 %v1377, %v1386
    %v1398 = vadd.f32 %v1378, %v1390
    %v1399 = vadd.f32 %v1379, %v1386
    %v1400 = vadd.f32 %v1380, %v1390
    %v1401 = vsel %vm759, %v1393, -inf
    %1402 = vmax.xlane.f32.xlu0 %v1401
    %v1403 = vpop.xlane.xlu0 %1402
    %v1404 = vsel %vm759, %v1394, -inf
    %1405 = vmax.xlane.f32.xlu0 %v1404
    %v1406 = vpop.xlane.xlu0 %1405
    %v1407 = vsel %vm759, %v1395, -inf
    %1408 = vmax.xlane.f32.xlu0 %v1407
    %v1409 = vpop.xlane.xlu0 %1408
    %v1410 = vsel %vm759, %v1396, -inf
    %1411 = vmax.xlane.f32.xlu0 %v1410
    %v1412 = vpop.xlane.xlu0 %1411
    %v1413 = vsel %vm759, %v1397, -inf
    %1414 = vmax.xlane.f32.xlu0 %v1413
    %v1415 = vpop.xlane.xlu0 %1414
    %v1416 = vsel %vm759, %v1398, -inf
    %1417 = vmax.xlane.f32.xlu0 %v1416
    %v1418 = vpop.xlane.xlu0 %1417
    %v1419 = vsel %vm759, %v1399, -inf
    %1420 = vmax.xlane.f32.xlu0 %v1419
    %v1421 = vpop.xlane.xlu0 %1420
    %v1422 = vsel %vm759, %v1400, -inf
    %1423 = vmax.xlane.f32.xlu0 %v1422
    %v1424 = vpop.xlane.xlu0 %1423
    %v1425 = vsub.f32 %v1393, %v1403
    %v1426 = vsub.f32 %v1394, %v1406
    %v1427 = vsub.f32 %v1395, %v1409
    %v1428 = vsub.f32 %v1396, %v1412
    %v1429 = vsub.f32 %v1397, %v1415
    %v1430 = vsub.f32 %v1398, %v1418
    %v1431 = vsub.f32 %v1399, %v1421
    %v1432 = vsub.f32 %v1400, %v1424
    %v1433 = vmul.f32 %v1425, 1.442695
    %v1434 = vpow.pop %v1433
    %v1435 = vmul.f32 %v1426, 1.442695
    %v1436 = vpow.pop %v1435
    %v1437 = vmul.f32 %v1427, 1.442695
    %v1438 = vpow.pop %v1437
    %v1439 = vmul.f32 %v1428, 1.442695
    %v1440 = vpow.pop %v1439
    %v1441 = vmul.f32 %v1429, 1.442695
    %v1442 = vpow.pop %v1441
    %v1443 = vmul.f32 %v1430, 1.442695
    %v1444 = vpow.pop %v1443
    %v1445 = vmul.f32 %v1431, 1.442695
    %v1446 = vpow.pop %v1445
    %v1447 = vmul.f32 %v1432, 1.442695
    %v1448 = vpow.pop %v1447
    %v1449 = vsel %vm759, %v1434, 0.0
    %1450 = vadd.xlane.f32.xlu0 %v1449
    %v1451 = vpop.xlane.xlu0 %1450
    %v1452 = vsel %vm759, %v1436, 0.0
    %1453 = vadd.xlane.f32.xlu0 %v1452
    %v1454 = vpop.xlane.xlu0 %1453
    %v1455 = vsel %vm759, %v1438, 0.0
    %1456 = vadd.xlane.f32.xlu0 %v1455
    %v1457 = vpop.xlane.xlu0 %1456
    %v1458 = vsel %vm759, %v1440, 0.0
    %1459 = vadd.xlane.f32.xlu0 %v1458
    %v1460 = vpop.xlane.xlu0 %1459
    %v1461 = vsel %vm759, %v1442, 0.0
    %1462 = vadd.xlane.f32.xlu0 %v1461
    %v1463 = vpop.xlane.xlu0 %1462
    %v1464 = vsel %vm759, %v1444, 0.0
    %1465 = vadd.xlane.f32.xlu0 %v1464
    %v1466 = vpop.xlane.xlu0 %1465
    %v1467 = vsel %vm759, %v1446, 0.0
    %1468 = vadd.xlane.f32.xlu0 %v1467
    %v1469 = vpop.xlane.xlu0 %1468
    %v1470 = vsel %vm759, %v1448, 0.0
    %1471 = vadd.xlane.f32.xlu0 %v1470
    %v1472 = vpop.xlane.xlu0 %1471
    %v1473 = vrcp.pop %v1451
    %v1474 = vrcp.pop %v1454
    %v1475 = vrcp.pop %v1457
    %v1476 = vrcp.pop %v1460
    %v1477 = vrcp.pop %v1463
    %v1478 = vrcp.pop %v1466
    %v1479 = vrcp.pop %v1469
    %v1480 = vrcp.pop %v1472
    %v1481 = vmul.f32 %v1434, %v1473
    %v1482 = vmul.f32 %v1436, %v1474
    %v1483 = vmul.f32 %v1438, %v1475
    %v1484 = vmul.f32 %v1440, %v1476
    %v1485 = vmul.f32 %v1442, %v1477
    %v1486 = vmul.f32 %v1444, %v1478
    %v1487 = vmul.f32 %v1446, %v1479
    %v1488 = vmul.f32 %v1448, %v1480
    %1489 = vrot.lane.b32.xlu0 %v260, 112
    %v1490 = vpop.permute.xlu0 %1489
    %v1493 = vsel %vm759, %v1481, 0
    %1495 = vmatprep.subr.mxu0 0.0
    %1496 = vmatpush1.msra.mxu0 %v1490
    %1497 = vmatprep.subr.mxu0 0.0
    %1498 = vmatpush1.msra.mxu0 0.0
    %1499 = vmatprep.subr.mxu0 0.0
    %1500 = vmatpush1.msra.mxu0 0.0
    %1501 = vmatprep.subr.mxu0 0.0
    %1502 = vmatpush1.msra.mxu0 0.0
    %1503 = vmatprep.subr.mxu0 0.0
    %1504 = vmatpush1.msra.mxu0 0.0
    %1505 = vmatprep.subr.mxu0 0.0
    %1506 = vmatpush1.msra.mxu0 0.0
    %1507 = vmatprep.subr.mxu0 0.0
    %1508 = vmatpush1.msra.mxu0 0.0
    %1509 = vmatprep.subr.mxu0 0.0
    %1510 = vmatpush1.msra.mxu0 0.0
    %1511 = vmatprep.subr.mxu0 0.0
    %1512 = vmatpush1.msra.mxu0 0.0
    %1513 = vmatprep.subr.mxu0 0.0
    %1514 = vmatpush1.msra.mxu0 0.0
    %1515 = vmatprep.subr.mxu0 0.0
    %1516 = vmatpush1.msra.mxu0 0.0
    %1517 = vmatprep.subr.mxu0 0.0
    %1518 = vmatpush1.msra.mxu0 0.0
    %1519 = vmatprep.subr.mxu0 0.0
    %1520 = vmatpush1.msra.mxu0 0.0
    %1521 = vmatprep.subr.mxu0 0.0
    %1522 = vmatpush1.msra.mxu0 0.0
    %1523 = vmatprep.subr.mxu0 0.0
    %1524 = vmatpush1.msra.mxu0 0.0
    %1525 = vmatprep.subr.mxu0 0.0
    %1526 = vmatpush1.msra.mxu0 0.0
    %1527 = vmatprep.subr.mxu0 0.0
    %1528 = vmatpush1.msra.mxu0 0.0
    %1529 = vmatprep.subr.mxu0 0.0
    %1530 = vmatpush1.msra.mxu0 0.0
    %1531 = vmatprep.subr.mxu0 0.0
    %1532 = vmatpush1.msra.mxu0 0.0
    %1533 = vmatprep.subr.mxu0 0.0
    %1534 = vmatpush1.msra.mxu0 0.0
    %1535 = vmatprep.subr.mxu0 0.0
    %1536 = vmatpush1.msra.mxu0 0.0
    %1537 = vmatprep.subr.mxu0 0.0
    %1538 = vmatpush1.msra.mxu0 0.0
    %1539 = vmatprep.subr.mxu0 0.0
    %1540 = vmatpush1.msra.mxu0 0.0
    %1541 = vmatprep.subr.mxu0 0.0
    %1542 = vmatpush1.msra.mxu0 0.0
    %1543 = vmatprep.subr.mxu0 0.0
    %1544 = vmatpush1.msra.mxu0 0.0
    %1545 = vmatprep.subr.mxu0 0.0
    %1546 = vmatpush1.msra.mxu0 0.0
    %1547 = vmatprep.subr.mxu0 0.0
    %1548 = vmatpush1.msra.mxu0 0.0
    %1549 = vmatprep.subr.mxu0 0.0
    %1550 = vmatpush1.msra.mxu0 0.0
    %1551 = vmatprep.subr.mxu0 0.0
    %1552 = vmatpush1.msra.mxu0 0.0
    %1553 = vmatprep.subr.mxu0 0.0
    %1554 = vmatpush1.msra.mxu0 0.0
    %1555 = vmatprep.subr.mxu0 0.0
    %1556 = vmatpush1.msra.mxu0 0.0
    %1557 = vmatprep.subr.mxu0 0.0
    %1558 = vmatpush1.msra.mxu0 0.0
    %1559 = vmatprep.mubr.f32.mxu0 0.0
    %1560 = vmatmul.mubr.f32.gmra.mrb[0].mxu0 %v1493
    %v1561 = vpop.f32.mrb[0].mxu0
    %v1562 = vadd.f32 0.0, %v1561
    %v1563 = vpop.f32.mrb[0].mxu0
    %1564 = vdwg.mxu0
    %1565 = vrot.lane.b32.xlu0 %v333, 112
    %v1566 = vpop.permute.xlu0 %1565
    %v1569 = vsel %vm759, %v1482, 0
    %1571 = vmatprep.subr.mxu0 0.0
    %1572 = vmatpush1.msra.mxu0 %v1566
    %1573 = vmatprep.subr.mxu0 0.0
    %1574 = vmatpush1.msra.mxu0 0.0
    %1575 = vmatprep.subr.mxu0 0.0
    %1576 = vmatpush1.msra.mxu0 0.0
    %1577 = vmatprep.subr.mxu0 0.0
    %1578 = vmatpush1.msra.mxu0 0.0
    %1579 = vmatprep.subr.mxu0 0.0
    %1580 = vmatpush1.msra.mxu0 0.0
    %1581 = vmatprep.subr.mxu0 0.0
    %1582 = vmatpush1.msra.mxu0 0.0
    %1583 = vmatprep.subr.mxu0 0.0
    %1584 = vmatpush1.msra.mxu0 0.0
    %1585 = vmatprep.subr.mxu0 0.0
    %1586 = vmatpush1.msra.mxu0 0.0
    %1587 = vmatprep.subr.mxu0 0.0
    %1588 = vmatpush1.msra.mxu0 0.0
    %1589 = vmatprep.subr.mxu0 0.0
    %1590 = vmatpush1.msra.mxu0 0.0
    %1591 = vmatprep.subr.mxu0 0.0
    %1592 = vmatpush1.msra.mxu0 0.0
    %1593 = vmatprep.subr.mxu0 0.0
    %1594 = vmatpush1.msra.mxu0 0.0
    %1595 = vmatprep.subr.mxu0 0.0
    %1596 = vmatpush1.msra.mxu0 0.0
    %1597 = vmatprep.subr.mxu0 0.0
    %1598 = vmatpush1.msra.mxu0 0.0
    %1599 = vmatprep.subr.mxu0 0.0
    %1600 = vmatpush1.msra.mxu0 0.0
    %1601 = vmatprep.subr.mxu0 0.0
    %1602 = vmatpush1.msra.mxu0 0.0
    %1603 = vmatprep.subr.mxu0 0.0
    %1604 = vmatpush1.msra.mxu0 0.0
    %1605 = vmatprep.subr.mxu0 0.0
    %1606 = vmatpush1.msra.mxu0 0.0
    %1607 = vmatprep.subr.mxu0 0.0
    %1608 = vmatpush1.msra.mxu0 0.0
    %1609 = vmatprep.subr.mxu0 0.0
    %1610 = vmatpush1.msra.mxu0 0.0
    %1611 = vmatprep.subr.mxu0 0.0
    %1612 = vmatpush1.msra.mxu0 0.0
    %1613 = vmatprep.subr.mxu0 0.0
    %1614 = vmatpush1.msra.mxu0 0.0
    %1615 = vmatprep.subr.mxu0 0.0
    %1616 = vmatpush1.msra.mxu0 0.0
    %1617 = vmatprep.subr.mxu0 0.0
    %1618 = vmatpush1.msra.mxu0 0.0
    %1619 = vmatprep.subr.mxu0 0.0
    %1620 = vmatpush1.msra.mxu0 0.0
    %1621 = vmatprep.subr.mxu0 0.0
    %1622 = vmatpush1.msra.mxu0 0.0
    %1623 = vmatprep.subr.mxu0 0.0
    %1624 = vmatpush1.msra.mxu0 0.0
    %1625 = vmatprep.subr.mxu0 0.0
    %1626 = vmatpush1.msra.mxu0 0.0
    %1627 = vmatprep.subr.mxu0 0.0
    %1628 = vmatpush1.msra.mxu0 0.0
    %1629 = vmatprep.subr.mxu0 0.0
    %1630 = vmatpush1.msra.mxu0 0.0
    %1631 = vmatprep.subr.mxu0 0.0
    %1632 = vmatpush1.msra.mxu0 0.0
    %1633 = vmatprep.subr.mxu0 0.0
    %1634 = vmatpush1.msra.mxu0 0.0
    %1635 = vmatprep.mubr.f32.mxu0 0.0
    %1636 = vmatmul.mubr.f32.gmra.mrb[0].mxu0 %v1569
    %v1637 = vpop.f32.mrb[0].mxu0
    %v1638 = vadd.f32 0.0, %v1637
    %v1639 = vpop.f32.mrb[0].mxu0
    %1640 = vdwg.mxu0
    %1641 = vrot.lane.b32.xlu0 %v403, 112
    %v1642 = vpop.permute.xlu0 %1641
    %v1645 = vsel %vm759, %v1483, 0
    %1647 = vmatprep.subr.mxu0 0.0
    %1648 = vmatpush1.msra.mxu0 %v1642
    %1649 = vmatprep.subr.mxu0 0.0
    %1650 = vmatpush1.msra.mxu0 0.0
    %1651 = vmatprep.subr.mxu0 0.0
    %1652 = vmatpush1.msra.mxu0 0.0
    %1653 = vmatprep.subr.mxu0 0.0
    %1654 = vmatpush1.msra.mxu0 0.0
    %1655 = vmatprep.subr.mxu0 0.0
    %1656 = vmatpush1.msra.mxu0 0.0
    %1657 = vmatprep.subr.mxu0 0.0
    %1658 = vmatpush1.msra.mxu0 0.0
    %1659 = vmatprep.subr.mxu0 0.0
    %1660 = vmatpush1.msra.mxu0 0.0
    %1661 = vmatprep.subr.mxu0 0.0
    %1662 = vmatpush1.msra.mxu0 0.0
    %1663 = vmatprep.subr.mxu0 0.0
    %1664 = vmatpush1.msra.mxu0 0.0
    %1665 = vmatprep.subr.mxu0 0.0
    %1666 = vmatpush1.msra.mxu0 0.0
    %1667 = vmatprep.subr.mxu0 0.0
    %1668 = vmatpush1.msra.mxu0 0.0
    %1669 = vmatprep.subr.mxu0 0.0
    %1670 = vmatpush1.msra.mxu0 0.0
    %1671 = vmatprep.subr.mxu0 0.0
    %1672 = vmatpush1.msra.mxu0 0.0
    %1673 = vmatprep.subr.mxu0 0.0
    %1674 = vmatpush1.msra.mxu0 0.0
    %1675 = vmatprep.subr.mxu0 0.0
    %1676 = vmatpush1.msra.mxu0 0.0
    %1677 = vmatprep.subr.mxu0 0.0
    %1678 = vmatpush1.msra.mxu0 0.0
    %1679 = vmatprep.subr.mxu0 0.0
    %1680 = vmatpush1.msra.mxu0 0.0
    %1681 = vmatprep.subr.mxu0 0.0
    %1682 = vmatpush1.msra.mxu0 0.0
    %1683 = vmatprep.subr.mxu0 0.0
    %1684 = vmatpush1.msra.mxu0 0.0
    %1685 = vmatprep.subr.mxu0 0.0
    %1686 = vmatpush1.msra.mxu0 0.0
    %1687 = vmatprep.subr.mxu0 0.0
    %1688 = vmatpush1.msra.mxu0 0.0
    %1689 = vmatprep.subr.mxu0 0.0
    %1690 = vmatpush1.msra.mxu0 0.0
    %1691 = vmatprep.subr.mxu0 0.0
    %1692 = vmatpush1.msra.mxu0 0.0
    %1693 = vmatprep.subr.mxu0 0.0
    %1694 = vmatpush1.msra.mxu0 0.0
    %1695 = vmatprep.subr.mxu0 0.0
    %1696 = vmatpush1.msra.mxu0 0.0
    %1697 = vmatprep.subr.mxu0 0.0
    %1698 = vmatpush1.msra.mxu0 0.0
    %1699 = vmatprep.subr.mxu0 0.0
    %1700 = vmatpush1.msra.mxu0 0.0
    %1701 = vmatprep.subr.mxu0 0.0
    %1702 = vmatpush1.msra.mxu0 0.0
    %1703 = vmatprep.subr.mxu0 0.0
    %1704 = vmatpush1.msra.mxu0 0.0
    %1705 = vmatprep.subr.mxu0 0.0
    %1706 = vmatpush1.msra.mxu0 0.0
    %1707 = vmatprep.subr.mxu0 0.0
    %1708 = vmatpush1.msra.mxu0 0.0
    %1709 = vmatprep.subr.mxu0 0.0
    %1710 = vmatpush1.msra.mxu0 0.0
    %1711 = vmatprep.mubr.f32.mxu0 0.0
    %1712 = vmatmul.mubr.f32.gmra.mrb[0].mxu0 %v1645
    %v1713 = vpop.f32.mrb[0].mxu0
    %v1714 = vadd.f32 0.0, %v1713
    %v1715 = vpop.f32.mrb[0].mxu0
    %1716 = vdwg.mxu0
    %1717 = vrot.lane.b32.xlu0 %v473, 112
    %v1718 = vpop.permute.xlu0 %1717
    %v1721 = vsel %vm759, %v1484, 0
    %1723 = vmatprep.subr.mxu0 0.0
    %1724 = vmatpush1.msra.mxu0 %v1718
    %1725 = vmatprep.subr.mxu0 0.0
    %1726 = vmatpush1.msra.mxu0 0.0
    %1727 = vmatprep.subr.mxu0 0.0
    %1728 = vmatpush1.msra.mxu0 0.0
    %1729 = vmatprep.subr.mxu0 0.0
    %1730 = vmatpush1.msra.mxu0 0.0
    %1731 = vmatprep.subr.mxu0 0.0
    %1732 = vmatpush1.msra.mxu0 0.0
    %1733 = vmatprep.subr.mxu0 0.0
    %1734 = vmatpush1.msra.mxu0 0.0
    %1735 = vmatprep.subr.mxu0 0.0
    %1736 = vmatpush1.msra.mxu0 0.0
    %1737 = vmatprep.subr.mxu0 0.0
    %1738 = vmatpush1.msra.mxu0 0.0
    %1739 = vmatprep.subr.mxu0 0.0
    %1740 = vmatpush1.msra.mxu0 0.0
    %1741 = vmatprep.subr.mxu0 0.0
    %1742 = vmatpush1.msra.mxu0 0.0
    %1743 = vmatprep.subr.mxu0 0.0
    %1744 = vmatpush1.msra.mxu0 0.0
    %1745 = vmatprep.subr.mxu0 0.0
    %1746 = vmatpush1.msra.mxu0 0.0
    %1747 = vmatprep.subr.mxu0 0.0
    %1748 = vmatpush1.msra.mxu0 0.0
    %1749 = vmatprep.subr.mxu0 0.0
    %1750 = vmatpush1.msra.mxu0 0.0
    %1751 = vmatprep.subr.mxu0 0.0
    %1752 = vmatpush1.msra.mxu0 0.0
    %1753 = vmatprep.subr.mxu0 0.0
    %1754 = vmatpush1.msra.mxu0 0.0
    %1755 = vmatprep.subr.mxu0 0.0
    %1756 = vmatpush1.msra.mxu0 0.0
    %1757 = vmatprep.subr.mxu0 0.0
    %1758 = vmatpush1.msra.mxu0 0.0
    %1759 = vmatprep.subr.mxu0 0.0
    %1760 = vmatpush1.msra.mxu0 0.0
    %1761 = vmatprep.subr.mxu0 0.0
    %1762 = vmatpush1.msra.mxu0 0.0
    %1763 = vmatprep.subr.mxu0 0.0
    %1764 = vmatpush1.msra.mxu0 0.0
    %1765 = vmatprep.subr.mxu0 0.0
    %1766 = vmatpush1.msra.mxu0 0.0
    %1767 = vmatprep.subr.mxu0 0.0
    %1768 = vmatpush1.msra.mxu0 0.0
    %1769 = vmatprep.subr.mxu0 0.0
    %1770 = vmatpush1.msra.mxu0 0.0
    %1771 = vmatprep.subr.mxu0 0.0
    %1772 = vmatpush1.msra.mxu0 0.0
    %1773 = vmatprep.subr.mxu0 0.0
    %1774 = vmatpush1.msra.mxu0 0.0
    %1775 = vmatprep.subr.mxu0 0.0
    %1776 = vmatpush1.msra.mxu0 0.0
    %1777 = vmatprep.subr.mxu0 0.0
    %1778 = vmatpush1.msra.mxu0 0.0
    %1779 = vmatprep.subr.mxu0 0.0
    %1780 = vmatpush1.msra.mxu0 0.0
    %1781 = vmatprep.subr.mxu0 0.0
    %1782 = vmatpush1.msra.mxu0 0.0
    %1783 = vmatprep.subr.mxu0 0.0
    %1784 = vmatpush1.msra.mxu0 0.0
    %1785 = vmatprep.subr.mxu0 0.0
    %1786 = vmatpush1.msra.mxu0 0.0
    %1787 = vmatprep.mubr.f32.mxu0 0.0
    %1788 = vmatmul.mubr.f32.gmra.mrb[0].mxu0 %v1721
    %v1789 = vpop.f32.mrb[0].mxu0
    %v1790 = vadd.f32 0.0, %v1789
    %v1791 = vpop.f32.mrb[0].mxu0
    %1792 = vdwg.mxu0
    %1793 = vrot.lane.b32.xlu0 %v543, 112
    %v1794 = vpop.permute.xlu0 %1793
    %v1797 = vsel %vm759, %v1485, 0
    %1799 = vmatprep.subr.mxu0 0.0
    %1800 = vmatpush1.msra.mxu0 %v1794
    %1801 = vmatprep.subr.mxu0 0.0
    %1802 = vmatpush1.msra.mxu0 0.0
    %1803 = vmatprep.subr.mxu0 0.0
    %1804 = vmatpush1.msra.mxu0 0.0
    %1805 = vmatprep.subr.mxu0 0.0
    %1806 = vmatpush1.msra.mxu0 0.0
    %1807 = vmatprep.subr.mxu0 0.0
    %1808 = vmatpush1.msra.mxu0 0.0
    %1809 = vmatprep.subr.mxu0 0.0
    %1810 = vmatpush1.msra.mxu0 0.0
    %1811 = vmatprep.subr.mxu0 0.0
    %1812 = vmatpush1.msra.mxu0 0.0
    %1813 = vmatprep.subr.mxu0 0.0
    %1814 = vmatpush1.msra.mxu0 0.0
    %1815 = vmatprep.subr.mxu0 0.0
    %1816 = vmatpush1.msra.mxu0 0.0
    %1817 = vmatprep.subr.mxu0 0.0
    %1818 = vmatpush1.msra.mxu0 0.0
    %1819 = vmatprep.subr.mxu0 0.0
    %1820 = vmatpush1.msra.mxu0 0.0
    %1821 = vmatprep.subr.mxu0 0.0
    %1822 = vmatpush1.msra.mxu0 0.0
    %1823 = vmatprep.subr.mxu0 0.0
    %1824 = vmatpush1.msra.mxu0 0.0
    %1825 = vmatprep.subr.mxu0 0.0
    %1826 = vmatpush1.msra.mxu0 0.0
    %1827 = vmatprep.subr.mxu0 0.0
    %1828 = vmatpush1.msra.mxu0 0.0
    %1829 = vmatprep.subr.mxu0 0.0
    %1830 = vmatpush1.msra.mxu0 0.0
    %1831 = vmatprep.subr.mxu0 0.0
    %1832 = vmatpush1.msra.mxu0 0.0
    %1833 = vmatprep.subr.mxu0 0.0
    %1834 = vmatpush1.msra.mxu0 0.0
    %1835 = vmatprep.subr.mxu0 0.0
    %1836 = vmatpush1.msra.mxu0 0.0
    %1837 = vmatprep.subr.mxu0 0.0
    %1838 = vmatpush1.msra.mxu0 0.0
    %1839 = vmatprep.subr.mxu0 0.0
    %1840 = vmatpush1.msra.mxu0 0.0
    %1841 = vmatprep.subr.mxu0 0.0
    %1842 = vmatpush1.msra.mxu0 0.0
    %1843 = vmatprep.subr.mxu0 0.0
    %1844 = vmatpush1.msra.mxu0 0.0
    %1845 = vmatprep.subr.mxu0 0.0
    %1846 = vmatpush1.msra.mxu0 0.0
    %1847 = vmatprep.subr.mxu0 0.0
    %1848 = vmatpush1.msra.mxu0 0.0
    %1849 = vmatprep.subr.mxu0 0.0
    %1850 = vmatpush1.msra.mxu0 0.0
    %1851 = vmatprep.subr.mxu0 0.0
    %1852 = vmatpush1.msra.mxu0 0.0
    %1853 = vmatprep.subr.mxu0 0.0
    %1854 = vmatpush1.msra.mxu0 0.0
    %1855 = vmatprep.subr.mxu0 0.0
    %1856 = vmatpush1.msra.mxu0 0.0
    %1857 = vmatprep.subr.mxu0 0.0
    %1858 = vmatpush1.msra.mxu0 0.0
    %1859 = vmatprep.subr.mxu0 0.0
    %1860 = vmatpush1.msra.mxu0 0.0
    %1861 = vmatprep.subr.mxu0 0.0
    %1862 = vmatpush1.msra.mxu0 0.0
    %1863 = vmatprep.mubr.f32.mxu0 0.0
    %1864 = vmatmul.mubr.f32.gmra.mrb[0].mxu0 %v1797
    %v1865 = vpop.f32.mrb[0].mxu0
    %v1866 = vadd.f32 0.0, %v1865
    %v1867 = vpop.f32.mrb[0].mxu0
    %1868 = vdwg.mxu0
    %1869 = vrot.lane.b32.xlu0 %v613, 112
    %v1870 = vpop.permute.xlu0 %1869
    %v1873 = vsel %vm759, %v1486, 0
    %1875 = vmatprep.subr.mxu0 0.0
    %1876 = vmatpush1.msra.mxu0 %v1870
    %1877 = vmatprep.subr.mxu0 0.0
    %1878 = vmatpush1.msra.mxu0 0.0
    %1879 = vmatprep.subr.mxu0 0.0
    %1880 = vmatpush1.msra.mxu0 0.0
    %1881 = vmatprep.subr.mxu0 0.0
    %1882 = vmatpush1.msra.mxu0 0.0
    %1883 = vmatprep.subr.mxu0 0.0
    %1884 = vmatpush1.msra.mxu0 0.0
    %1885 = vmatprep.subr.mxu0 0.0
    %1886 = vmatpush1.msra.mxu0 0.0
    %1887 = vmatprep.subr.mxu0 0.0
    %1888 = vmatpush1.msra.mxu0 0.0
    %1889 = vmatprep.subr.mxu0 0.0
    %1890 = vmatpush1.msra.mxu0 0.0
    %1891 = vmatprep.subr.mxu0 0.0
    %1892 = vmatpush1.msra.mxu0 0.0
    %1893 = vmatprep.subr.mxu0 0.0
    %1894 = vmatpush1.msra.mxu0 0.0
    %1895 = vmatprep.subr.mxu0 0.0
    %1896 = vmatpush1.msra.mxu0 0.0
    %1897 = vmatprep.subr.mxu0 0.0
    %1898 = vmatpush1.msra.mxu0 0.0
    %1899 = vmatprep.subr.mxu0 0.0
    %1900 = vmatpush1.msra.mxu0 0.0
    %1901 = vmatprep.subr.mxu0 0.0
    %1902 = vmatpush1.msra.mxu0 0.0
    %1903 = vmatprep.subr.mxu0 0.0
    %1904 = vmatpush1.msra.mxu0 0.0
    %1905 = vmatprep.subr.mxu0 0.0
    %1906 = vmatpush1.msra.mxu0 0.0
    %1907 = vmatprep.subr.mxu0 0.0
    %1908 = vmatpush1.msra.mxu0 0.0
    %1909 = vmatprep.subr.mxu0 0.0
    %1910 = vmatpush1.msra.mxu0 0.0
    %1911 = vmatprep.subr.mxu0 0.0
    %1912 = vmatpush1.msra.mxu0 0.0
    %1913 = vmatprep.subr.mxu0 0.0
    %1914 = vmatpush1.msra.mxu0 0.0
    %1915 = vmatprep.subr.mxu0 0.0
    %1916 = vmatpush1.msra.mxu0 0.0
    %1917 = vmatprep.subr.mxu0 0.0
    %1918 = vmatpush1.msra.mxu0 0.0
    %1919 = vmatprep.subr.mxu0 0.0
    %1920 = vmatpush1.msra.mxu0 0.0
    %1921 = vmatprep.subr.mxu0 0.0
    %1922 = vmatpush1.msra.mxu0 0.0
    %1923 = vmatprep.subr.mxu0 0.0
    %1924 = vmatpush1.msra.mxu0 0.0
    %1925 = vmatprep.subr.mxu0 0.0
    %1926 = vmatpush1.msra.mxu0 0.0
    %1927 = vmatprep.subr.mxu0 0.0
    %1928 = vmatpush1.msra.mxu0 0.0
    %1929 = vmatprep.subr.mxu0 0.0
    %1930 = vmatpush1.msra.mxu0 0.0
    %1931 = vmatprep.subr.mxu0 0.0
    %1932 = vmatpush1.msra.mxu0 0.0
    %1933 = vmatprep.subr.mxu0 0.0
    %1934 = vmatpush1.msra.mxu0 0.0
    %1935 = vmatprep.subr.mxu0 0.0
    %1936 = vmatpush1.msra.mxu0 0.0
    %1937 = vmatprep.subr.mxu0 0.0
    %1938 = vmatpush1.msra.mxu0 0.0
    %1939 = vmatprep.mubr.f32.mxu0 0.0
    %1940 = vmatmul.mubr.f32.gmra.mrb[0].mxu0 %v1873
    %v1941 = vpop.f32.mrb[0].mxu0
    %v1942 = vadd.f32 0.0, %v1941
    %v1943 = vpop.f32.mrb[0].mxu0
    %1944 = vdwg.mxu0
    %1945 = vrot.lane.b32.xlu0 %v683, 112
    %v1946 = vpop.permute.xlu0 %1945
    %v1949 = vsel %vm759, %v1487, 0
    %1951 = vmatprep.subr.mxu0 0.0
    %1952 = vmatpush1.msra.mxu0 %v1946
    %1953 = vmatprep.subr.mxu0 0.0
    %1954 = vmatpush1.msra.mxu0 0.0
    %1955 = vmatprep.subr.mxu0 0.0
    %1956 = vmatpush1.msra.mxu0 0.0
    %1957 = vmatprep.subr.mxu0 0.0
    %1958 = vmatpush1.msra.mxu0 0.0
    %1959 = vmatprep.subr.mxu0 0.0
    %1960 = vmatpush1.msra.mxu0 0.0
    %1961 = vmatprep.subr.mxu0 0.0
    %1962 = vmatpush1.msra.mxu0 0.0
    %1963 = vmatprep.subr.mxu0 0.0
    %1964 = vmatpush1.msra.mxu0 0.0
    %1965 = vmatprep.subr.mxu0 0.0
    %1966 = vmatpush1.msra.mxu0 0.0
    %1967 = vmatprep.subr.mxu0 0.0
    %1968 = vmatpush1.msra.mxu0 0.0
    %1969 = vmatprep.subr.mxu0 0.0
    %1970 = vmatpush1.msra.mxu0 0.0
    %1971 = vmatprep.subr.mxu0 0.0
    %1972 = vmatpush1.msra.mxu0 0.0
    %1973 = vmatprep.subr.mxu0 0.0
    %1974 = vmatpush1.msra.mxu0 0.0
    %1975 = vmatprep.subr.mxu0 0.0
    %1976 = vmatpush1.msra.mxu0 0.0
    %1977 = vmatprep.subr.mxu0 0.0
    %1978 = vmatpush1.msra.mxu0 0.0
    %1979 = vmatprep.subr.mxu0 0.0
    %1980 = vmatpush1.msra.mxu0 0.0
    %1981 = vmatprep.subr.mxu0 0.0
    %1982 = vmatpush1.msra.mxu0 0.0
    %1983 = vmatprep.subr.mxu0 0.0
    %1984 = vmatpush1.msra.mxu0 0.0
    %1985 = vmatprep.subr.mxu0 0.0
    %1986 = vmatpush1.msra.mxu0 0.0
    %1987 = vmatprep.subr.mxu0 0.0
    %1988 = vmatpush1.msra.mxu0 0.0
    %1989 = vmatprep.subr.mxu0 0.0
    %1990 = vmatpush1.msra.mxu0 0.0
    %1991 = vmatprep.subr.mxu0 0.0
    %1992 = vmatpush1.msra.mxu0 0.0
    %1993 = vmatprep.subr.mxu0 0.0
    %1994 = vmatpush1.msra.mxu0 0.0
    %1995 = vmatprep.subr.mxu0 0.0
    %1996 = vmatpush1.msra.mxu0 0.0
    %1997 = vmatprep.subr.mxu0 0.0
    %1998 = vmatpush1.msra.mxu0 0.0
    %1999 = vmatprep.subr.mxu0 0.0
    %2000 = vmatpush1.msra.mxu0 0.0
    %2001 = vmatprep.subr.mxu0 0.0
    %2002 = vmatpush1.msra.mxu0 0.0
    %2003 = vmatprep.subr.mxu0 0.0
    %2004 = vmatpush1.msra.mxu0 0.0
    %2005 = vmatprep.subr.mxu0 0.0
    %2006 = vmatpush1.msra.mxu0 0.0
    %2007 = vmatprep.subr.mxu0 0.0
    %2008 = vmatpush1.msra.mxu0 0.0
    %2009 = vmatprep.subr.mxu0 0.0
    %2010 = vmatpush1.msra.mxu0 0.0
    %2011 = vmatprep.subr.mxu0 0.0
    %2012 = vmatpush1.msra.mxu0 0.0
    %2013 = vmatprep.subr.mxu0 0.0
    %2014 = vmatpush1.msra.mxu0 0.0
    %2015 = vmatprep.mubr.f32.mxu0 0.0
    %2016 = vmatmul.mubr.f32.gmra.mrb[0].mxu0 %v1949
    %v2017 = vpop.f32.mrb[0].mxu0
    %v2018 = vadd.f32 0.0, %v2017
    %v2019 = vpop.f32.mrb[0].mxu0
    %2020 = vdwg.mxu0
    %2021 = vrot.lane.b32.xlu0 %v753, 112
    %v2022 = vpop.permute.xlu0 %2021
    %v2025 = vsel %vm759, %v1488, 0
    %2027 = vmatprep.subr.mxu0 0.0
    %2028 = vmatpush1.msra.mxu0 %v2022
    %2029 = vmatprep.subr.mxu0 0.0
    %2030 = vmatpush1.msra.mxu0 0.0
    %2031 = vmatprep.subr.mxu0 0.0
    %2032 = vmatpush1.msra.mxu0 0.0
    %2033 = vmatprep.subr.mxu0 0.0
    %2034 = vmatpush1.msra.mxu0 0.0
    %2035 = vmatprep.subr.mxu0 0.0
    %2036 = vmatpush1.msra.mxu0 0.0
    %2037 = vmatprep.subr.mxu0 0.0
    %2038 = vmatpush1.msra.mxu0 0.0
    %2039 = vmatprep.subr.mxu0 0.0
    %2040 = vmatpush1.msra.mxu0 0.0
    %2041 = vmatprep.subr.mxu0 0.0
    %2042 = vmatpush1.msra.mxu0 0.0
    %2043 = vmatprep.subr.mxu0 0.0
    %2044 = vmatpush1.msra.mxu0 0.0
    %2045 = vmatprep.subr.mxu0 0.0
    %2046 = vmatpush1.msra.mxu0 0.0
    %2047 = vmatprep.subr.mxu0 0.0
    %2048 = vmatpush1.msra.mxu0 0.0
    %2049 = vmatprep.subr.mxu0 0.0
    %2050 = vmatpush1.msra.mxu0 0.0
    %2051 = vmatprep.subr.mxu0 0.0
    %2052 = vmatpush1.msra.mxu0 0.0
    %2053 = vmatprep.subr.mxu0 0.0
    %2054 = vmatpush1.msra.mxu0 0.0
    %2055 = vmatprep.subr.mxu0 0.0
    %2056 = vmatpush1.msra.mxu0 0.0
    %2057 = vmatprep.subr.mxu0 0.0
    %2058 = vmatpush1.msra.mxu0 0.0
    %2059 = vmatprep.subr.mxu0 0.0
    %2060 = vmatpush1.msra.mxu0 0.0
    %2061 = vmatprep.subr.mxu0 0.0
    %2062 = vmatpush1.msra.mxu0 0.0
    %2063 = vmatprep.subr.mxu0 0.0
    %2064 = vmatpush1.msra.mxu0 0.0
    %2065 = vmatprep.subr.mxu0 0.0
    %2066 = vmatpush1.msra.mxu0 0.0
    %2067 = vmatprep.subr.mxu0 0.0
    %2068 = vmatpush1.msra.mxu0 0.0
    %2069 = vmatprep.subr.mxu0 0.0
    %2070 = vmatpush1.msra.mxu0 0.0
    %2071 = vmatprep.subr.mxu0 0.0
    %2072 = vmatpush1.msra.mxu0 0.0
    %2073 = vmatprep.subr.mxu0 0.0
    %2074 = vmatpush1.msra.mxu0 0.0
    %2075 = vmatprep.subr.mxu0 0.0
    %2076 = vmatpush1.msra.mxu0 0.0
    %2077 = vmatprep.subr.mxu0 0.0
    %2078 = vmatpush1.msra.mxu0 0.0
    %2079 = vmatprep.subr.mxu0 0.0
    %2080 = vmatpush1.msra.mxu0 0.0
    %2081 = vmatprep.subr.mxu0 0.0
    %2082 = vmatpush1.msra.mxu0 0.0
    %2083 = vmatprep.subr.mxu0 0.0
    %2084 = vmatpush1.msra.mxu0 0.0
    %2085 = vmatprep.subr.mxu0 0.0
    %2086 = vmatpush1.msra.mxu0 0.0
    %2087 = vmatprep.subr.mxu0 0.0
    %2088 = vmatpush1.msra.mxu0 0.0
    %2089 = vmatprep.subr.mxu0 0.0
    %2090 = vmatpush1.msra.mxu0 0.0
    %2091 = vmatprep.mubr.f32.mxu0 0.0
    %2092 = vmatmul.mubr.f32.gmra.mrb[0].mxu0 %v2025
    %v2093 = vpop.f32.mrb[0].mxu0
    %v2094 = vadd.f32 0.0, %v2093
    %v2095 = vpop.f32.mrb[0].mxu0
    %2096 = vdwg.mxu0
    %v2097 = vld [vmem:[%s5] sm:$0xff]
    %v2098 = vld [vmem:[%s5 + $0x8] sm:$0xff]
    %v2099 = vld [vmem:[%s5 + $0x10] sm:$0xff]
    %v2100 = vld [vmem:[%s5 + $0x18] sm:$0xff]
    %v2101 = vld [vmem:[%s5 + $0x20] sm:$0xff]
    %v2102 = vld [vmem:[%s5 + $0x28] sm:$0xff]
    %v2103 = vld [vmem:[%s5 + $0x30] sm:$0xff]
    %v2104 = vld [vmem:[%s5 + $0x38] sm:$0xff]
    %v2106 = vsel %vm759, %v1562, 0
    %2108 = vmatprep.subr.mxu0 0.0
    %2109 = vmatpush1.msra.mxu0 %v2097
    %2110 = vmatprep.subr.mxu0 0.0
    %2111 = vmatpush1.msra.mxu0 0.0
    %2112 = vmatprep.subr.mxu0 0.0
    %2113 = vmatpush1.msra.mxu0 0.0
    %2114 = vmatprep.subr.mxu0 0.0
    %2115 = vmatpush1.msra.mxu0 0.0
    %2116 = vmatprep.subr.mxu0 0.0
    %2117 = vmatpush1.msra.mxu0 0.0
    %2118 = vmatprep.subr.mxu0 0.0
    %2119 = vmatpush1.msra.mxu0 0.0
    %2120 = vmatprep.subr.mxu0 0.0
    %2121 = vmatpush1.msra.mxu0 0.0
    %2122 = vmatprep.subr.mxu0 0.0
    %2123 = vmatpush1.msra.mxu0 0.0
    %2124 = vmatprep.subr.mxu0 0.0
    %2125 = vmatpush1.msra.mxu0 0.0
    %2126 = vmatprep.subr.mxu0 0.0
    %2127 = vmatpush1.msra.mxu0 0.0
    %2128 = vmatprep.subr.mxu0 0.0
    %2129 = vmatpush1.msra.mxu0 0.0
    %2130 = vmatprep.subr.mxu0 0.0
    %2131 = vmatpush1.msra.mxu0 0.0
    %2132 = vmatprep.subr.mxu0 0.0
    %2133 = vmatpush1.msra.mxu0 0.0
    %2134 = vmatprep.subr.mxu0 0.0
    %2135 = vmatpush1.msra.mxu0 0.0
    %2136 = vmatprep.subr.mxu0 0.0
    %2137 = vmatpush1.msra.mxu0 0.0
    %2138 = vmatprep.subr.mxu0 0.0
    %2139 = vmatpush1.msra.mxu0 0.0
    %2140 = vmatprep.subr.mxu0 0.0
    %2141 = vmatpush1.msra.mxu0 0.0
    %2142 = vmatprep.subr.mxu0 0.0
    %2143 = vmatpush1.msra.mxu0 0.0
    %2144 = vmatprep.subr.mxu0 0.0
    %2145 = vmatpush1.msra.mxu0 0.0
    %2146 = vmatprep.subr.mxu0 0.0
    %2147 = vmatpush1.msra.mxu0 0.0
    %2148 = vmatprep.subr.mxu0 0.0
    %2149 = vmatpush1.msra.mxu0 0.0
    %2150 = vmatprep.subr.mxu0 0.0
    %2151 = vmatpush1.msra.mxu0 0.0
    %2152 = vmatprep.subr.mxu0 0.0
    %2153 = vmatpush1.msra.mxu0 0.0
    %2154 = vmatprep.subr.mxu0 0.0
    %2155 = vmatpush1.msra.mxu0 0.0
    %2156 = vmatprep.subr.mxu0 0.0
    %2157 = vmatpush1.msra.mxu0 0.0
    %2158 = vmatprep.subr.mxu0 0.0
    %2159 = vmatpush1.msra.mxu0 0.0
    %2160 = vmatprep.subr.mxu0 0.0
    %2161 = vmatpush1.msra.mxu0 0.0
    %2162 = vmatprep.subr.mxu0 0.0
    %2163 = vmatpush1.msra.mxu0 0.0
    %2164 = vmatprep.subr.mxu0 0.0
    %2165 = vmatpush1.msra.mxu0 0.0
    %2166 = vmatprep.subr.mxu0 0.0
    %2167 = vmatpush1.msra.mxu0 0.0
    %2168 = vmatprep.subr.mxu0 0.0
    %2169 = vmatpush1.msra.mxu0 0.0
    %2170 = vmatprep.subr.mxu0 0.0
    %2171 = vmatpush1.msra.mxu0 0.0
    %2172 = vmatprep.mubr.f32.mxu0 0.0
    %2173 = vmatmul.mubr.f32.gmra.mrb[0].mxu0 %v2106
    %v2174 = vpop.f32.mrb[0].mxu0
    %v2175 = vadd.f32 0.0, %v2174
    %v2176 = vpop.f32.mrb[0].mxu0
    %2177 = vdwg.mxu0
    %v2179 = vsel %vm759, %v1638, 0
    %2181 = vmatprep.subr.mxu0 0.0
    %2182 = vmatpush1.msra.mxu0 %v2098
    %2183 = vmatprep.subr.mxu0 0.0
    %2184 = vmatpush1.msra.mxu0 0.0
    %2185 = vmatprep.subr.mxu0 0.0
    %2186 = vmatpush1.msra.mxu0 0.0
    %2187 = vmatprep.subr.mxu0 0.0
    %2188 = vmatpush1.msra.mxu0 0.0
    %2189 = vmatprep.subr.mxu0 0.0
    %2190 = vmatpush1.msra.mxu0 0.0
    %2191 = vmatprep.subr.mxu0 0.0
    %2192 = vmatpush1.msra.mxu0 0.0
    %2193 = vmatprep.subr.mxu0 0.0
    %2194 = vmatpush1.msra.mxu0 0.0
    %2195 = vmatprep.subr.mxu0 0.0
    %2196 = vmatpush1.msra.mxu0 0.0
    %2197 = vmatprep.subr.mxu0 0.0
    %2198 = vmatpush1.msra.mxu0 0.0
    %2199 = vmatprep.subr.mxu0 0.0
    %2200 = vmatpush1.msra.mxu0 0.0
    %2201 = vmatprep.subr.mxu0 0.0
    %2202 = vmatpush1.msra.mxu0 0.0
    %2203 = vmatprep.subr.mxu0 0.0
    %2204 = vmatpush1.msra.mxu0 0.0
    %2205 = vmatprep.subr.mxu0 0.0
    %2206 = vmatpush1.msra.mxu0 0.0
    %2207 = vmatprep.subr.mxu0 0.0
    %2208 = vmatpush1.msra.mxu0 0.0
    %2209 = vmatprep.subr.mxu0 0.0
    %2210 = vmatpush1.msra.mxu0 0.0
    %2211 = vmatprep.subr.mxu0 0.0
    %2212 = vmatpush1.msra.mxu0 0.0
    %2213 = vmatprep.subr.mxu0 0.0
    %2214 = vmatpush1.msra.mxu0 0.0
    %2215 = vmatprep.subr.mxu0 0.0
    %2216 = vmatpush1.msra.mxu0 0.0
    %2217 = vmatprep.subr.mxu0 0.0
    %2218 = vmatpush1.msra.mxu0 0.0
    %2219 = vmatprep.subr.mxu0 0.0
    %2220 = vmatpush1.msra.mxu0 0.0
    %2221 = vmatprep.subr.mxu0 0.0
    %2222 = vmatpush1.msra.mxu0 0.0
    %2223 = vmatprep.subr.mxu0 0.0
    %2224 = vmatpush1.msra.mxu0 0.0
    %2225 = vmatprep.subr.mxu0 0.0
    %2226 = vmatpush1.msra.mxu0 0.0
    %2227 = vmatprep.subr.mxu0 0.0
    %2228 = vmatpush1.msra.mxu0 0.0
    %2229 = vmatprep.subr.mxu0 0.0
    %2230 = vmatpush1.msra.mxu0 0.0
    %2231 = vmatprep.subr.mxu0 0.0
    %2232 = vmatpush1.msra.mxu0 0.0
    %2233 = vmatprep.subr.mxu0 0.0
    %2234 = vmatpush1.msra.mxu0 0.0
    %2235 = vmatprep.subr.mxu0 0.0
    %2236 = vmatpush1.msra.mxu0 0.0
    %2237 = vmatprep.subr.mxu0 0.0
    %2238 = vmatpush1.msra.mxu0 0.0
    %2239 = vmatprep.subr.mxu0 0.0
    %2240 = vmatpush1.msra.mxu0 0.0
    %2241 = vmatprep.subr.mxu0 0.0
    %2242 = vmatpush1.msra.mxu0 0.0
    %2243 = vmatprep.subr.mxu0 0.0
    %2244 = vmatpush1.msra.mxu0 0.0
    %2245 = vmatprep.mubr.f32.mxu0 0.0
    %2246 = vmatmul.mubr.f32.gmra.mrb[0].mxu0 %v2179
    %v2247 = vpop.f32.mrb[0].mxu0
    %v2248 = vadd.f32 0.0, %v2247
    %v2249 = vpop.f32.mrb[0].mxu0
    %2250 = vdwg.mxu0
    %v2252 = vsel %vm759, %v1714, 0
    %2254 = vmatprep.subr.mxu0 0.0
    %2255 = vmatpush1.msra.mxu0 %v2099
    %2256 = vmatprep.subr.mxu0 0.0
    %2257 = vmatpush1.msra.mxu0 0.0
    %2258 = vmatprep.subr.mxu0 0.0
    %2259 = vmatpush1.msra.mxu0 0.0
    %2260 = vmatprep.subr.mxu0 0.0
    %2261 = vmatpush1.msra.mxu0 0.0
    %2262 = vmatprep.subr.mxu0 0.0
    %2263 = vmatpush1.msra.mxu0 0.0
    %2264 = vmatprep.subr.mxu0 0.0
    %2265 = vmatpush1.msra.mxu0 0.0
    %2266 = vmatprep.subr.mxu0 0.0
    %2267 = vmatpush1.msra.mxu0 0.0
    %2268 = vmatprep.subr.mxu0 0.0
    %2269 = vmatpush1.msra.mxu0 0.0
    %2270 = vmatprep.subr.mxu0 0.0
    %2271 = vmatpush1.msra.mxu0 0.0
    %2272 = vmatprep.subr.mxu0 0.0
    %2273 = vmatpush1.msra.mxu0 0.0
    %2274 = vmatprep.subr.mxu0 0.0
    %2275 = vmatpush1.msra.mxu0 0.0
    %2276 = vmatprep.subr.mxu0 0.0
    %2277 = vmatpush1.msra.mxu0 0.0
    %2278 = vmatprep.subr.mxu0 0.0
    %2279 = vmatpush1.msra.mxu0 0.0
    %2280 = vmatprep.subr.mxu0 0.0
    %2281 = vmatpush1.msra.mxu0 0.0
    %2282 = vmatprep.subr.mxu0 0.0
    %2283 = vmatpush1.msra.mxu0 0.0
    %2284 = vmatprep.subr.mxu0 0.0
    %2285 = vmatpush1.msra.mxu0 0.0
    %2286 = vmatprep.subr.mxu0 0.0
    %2287 = vmatpush1.msra.mxu0 0.0
    %2288 = vmatprep.subr.mxu0 0.0
    %2289 = vmatpush1.msra.mxu0 0.0
    %2290 = vmatprep.subr.mxu0 0.0
    %2291 = vmatpush1.msra.mxu0 0.0
    %2292 = vmatprep.subr.mxu0 0.0
    %2293 = vmatpush1.msra.mxu0 0.0
    %2294 = vmatprep.subr.mxu0 0.0
    %2295 = vmatpush1.msra.mxu0 0.0
    %2296 = vmatprep.subr.mxu0 0.0
    %2297 = vmatpush1.msra.mxu0 0.0
    %2298 = vmatprep.subr.mxu0 0.0
    %2299 = vmatpush1.msra.mxu0 0.0
    %2300 = vmatprep.subr.mxu0 0.0
    %2301 = vmatpush1.msra.mxu0 0.0
    %2302 = vmatprep.subr.mxu0 0.0
    %2303 = vmatpush1.msra.mxu0 0.0
    %2304 = vmatprep.subr.mxu0 0.0
    %2305 = vmatpush1.msra.mxu0 0.0
    %2306 = vmatprep.subr.mxu0 0.0
    %2307 = vmatpush1.msra.mxu0 0.0
    %2308 = vmatprep.subr.mxu0 0.0
    %2309 = vmatpush1.msra.mxu0 0.0
    %2310 = vmatprep.subr.mxu0 0.0
    %2311 = vmatpush1.msra.mxu0 0.0
    %2312 = vmatprep.subr.mxu0 0.0
    %2313 = vmatpush1.msra.mxu0 0.0
    %2314 = vmatprep.subr.mxu0 0.0
    %2315 = vmatpush1.msra.mxu0 0.0
    %2316 = vmatprep.subr.mxu0 0.0
    %2317 = vmatpush1.msra.mxu0 0.0
    %2318 = vmatprep.mubr.f32.mxu0 0.0
    %2319 = vmatmul.mubr.f32.gmra.mrb[0].mxu0 %v2252
    %v2320 = vpop.f32.mrb[0].mxu0
    %v2321 = vadd.f32 0.0, %v2320
    %v2322 = vpop.f32.mrb[0].mxu0
    %2323 = vdwg.mxu0
    %v2325 = vsel %vm759, %v1790, 0
    %2327 = vmatprep.subr.mxu0 0.0
    %2328 = vmatpush1.msra.mxu0 %v2100
    %2329 = vmatprep.subr.mxu0 0.0
    %2330 = vmatpush1.msra.mxu0 0.0
    %2331 = vmatprep.subr.mxu0 0.0
    %2332 = vmatpush1.msra.mxu0 0.0
    %2333 = vmatprep.subr.mxu0 0.0
    %2334 = vmatpush1.msra.mxu0 0.0
    %2335 = vmatprep.subr.mxu0 0.0
    %2336 = vmatpush1.msra.mxu0 0.0
    %2337 = vmatprep.subr.mxu0 0.0
    %2338 = vmatpush1.msra.mxu0 0.0
    %2339 = vmatprep.subr.mxu0 0.0
    %2340 = vmatpush1.msra.mxu0 0.0
    %2341 = vmatprep.subr.mxu0 0.0
    %2342 = vmatpush1.msra.mxu0 0.0
    %2343 = vmatprep.subr.mxu0 0.0
    %2344 = vmatpush1.msra.mxu0 0.0
    %2345 = vmatprep.subr.mxu0 0.0
    %2346 = vmatpush1.msra.mxu0 0.0
    %2347 = vmatprep.subr.mxu0 0.0
    %2348 = vmatpush1.msra.mxu0 0.0
    %2349 = vmatprep.subr.mxu0 0.0
    %2350 = vmatpush1.msra.mxu0 0.0
    %2351 = vmatprep.subr.mxu0 0.0
    %2352 = vmatpush1.msra.mxu0 0.0
    %2353 = vmatprep.subr.mxu0 0.0
    %2354 = vmatpush1.msra.mxu0 0.0
    %2355 = vmatprep.subr.mxu0 0.0
    %2356 = vmatpush1.msra.mxu0 0.0
    %2357 = vmatprep.subr.mxu0 0.0
    %2358 = vmatpush1.msra.mxu0 0.0
    %2359 = vmatprep.subr.mxu0 0.0
    %2360 = vmatpush1.msra.mxu0 0.0
    %2361 = vmatprep.subr.mxu0 0.0
    %2362 = vmatpush1.msra.mxu0 0.0
    %2363 = vmatprep.subr.mxu0 0.0
    %2364 = vmatpush1.msra.mxu0 0.0
    %2365 = vmatprep.subr.mxu0 0.0
    %2366 = vmatpush1.msra.mxu0 0.0
    %2367 = vmatprep.subr.mxu0 0.0
    %2368 = vmatpush1.msra.mxu0 0.0
    %2369 = vmatprep.subr.mxu0 0.0
    %2370 = vmatpush1.msra.mxu0 0.0
    %2371 = vmatprep.subr.mxu0 0.0
    %2372 = vmatpush1.msra.mxu0 0.0
    %2373 = vmatprep.subr.mxu0 0.0
    %2374 = vmatpush1.msra.mxu0 0.0
    %2375 = vmatprep.subr.mxu0 0.0
    %2376 = vmatpush1.msra.mxu0 0.0
    %2377 = vmatprep.subr.mxu0 0.0
    %2378 = vmatpush1.msra.mxu0 0.0
    %2379 = vmatprep.subr.mxu0 0.0
    %2380 = vmatpush1.msra.mxu0 0.0
    %2381 = vmatprep.subr.mxu0 0.0
    %2382 = vmatpush1.msra.mxu0 0.0
    %2383 = vmatprep.subr.mxu0 0.0
    %2384 = vmatpush1.msra.mxu0 0.0
    %2385 = vmatprep.subr.mxu0 0.0
    %2386 = vmatpush1.msra.mxu0 0.0
    %2387 = vmatprep.subr.mxu0 0.0
    %2388 = vmatpush1.msra.mxu0 0.0
    %2389 = vmatprep.subr.mxu0 0.0
    %2390 = vmatpush1.msra.mxu0 0.0
    %2391 = vmatprep.mubr.f32.mxu0 0.0
    %2392 = vmatmul.mubr.f32.gmra.mrb[0].mxu0 %v2325
    %v2393 = vpop.f32.mrb[0].mxu0
    %v2394 = vadd.f32 0.0, %v2393
    %v2395 = vpop.f32.mrb[0].mxu0
    %2396 = vdwg.mxu0
    %v2398 = vsel %vm759, %v1866, 0
    %2400 = vmatprep.subr.mxu0 0.0
    %2401 = vmatpush1.msra.mxu0 %v2101
    %2402 = vmatprep.subr.mxu0 0.0
    %2403 = vmatpush1.msra.mxu0 0.0
    %2404 = vmatprep.subr.mxu0 0.0
    %2405 = vmatpush1.msra.mxu0 0.0
    %2406 = vmatprep.subr.mxu0 0.0
    %2407 = vmatpush1.msra.mxu0 0.0
    %2408 = vmatprep.subr.mxu0 0.0
    %2409 = vmatpush1.msra.mxu0 0.0
    %2410 = vmatprep.subr.mxu0 0.0
    %2411 = vmatpush1.msra.mxu0 0.0
    %2412 = vmatprep.subr.mxu0 0.0
    %2413 = vmatpush1.msra.mxu0 0.0
    %2414 = vmatprep.subr.mxu0 0.0
    %2415 = vmatpush1.msra.mxu0 0.0
    %2416 = vmatprep.subr.mxu0 0.0
    %2417 = vmatpush1.msra.mxu0 0.0
    %2418 = vmatprep.subr.mxu0 0.0
    %2419 = vmatpush1.msra.mxu0 0.0
    %2420 = vmatprep.subr.mxu0 0.0
    %2421 = vmatpush1.msra.mxu0 0.0
    %2422 = vmatprep.subr.mxu0 0.0
    %2423 = vmatpush1.msra.mxu0 0.0
    %2424 = vmatprep.subr.mxu0 0.0
    %2425 = vmatpush1.msra.mxu0 0.0
    %2426 = vmatprep.subr.mxu0 0.0
    %2427 = vmatpush1.msra.mxu0 0.0
    %2428 = vmatprep.subr.mxu0 0.0
    %2429 = vmatpush1.msra.mxu0 0.0
    %2430 = vmatprep.subr.mxu0 0.0
    %2431 = vmatpush1.msra.mxu0 0.0
    %2432 = vmatprep.subr.mxu0 0.0
    %2433 = vmatpush1.msra.mxu0 0.0
    %2434 = vmatprep.subr.mxu0 0.0
    %2435 = vmatpush1.msra.mxu0 0.0
    %2436 = vmatprep.subr.mxu0 0.0
    %2437 = vmatpush1.msra.mxu0 0.0
    %2438 = vmatprep.subr.mxu0 0.0
    %2439 = vmatpush1.msra.mxu0 0.0
    %2440 = vmatprep.subr.mxu0 0.0
    %2441 = vmatpush1.msra.mxu0 0.0
    %2442 = vmatprep.subr.mxu0 0.0
    %2443 = vmatpush1.msra.mxu0 0.0
    %2444 = vmatprep.subr.mxu0 0.0
    %2445 = vmatpush1.msra.mxu0 0.0
    %2446 = vmatprep.subr.mxu0 0.0
    %2447 = vmatpush1.msra.mxu0 0.0
    %2448 = vmatprep.subr.mxu0 0.0
    %2449 = vmatpush1.msra.mxu0 0.0
    %2450 = vmatprep.subr.mxu0 0.0
    %2451 = vmatpush1.msra.mxu0 0.0
    %2452 = vmatprep.subr.mxu0 0.0
    %2453 = vmatpush1.msra.mxu0 0.0
    %2454 = vmatprep.subr.mxu0 0.0
    %2455 = vmatpush1.msra.mxu0 0.0
    %2456 = vmatprep.subr.mxu0 0.0
    %2457 = vmatpush1.msra.mxu0 0.0
    %2458 = vmatprep.subr.mxu0 0.0
    %2459 = vmatpush1.msra.mxu0 0.0
    %2460 = vmatprep.subr.mxu0 0.0
    %2461 = vmatpush1.msra.mxu0 0.0
    %2462 = vmatprep.subr.mxu0 0.0
    %2463 = vmatpush1.msra.mxu0 0.0
    %2464 = vmatprep.mubr.f32.mxu0 0.0
    %2465 = vmatmul.mubr.f32.gmra.mrb[0].mxu0 %v2398
    %v2466 = vpop.f32.mrb[0].mxu0
    %v2467 = vadd.f32 0.0, %v2466
    %v2468 = vpop.f32.mrb[0].mxu0
    %2469 = vdwg.mxu0
    %v2471 = vsel %vm759, %v1942, 0
    %2473 = vmatprep.subr.mxu0 0.0
    %2474 = vmatpush1.msra.mxu0 %v2102
    %2475 = vmatprep.subr.mxu0 0.0
    %2476 = vmatpush1.msra.mxu0 0.0
    %2477 = vmatprep.subr.mxu0 0.0
    %2478 = vmatpush1.msra.mxu0 0.0
    %2479 = vmatprep.subr.mxu0 0.0
    %2480 = vmatpush1.msra.mxu0 0.0
    %2481 = vmatprep.subr.mxu0 0.0
    %2482 = vmatpush1.msra.mxu0 0.0
    %2483 = vmatprep.subr.mxu0 0.0
    %2484 = vmatpush1.msra.mxu0 0.0
    %2485 = vmatprep.subr.mxu0 0.0
    %2486 = vmatpush1.msra.mxu0 0.0
    %2487 = vmatprep.subr.mxu0 0.0
    %2488 = vmatpush1.msra.mxu0 0.0
    %2489 = vmatprep.subr.mxu0 0.0
    %2490 = vmatpush1.msra.mxu0 0.0
    %2491 = vmatprep.subr.mxu0 0.0
    %2492 = vmatpush1.msra.mxu0 0.0
    %2493 = vmatprep.subr.mxu0 0.0
    %2494 = vmatpush1.msra.mxu0 0.0
    %2495 = vmatprep.subr.mxu0 0.0
    %2496 = vmatpush1.msra.mxu0 0.0
    %2497 = vmatprep.subr.mxu0 0.0
    %2498 = vmatpush1.msra.mxu0 0.0
    %2499 = vmatprep.subr.mxu0 0.0
    %2500 = vmatpush1.msra.mxu0 0.0
    %2501 = vmatprep.subr.mxu0 0.0
    %2502 = vmatpush1.msra.mxu0 0.0
    %2503 = vmatprep.subr.mxu0 0.0
    %2504 = vmatpush1.msra.mxu0 0.0
    %2505 = vmatprep.subr.mxu0 0.0
    %2506 = vmatpush1.msra.mxu0 0.0
    %2507 = vmatprep.subr.mxu0 0.0
    %2508 = vmatpush1.msra.mxu0 0.0
    %2509 = vmatprep.subr.mxu0 0.0
    %2510 = vmatpush1.msra.mxu0 0.0
    %2511 = vmatprep.subr.mxu0 0.0
    %2512 = vmatpush1.msra.mxu0 0.0
    %2513 = vmatprep.subr.mxu0 0.0
    %2514 = vmatpush1.msra.mxu0 0.0
    %2515 = vmatprep.subr.mxu0 0.0
    %2516 = vmatpush1.msra.mxu0 0.0
    %2517 = vmatprep.subr.mxu0 0.0
    %2518 = vmatpush1.msra.mxu0 0.0
    %2519 = vmatprep.subr.mxu0 0.0
    %2520 = vmatpush1.msra.mxu0 0.0
    %2521 = vmatprep.subr.mxu0 0.0
    %2522 = vmatpush1.msra.mxu0 0.0
    %2523 = vmatprep.subr.mxu0 0.0
    %2524 = vmatpush1.msra.mxu0 0.0
    %2525 = vmatprep.subr.mxu0 0.0
    %2526 = vmatpush1.msra.mxu0 0.0
    %2527 = vmatprep.subr.mxu0 0.0
    %2528 = vmatpush1.msra.mxu0 0.0
    %2529 = vmatprep.subr.mxu0 0.0
    %2530 = vmatpush1.msra.mxu0 0.0
    %2531 = vmatprep.subr.mxu0 0.0
    %2532 = vmatpush1.msra.mxu0 0.0
    %2533 = vmatprep.subr.mxu0 0.0
    %2534 = vmatpush1.msra.mxu0 0.0
    %2535 = vmatprep.subr.mxu0 0.0
    %2536 = vmatpush1.msra.mxu0 0.0
    %2537 = vmatprep.mubr.f32.mxu0 0.0
    %2538 = vmatmul.mubr.f32.gmra.mrb[0].mxu0 %v2471
    %v2539 = vpop.f32.mrb[0].mxu0
    %v2540 = vadd.f32 0.0, %v2539
    %v2541 = vpop.f32.mrb[0].mxu0
    %2542 = vdwg.mxu0
    %v2544 = vsel %vm759, %v2018, 0
    %2546 = vmatprep.subr.mxu0 0.0
    %2547 = vmatpush1.msra.mxu0 %v2103
    %2548 = vmatprep.subr.mxu0 0.0
    %2549 = vmatpush1.msra.mxu0 0.0
    %2550 = vmatprep.subr.mxu0 0.0
    %2551 = vmatpush1.msra.mxu0 0.0
    %2552 = vmatprep.subr.mxu0 0.0
    %2553 = vmatpush1.msra.mxu0 0.0
    %2554 = vmatprep.subr.mxu0 0.0
    %2555 = vmatpush1.msra.mxu0 0.0
    %2556 = vmatprep.subr.mxu0 0.0
    %2557 = vmatpush1.msra.mxu0 0.0
    %2558 = vmatprep.subr.mxu0 0.0
    %2559 = vmatpush1.msra.mxu0 0.0
    %2560 = vmatprep.subr.mxu0 0.0
    %2561 = vmatpush1.msra.mxu0 0.0
    %2562 = vmatprep.subr.mxu0 0.0
    %2563 = vmatpush1.msra.mxu0 0.0
    %2564 = vmatprep.subr.mxu0 0.0
    %2565 = vmatpush1.msra.mxu0 0.0
    %2566 = vmatprep.subr.mxu0 0.0
    %2567 = vmatpush1.msra.mxu0 0.0
    %2568 = vmatprep.subr.mxu0 0.0
    %2569 = vmatpush1.msra.mxu0 0.0
    %2570 = vmatprep.subr.mxu0 0.0
    %2571 = vmatpush1.msra.mxu0 0.0
    %2572 = vmatprep.subr.mxu0 0.0
    %2573 = vmatpush1.msra.mxu0 0.0
    %2574 = vmatprep.subr.mxu0 0.0
    %2575 = vmatpush1.msra.mxu0 0.0
    %2576 = vmatprep.subr.mxu0 0.0
    %2577 = vmatpush1.msra.mxu0 0.0
    %2578 = vmatprep.subr.mxu0 0.0
    %2579 = vmatpush1.msra.mxu0 0.0
    %2580 = vmatprep.subr.mxu0 0.0
    %2581 = vmatpush1.msra.mxu0 0.0
    %2582 = vmatprep.subr.mxu0 0.0
    %2583 = vmatpush1.msra.mxu0 0.0
    %2584 = vmatprep.subr.mxu0 0.0
    %2585 = vmatpush1.msra.mxu0 0.0
    %2586 = vmatprep.subr.mxu0 0.0
    %2587 = vmatpush1.msra.mxu0 0.0
    %2588 = vmatprep.subr.mxu0 0.0
    %2589 = vmatpush1.msra.mxu0 0.0
    %2590 = vmatprep.subr.mxu0 0.0
    %2591 = vmatpush1.msra.mxu0 0.0
    %2592 = vmatprep.subr.mxu0 0.0
    %2593 = vmatpush1.msra.mxu0 0.0
    %2594 = vmatprep.subr.mxu0 0.0
    %2595 = vmatpush1.msra.mxu0 0.0
    %2596 = vmatprep.subr.mxu0 0.0
    %2597 = vmatpush1.msra.mxu0 0.0
    %2598 = vmatprep.subr.mxu0 0.0
    %2599 = vmatpush1.msra.mxu0 0.0
    %2600 = vmatprep.subr.mxu0 0.0
    %2601 = vmatpush1.msra.mxu0 0.0
    %2602 = vmatprep.subr.mxu0 0.0
    %2603 = vmatpush1.msra.mxu0 0.0
    %2604 = vmatprep.subr.mxu0 0.0
    %2605 = vmatpush1.msra.mxu0 0.0
    %2606 = vmatprep.subr.mxu0 0.0
    %2607 = vmatpush1.msra.mxu0 0.0
    %2608 = vmatprep.subr.mxu0 0.0
    %2609 = vmatpush1.msra.mxu0 0.0
    %2610 = vmatprep.mubr.f32.mxu0 0.0
    %2611 = vmatmul.mubr.f32.gmra.mrb[0].mxu0 %v2544
    %v2612 = vpop.f32.mrb[0].mxu0
    %v2613 = vadd.f32 0.0, %v2612
    %v2614 = vpop.f32.mrb[0].mxu0
    %2615 = vdwg.mxu0
    %v2617 = vsel %vm759, %v2094, 0
    %2619 = vmatprep.subr.mxu0 0.0
    %2620 = vmatpush1.msra.mxu0 %v2104
    %2621 = vmatprep.subr.mxu0 0.0
    %2622 = vmatpush1.msra.mxu0 0.0
    %2623 = vmatprep.subr.mxu0 0.0
    %2624 = vmatpush1.msra.mxu0 0.0
    %2625 = vmatprep.subr.mxu0 0.0
    %2626 = vmatpush1.msra.mxu0 0.0
    %2627 = vmatprep.subr.mxu0 0.0
    %2628 = vmatpush1.msra.mxu0 0.0
    %2629 = vmatprep.subr.mxu0 0.0
    %2630 = vmatpush1.msra.mxu0 0.0
    %2631 = vmatprep.subr.mxu0 0.0
    %2632 = vmatpush1.msra.mxu0 0.0
    %2633 = vmatprep.subr.mxu0 0.0
    %2634 = vmatpush1.msra.mxu0 0.0
    %2635 = vmatprep.subr.mxu0 0.0
    %2636 = vmatpush1.msra.mxu0 0.0
    %2637 = vmatprep.subr.mxu0 0.0
    %2638 = vmatpush1.msra.mxu0 0.0
    %2639 = vmatprep.subr.mxu0 0.0
    %2640 = vmatpush1.msra.mxu0 0.0
    %2641 = vmatprep.subr.mxu0 0.0
    %2642 = vmatpush1.msra.mxu0 0.0
    %2643 = vmatprep.subr.mxu0 0.0
    %2644 = vmatpush1.msra.mxu0 0.0
    %2645 = vmatprep.subr.mxu0 0.0
    %2646 = vmatpush1.msra.mxu0 0.0
    %2647 = vmatprep.subr.mxu0 0.0
    %2648 = vmatpush1.msra.mxu0 0.0
    %2649 = vmatprep.subr.mxu0 0.0
    %2650 = vmatpush1.msra.mxu0 0.0
    %2651 = vmatprep.subr.mxu0 0.0
    %2652 = vmatpush1.msra.mxu0 0.0
    %2653 = vmatprep.subr.mxu0 0.0
    %2654 = vmatpush1.msra.mxu0 0.0
    %2655 = vmatprep.subr.mxu0 0.0
    %2656 = vmatpush1.msra.mxu0 0.0
    %2657 = vmatprep.subr.mxu0 0.0
    %2658 = vmatpush1.msra.mxu0 0.0
    %2659 = vmatprep.subr.mxu0 0.0
    %2660 = vmatpush1.msra.mxu0 0.0
    %2661 = vmatprep.subr.mxu0 0.0
    %2662 = vmatpush1.msra.mxu0 0.0
    %2663 = vmatprep.subr.mxu0 0.0
    %2664 = vmatpush1.msra.mxu0 0.0
    %2665 = vmatprep.subr.mxu0 0.0
    %2666 = vmatpush1.msra.mxu0 0.0
    %2667 = vmatprep.subr.mxu0 0.0
    %2668 = vmatpush1.msra.mxu0 0.0
    %2669 = vmatprep.subr.mxu0 0.0
    %2670 = vmatpush1.msra.mxu0 0.0
    %2671 = vmatprep.subr.mxu0 0.0
    %2672 = vmatpush1.msra.mxu0 0.0
    %2673 = vmatprep.subr.mxu0 0.0
    %2674 = vmatpush1.msra.mxu0 0.0
    %2675 = vmatprep.subr.mxu0 0.0
    %2676 = vmatpush1.msra.mxu0 0.0
    %2677 = vmatprep.subr.mxu0 0.0
    %2678 = vmatpush1.msra.mxu0 0.0
    %2679 = vmatprep.subr.mxu0 0.0
    %2680 = vmatpush1.msra.mxu0 0.0
    %2681 = vmatprep.subr.mxu0 0.0
    %2682 = vmatpush1.msra.mxu0 0.0
    %2683 = vmatprep.mubr.f32.mxu0 0.0
    %2684 = vmatmul.mubr.f32.gmra.mrb[0].mxu0 %v2617
    %v2685 = vpop.f32.mrb[0].mxu0
    %v2686 = vadd.f32 0.0, %v2685
    %v2687 = vpop.f32.mrb[0].mxu0
    %2688 = vdwg.mxu0
    %v2689 = vsel %vm45, %v2175, 0.0
    %v2690 = vsel %vm45, %v2321, 0.0
    %v2691 = vadd.f32 %v2689, %v2690
    %v2692 = vsel %vm45, %v2467, 0.0
    %v2693 = vadd.f32 %v2691, %v2692
    %v2694 = vsel %vm45, %v2613, 0.0
    %v2695 = vadd.f32 %v2693, %v2694
    %v2696 = vsel %vm45, %v2248, 0.0
    %v2697 = vsel %vm45, %v2394, 0.0
    %v2698 = vadd.f32 %v2696, %v2697
    %v2699 = vsel %vm45, %v2540, 0.0
    %v2700 = vadd.f32 %v2698, %v2699
    %v2701 = vsel %vm45, %v2686, 0.0
    %v2702 = vadd.f32 %v2700, %v2701
    %v2703 = vlaneseq
    %v2704 = vshrl.u32 %v2703, 7
    %v2705 = vsub.s32 0, %v2704
    %v2706 = vrot.slane %v101, %v2705
    %v2707 = vadd.f32 %v2695, %v2706
    %v2708 = vadd.f32 %v2702, %v2706
    %v2709 = vadd.f32 %v83, %v2707
    %v2710 = vadd.f32 %v84, %v2708
    %v2711 = vsel %vm45, %v2709, 0.0
    %2712 = vadd.xlane.f32.xlu0 %v2711
    %v2713 = vpop.xlane.xlu0 %2712
    %v2714 = vsel %vm45, %v2710, 0.0
    %2715 = vadd.xlane.f32.xlu0 %v2714
    %v2716 = vpop.xlane.xlu0 %2715
    %v2717 = vmul.f32 %v2713, %v52
    %v2718 = vmul.f32 %v2716, %v52
    %v2719 = vsub.f32 %v2709, %v2717
    %v2720 = vsub.f32 %v2710, %v2718
    %v2721 = vmul.f32 %v2719, %v2719
    %v2722 = vmul.f32 %v2720, %v2720
    %v2723 = vsel %vm45, %v2721, 0.0
    %2724 = vadd.xlane.f32.xlu0 %v2723
    %v2725 = vpop.xlane.xlu0 %2724
    %v2726 = vsel %vm45, %v2722, 0.0
    %2727 = vadd.xlane.f32.xlu0 %v2726
    %v2728 = vpop.xlane.xlu0 %2727
    %v2729 = vmul.f32 %v2725, %v52
    %v2730 = vmul.f32 %v2728, %v52
    %v2731 = vadd.f32 %v2729, 1e-12
    %v2732 = vadd.f32 %v2730, 1e-12
    %v2733 = vrsqrt.pop %v2731
    %v2734 = vrsqrt.pop %v2732
    %v2735 = vmul.f32 %v2719, %v2733
    %v2736 = vmul.f32 %v2720, %v2734
    %v2737 = vlaneseq
    %v2738 = vshrl.u32 %v2737, 7
    %v2739 = vsub.s32 1, %v2738
    %v2740 = vrot.slane %v101, %v2739
    %v2741 = vmul.f32 %v2735, %v2740
    %v2742 = vmul.f32 %v2736, %v2740
    %v2743 = vlaneseq
    %v2744 = vshrl.u32 %v2743, 7
    %v2745 = vsub.s32 2, %v2744
    %v2746 = vrot.slane %v101, %v2745
    %v2747 = vadd.f32 %v2741, %v2746
    %v2748 = vadd.f32 %v2742, %v2746
    %v2749 = vld [vmem:[%s7] sm:$0xff]
    %v2750 = vld [vmem:[%s7 + $0x8] sm:$0xff]
    %v2751 = vld [vmem:[%s7 + $0x10] sm:$0xff]
    %v2752 = vld [vmem:[%s7 + $0x18] sm:$0xff]
    %v2753 = vld [vmem:[%s8] sm:$0x1]
    %v2755 = vlaneseq
    %v2756 = vshrl.u32 %v2755, 7
    %v2757 = vsub.s32 0, %v2756
    %v2758 = vrot.slane %v2753, %v2757
    %v2761 = vsel %vm45, %v2747, 0
    %v2764 = vsel %vm45, %v2748, 0
    %2766 = vmatprep.subr.mxu0 0.0
    %2767 = vmatpush1.msra.mxu0 %v2749
    %2768 = vmatprep.subr.mxu0 0.0
    %2769 = vmatpush1.msra.mxu0 %v2750
    %2770 = vmatprep.subr.mxu0 0.0
    %2771 = vmatpush1.msra.mxu0 %v2751
    %2772 = vmatprep.subr.mxu0 0.0
    %2773 = vmatpush1.msra.mxu0 %v2752
    %2774 = vmatprep.subr.mxu0 0.0
    %2775 = vmatpush1.msra.mxu0 0.0
    %2776 = vmatprep.subr.mxu0 0.0
    %2777 = vmatpush1.msra.mxu0 0.0
    %2778 = vmatprep.subr.mxu0 0.0
    %2779 = vmatpush1.msra.mxu0 0.0
    %2780 = vmatprep.subr.mxu0 0.0
    %2781 = vmatpush1.msra.mxu0 0.0
    %2782 = vmatprep.subr.mxu0 0.0
    %2783 = vmatpush1.msra.mxu0 0.0
    %2784 = vmatprep.subr.mxu0 0.0
    %2785 = vmatpush1.msra.mxu0 0.0
    %2786 = vmatprep.subr.mxu0 0.0
    %2787 = vmatpush1.msra.mxu0 0.0
    %2788 = vmatprep.subr.mxu0 0.0
    %2789 = vmatpush1.msra.mxu0 0.0
    %2790 = vmatprep.subr.mxu0 0.0
    %2791 = vmatpush1.msra.mxu0 0.0
    %2792 = vmatprep.subr.mxu0 0.0
    %2793 = vmatpush1.msra.mxu0 0.0
    %2794 = vmatprep.subr.mxu0 0.0
    %2795 = vmatpush1.msra.mxu0 0.0
    %2796 = vmatprep.subr.mxu0 0.0
    %2797 = vmatpush1.msra.mxu0 0.0
    %2798 = vmatprep.subr.mxu0 0.0
    %2799 = vmatpush1.msra.mxu0 0.0
    %2800 = vmatprep.subr.mxu0 0.0
    %2801 = vmatpush1.msra.mxu0 0.0
    %2802 = vmatprep.subr.mxu0 0.0
    %2803 = vmatpush1.msra.mxu0 0.0
    %2804 = vmatprep.subr.mxu0 0.0
    %2805 = vmatpush1.msra.mxu0 0.0
    %2806 = vmatprep.subr.mxu0 0.0
    %2807 = vmatpush1.msra.mxu0 0.0
    %2808 = vmatprep.subr.mxu0 0.0
    %2809 = vmatpush1.msra.mxu0 0.0
    %2810 = vmatprep.subr.mxu0 0.0
    %2811 = vmatpush1.msra.mxu0 0.0
    %2812 = vmatprep.subr.mxu0 0.0
    %2813 = vmatpush1.msra.mxu0 0.0
    %2814 = vmatprep.subr.mxu0 0.0
    %2815 = vmatpush1.msra.mxu0 0.0
    %2816 = vmatprep.subr.mxu0 0.0
    %2817 = vmatpush1.msra.mxu0 0.0
    %2818 = vmatprep.subr.mxu0 0.0
    %2819 = vmatpush1.msra.mxu0 0.0
    %2820 = vmatprep.subr.mxu0 0.0
    %2821 = vmatpush1.msra.mxu0 0.0
    %2822 = vmatprep.subr.mxu0 0.0
    %2823 = vmatpush1.msra.mxu0 0.0
    %2824 = vmatprep.subr.mxu0 0.0
    %2825 = vmatpush1.msra.mxu0 0.0
    %2826 = vmatprep.subr.mxu0 0.0
    %2827 = vmatpush1.msra.mxu0 0.0
    %2828 = vmatprep.subr.mxu0 0.0
    %2829 = vmatpush1.msra.mxu0 0.0
    %2830 = vmatprep.mubr.f32.mxu0 0.0
    %2831 = vmatmul.mubr.f32.gmra.mrb[0].mxu0 %v2761
    %v2832 = vpop.f32.mrb[0].mxu0
    %v2833 = vadd.f32 %v2758, %v2832
    %v2834 = vpop.f32.mrb[0].mxu0
    %2835 = vmatprep.mubr.f32.mxu0 0.0
    %2836 = vmatmul.mubr.f32.gmra.mrb[0].mxu0 %v2764
    %v2837 = vpop.f32.mrb[0].mxu0
    %v2838 = vadd.f32 %v2758, %v2837
    %v2839 = vpop.f32.mrb[0].mxu0
    %2840 = vdwg.mxu0
    %v2841 = vmul.f32 %v2833, 0.5
    %v2842 = vmul.f32 %v2838, 0.5
    %v2843 = vmul.f32 %v2833, 0.044715
    %v2844 = vmul.f32 %v2838, 0.044715
    %v2845 = vmul.f32 %v2843, %v2833
    %v2846 = vmul.f32 %v2844, %v2838
    %v2847 = vmul.f32 %v2845, %v2833
    %v2848 = vmul.f32 %v2846, %v2838
    %v2849 = vadd.f32 %v2833, %v2847
    %v2850 = vadd.f32 %v2838, %v2848
    %v2851 = vmul.f32 %v2849, 0.7978846
    %v2852 = vmul.f32 %v2850, 0.7978846
    %v2853 = vtanh.pop %v2851
    %v2854 = vtanh.pop %v2852
    %v2855 = vadd.f32 %v2853, 1.0
    %v2856 = vadd.f32 %v2854, 1.0
    %v2857 = vmul.f32 %v2841, %v2855
    %v2858 = vmul.f32 %v2842, %v2856
    %v2859 = vld [vmem:[%s9] sm:$0xff]
    %v2860 = vld [vmem:[%s9 + $0x8] sm:$0xff]
    %v2861 = vld [vmem:[%s9 + $0x10] sm:$0xff]
    %v2862 = vld [vmem:[%s9 + $0x18] sm:$0xff]
    %v2863 = vld [vmem:[%s9 + $0x20] sm:$0xff]
    %v2864 = vld [vmem:[%s9 + $0x28] sm:$0xff]
    %v2865 = vld [vmem:[%s9 + $0x30] sm:$0xff]
    %v2866 = vld [vmem:[%s9 + $0x38] sm:$0xff]
    %v2867 = vlaneseq
    %v2868 = vshrl.u32 %v2867, 7
    %v2869 = vsub.s32 3, %v2868
    %v2870 = vrot.slane %v101, %v2869
    %vm2871 = vcmask 523264
    %v2873 = vsel %vm2871, %v2857, 0
    %v2876 = vsel %vm2871, %v2858, 0
    %2878 = vmatprep.subr.mxu0 0.0
    %2879 = vmatpush1.msra.mxu0 %v2859
    %2880 = vmatprep.subr.mxu0 0.0
    %2881 = vmatpush1.msra.mxu0 %v2860
    %2882 = vmatprep.subr.mxu0 0.0
    %2883 = vmatpush1.msra.mxu0 %v2861
    %2884 = vmatprep.subr.mxu0 0.0
    %2885 = vmatpush1.msra.mxu0 %v2862
    %2886 = vmatprep.subr.mxu0 0.0
    %2887 = vmatpush1.msra.mxu0 %v2863
    %2888 = vmatprep.subr.mxu0 0.0
    %2889 = vmatpush1.msra.mxu0 %v2864
    %2890 = vmatprep.subr.mxu0 0.0
    %2891 = vmatpush1.msra.mxu0 %v2865
    %2892 = vmatprep.subr.mxu0 0.0
    %2893 = vmatpush1.msra.mxu0 %v2866
    %2894 = vmatprep.subr.mxu0 0.0
    %2895 = vmatpush1.msra.mxu0 0.0
    %2896 = vmatprep.subr.mxu0 0.0
    %2897 = vmatpush1.msra.mxu0 0.0
    %2898 = vmatprep.subr.mxu0 0.0
    %2899 = vmatpush1.msra.mxu0 0.0
    %2900 = vmatprep.subr.mxu0 0.0
    %2901 = vmatpush1.msra.mxu0 0.0
    %2902 = vmatprep.subr.mxu0 0.0
    %2903 = vmatpush1.msra.mxu0 0.0
    %2904 = vmatprep.subr.mxu0 0.0
    %2905 = vmatpush1.msra.mxu0 0.0
    %2906 = vmatprep.subr.mxu0 0.0
    %2907 = vmatpush1.msra.mxu0 0.0
    %2908 = vmatprep.subr.mxu0 0.0
    %2909 = vmatpush1.msra.mxu0 0.0
    %2910 = vmatprep.subr.mxu0 0.0
    %2911 = vmatpush1.msra.mxu0 0.0
    %2912 = vmatprep.subr.mxu0 0.0
    %2913 = vmatpush1.msra.mxu0 0.0
    %2914 = vmatprep.subr.mxu0 0.0
    %2915 = vmatpush1.msra.mxu0 0.0
    %2916 = vmatprep.subr.mxu0 0.0
    %2917 = vmatpush1.msra.mxu0 0.0
    %2918 = vmatprep.subr.mxu0 0.0
    %2919 = vmatpush1.msra.mxu0 0.0
    %2920 = vmatprep.subr.mxu0 0.0
    %2921 = vmatpush1.msra.mxu0 0.0
    %2922 = vmatprep.subr.mxu0 0.0
    %2923 = vmatpush1.msra.mxu0 0.0
    %2924 = vmatprep.subr.mxu0 0.0
    %2925 = vmatpush1.msra.mxu0 0.0
    %2926 = vmatprep.subr.mxu0 0.0
    %2927 = vmatpush1.msra.mxu0 0.0
    %2928 = vmatprep.subr.mxu0 0.0
    %2929 = vmatpush1.msra.mxu0 0.0
    %2930 = vmatprep.subr.mxu0 0.0
    %2931 = vmatpush1.msra.mxu0 0.0
    %2932 = vmatprep.subr.mxu0 0.0
    %2933 = vmatpush1.msra.mxu0 0.0
    %2934 = vmatprep.subr.mxu0 0.0
    %2935 = vmatpush1.msra.mxu0 0.0
    %2936 = vmatprep.subr.mxu0 0.0
    %2937 = vmatpush1.msra.mxu0 0.0
    %2938 = vmatprep.subr.mxu0 0.0
    %2939 = vmatpush1.msra.mxu0 0.0
    %2940 = vmatprep.subr.mxu0 0.0
    %2941 = vmatpush1.msra.mxu0 0.0
    %2942 = vmatprep.mubr.f32.mxu0 0.0
    %2943 = vmatmul.mubr.f32.gmra.mrb[0].mxu0 %v2873
    %v2944 = vpop.f32.mrb[0].mxu0
    %v2945 = vadd.f32 %v2870, %v2944
    %v2946 = vpop.f32.mrb[0].mxu0
    %2947 = vmatprep.mubr.f32.mxu0 0.0
    %2948 = vmatmul.mubr.f32.gmra.mrb[0].mxu0 %v2876
    %v2949 = vpop.f32.mrb[0].mxu0
    %v2950 = vadd.f32 %v2870, %v2949
    %v2951 = vpop.f32.mrb[0].mxu0
    %2952 = vdwg.mxu0
    %v2953 = vadd.f32 %v2747, %v2945
    %v2954 = vadd.f32 %v2748, %v2950
    %v2955 = vsel %vm45, %v2953, 0.0
    %2956 = vadd.xlane.f32.xlu0 %v2955
    %v2957 = vpop.xlane.xlu0 %2956
    %v2958 = vsel %vm45, %v2954, 0.0
    %2959 = vadd.xlane.f32.xlu0 %v2958
    %v2960 = vpop.xlane.xlu0 %2959
    %v2961 = vmul.f32 %v2957, %v52
    %v2962 = vmul.f32 %v2960, %v52
    %v2963 = vsub.f32 %v2953, %v2961
    %v2964 = vsub.f32 %v2954, %v2962
    %v2965 = vmul.f32 %v2963, %v2963
    %v2966 = vmul.f32 %v2964, %v2964
    %v2967 = vsel %vm45, %v2965, 0.0
    %2968 = vadd.xlane.f32.xlu0 %v2967
    %v2969 = vpop.xlane.xlu0 %2968
    %v2970 = vsel %vm45, %v2966, 0.0
    %2971 = vadd.xlane.f32.xlu0 %v2970
    %v2972 = vpop.xlane.xlu0 %2971
    %v2973 = vmul.f32 %v2969, %v52
    %v2974 = vmul.f32 %v2972, %v52
    %v2975 = vadd.f32 %v2973, 1e-12
    %v2976 = vadd.f32 %v2974, 1e-12
    %v2977 = vrsqrt.pop %v2975
    %v2978 = vrsqrt.pop %v2976
    %v2979 = vmul.f32 %v2963, %v2977
    %v2980 = vmul.f32 %v2964, %v2978
    %v2981 = vlaneseq
    %v2982 = vshrl.u32 %v2981, 7
    %v2983 = vsub.s32 4, %v2982
    %v2984 = vrot.slane %v101, %v2983
    %v2985 = vmul.f32 %v2979, %v2984
    %v2986 = vmul.f32 %v2980, %v2984
    %v2987 = vlaneseq
    %v2988 = vshrl.u32 %v2987, 7
    %v2989 = vsub.s32 5, %v2988
    %v2990 = vrot.slane %v101, %v2989
    %v2991 = vadd.f32 %v2985, %v2990
    %v2992 = vadd.f32 %v2986, %v2990
    %v2993 = vsel %vm45, %v2991, 0.0
    %v2994 = vrot.slane %v2993, 4
    %v2995 = vadd.f32 %v2993, %v2994
    %v2996 = vrot.slane %v2995, 2
    %v2997 = vadd.f32 %v2995, %v2996
    %v2998 = vrot.slane %v2997, 1
    %v2999 = vadd.f32 %v2997, %v2998
    %v3000 = vsel %vm45, %v2992, 0.0
    %v3001 = vrot.slane %v3000, 4
    %v3002 = vadd.f32 %v3000, %v3001
    %v3003 = vrot.slane %v3002, 2
    %v3004 = vadd.f32 %v3002, %v3003
    %v3005 = vrot.slane %v3004, 1
    %v3006 = vadd.f32 %v3004, %v3005
    %v3007 = vadd.f32 %v93, %v2999
    %v3008 = vadd.f32 %v100, %v3006
    %s3009 = scalar_lea.vmem %s6, 8
    %v3010 = vld [vmem:[%s3009] sm:$0x3f]
    %s3011 = scalar_lea.vmem %s3, 256
    %v3012 = vld [vmem:[%s3011] sm:$0xff]
    %v3013 = vld [vmem:[%s3011 + $0x8] sm:$0xff]
    %v3014 = vld [vmem:[%s3011 + $0x10] sm:$0xff]
    %v3015 = vld [vmem:[%s3011 + $0x18] sm:$0xff]
    %v3016 = vld [vmem:[%s3011 + $0x20] sm:$0xff]
    %v3017 = vld [vmem:[%s3011 + $0x28] sm:$0xff]
    %v3018 = vld [vmem:[%s3011 + $0x30] sm:$0xff]
    %v3019 = vld [vmem:[%s3011 + $0x38] sm:$0xff]
    %v3020 = vld [vmem:[%s3011 + $0x40] sm:$0xff]
    %v3021 = vld [vmem:[%s3011 + $0x48] sm:$0xff]
    %v3022 = vld [vmem:[%s3011 + $0x50] sm:$0xff]
    %v3023 = vld [vmem:[%s3011 + $0x58] sm:$0xff]
    %v3024 = vld [vmem:[%s3011 + $0x60] sm:$0xff]
    %v3025 = vld [vmem:[%s3011 + $0x68] sm:$0xff]
    %v3026 = vld [vmem:[%s3011 + $0x70] sm:$0xff]
    %v3027 = vld [vmem:[%s3011 + $0x78] sm:$0xff]
    %v3028 = vld [vmem:[%s3011 + $0x80] sm:$0xff]
    %v3029 = vld [vmem:[%s3011 + $0x88] sm:$0xff]
    %v3030 = vld [vmem:[%s3011 + $0x90] sm:$0xff]
    %v3031 = vld [vmem:[%s3011 + $0x98] sm:$0xff]
    %v3032 = vld [vmem:[%s3011 + $0xa0] sm:$0xff]
    %v3033 = vld [vmem:[%s3011 + $0xa8] sm:$0xff]
    %v3034 = vld [vmem:[%s3011 + $0xb0] sm:$0xff]
    %v3035 = vld [vmem:[%s3011 + $0xb8] sm:$0xff]
    %v3036 = vld [vmem:[%s3011 + $0xc0] sm:$0xff]
    %v3037 = vld [vmem:[%s3011 + $0xc8] sm:$0xff]
    %v3038 = vld [vmem:[%s3011 + $0xd0] sm:$0xff]
    %v3039 = vld [vmem:[%s3011 + $0xd8] sm:$0xff]
    %v3040 = vld [vmem:[%s3011 + $0xe0] sm:$0xff]
    %v3041 = vld [vmem:[%s3011 + $0xe8] sm:$0xff]
    %v3042 = vld [vmem:[%s3011 + $0xf0] sm:$0xff]
    %v3043 = vld [vmem:[%s3011 + $0xf8] sm:$0xff]
    %s3044 = scalar_lea.vmem %s4, 8
    %v3045 = vld [vmem:[%s3044] sm:$0x1]
    %v3046 = vld [vmem:[%s3044 + $0x1] sm:$0x1]
    %v3047 = vld [vmem:[%s3044 + $0x2] sm:$0x1]
    %v3048 = vld [vmem:[%s3044 + $0x3] sm:$0x1]
    %v3049 = vld [vmem:[%s3044 + $0x4] sm:$0x1]
    %v3050 = vld [vmem:[%s3044 + $0x5] sm:$0x1]
    %v3051 = vld [vmem:[%s3044 + $0x6] sm:$0x1]
    %v3052 = vld [vmem:[%s3044 + $0x7] sm:$0x1]
    %v3061 = vlaneseq
    %v3062 = vshrl.u32 %v3061, 7
    %v3063 = vsub.s32 0, %v3062
    %v3064 = vrot.slane %v3045, %v3063
    %v3065 = vlaneseq
    %v3066 = vshrl.u32 %v3065, 7
    %v3067 = vsub.s32 0, %v3066
    %v3068 = vrot.slane %v3046, %v3067
    %v3069 = vlaneseq
    %v3070 = vshrl.u32 %v3069, 7
    %v3071 = vsub.s32 0, %v3070
    %v3072 = vrot.slane %v3047, %v3071
    %v3073 = vlaneseq
    %v3074 = vshrl.u32 %v3073, 7
    %v3075 = vsub.s32 0, %v3074
    %v3076 = vrot.slane %v3048, %v3075
    %v3077 = vlaneseq
    %v3078 = vshrl.u32 %v3077, 7
    %v3079 = vsub.s32 0, %v3078
    %v3080 = vrot.slane %v3049, %v3079
    %v3081 = vlaneseq
    %v3082 = vshrl.u32 %v3081, 7
    %v3083 = vsub.s32 0, %v3082
    %v3084 = vrot.slane %v3050, %v3083
    %v3085 = vlaneseq
    %v3086 = vshrl.u32 %v3085, 7
    %v3087 = vsub.s32 0, %v3086
    %v3088 = vrot.slane %v3051, %v3087
    %v3089 = vlaneseq
    %v3090 = vshrl.u32 %v3089, 7
    %v3091 = vsub.s32 0, %v3090
    %v3092 = vrot.slane %v3052, %v3091
    %v3102 = vsel %vm45, %v2991, 0
    %3104 = vmatprep.subr.mxu0 0.0
    %3105 = vmatpush1.msra.mxu0 %v3012
    %3106 = vmatprep.subr.mxu0 0.0
    %3107 = vmatpush1.msra.mxu0 %v3013
    %3108 = vmatprep.subr.mxu0 0.0
    %3109 = vmatpush1.msra.mxu0 %v3014
    %3110 = vmatprep.subr.mxu0 0.0
    %3111 = vmatpush1.msra.mxu0 %v3015
    %3112 = vmatprep.subr.mxu0 0.0
    %3113 = vmatpush1.msra.mxu0 0.0
    %3114 = vmatprep.subr.mxu0 0.0
    %3115 = vmatpush1.msra.mxu0 0.0
    %3116 = vmatprep.subr.mxu0 0.0
    %3117 = vmatpush1.msra.mxu0 0.0
    %3118 = vmatprep.subr.mxu0 0.0
    %3119 = vmatpush1.msra.mxu0 0.0
    %3120 = vmatprep.subr.mxu0 0.0
    %3121 = vmatpush1.msra.mxu0 0.0
    %3122 = vmatprep.subr.mxu0 0.0
    %3123 = vmatpush1.msra.mxu0 0.0
    %3124 = vmatprep.subr.mxu0 0.0
    %3125 = vmatpush1.msra.mxu0 0.0
    %3126 = vmatprep.subr.mxu0 0.0
    %3127 = vmatpush1.msra.mxu0 0.0
    %3128 = vmatprep.subr.mxu0 0.0
    %3129 = vmatpush1.msra.mxu0 0.0
    %3130 = vmatprep.subr.mxu0 0.0
    %3131 = vmatpush1.msra.mxu0 0.0
    %3132 = vmatprep.subr.mxu0 0.0
    %3133 = vmatpush1.msra.mxu0 0.0
    %3134 = vmatprep.subr.mxu0 0.0
    %3135 = vmatpush1.msra.mxu0 0.0
    %3136 = vmatprep.subr.mxu0 0.0
    %3137 = vmatpush1.msra.mxu0 0.0
    %3138 = vmatprep.subr.mxu0 0.0
    %3139 = vmatpush1.msra.mxu0 0.0
    %3140 = vmatprep.subr.mxu0 0.0
    %3141 = vmatpush1.msra.mxu0 0.0
    %3142 = vmatprep.subr.mxu0 0.0
    %3143 = vmatpush1.msra.mxu0 0.0
    %3144 = vmatprep.subr.mxu0 0.0
    %3145 = vmatpush1.msra.mxu0 0.0
    %3146 = vmatprep.subr.mxu0 0.0
    %3147 = vmatpush1.msra.mxu0 0.0
    %3148 = vmatprep.subr.mxu0 0.0
    %3149 = vmatpush1.msra.mxu0 0.0
    %3150 = vmatprep.subr.mxu0 0.0
    %3151 = vmatpush1.msra.mxu0 0.0
    %3152 = vmatprep.subr.mxu0 0.0
    %3153 = vmatpush1.msra.mxu0 0.0
    %3154 = vmatprep.subr.mxu0 0.0
    %3155 = vmatpush1.msra.mxu0 0.0
    %3156 = vmatprep.subr.mxu0 0.0
    %3157 = vmatpush1.msra.mxu0 0.0
    %3158 = vmatprep.subr.mxu0 0.0
    %3159 = vmatpush1.msra.mxu0 0.0
    %3160 = vmatprep.subr.mxu0 0.0
    %3161 = vmatpush1.msra.mxu0 0.0
    %3162 = vmatprep.subr.mxu0 0.0
    %3163 = vmatpush1.msra.mxu0 0.0
    %3164 = vmatprep.subr.mxu0 0.0
    %3165 = vmatpush1.msra.mxu0 0.0
    %3166 = vmatprep.subr.mxu0 0.0
    %3167 = vmatpush1.msra.mxu0 0.0
    %3168 = vmatprep.mubr.f32.mxu0 0.0
    %3169 = vmatmul.mubr.f32.gmra.mrb[0].mxu0 %v3102
    %v3170 = vpop.f32.mrb[0].mxu0
    %v3171 = vadd.f32 %v3064, %v3170
    %v3172 = vpop.f32.mrb[0].mxu0
    %3173 = vdwg.mxu0
    %v3175 = vsel %vm45, %v2992, 0
    %3177 = vmatprep.subr.mxu0 0.0
    %3178 = vmatpush1.msra.mxu0 %v3016
    %3179 = vmatprep.subr.mxu0 0.0
    %3180 = vmatpush1.msra.mxu0 %v3017
    %3181 = vmatprep.subr.mxu0 0.0
    %3182 = vmatpush1.msra.mxu0 %v3018
    %3183 = vmatprep.subr.mxu0 0.0
    %3184 = vmatpush1.msra.mxu0 %v3019
    %3185 = vmatprep.subr.mxu0 0.0
    %3186 = vmatpush1.msra.mxu0 0.0
    %3187 = vmatprep.subr.mxu0 0.0
    %3188 = vmatpush1.msra.mxu0 0.0
    %3189 = vmatprep.subr.mxu0 0.0
    %3190 = vmatpush1.msra.mxu0 0.0
    %3191 = vmatprep.subr.mxu0 0.0
    %3192 = vmatpush1.msra.mxu0 0.0
    %3193 = vmatprep.subr.mxu0 0.0
    %3194 = vmatpush1.msra.mxu0 0.0
    %3195 = vmatprep.subr.mxu0 0.0
    %3196 = vmatpush1.msra.mxu0 0.0
    %3197 = vmatprep.subr.mxu0 0.0
    %3198 = vmatpush1.msra.mxu0 0.0
    %3199 = vmatprep.subr.mxu0 0.0
    %3200 = vmatpush1.msra.mxu0 0.0
    %3201 = vmatprep.subr.mxu0 0.0
    %3202 = vmatpush1.msra.mxu0 0.0
    %3203 = vmatprep.subr.mxu0 0.0
    %3204 = vmatpush1.msra.mxu0 0.0
    %3205 = vmatprep.subr.mxu0 0.0
    %3206 = vmatpush1.msra.mxu0 0.0
    %3207 = vmatprep.subr.mxu0 0.0
    %3208 = vmatpush1.msra.mxu0 0.0
    %3209 = vmatprep.subr.mxu0 0.0
    %3210 = vmatpush1.msra.mxu0 0.0
    %3211 = vmatprep.subr.mxu0 0.0
    %3212 = vmatpush1.msra.mxu0 0.0
    %3213 = vmatprep.subr.mxu0 0.0
    %3214 = vmatpush1.msra.mxu0 0.0
    %3215 = vmatprep.subr.mxu0 0.0
    %3216 = vmatpush1.msra.mxu0 0.0
    %3217 = vmatprep.subr.mxu0 0.0
    %3218 = vmatpush1.msra.mxu0 0.0
    %3219 = vmatprep.subr.mxu0 0.0
    %3220 = vmatpush1.msra.mxu0 0.0
    %3221 = vmatprep.subr.mxu0 0.0
    %3222 = vmatpush1.msra.mxu0 0.0
    %3223 = vmatprep.subr.mxu0 0.0
    %3224 = vmatpush1.msra.mxu0 0.0
    %3225 = vmatprep.subr.mxu0 0.0
    %3226 = vmatpush1.msra.mxu0 0.0
    %3227 = vmatprep.subr.mxu0 0.0
    %3228 = vmatpush1.msra.mxu0 0.0
    %3229 = vmatprep.subr.mxu0 0.0
    %3230 = vmatpush1.msra.mxu0 0.0
    %3231 = vmatprep.subr.mxu0 0.0
    %3232 = vmatpush1.msra.mxu0 0.0
    %3233 = vmatprep.subr.mxu0 0.0
    %3234 = vmatpush1.msra.mxu0 0.0
    %3235 = vmatprep.subr.mxu0 0.0
    %3236 = vmatpush1.msra.mxu0 0.0
    %3237 = vmatprep.subr.mxu0 0.0
    %3238 = vmatpush1.msra.mxu0 0.0
    %3239 = vmatprep.subr.mxu0 0.0
    %3240 = vmatpush1.msra.mxu0 0.0
    %3241 = vmatprep.mubr.f32.mxu0 0.0
    %3242 = vmatmul.mubr.f32.gmra.mrb[0].mxu0 %v3175
    %v3243 = vpop.f32.mrb[0].mxu0
    %v3244 = vadd.f32 %v3068, %v3243
    %v3245 = vpop.f32.mrb[0].mxu0
    %3246 = vdwg.mxu0
    %3247 = vmatprep.subr.mxu0 0.0
    %3248 = vmatpush1.msra.mxu0 %v3020
    %3249 = vmatprep.subr.mxu0 0.0
    %3250 = vmatpush1.msra.mxu0 %v3021
    %3251 = vmatprep.subr.mxu0 0.0
    %3252 = vmatpush1.msra.mxu0 %v3022
    %3253 = vmatprep.subr.mxu0 0.0
    %3254 = vmatpush1.msra.mxu0 %v3023
    %3255 = vmatprep.subr.mxu0 0.0
    %3256 = vmatpush1.msra.mxu0 0.0
    %3257 = vmatprep.subr.mxu0 0.0
    %3258 = vmatpush1.msra.mxu0 0.0
    %3259 = vmatprep.subr.mxu0 0.0
    %3260 = vmatpush1.msra.mxu0 0.0
    %3261 = vmatprep.subr.mxu0 0.0
    %3262 = vmatpush1.msra.mxu0 0.0
    %3263 = vmatprep.subr.mxu0 0.0
    %3264 = vmatpush1.msra.mxu0 0.0
    %3265 = vmatprep.subr.mxu0 0.0
    %3266 = vmatpush1.msra.mxu0 0.0
    %3267 = vmatprep.subr.mxu0 0.0
    %3268 = vmatpush1.msra.mxu0 0.0
    %3269 = vmatprep.subr.mxu0 0.0
    %3270 = vmatpush1.msra.mxu0 0.0
    %3271 = vmatprep.subr.mxu0 0.0
    %3272 = vmatpush1.msra.mxu0 0.0
    %3273 = vmatprep.subr.mxu0 0.0
    %3274 = vmatpush1.msra.mxu0 0.0
    %3275 = vmatprep.subr.mxu0 0.0
    %3276 = vmatpush1.msra.mxu0 0.0
    %3277 = vmatprep.subr.mxu0 0.0
    %3278 = vmatpush1.msra.mxu0 0.0
    %3279 = vmatprep.subr.mxu0 0.0
    %3280 = vmatpush1.msra.mxu0 0.0
    %3281 = vmatprep.subr.mxu0 0.0
    %3282 = vmatpush1.msra.mxu0 0.0
    %3283 = vmatprep.subr.mxu0 0.0
    %3284 = vmatpush1.msra.mxu0 0.0
    %3285 = vmatprep.subr.mxu0 0.0
    %3286 = vmatpush1.msra.mxu0 0.0
    %3287 = vmatprep.subr.mxu0 0.0
    %3288 = vmatpush1.msra.mxu0 0.0
    %3289 = vmatprep.subr.mxu0 0.0
    %3290 = vmatpush1.msra.mxu0 0.0
    %3291 = vmatprep.subr.mxu0 0.0
    %3292 = vmatpush1.msra.mxu0 0.0
    %3293 = vmatprep.subr.mxu0 0.0
    %3294 = vmatpush1.msra.mxu0 0.0
    %3295 = vmatprep.subr.mxu0 0.0
    %3296 = vmatpush1.msra.mxu0 0.0
    %3297 = vmatprep.subr.mxu0 0.0
    %3298 = vmatpush1.msra.mxu0 0.0
    %3299 = vmatprep.subr.mxu0 0.0
    %3300 = vmatpush1.msra.mxu0 0.0
    %3301 = vmatprep.subr.mxu0 0.0
    %3302 = vmatpush1.msra.mxu0 0.0
    %3303 = vmatprep.subr.mxu0 0.0
    %3304 = vmatpush1.msra.mxu0 0.0
    %3305 = vmatprep.subr.mxu0 0.0
    %3306 = vmatpush1.msra.mxu0 0.0
    %3307 = vmatprep.subr.mxu0 0.0
    %3308 = vmatpush1.msra.mxu0 0.0
    %3309 = vmatprep.subr.mxu0 0.0
    %3310 = vmatpush1.msra.mxu0 0.0
    %3311 = vmatprep.mubr.f32.mxu0 0.0
    %3312 = vmatmul.mubr.f32.gmra.mrb[0].mxu0 %v3102
    %v3313 = vpop.f32.mrb[0].mxu0
    %v3314 = vadd.f32 %v3072, %v3313
    %v3315 = vpop.f32.mrb[0].mxu0
    %3316 = vdwg.mxu0
    %3317 = vmatprep.subr.mxu0 0.0
    %3318 = vmatpush1.msra.mxu0 %v3024
    %3319 = vmatprep.subr.mxu0 0.0
    %3320 = vmatpush1.msra.mxu0 %v3025
    %3321 = vmatprep.subr.mxu0 0.0
    %3322 = vmatpush1.msra.mxu0 %v3026
    %3323 = vmatprep.subr.mxu0 0.0
    %3324 = vmatpush1.msra.mxu0 %v3027
    %3325 = vmatprep.subr.mxu0 0.0
    %3326 = vmatpush1.msra.mxu0 0.0
    %3327 = vmatprep.subr.mxu0 0.0
    %3328 = vmatpush1.msra.mxu0 0.0
    %3329 = vmatprep.subr.mxu0 0.0
    %3330 = vmatpush1.msra.mxu0 0.0
    %3331 = vmatprep.subr.mxu0 0.0
    %3332 = vmatpush1.msra.mxu0 0.0
    %3333 = vmatprep.subr.mxu0 0.0
    %3334 = vmatpush1.msra.mxu0 0.0
    %3335 = vmatprep.subr.mxu0 0.0
    %3336 = vmatpush1.msra.mxu0 0.0
    %3337 = vmatprep.subr.mxu0 0.0
    %3338 = vmatpush1.msra.mxu0 0.0
    %3339 = vmatprep.subr.mxu0 0.0
    %3340 = vmatpush1.msra.mxu0 0.0
    %3341 = vmatprep.subr.mxu0 0.0
    %3342 = vmatpush1.msra.mxu0 0.0
    %3343 = vmatprep.subr.mxu0 0.0
    %3344 = vmatpush1.msra.mxu0 0.0
    %3345 = vmatprep.subr.mxu0 0.0
    %3346 = vmatpush1.msra.mxu0 0.0
    %3347 = vmatprep.subr.mxu0 0.0
    %3348 = vmatpush1.msra.mxu0 0.0
    %3349 = vmatprep.subr.mxu0 0.0
    %3350 = vmatpush1.msra.mxu0 0.0
    %3351 = vmatprep.subr.mxu0 0.0
    %3352 = vmatpush1.msra.mxu0 0.0
    %3353 = vmatprep.subr.mxu0 0.0
    %3354 = vmatpush1.msra.mxu0 0.0
    %3355 = vmatprep.subr.mxu0 0.0
    %3356 = vmatpush1.msra.mxu0 0.0
    %3357 = vmatprep.subr.mxu0 0.0
    %3358 = vmatpush1.msra.mxu0 0.0
    %3359 = vmatprep.subr.mxu0 0.0
    %3360 = vmatpush1.msra.mxu0 0.0
    %3361 = vmatprep.subr.mxu0 0.0
    %3362 = vmatpush1.msra.mxu0 0.0
    %3363 = vmatprep.subr.mxu0 0.0
    %3364 = vmatpush1.msra.mxu0 0.0
    %3365 = vmatprep.subr.mxu0 0.0
    %3366 = vmatpush1.msra.mxu0 0.0
    %3367 = vmatprep.subr.mxu0 0.0
    %3368 = vmatpush1.msra.mxu0 0.0
    %3369 = vmatprep.subr.mxu0 0.0
    %3370 = vmatpush1.msra.mxu0 0.0
    %3371 = vmatprep.subr.mxu0 0.0
    %3372 = vmatpush1.msra.mxu0 0.0
    %3373 = vmatprep.subr.mxu0 0.0
    %3374 = vmatpush1.msra.mxu0 0.0
    %3375 = vmatprep.subr.mxu0 0.0
    %3376 = vmatpush1.msra.mxu0 0.0
    %3377 = vmatprep.subr.mxu0 0.0
    %3378 = vmatpush1.msra.mxu0 0.0
    %3379 = vmatprep.subr.mxu0 0.0
    %3380 = vmatpush1.msra.mxu0 0.0
    %3381 = vmatprep.mubr.f32.mxu0 0.0
    %3382 = vmatmul.mubr.f32.gmra.mrb[0].mxu0 %v3175
    %v3383 = vpop.f32.mrb[0].mxu0
    %v3384 = vadd.f32 %v3076, %v3383
    %v3385 = vpop.f32.mrb[0].mxu0
    %3386 = vdwg.mxu0
    %3387 = vmatprep.subr.mxu0 0.0
    %3388 = vmatpush1.msra.mxu0 %v3028
    %3389 = vmatprep.subr.mxu0 0.0
    %3390 = vmatpush1.msra.mxu0 %v3029
    %3391 = vmatprep.subr.mxu0 0.0
    %3392 = vmatpush1.msra.mxu0 %v3030
    %3393 = vmatprep.subr.mxu0 0.0
    %3394 = vmatpush1.msra.mxu0 %v3031
    %3395 = vmatprep.subr.mxu0 0.0
    %3396 = vmatpush1.msra.mxu0 0.0
    %3397 = vmatprep.subr.mxu0 0.0
    %3398 = vmatpush1.msra.mxu0 0.0
    %3399 = vmatprep.subr.mxu0 0.0
    %3400 = vmatpush1.msra.mxu0 0.0
    %3401 = vmatprep.subr.mxu0 0.0
    %3402 = vmatpush1.msra.mxu0 0.0
    %3403 = vmatprep.subr.mxu0 0.0
    %3404 = vmatpush1.msra.mxu0 0.0
    %3405 = vmatprep.subr.mxu0 0.0
    %3406 = vmatpush1.msra.mxu0 0.0
    %3407 = vmatprep.subr.mxu0 0.0
    %3408 = vmatpush1.msra.mxu0 0.0
    %3409 = vmatprep.subr.mxu0 0.0
    %3410 = vmatpush1.msra.mxu0 0.0
    %3411 = vmatprep.subr.mxu0 0.0
    %3412 = vmatpush1.msra.mxu0 0.0
    %3413 = vmatprep.subr.mxu0 0.0
    %3414 = vmatpush1.msra.mxu0 0.0
    %3415 = vmatprep.subr.mxu0 0.0
    %3416 = vmatpush1.msra.mxu0 0.0
    %3417 = vmatprep.subr.mxu0 0.0
    %3418 = vmatpush1.msra.mxu0 0.0
    %3419 = vmatprep.subr.mxu0 0.0
    %3420 = vmatpush1.msra.mxu0 0.0
    %3421 = vmatprep.subr.mxu0 0.0
    %3422 = vmatpush1.msra.mxu0 0.0
    %3423 = vmatprep.subr.mxu0 0.0
    %3424 = vmatpush1.msra.mxu0 0.0
    %3425 = vmatprep.subr.mxu0 0.0
    %3426 = vmatpush1.msra.mxu0 0.0
    %3427 = vmatprep.subr.mxu0 0.0
    %3428 = vmatpush1.msra.mxu0 0.0
    %3429 = vmatprep.subr.mxu0 0.0
    %3430 = vmatpush1.msra.mxu0 0.0
    %3431 = vmatprep.subr.mxu0 0.0
    %3432 = vmatpush1.msra.mxu0 0.0
    %3433 = vmatprep.subr.mxu0 0.0
    %3434 = vmatpush1.msra.mxu0 0.0
    %3435 = vmatprep.subr.mxu0 0.0
    %3436 = vmatpush1.msra.mxu0 0.0
    %3437 = vmatprep.subr.mxu0 0.0
    %3438 = vmatpush1.msra.mxu0 0.0
    %3439 = vmatprep.subr.mxu0 0.0
    %3440 = vmatpush1.msra.mxu0 0.0
    %3441 = vmatprep.subr.mxu0 0.0
    %3442 = vmatpush1.msra.mxu0 0.0
    %3443 = vmatprep.subr.mxu0 0.0
    %3444 = vmatpush1.msra.mxu0 0.0
    %3445 = vmatprep.subr.mxu0 0.0
    %3446 = vmatpush1.msra.mxu0 0.0
    %3447 = vmatprep.subr.mxu0 0.0
    %3448 = vmatpush1.msra.mxu0 0.0
    %3449 = vmatprep.subr.mxu0 0.0
    %3450 = vmatpush1.msra.mxu0 0.0
    %3451 = vmatprep.mubr.f32.mxu0 0.0
    %3452 = vmatmul.mubr.f32.gmra.mrb[0].mxu0 %v3102
    %v3453 = vpop.f32.mrb[0].mxu0
    %v3454 = vadd.f32 %v3080, %v3453
    %v3455 = vpop.f32.mrb[0].mxu0
    %3456 = vdwg.mxu0
    %3457 = vmatprep.subr.mxu0 0.0
    %3458 = vmatpush1.msra.mxu0 %v3032
    %3459 = vmatprep.subr.mxu0 0.0
    %3460 = vmatpush1.msra.mxu0 %v3033
    %3461 = vmatprep.subr.mxu0 0.0
    %3462 = vmatpush1.msra.mxu0 %v3034
    %3463 = vmatprep.subr.mxu0 0.0
    %3464 = vmatpush1.msra.mxu0 %v3035
    %3465 = vmatprep.subr.mxu0 0.0
    %3466 = vmatpush1.msra.mxu0 0.0
    %3467 = vmatprep.subr.mxu0 0.0
    %3468 = vmatpush1.msra.mxu0 0.0
    %3469 = vmatprep.subr.mxu0 0.0
    %3470 = vmatpush1.msra.mxu0 0.0
    %3471 = vmatprep.subr.mxu0 0.0
    %3472 = vmatpush1.msra.mxu0 0.0
    %3473 = vmatprep.subr.mxu0 0.0
    %3474 = vmatpush1.msra.mxu0 0.0
    %3475 = vmatprep.subr.mxu0 0.0
    %3476 = vmatpush1.msra.mxu0 0.0
    %3477 = vmatprep.subr.mxu0 0.0
    %3478 = vmatpush1.msra.mxu0 0.0
    %3479 = vmatprep.subr.mxu0 0.0
    %3480 = vmatpush1.msra.mxu0 0.0
    %3481 = vmatprep.subr.mxu0 0.0
    %3482 = vmatpush1.msra.mxu0 0.0
    %3483 = vmatprep.subr.mxu0 0.0
    %3484 = vmatpush1.msra.mxu0 0.0
    %3485 = vmatprep.subr.mxu0 0.0
    %3486 = vmatpush1.msra.mxu0 0.0
    %3487 = vmatprep.subr.mxu0 0.0
    %3488 = vmatpush1.msra.mxu0 0.0
    %3489 = vmatprep.subr.mxu0 0.0
    %3490 = vmatpush1.msra.mxu0 0.0
    %3491 = vmatprep.subr.mxu0 0.0
    %3492 = vmatpush1.msra.mxu0 0.0
    %3493 = vmatprep.subr.mxu0 0.0
    %3494 = vmatpush1.msra.mxu0 0.0
    %3495 = vmatprep.subr.mxu0 0.0
    %3496 = vmatpush1.msra.mxu0 0.0
    %3497 = vmatprep.subr.mxu0 0.0
    %3498 = vmatpush1.msra.mxu0 0.0
    %3499 = vmatprep.subr.mxu0 0.0
    %3500 = vmatpush1.msra.mxu0 0.0
    %3501 = vmatprep.subr.mxu0 0.0
    %3502 = vmatpush1.msra.mxu0 0.0
    %3503 = vmatprep.subr.mxu0 0.0
    %3504 = vmatpush1.msra.mxu0 0.0
    %3505 = vmatprep.subr.mxu0 0.0
    %3506 = vmatpush1.msra.mxu0 0.0
    %3507 = vmatprep.subr.mxu0 0.0
    %3508 = vmatpush1.msra.mxu0 0.0
    %3509 = vmatprep.subr.mxu0 0.0
    %3510 = vmatpush1.msra.mxu0 0.0
    %3511 = vmatprep.subr.mxu0 0.0
    %3512 = vmatpush1.msra.mxu0 0.0
    %3513 = vmatprep.subr.mxu0 0.0
    %3514 = vmatpush1.msra.mxu0 0.0
    %3515 = vmatprep.subr.mxu0 0.0
    %3516 = vmatpush1.msra.mxu0 0.0
    %3517 = vmatprep.subr.mxu0 0.0
    %3518 = vmatpush1.msra.mxu0 0.0
    %3519 = vmatprep.subr.mxu0 0.0
    %3520 = vmatpush1.msra.mxu0 0.0
    %3521 = vmatprep.mubr.f32.mxu0 0.0
    %3522 = vmatmul.mubr.f32.gmra.mrb[0].mxu0 %v3175
    %v3523 = vpop.f32.mrb[0].mxu0
    %v3524 = vadd.f32 %v3084, %v3523
    %v3525 = vpop.f32.mrb[0].mxu0
    %3526 = vdwg.mxu0
    %3527 = vmatprep.subr.mxu0 0.0
    %3528 = vmatpush1.msra.mxu0 %v3036
    %3529 = vmatprep.subr.mxu0 0.0
    %3530 = vmatpush1.msra.mxu0 %v3037
    %3531 = vmatprep.subr.mxu0 0.0
    %3532 = vmatpush1.msra.mxu0 %v3038
    %3533 = vmatprep.subr.mxu0 0.0
    %3534 = vmatpush1.msra.mxu0 %v3039
    %3535 = vmatprep.subr.mxu0 0.0
    %3536 = vmatpush1.msra.mxu0 0.0
    %3537 = vmatprep.subr.mxu0 0.0
    %3538 = vmatpush1.msra.mxu0 0.0
    %3539 = vmatprep.subr.mxu0 0.0
    %3540 = vmatpush1.msra.mxu0 0.0
    %3541 = vmatprep.subr.mxu0 0.0
    %3542 = vmatpush1.msra.mxu0 0.0
    %3543 = vmatprep.subr.mxu0 0.0
    %3544 = vmatpush1.msra.mxu0 0.0
    %3545 = vmatprep.subr.mxu0 0.0
    %3546 = vmatpush1.msra.mxu0 0.0
    %3547 = vmatprep.subr.mxu0 0.0
    %3548 = vmatpush1.msra.mxu0 0.0
    %3549 = vmatprep.subr.mxu0 0.0
    %3550 = vmatpush1.msra.mxu0 0.0
    %3551 = vmatprep.subr.mxu0 0.0
    %3552 = vmatpush1.msra.mxu0 0.0
    %3553 = vmatprep.subr.mxu0 0.0
    %3554 = vmatpush1.msra.mxu0 0.0
    %3555 = vmatprep.subr.mxu0 0.0
    %3556 = vmatpush1.msra.mxu0 0.0
    %3557 = vmatprep.subr.mxu0 0.0
    %3558 = vmatpush1.msra.mxu0 0.0
    %3559 = vmatprep.subr.mxu0 0.0
    %3560 = vmatpush1.msra.mxu0 0.0
    %3561 = vmatprep.subr.mxu0 0.0
    %3562 = vmatpush1.msra.mxu0 0.0
    %3563 = vmatprep.subr.mxu0 0.0
    %3564 = vmatpush1.msra.mxu0 0.0
    %3565 = vmatprep.subr.mxu0 0.0
    %3566 = vmatpush1.msra.mxu0 0.0
    %3567 = vmatprep.subr.mxu0 0.0
    %3568 = vmatpush1.msra.mxu0 0.0
    %3569 = vmatprep.subr.mxu0 0.0
    %3570 = vmatpush1.msra.mxu0 0.0
    %3571 = vmatprep.subr.mxu0 0.0
    %3572 = vmatpush1.msra.mxu0 0.0
    %3573 = vmatprep.subr.mxu0 0.0
    %3574 = vmatpush1.msra.mxu0 0.0
    %3575 = vmatprep.subr.mxu0 0.0
    %3576 = vmatpush1.msra.mxu0 0.0
    %3577 = vmatprep.subr.mxu0 0.0
    %3578 = vmatpush1.msra.mxu0 0.0
    %3579 = vmatprep.subr.mxu0 0.0
    %3580 = vmatpush1.msra.mxu0 0.0
    %3581 = vmatprep.subr.mxu0 0.0
    %3582 = vmatpush1.msra.mxu0 0.0
    %3583 = vmatprep.subr.mxu0 0.0
    %3584 = vmatpush1.msra.mxu0 0.0
    %3585 = vmatprep.subr.mxu0 0.0
    %3586 = vmatpush1.msra.mxu0 0.0
    %3587 = vmatprep.subr.mxu0 0.0
    %3588 = vmatpush1.msra.mxu0 0.0
    %3589 = vmatprep.subr.mxu0 0.0
    %3590 = vmatpush1.msra.mxu0 0.0
    %3591 = vmatprep.mubr.f32.mxu0 0.0
    %3592 = vmatmul.mubr.f32.gmra.mrb[0].mxu0 %v3102
    %v3593 = vpop.f32.mrb[0].mxu0
    %v3594 = vadd.f32 %v3088, %v3593
    %v3595 = vpop.f32.mrb[0].mxu0
    %3596 = vdwg.mxu0
    %3597 = vmatprep.subr.mxu0 0.0
    %3598 = vmatpush1.msra.mxu0 %v3040
    %3599 = vmatprep.subr.mxu0 0.0
    %3600 = vmatpush1.msra.mxu0 %v3041
    %3601 = vmatprep.subr.mxu0 0.0
    %3602 = vmatpush1.msra.mxu0 %v3042
    %3603 = vmatprep.subr.mxu0 0.0
    %3604 = vmatpush1.msra.mxu0 %v3043
    %3605 = vmatprep.subr.mxu0 0.0
    %3606 = vmatpush1.msra.mxu0 0.0
    %3607 = vmatprep.subr.mxu0 0.0
    %3608 = vmatpush1.msra.mxu0 0.0
    %3609 = vmatprep.subr.mxu0 0.0
    %3610 = vmatpush1.msra.mxu0 0.0
    %3611 = vmatprep.subr.mxu0 0.0
    %3612 = vmatpush1.msra.mxu0 0.0
    %3613 = vmatprep.subr.mxu0 0.0
    %3614 = vmatpush1.msra.mxu0 0.0
    %3615 = vmatprep.subr.mxu0 0.0
    %3616 = vmatpush1.msra.mxu0 0.0
    %3617 = vmatprep.subr.mxu0 0.0
    %3618 = vmatpush1.msra.mxu0 0.0
    %3619 = vmatprep.subr.mxu0 0.0
    %3620 = vmatpush1.msra.mxu0 0.0
    %3621 = vmatprep.subr.mxu0 0.0
    %3622 = vmatpush1.msra.mxu0 0.0
    %3623 = vmatprep.subr.mxu0 0.0
    %3624 = vmatpush1.msra.mxu0 0.0
    %3625 = vmatprep.subr.mxu0 0.0
    %3626 = vmatpush1.msra.mxu0 0.0
    %3627 = vmatprep.subr.mxu0 0.0
    %3628 = vmatpush1.msra.mxu0 0.0
    %3629 = vmatprep.subr.mxu0 0.0
    %3630 = vmatpush1.msra.mxu0 0.0
    %3631 = vmatprep.subr.mxu0 0.0
    %3632 = vmatpush1.msra.mxu0 0.0
    %3633 = vmatprep.subr.mxu0 0.0
    %3634 = vmatpush1.msra.mxu0 0.0
    %3635 = vmatprep.subr.mxu0 0.0
    %3636 = vmatpush1.msra.mxu0 0.0
    %3637 = vmatprep.subr.mxu0 0.0
    %3638 = vmatpush1.msra.mxu0 0.0
    %3639 = vmatprep.subr.mxu0 0.0
    %3640 = vmatpush1.msra.mxu0 0.0
    %3641 = vmatprep.subr.mxu0 0.0
    %3642 = vmatpush1.msra.mxu0 0.0
    %3643 = vmatprep.subr.mxu0 0.0
    %3644 = vmatpush1.msra.mxu0 0.0
    %3645 = vmatprep.subr.mxu0 0.0
    %3646 = vmatpush1.msra.mxu0 0.0
    %3647 = vmatprep.subr.mxu0 0.0
    %3648 = vmatpush1.msra.mxu0 0.0
    %3649 = vmatprep.subr.mxu0 0.0
    %3650 = vmatpush1.msra.mxu0 0.0
    %3651 = vmatprep.subr.mxu0 0.0
    %3652 = vmatpush1.msra.mxu0 0.0
    %3653 = vmatprep.subr.mxu0 0.0
    %3654 = vmatpush1.msra.mxu0 0.0
    %3655 = vmatprep.subr.mxu0 0.0
    %3656 = vmatpush1.msra.mxu0 0.0
    %3657 = vmatprep.subr.mxu0 0.0
    %3658 = vmatpush1.msra.mxu0 0.0
    %3659 = vmatprep.subr.mxu0 0.0
    %3660 = vmatpush1.msra.mxu0 0.0
    %3661 = vmatprep.mubr.f32.mxu0 0.0
    %3662 = vmatmul.mubr.f32.gmra.mrb[0].mxu0 %v3175
    %v3663 = vpop.f32.mrb[0].mxu0
    %v3664 = vadd.f32 %v3092, %v3663
    %v3665 = vpop.f32.mrb[0].mxu0
    %3666 = vdwg.mxu0
    %3668 = vrot.lane.b32.xlu0 %v3171, 120
    %v3669 = vpop.permute.xlu0 %3668
    %v3670 = vsel %vm759, %v3171, 0
    %v3672 = vsel %vm759, %v3669, 0
    %3674 = vmatprep.subr.mxu0 0.0
    %3675 = vmatpush1.xpose.msra.mxu0 %v3672
    %3676 = vmatprep.subr.mxu0 0.0
    %3677 = vmatpush1.xpose.msra.mxu0 0.0
    %3678 = vmatprep.subr.mxu0 0.0
    %3679 = vmatpush1.xpose.msra.mxu0 0.0
    %3680 = vmatprep.subr.mxu0 0.0
    %3681 = vmatpush1.xpose.msra.mxu0 0.0
    %3682 = vmatprep.subr.mxu0 0.0
    %3683 = vmatpush1.xpose.msra.mxu0 0.0
    %3684 = vmatprep.subr.mxu0 0.0
    %3685 = vmatpush1.xpose.msra.mxu0 0.0
    %3686 = vmatprep.subr.mxu0 0.0
    %3687 = vmatpush1.xpose.msra.mxu0 0.0
    %3688 = vmatprep.subr.mxu0 0.0
    %3689 = vmatpush1.xpose.msra.mxu0 0.0
    %3690 = vmatprep.subr.mxu0 0.0
    %3691 = vmatpush1.xpose.msra.mxu0 0.0
    %3692 = vmatprep.subr.mxu0 0.0
    %3693 = vmatpush1.xpose.msra.mxu0 0.0
    %3694 = vmatprep.subr.mxu0 0.0
    %3695 = vmatpush1.xpose.msra.mxu0 0.0
    %3696 = vmatprep.subr.mxu0 0.0
    %3697 = vmatpush1.xpose.msra.mxu0 0.0
    %3698 = vmatprep.subr.mxu0 0.0
    %3699 = vmatpush1.xpose.msra.mxu0 0.0
    %3700 = vmatprep.subr.mxu0 0.0
    %3701 = vmatpush1.xpose.msra.mxu0 0.0
    %3702 = vmatprep.subr.mxu0 0.0
    %3703 = vmatpush1.xpose.msra.mxu0 0.0
    %3704 = vmatprep.subr.mxu0 0.0
    %3705 = vmatpush1.xpose.msra.mxu0 0.0
    %3706 = vmatprep.subr.mxu0 0.0
    %3707 = vmatpush1.xpose.msra.mxu0 0.0
    %3708 = vmatprep.subr.mxu0 0.0
    %3709 = vmatpush1.xpose.msra.mxu0 0.0
    %3710 = vmatprep.subr.mxu0 0.0
    %3711 = vmatpush1.xpose.msra.mxu0 0.0
    %3712 = vmatprep.subr.mxu0 0.0
    %3713 = vmatpush1.xpose.msra.mxu0 0.0
    %3714 = vmatprep.subr.mxu0 0.0
    %3715 = vmatpush1.xpose.msra.mxu0 0.0
    %3716 = vmatprep.subr.mxu0 0.0
    %3717 = vmatpush1.xpose.msra.mxu0 0.0
    %3718 = vmatprep.subr.mxu0 0.0
    %3719 = vmatpush1.xpose.msra.mxu0 0.0
    %3720 = vmatprep.subr.mxu0 0.0
    %3721 = vmatpush1.xpose.msra.mxu0 0.0
    %3722 = vmatprep.subr.mxu0 0.0
    %3723 = vmatpush1.xpose.msra.mxu0 0.0
    %3724 = vmatprep.subr.mxu0 0.0
    %3725 = vmatpush1.xpose.msra.mxu0 0.0
    %3726 = vmatprep.subr.mxu0 0.0
    %3727 = vmatpush1.xpose.msra.mxu0 0.0
    %3728 = vmatprep.subr.mxu0 0.0
    %3729 = vmatpush1.xpose.msra.mxu0 0.0
    %3730 = vmatprep.subr.mxu0 0.0
    %3731 = vmatpush1.xpose.msra.mxu0 0.0
    %3732 = vmatprep.subr.mxu0 0.0
    %3733 = vmatpush1.xpose.msra.mxu0 0.0
    %3734 = vmatprep.subr.mxu0 0.0
    %3735 = vmatpush1.xpose.msra.mxu0 0.0
    %3736 = vmatprep.subr.mxu0 0.0
    %3737 = vmatpush1.xpose.msra.mxu0 0.0
    %3738 = vmatprep.mubr.f32.mxu0 0.0
    %3739 = vmatmul.mubr.f32.gmra.mrb[0].mxu0 %v3670
    %v3740 = vpop.f32.mrb[0].mxu0
    %v3741 = vadd.f32 0.0, %v3740
    %v3742 = vpop.f32.mrb[0].mxu0
    %3743 = vdwg.mxu0
    %3745 = vrot.lane.b32.xlu0 %v3244, 120
    %v3746 = vpop.permute.xlu0 %3745
    %v3747 = vsel %vm759, %v3244, 0
    %v3749 = vsel %vm759, %v3746, 0
    %3751 = vmatprep.subr.mxu0 0.0
    %3752 = vmatpush1.xpose.msra.mxu0 %v3749
    %3753 = vmatprep.subr.mxu0 0.0
    %3754 = vmatpush1.xpose.msra.mxu0 0.0
    %3755 = vmatprep.subr.mxu0 0.0
    %3756 = vmatpush1.xpose.msra.mxu0 0.0
    %3757 = vmatprep.subr.mxu0 0.0
    %3758 = vmatpush1.xpose.msra.mxu0 0.0
    %3759 = vmatprep.subr.mxu0 0.0
    %3760 = vmatpush1.xpose.msra.mxu0 0.0
    %3761 = vmatprep.subr.mxu0 0.0
    %3762 = vmatpush1.xpose.msra.mxu0 0.0
    %3763 = vmatprep.subr.mxu0 0.0
    %3764 = vmatpush1.xpose.msra.mxu0 0.0
    %3765 = vmatprep.subr.mxu0 0.0
    %3766 = vmatpush1.xpose.msra.mxu0 0.0
    %3767 = vmatprep.subr.mxu0 0.0
    %3768 = vmatpush1.xpose.msra.mxu0 0.0
    %3769 = vmatprep.subr.mxu0 0.0
    %3770 = vmatpush1.xpose.msra.mxu0 0.0
    %3771 = vmatprep.subr.mxu0 0.0
    %3772 = vmatpush1.xpose.msra.mxu0 0.0
    %3773 = vmatprep.subr.mxu0 0.0
    %3774 = vmatpush1.xpose.msra.mxu0 0.0
    %3775 = vmatprep.subr.mxu0 0.0
    %3776 = vmatpush1.xpose.msra.mxu0 0.0
    %3777 = vmatprep.subr.mxu0 0.0
    %3778 = vmatpush1.xpose.msra.mxu0 0.0
    %3779 = vmatprep.subr.mxu0 0.0
    %3780 = vmatpush1.xpose.msra.mxu0 0.0
    %3781 = vmatprep.subr.mxu0 0.0
    %3782 = vmatpush1.xpose.msra.mxu0 0.0
    %3783 = vmatprep.subr.mxu0 0.0
    %3784 = vmatpush1.xpose.msra.mxu0 0.0
    %3785 = vmatprep.subr.mxu0 0.0
    %3786 = vmatpush1.xpose.msra.mxu0 0.0
    %3787 = vmatprep.subr.mxu0 0.0
    %3788 = vmatpush1.xpose.msra.mxu0 0.0
    %3789 = vmatprep.subr.mxu0 0.0
    %3790 = vmatpush1.xpose.msra.mxu0 0.0
    %3791 = vmatprep.subr.mxu0 0.0
    %3792 = vmatpush1.xpose.msra.mxu0 0.0
    %3793 = vmatprep.subr.mxu0 0.0
    %3794 = vmatpush1.xpose.msra.mxu0 0.0
    %3795 = vmatprep.subr.mxu0 0.0
    %3796 = vmatpush1.xpose.msra.mxu0 0.0
    %3797 = vmatprep.subr.mxu0 0.0
    %3798 = vmatpush1.xpose.msra.mxu0 0.0
    %3799 = vmatprep.subr.mxu0 0.0
    %3800 = vmatpush1.xpose.msra.mxu0 0.0
    %3801 = vmatprep.subr.mxu0 0.0
    %3802 = vmatpush1.xpose.msra.mxu0 0.0
    %3803 = vmatprep.subr.mxu0 0.0
    %3804 = vmatpush1.xpose.msra.mxu0 0.0
    %3805 = vmatprep.subr.mxu0 0.0
    %3806 = vmatpush1.xpose.msra.mxu0 0.0
    %3807 = vmatprep.subr.mxu0 0.0
    %3808 = vmatpush1.xpose.msra.mxu0 0.0
    %3809 = vmatprep.subr.mxu0 0.0
    %3810 = vmatpush1.xpose.msra.mxu0 0.0
    %3811 = vmatprep.subr.mxu0 0.0
    %3812 = vmatpush1.xpose.msra.mxu0 0.0
    %3813 = vmatprep.subr.mxu0 0.0
    %3814 = vmatpush1.xpose.msra.mxu0 0.0
    %3815 = vmatprep.mubr.f32.mxu0 0.0
    %3816 = vmatmul.mubr.f32.gmra.mrb[0].mxu0 %v3747
    %v3817 = vpop.f32.mrb[0].mxu0
    %v3818 = vadd.f32 0.0, %v3817
    %v3819 = vpop.f32.mrb[0].mxu0
    %3820 = vdwg.mxu0
    %3822 = vrot.lane.b32.xlu0 %v3314, 120
    %v3823 = vpop.permute.xlu0 %3822
    %v3824 = vsel %vm759, %v3314, 0
    %v3826 = vsel %vm759, %v3823, 0
    %3828 = vmatprep.subr.mxu0 0.0
    %3829 = vmatpush1.xpose.msra.mxu0 %v3826
    %3830 = vmatprep.subr.mxu0 0.0
    %3831 = vmatpush1.xpose.msra.mxu0 0.0
    %3832 = vmatprep.subr.mxu0 0.0
    %3833 = vmatpush1.xpose.msra.mxu0 0.0
    %3834 = vmatprep.subr.mxu0 0.0
    %3835 = vmatpush1.xpose.msra.mxu0 0.0
    %3836 = vmatprep.subr.mxu0 0.0
    %3837 = vmatpush1.xpose.msra.mxu0 0.0
    %3838 = vmatprep.subr.mxu0 0.0
    %3839 = vmatpush1.xpose.msra.mxu0 0.0
    %3840 = vmatprep.subr.mxu0 0.0
    %3841 = vmatpush1.xpose.msra.mxu0 0.0
    %3842 = vmatprep.subr.mxu0 0.0
    %3843 = vmatpush1.xpose.msra.mxu0 0.0
    %3844 = vmatprep.subr.mxu0 0.0
    %3845 = vmatpush1.xpose.msra.mxu0 0.0
    %3846 = vmatprep.subr.mxu0 0.0
    %3847 = vmatpush1.xpose.msra.mxu0 0.0
    %3848 = vmatprep.subr.mxu0 0.0
    %3849 = vmatpush1.xpose.msra.mxu0 0.0
    %3850 = vmatprep.subr.mxu0 0.0
    %3851 = vmatpush1.xpose.msra.mxu0 0.0
    %3852 = vmatprep.subr.mxu0 0.0
    %3853 = vmatpush1.xpose.msra.mxu0 0.0
    %3854 = vmatprep.subr.mxu0 0.0
    %3855 = vmatpush1.xpose.msra.mxu0 0.0
    %3856 = vmatprep.subr.mxu0 0.0
    %3857 = vmatpush1.xpose.msra.mxu0 0.0
    %3858 = vmatprep.subr.mxu0 0.0
    %3859 = vmatpush1.xpose.msra.mxu0 0.0
    %3860 = vmatprep.subr.mxu0 0.0
    %3861 = vmatpush1.xpose.msra.mxu0 0.0
    %3862 = vmatprep.subr.mxu0 0.0
    %3863 = vmatpush1.xpose.msra.mxu0 0.0
    %3864 = vmatprep.subr.mxu0 0.0
    %3865 = vmatpush1.xpose.msra.mxu0 0.0
    %3866 = vmatprep.subr.mxu0 0.0
    %3867 = vmatpush1.xpose.msra.mxu0 0.0
    %3868 = vmatprep.subr.mxu0 0.0
    %3869 = vmatpush1.xpose.msra.mxu0 0.0
    %3870 = vmatprep.subr.mxu0 0.0
    %3871 = vmatpush1.xpose.msra.mxu0 0.0
    %3872 = vmatprep.subr.mxu0 0.0
    %3873 = vmatpush1.xpose.msra.mxu0 0.0
    %3874 = vmatprep.subr.mxu0 0.0
    %3875 = vmatpush1.xpose.msra.mxu0 0.0
    %3876 = vmatprep.subr.mxu0 0.0
    %3877 = vmatpush1.xpose.msra.mxu0 0.0
    %3878 = vmatprep.subr.mxu0 0.0
    %3879 = vmatpush1.xpose.msra.mxu0 0.0
    %3880 = vmatprep.subr.mxu0 0.0
    %3881 = vmatpush1.xpose.msra.mxu0 0.0
    %3882 = vmatprep.subr.mxu0 0.0
    %3883 = vmatpush1.xpose.msra.mxu0 0.0
    %3884 = vmatprep.subr.mxu0 0.0
    %3885 = vmatpush1.xpose.msra.mxu0 0.0
    %3886 = vmatprep.subr.mxu0 0.0
    %3887 = vmatpush1.xpose.msra.mxu0 0.0
    %3888 = vmatprep.subr.mxu0 0.0
    %3889 = vmatpush1.xpose.msra.mxu0 0.0
    %3890 = vmatprep.subr.mxu0 0.0
    %3891 = vmatpush1.xpose.msra.mxu0 0.0
    %3892 = vmatprep.mubr.f32.mxu0 0.0
    %3893 = vmatmul.mubr.f32.gmra.mrb[0].mxu0 %v3824
    %v3894 = vpop.f32.mrb[0].mxu0
    %v3895 = vadd.f32 0.0, %v3894
    %v3896 = vpop.f32.mrb[0].mxu0
    %3897 = vdwg.mxu0
    %3899 = vrot.lane.b32.xlu0 %v3384, 120
    %v3900 = vpop.permute.xlu0 %3899
    %v3901 = vsel %vm759, %v3384, 0
    %v3903 = vsel %vm759, %v3900, 0
    %3905 = vmatprep.subr.mxu0 0.0
    %3906 = vmatpush1.xpose.msra.mxu0 %v3903
    %3907 = vmatprep.subr.mxu0 0.0
    %3908 = vmatpush1.xpose.msra.mxu0 0.0
    %3909 = vmatprep.subr.mxu0 0.0
    %3910 = vmatpush1.xpose.msra.mxu0 0.0
    %3911 = vmatprep.subr.mxu0 0.0
    %3912 = vmatpush1.xpose.msra.mxu0 0.0
    %3913 = vmatprep.subr.mxu0 0.0
    %3914 = vmatpush1.xpose.msra.mxu0 0.0
    %3915 = vmatprep.subr.mxu0 0.0
    %3916 = vmatpush1.xpose.msra.mxu0 0.0
    %3917 = vmatprep.subr.mxu0 0.0
    %3918 = vmatpush1.xpose.msra.mxu0 0.0
    %3919 = vmatprep.subr.mxu0 0.0
    %3920 = vmatpush1.xpose.msra.mxu0 0.0
    %3921 = vmatprep.subr.mxu0 0.0
    %3922 = vmatpush1.xpose.msra.mxu0 0.0
    %3923 = vmatprep.subr.mxu0 0.0
    %3924 = vmatpush1.xpose.msra.mxu0 0.0
    %3925 = vmatprep.subr.mxu0 0.0
    %3926 = vmatpush1.xpose.msra.mxu0 0.0
    %3927 = vmatprep.subr.mxu0 0.0
    %3928 = vmatpush1.xpose.msra.mxu0 0.0
    %3929 = vmatprep.subr.mxu0 0.0
    %3930 = vmatpush1.xpose.msra.mxu0 0.0
    %3931 = vmatprep.subr.mxu0 0.0
    %3932 = vmatpush1.xpose.msra.mxu0 0.0
    %3933 = vmatprep.subr.mxu0 0.0
    %3934 = vmatpush1.xpose.msra.mxu0 0.0
    %3935 = vmatprep.subr.mxu0 0.0
    %3936 = vmatpush1.xpose.msra.mxu0 0.0
    %3937 = vmatprep.subr.mxu0 0.0
    %3938 = vmatpush1.xpose.msra.mxu0 0.0
    %3939 = vmatprep.subr.mxu0 0.0
    %3940 = vmatpush1.xpose.msra.mxu0 0.0
    %3941 = vmatprep.subr.mxu0 0.0
    %3942 = vmatpush1.xpose.msra.mxu0 0.0
    %3943 = vmatprep.subr.mxu0 0.0
    %3944 = vmatpush1.xpose.msra.mxu0 0.0
    %3945 = vmatprep.subr.mxu0 0.0
    %3946 = vmatpush1.xpose.msra.mxu0 0.0
    %3947 = vmatprep.subr.mxu0 0.0
    %3948 = vmatpush1.xpose.msra.mxu0 0.0
    %3949 = vmatprep.subr.mxu0 0.0
    %3950 = vmatpush1.xpose.msra.mxu0 0.0
    %3951 = vmatprep.subr.mxu0 0.0
    %3952 = vmatpush1.xpose.msra.mxu0 0.0
    %3953 = vmatprep.subr.mxu0 0.0
    %3954 = vmatpush1.xpose.msra.mxu0 0.0
    %3955 = vmatprep.subr.mxu0 0.0
    %3956 = vmatpush1.xpose.msra.mxu0 0.0
    %3957 = vmatprep.subr.mxu0 0.0
    %3958 = vmatpush1.xpose.msra.mxu0 0.0
    %3959 = vmatprep.subr.mxu0 0.0
    %3960 = vmatpush1.xpose.msra.mxu0 0.0
    %3961 = vmatprep.subr.mxu0 0.0
    %3962 = vmatpush1.xpose.msra.mxu0 0.0
    %3963 = vmatprep.subr.mxu0 0.0
    %3964 = vmatpush1.xpose.msra.mxu0 0.0
    %3965 = vmatprep.subr.mxu0 0.0
    %3966 = vmatpush1.xpose.msra.mxu0 0.0
    %3967 = vmatprep.subr.mxu0 0.0
    %3968 = vmatpush1.xpose.msra.mxu0 0.0
    %3969 = vmatprep.mubr.f32.mxu0 0.0
    %3970 = vmatmul.mubr.f32.gmra.mrb[0].mxu0 %v3901
    %v3971 = vpop.f32.mrb[0].mxu0
    %v3972 = vadd.f32 0.0, %v3971
    %v3973 = vpop.f32.mrb[0].mxu0
    %3974 = vdwg.mxu0
    %3976 = vrot.lane.b32.xlu0 %v3454, 120
    %v3977 = vpop.permute.xlu0 %3976
    %v3978 = vsel %vm759, %v3454, 0
    %v3980 = vsel %vm759, %v3977, 0
    %3982 = vmatprep.subr.mxu0 0.0
    %3983 = vmatpush1.xpose.msra.mxu0 %v3980
    %3984 = vmatprep.subr.mxu0 0.0
    %3985 = vmatpush1.xpose.msra.mxu0 0.0
    %3986 = vmatprep.subr.mxu0 0.0
    %3987 = vmatpush1.xpose.msra.mxu0 0.0
    %3988 = vmatprep.subr.mxu0 0.0
    %3989 = vmatpush1.xpose.msra.mxu0 0.0
    %3990 = vmatprep.subr.mxu0 0.0
    %3991 = vmatpush1.xpose.msra.mxu0 0.0
    %3992 = vmatprep.subr.mxu0 0.0
    %3993 = vmatpush1.xpose.msra.mxu0 0.0
    %3994 = vmatprep.subr.mxu0 0.0
    %3995 = vmatpush1.xpose.msra.mxu0 0.0
    %3996 = vmatprep.subr.mxu0 0.0
    %3997 = vmatpush1.xpose.msra.mxu0 0.0
    %3998 = vmatprep.subr.mxu0 0.0
    %3999 = vmatpush1.xpose.msra.mxu0 0.0
    %4000 = vmatprep.subr.mxu0 0.0
    %4001 = vmatpush1.xpose.msra.mxu0 0.0
    %4002 = vmatprep.subr.mxu0 0.0
    %4003 = vmatpush1.xpose.msra.mxu0 0.0
    %4004 = vmatprep.subr.mxu0 0.0
    %4005 = vmatpush1.xpose.msra.mxu0 0.0
    %4006 = vmatprep.subr.mxu0 0.0
    %4007 = vmatpush1.xpose.msra.mxu0 0.0
    %4008 = vmatprep.subr.mxu0 0.0
    %4009 = vmatpush1.xpose.msra.mxu0 0.0
    %4010 = vmatprep.subr.mxu0 0.0
    %4011 = vmatpush1.xpose.msra.mxu0 0.0
    %4012 = vmatprep.subr.mxu0 0.0
    %4013 = vmatpush1.xpose.msra.mxu0 0.0
    %4014 = vmatprep.subr.mxu0 0.0
    %4015 = vmatpush1.xpose.msra.mxu0 0.0
    %4016 = vmatprep.subr.mxu0 0.0
    %4017 = vmatpush1.xpose.msra.mxu0 0.0
    %4018 = vmatprep.subr.mxu0 0.0
    %4019 = vmatpush1.xpose.msra.mxu0 0.0
    %4020 = vmatprep.subr.mxu0 0.0
    %4021 = vmatpush1.xpose.msra.mxu0 0.0
    %4022 = vmatprep.subr.mxu0 0.0
    %4023 = vmatpush1.xpose.msra.mxu0 0.0
    %4024 = vmatprep.subr.mxu0 0.0
    %4025 = vmatpush1.xpose.msra.mxu0 0.0
    %4026 = vmatprep.subr.mxu0 0.0
    %4027 = vmatpush1.xpose.msra.mxu0 0.0
    %4028 = vmatprep.subr.mxu0 0.0
    %4029 = vmatpush1.xpose.msra.mxu0 0.0
    %4030 = vmatprep.subr.mxu0 0.0
    %4031 = vmatpush1.xpose.msra.mxu0 0.0
    %4032 = vmatprep.subr.mxu0 0.0
    %4033 = vmatpush1.xpose.msra.mxu0 0.0
    %4034 = vmatprep.subr.mxu0 0.0
    %4035 = vmatpush1.xpose.msra.mxu0 0.0
    %4036 = vmatprep.subr.mxu0 0.0
    %4037 = vmatpush1.xpose.msra.mxu0 0.0
    %4038 = vmatprep.subr.mxu0 0.0
    %4039 = vmatpush1.xpose.msra.mxu0 0.0
    %4040 = vmatprep.subr.mxu0 0.0
    %4041 = vmatpush1.xpose.msra.mxu0 0.0
    %4042 = vmatprep.subr.mxu0 0.0
    %4043 = vmatpush1.xpose.msra.mxu0 0.0
    %4044 = vmatprep.subr.mxu0 0.0
    %4045 = vmatpush1.xpose.msra.mxu0 0.0
    %4046 = vmatprep.mubr.f32.mxu0 0.0
    %4047 = vmatmul.mubr.f32.gmra.mrb[0].mxu0 %v3978
    %v4048 = vpop.f32.mrb[0].mxu0
    %v4049 = vadd.f32 0.0, %v4048
    %v4050 = vpop.f32.mrb[0].mxu0
    %4051 = vdwg.mxu0
    %4053 = vrot.lane.b32.xlu0 %v3524, 120
    %v4054 = vpop.permute.xlu0 %4053
    %v4055 = vsel %vm759, %v3524, 0
    %v4057 = vsel %vm759, %v4054, 0
    %4059 = vmatprep.subr.mxu0 0.0
    %4060 = vmatpush1.xpose.msra.mxu0 %v4057
    %4061 = vmatprep.subr.mxu0 0.0
    %4062 = vmatpush1.xpose.msra.mxu0 0.0
    %4063 = vmatprep.subr.mxu0 0.0
    %4064 = vmatpush1.xpose.msra.mxu0 0.0
    %4065 = vmatprep.subr.mxu0 0.0
    %4066 = vmatpush1.xpose.msra.mxu0 0.0
    %4067 = vmatprep.subr.mxu0 0.0
    %4068 = vmatpush1.xpose.msra.mxu0 0.0
    %4069 = vmatprep.subr.mxu0 0.0
    %4070 = vmatpush1.xpose.msra.mxu0 0.0
    %4071 = vmatprep.subr.mxu0 0.0
    %4072 = vmatpush1.xpose.msra.mxu0 0.0
    %4073 = vmatprep.subr.mxu0 0.0
    %4074 = vmatpush1.xpose.msra.mxu0 0.0
    %4075 = vmatprep.subr.mxu0 0.0
    %4076 = vmatpush1.xpose.msra.mxu0 0.0
    %4077 = vmatprep.subr.mxu0 0.0
    %4078 = vmatpush1.xpose.msra.mxu0 0.0
    %4079 = vmatprep.subr.mxu0 0.0
    %4080 = vmatpush1.xpose.msra.mxu0 0.0
    %4081 = vmatprep.subr.mxu0 0.0
    %4082 = vmatpush1.xpose.msra.mxu0 0.0
    %4083 = vmatprep.subr.mxu0 0.0
    %4084 = vmatpush1.xpose.msra.mxu0 0.0
    %4085 = vmatprep.subr.mxu0 0.0
    %4086 = vmatpush1.xpose.msra.mxu0 0.0
    %4087 = vmatprep.subr.mxu0 0.0
    %4088 = vmatpush1.xpose.msra.mxu0 0.0
    %4089 = vmatprep.subr.mxu0 0.0
    %4090 = vmatpush1.xpose.msra.mxu0 0.0
    %4091 = vmatprep.subr.mxu0 0.0
    %4092 = vmatpush1.xpose.msra.mxu0 0.0
    %4093 = vmatprep.subr.mxu0 0.0
    %4094 = vmatpush1.xpose.msra.mxu0 0.0
    %4095 = vmatprep.subr.mxu0 0.0
    %4096 = vmatpush1.xpose.msra.mxu0 0.0
    %4097 = vmatprep.subr.mxu0 0.0
    %4098 = vmatpush1.xpose.msra.mxu0 0.0
    %4099 = vmatprep.subr.mxu0 0.0
    %4100 = vmatpush1.xpose.msra.mxu0 0.0
    %4101 = vmatprep.subr.mxu0 0.0
    %4102 = vmatpush1.xpose.msra.mxu0 0.0
    %4103 = vmatprep.subr.mxu0 0.0
    %4104 = vmatpush1.xpose.msra.mxu0 0.0
    %4105 = vmatprep.subr.mxu0 0.0
    %4106 = vmatpush1.xpose.msra.mxu0 0.0
    %4107 = vmatprep.subr.mxu0 0.0
    %4108 = vmatpush1.xpose.msra.mxu0 0.0
    %4109 = vmatprep.subr.mxu0 0.0
    %4110 = vmatpush1.xpose.msra.mxu0 0.0
    %4111 = vmatprep.subr.mxu0 0.0
    %4112 = vmatpush1.xpose.msra.mxu0 0.0
    %4113 = vmatprep.subr.mxu0 0.0
    %4114 = vmatpush1.xpose.msra.mxu0 0.0
    %4115 = vmatprep.subr.mxu0 0.0
    %4116 = vmatpush1.xpose.msra.mxu0 0.0
    %4117 = vmatprep.subr.mxu0 0.0
    %4118 = vmatpush1.xpose.msra.mxu0 0.0
    %4119 = vmatprep.subr.mxu0 0.0
    %4120 = vmatpush1.xpose.msra.mxu0 0.0
    %4121 = vmatprep.subr.mxu0 0.0
    %4122 = vmatpush1.xpose.msra.mxu0 0.0
    %4123 = vmatprep.mubr.f32.mxu0 0.0
    %4124 = vmatmul.mubr.f32.gmra.mrb[0].mxu0 %v4055
    %v4125 = vpop.f32.mrb[0].mxu0
    %v4126 = vadd.f32 0.0, %v4125
    %v4127 = vpop.f32.mrb[0].mxu0
    %4128 = vdwg.mxu0
    %4130 = vrot.lane.b32.xlu0 %v3594, 120
    %v4131 = vpop.permute.xlu0 %4130
    %v4132 = vsel %vm759, %v3594, 0
    %v4134 = vsel %vm759, %v4131, 0
    %4136 = vmatprep.subr.mxu0 0.0
    %4137 = vmatpush1.xpose.msra.mxu0 %v4134
    %4138 = vmatprep.subr.mxu0 0.0
    %4139 = vmatpush1.xpose.msra.mxu0 0.0
    %4140 = vmatprep.subr.mxu0 0.0
    %4141 = vmatpush1.xpose.msra.mxu0 0.0
    %4142 = vmatprep.subr.mxu0 0.0
    %4143 = vmatpush1.xpose.msra.mxu0 0.0
    %4144 = vmatprep.subr.mxu0 0.0
    %4145 = vmatpush1.xpose.msra.mxu0 0.0
    %4146 = vmatprep.subr.mxu0 0.0
    %4147 = vmatpush1.xpose.msra.mxu0 0.0
    %4148 = vmatprep.subr.mxu0 0.0
    %4149 = vmatpush1.xpose.msra.mxu0 0.0
    %4150 = vmatprep.subr.mxu0 0.0
    %4151 = vmatpush1.xpose.msra.mxu0 0.0
    %4152 = vmatprep.subr.mxu0 0.0
    %4153 = vmatpush1.xpose.msra.mxu0 0.0
    %4154 = vmatprep.subr.mxu0 0.0
    %4155 = vmatpush1.xpose.msra.mxu0 0.0
    %4156 = vmatprep.subr.mxu0 0.0
    %4157 = vmatpush1.xpose.msra.mxu0 0.0
    %4158 = vmatprep.subr.mxu0 0.0
    %4159 = vmatpush1.xpose.msra.mxu0 0.0
    %4160 = vmatprep.subr.mxu0 0.0
    %4161 = vmatpush1.xpose.msra.mxu0 0.0
    %4162 = vmatprep.subr.mxu0 0.0
    %4163 = vmatpush1.xpose.msra.mxu0 0.0
    %4164 = vmatprep.subr.mxu0 0.0
    %4165 = vmatpush1.xpose.msra.mxu0 0.0
    %4166 = vmatprep.subr.mxu0 0.0
    %4167 = vmatpush1.xpose.msra.mxu0 0.0
    %4168 = vmatprep.subr.mxu0 0.0
    %4169 = vmatpush1.xpose.msra.mxu0 0.0
    %4170 = vmatprep.subr.mxu0 0.0
    %4171 = vmatpush1.xpose.msra.mxu0 0.0
    %4172 = vmatprep.subr.mxu0 0.0
    %4173 = vmatpush1.xpose.msra.mxu0 0.0
    %4174 = vmatprep.subr.mxu0 0.0
    %4175 = vmatpush1.xpose.msra.mxu0 0.0
    %4176 = vmatprep.subr.mxu0 0.0
    %4177 = vmatpush1.xpose.msra.mxu0 0.0
    %4178 = vmatprep.subr.mxu0 0.0
    %4179 = vmatpush1.xpose.msra.mxu0 0.0
    %4180 = vmatprep.subr.mxu0 0.0
    %4181 = vmatpush1.xpose.msra.mxu0 0.0
    %4182 = vmatprep.subr.mxu0 0.0
    %4183 = vmatpush1.xpose.msra.mxu0 0.0
    %4184 = vmatprep.subr.mxu0 0.0
    %4185 = vmatpush1.xpose.msra.mxu0 0.0
    %4186 = vmatprep.subr.mxu0 0.0
    %4187 = vmatpush1.xpose.msra.mxu0 0.0
    %4188 = vmatprep.subr.mxu0 0.0
    %4189 = vmatpush1.xpose.msra.mxu0 0.0
    %4190 = vmatprep.subr.mxu0 0.0
    %4191 = vmatpush1.xpose.msra.mxu0 0.0
    %4192 = vmatprep.subr.mxu0 0.0
    %4193 = vmatpush1.xpose.msra.mxu0 0.0
    %4194 = vmatprep.subr.mxu0 0.0
    %4195 = vmatpush1.xpose.msra.mxu0 0.0
    %4196 = vmatprep.subr.mxu0 0.0
    %4197 = vmatpush1.xpose.msra.mxu0 0.0
    %4198 = vmatprep.subr.mxu0 0.0
    %4199 = vmatpush1.xpose.msra.mxu0 0.0
    %4200 = vmatprep.mubr.f32.mxu0 0.0
    %4201 = vmatmul.mubr.f32.gmra.mrb[0].mxu0 %v4132
    %v4202 = vpop.f32.mrb[0].mxu0
    %v4203 = vadd.f32 0.0, %v4202
    %v4204 = vpop.f32.mrb[0].mxu0
    %4205 = vdwg.mxu0
    %4207 = vrot.lane.b32.xlu0 %v3664, 120
    %v4208 = vpop.permute.xlu0 %4207
    %v4209 = vsel %vm759, %v3664, 0
    %v4211 = vsel %vm759, %v4208, 0
    %4213 = vmatprep.subr.mxu0 0.0
    %4214 = vmatpush1.xpose.msra.mxu0 %v4211
    %4215 = vmatprep.subr.mxu0 0.0
    %4216 = vmatpush1.xpose.msra.mxu0 0.0
    %4217 = vmatprep.subr.mxu0 0.0
    %4218 = vmatpush1.xpose.msra.mxu0 0.0
    %4219 = vmatprep.subr.mxu0 0.0
    %4220 = vmatpush1.xpose.msra.mxu0 0.0
    %4221 = vmatprep.subr.mxu0 0.0
    %4222 = vmatpush1.xpose.msra.mxu0 0.0
    %4223 = vmatprep.subr.mxu0 0.0
    %4224 = vmatpush1.xpose.msra.mxu0 0.0
    %4225 = vmatprep.subr.mxu0 0.0
    %4226 = vmatpush1.xpose.msra.mxu0 0.0
    %4227 = vmatprep.subr.mxu0 0.0
    %4228 = vmatpush1.xpose.msra.mxu0 0.0
    %4229 = vmatprep.subr.mxu0 0.0
    %4230 = vmatpush1.xpose.msra.mxu0 0.0
    %4231 = vmatprep.subr.mxu0 0.0
    %4232 = vmatpush1.xpose.msra.mxu0 0.0
    %4233 = vmatprep.subr.mxu0 0.0
    %4234 = vmatpush1.xpose.msra.mxu0 0.0
    %4235 = vmatprep.subr.mxu0 0.0
    %4236 = vmatpush1.xpose.msra.mxu0 0.0
    %4237 = vmatprep.subr.mxu0 0.0
    %4238 = vmatpush1.xpose.msra.mxu0 0.0
    %4239 = vmatprep.subr.mxu0 0.0
    %4240 = vmatpush1.xpose.msra.mxu0 0.0
    %4241 = vmatprep.subr.mxu0 0.0
    %4242 = vmatpush1.xpose.msra.mxu0 0.0
    %4243 = vmatprep.subr.mxu0 0.0
    %4244 = vmatpush1.xpose.msra.mxu0 0.0
    %4245 = vmatprep.subr.mxu0 0.0
    %4246 = vmatpush1.xpose.msra.mxu0 0.0
    %4247 = vmatprep.subr.mxu0 0.0
    %4248 = vmatpush1.xpose.msra.mxu0 0.0
    %4249 = vmatprep.subr.mxu0 0.0
    %4250 = vmatpush1.xpose.msra.mxu0 0.0
    %4251 = vmatprep.subr.mxu0 0.0
    %4252 = vmatpush1.xpose.msra.mxu0 0.0
    %4253 = vmatprep.subr.mxu0 0.0
    %4254 = vmatpush1.xpose.msra.mxu0 0.0
    %4255 = vmatprep.subr.mxu0 0.0
    %4256 = vmatpush1.xpose.msra.mxu0 0.0
    %4257 = vmatprep.subr.mxu0 0.0
    %4258 = vmatpush1.xpose.msra.mxu0 0.0
    %4259 = vmatprep.subr.mxu0 0.0
    %4260 = vmatpush1.xpose.msra.mxu0 0.0
    %4261 = vmatprep.subr.mxu0 0.0
    %4262 = vmatpush1.xpose.msra.mxu0 0.0
    %4263 = vmatprep.subr.mxu0 0.0
    %4264 = vmatpush1.xpose.msra.mxu0 0.0
    %4265 = vmatprep.subr.mxu0 0.0
    %4266 = vmatpush1.xpose.msra.mxu0 0.0
    %4267 = vmatprep.subr.mxu0 0.0
    %4268 = vmatpush1.xpose.msra.mxu0 0.0
    %4269 = vmatprep.subr.mxu0 0.0
    %4270 = vmatpush1.xpose.msra.mxu0 0.0
    %4271 = vmatprep.subr.mxu0 0.0
    %4272 = vmatpush1.xpose.msra.mxu0 0.0
    %4273 = vmatprep.subr.mxu0 0.0
    %4274 = vmatpush1.xpose.msra.mxu0 0.0
    %4275 = vmatprep.subr.mxu0 0.0
    %4276 = vmatpush1.xpose.msra.mxu0 0.0
    %4277 = vmatprep.mubr.f32.mxu0 0.0
    %4278 = vmatmul.mubr.f32.gmra.mrb[0].mxu0 %v4209
    %v4279 = vpop.f32.mrb[0].mxu0
    %v4280 = vadd.f32 0.0, %v4279
    %v4281 = vpop.f32.mrb[0].mxu0
    %4282 = vdwg.mxu0
    %v4283 = vmul.f32 %v3741, 0.35355338
    %v4284 = vmul.f32 %v3818, 0.35355338
    %v4285 = vmul.f32 %v3895, 0.35355338
    %v4286 = vmul.f32 %v3972, 0.35355338
    %v4287 = vmul.f32 %v4049, 0.35355338
    %v4288 = vmul.f32 %v4126, 0.35355338
    %v4289 = vmul.f32 %v4203, 0.35355338
    %v4290 = vmul.f32 %v4280, 0.35355338
    %v4291 = vadd.f32 %v4283, %v1386
    %v4292 = vadd.f32 %v4284, %v1390
    %v4293 = vadd.f32 %v4285, %v1386
    %v4294 = vadd.f32 %v4286, %v1390
    %v4295 = vadd.f32 %v4287, %v1386
    %v4296 = vadd.f32 %v4288, %v1390
    %v4297 = vadd.f32 %v4289, %v1386
    %v4298 = vadd.f32 %v4290, %v1390
    %v4299 = vsel %vm759, %v4291, -inf
    %4300 = vmax.xlane.f32.xlu0 %v4299
    %v4301 = vpop.xlane.xlu0 %4300
    %v4302 = vsel %vm759, %v4292, -inf
    %4303 = vmax.xlane.f32.xlu0 %v4302
    %v4304 = vpop.xlane.xlu0 %4303
    %v4305 = vsel %vm759, %v4293, -inf
    %4306 = vmax.xlane.f32.xlu0 %v4305
    %v4307 = vpop.xlane.xlu0 %4306
    %v4308 = vsel %vm759, %v4294, -inf
    %4309 = vmax.xlane.f32.xlu0 %v4308
    %v4310 = vpop.xlane.xlu0 %4309
    %v4311 = vsel %vm759, %v4295, -inf
    %4312 = vmax.xlane.f32.xlu0 %v4311
    %v4313 = vpop.xlane.xlu0 %4312
    %v4314 = vsel %vm759, %v4296, -inf
    %4315 = vmax.xlane.f32.xlu0 %v4314
    %v4316 = vpop.xlane.xlu0 %4315
    %v4317 = vsel %vm759, %v4297, -inf
    %4318 = vmax.xlane.f32.xlu0 %v4317
    %v4319 = vpop.xlane.xlu0 %4318
    %v4320 = vsel %vm759, %v4298, -inf
    %4321 = vmax.xlane.f32.xlu0 %v4320
    %v4322 = vpop.xlane.xlu0 %4321
    %v4323 = vsub.f32 %v4291, %v4301
    %v4324 = vsub.f32 %v4292, %v4304
    %v4325 = vsub.f32 %v4293, %v4307
    %v4326 = vsub.f32 %v4294, %v4310
    %v4327 = vsub.f32 %v4295, %v4313
    %v4328 = vsub.f32 %v4296, %v4316
    %v4329 = vsub.f32 %v4297, %v4319
    %v4330 = vsub.f32 %v4298, %v4322
    %v4331 = vmul.f32 %v4323, 1.442695
    %v4332 = vpow.pop %v4331
    %v4333 = vmul.f32 %v4324, 1.442695
    %v4334 = vpow.pop %v4333
    %v4335 = vmul.f32 %v4325, 1.442695
    %v4336 = vpow.pop %v4335
    %v4337 = vmul.f32 %v4326, 1.442695
    %v4338 = vpow.pop %v4337
    %v4339 = vmul.f32 %v4327, 1.442695
    %v4340 = vpow.pop %v4339
    %v4341 = vmul.f32 %v4328, 1.442695
    %v4342 = vpow.pop %v4341
    %v4343 = vmul.f32 %v4329, 1.442695
    %v4344 = vpow.pop %v4343
    %v4345 = vmul.f32 %v4330, 1.442695
    %v4346 = vpow.pop %v4345
    %v4347 = vsel %vm759, %v4332, 0.0
    %4348 = vadd.xlane.f32.xlu0 %v4347
    %v4349 = vpop.xlane.xlu0 %4348
    %v4350 = vsel %vm759, %v4334, 0.0
    %4351 = vadd.xlane.f32.xlu0 %v4350
    %v4352 = vpop.xlane.xlu0 %4351
    %v4353 = vsel %vm759, %v4336, 0.0
    %4354 = vadd.xlane.f32.xlu0 %v4353
    %v4355 = vpop.xlane.xlu0 %4354
    %v4356 = vsel %vm759, %v4338, 0.0
    %4357 = vadd.xlane.f32.xlu0 %v4356
    %v4358 = vpop.xlane.xlu0 %4357
    %v4359 = vsel %vm759, %v4340, 0.0
    %4360 = vadd.xlane.f32.xlu0 %v4359
    %v4361 = vpop.xlane.xlu0 %4360
    %v4362 = vsel %vm759, %v4342, 0.0
    %4363 = vadd.xlane.f32.xlu0 %v4362
    %v4364 = vpop.xlane.xlu0 %4363
    %v4365 = vsel %vm759, %v4344, 0.0
    %4366 = vadd.xlane.f32.xlu0 %v4365
    %v4367 = vpop.xlane.xlu0 %4366
    %v4368 = vsel %vm759, %v4346, 0.0
    %4369 = vadd.xlane.f32.xlu0 %v4368
    %v4370 = vpop.xlane.xlu0 %4369
    %v4371 = vrcp.pop %v4349
    %v4372 = vrcp.pop %v4352
    %v4373 = vrcp.pop %v4355
    %v4374 = vrcp.pop %v4358
    %v4375 = vrcp.pop %v4361
    %v4376 = vrcp.pop %v4364
    %v4377 = vrcp.pop %v4367
    %v4378 = vrcp.pop %v4370
    %v4379 = vmul.f32 %v4332, %v4371
    %v4380 = vmul.f32 %v4334, %v4372
    %v4381 = vmul.f32 %v4336, %v4373
    %v4382 = vmul.f32 %v4338, %v4374
    %v4383 = vmul.f32 %v4340, %v4375
    %v4384 = vmul.f32 %v4342, %v4376
    %v4385 = vmul.f32 %v4344, %v4377
    %v4386 = vmul.f32 %v4346, %v4378
    %4387 = vrot.lane.b32.xlu0 %v3171, 112
    %v4388 = vpop.permute.xlu0 %4387
    %v4391 = vsel %vm759, %v4379, 0
    %4393 = vmatprep.subr.mxu0 0.0
    %4394 = vmatpush1.msra.mxu0 %v4388
    %4395 = vmatprep.subr.mxu0 0.0
    %4396 = vmatpush1.msra.mxu0 0.0
    %4397 = vmatprep.subr.mxu0 0.0
    %4398 = vmatpush1.msra.mxu0 0.0
    %4399 = vmatprep.subr.mxu0 0.0
    %4400 = vmatpush1.msra.mxu0 0.0
    %4401 = vmatprep.subr.mxu0 0.0
    %4402 = vmatpush1.msra.mxu0 0.0
    %4403 = vmatprep.subr.mxu0 0.0
    %4404 = vmatpush1.msra.mxu0 0.0
    %4405 = vmatprep.subr.mxu0 0.0
    %4406 = vmatpush1.msra.mxu0 0.0
    %4407 = vmatprep.subr.mxu0 0.0
    %4408 = vmatpush1.msra.mxu0 0.0
    %4409 = vmatprep.subr.mxu0 0.0
    %4410 = vmatpush1.msra.mxu0 0.0
    %4411 = vmatprep.subr.mxu0 0.0
    %4412 = vmatpush1.msra.mxu0 0.0
    %4413 = vmatprep.subr.mxu0 0.0
    %4414 = vmatpush1.msra.mxu0 0.0
    %4415 = vmatprep.subr.mxu0 0.0
    %4416 = vmatpush1.msra.mxu0 0.0
    %4417 = vmatprep.subr.mxu0 0.0
    %4418 = vmatpush1.msra.mxu0 0.0
    %4419 = vmatprep.subr.mxu0 0.0
    %4420 = vmatpush1.msra.mxu0 0.0
    %4421 = vmatprep.subr.mxu0 0.0
    %4422 = vmatpush1.msra.mxu0 0.0
    %4423 = vmatprep.subr.mxu0 0.0
    %4424 = vmatpush1.msra.mxu0 0.0
    %4425 = vmatprep.subr.mxu0 0.0
    %4426 = vmatpush1.msra.mxu0 0.0
    %4427 = vmatprep.subr.mxu0 0.0
    %4428 = vmatpush1.msra.mxu0 0.0
    %4429 = vmatprep.subr.mxu0 0.0
    %4430 = vmatpush1.msra.mxu0 0.0
    %4431 = vmatprep.subr.mxu0 0.0
    %4432 = vmatpush1.msra.mxu0 0.0
    %4433 = vmatprep.subr.mxu0 0.0
    %4434 = vmatpush1.msra.mxu0 0.0
    %4435 = vmatprep.subr.mxu0 0.0
    %4436 = vmatpush1.msra.mxu0 0.0
    %4437 = vmatprep.subr.mxu0 0.0
    %4438 = vmatpush1.msra.mxu0 0.0
    %4439 = vmatprep.subr.mxu0 0.0
    %4440 = vmatpush1.msra.mxu0 0.0
    %4441 = vmatprep.subr.mxu0 0.0
    %4442 = vmatpush1.msra.mxu0 0.0
    %4443 = vmatprep.subr.mxu0 0.0
    %4444 = vmatpush1.msra.mxu0 0.0
    %4445 = vmatprep.subr.mxu0 0.0
    %4446 = vmatpush1.msra.mxu0 0.0
    %4447 = vmatprep.subr.mxu0 0.0
    %4448 = vmatpush1.msra.mxu0 0.0
    %4449 = vmatprep.subr.mxu0 0.0
    %4450 = vmatpush1.msra.mxu0 0.0
    %4451 = vmatprep.subr.mxu0 0.0
    %4452 = vmatpush1.msra.mxu0 0.0
    %4453 = vmatprep.subr.mxu0 0.0
    %4454 = vmatpush1.msra.mxu0 0.0
    %4455 = vmatprep.subr.mxu0 0.0
    %4456 = vmatpush1.msra.mxu0 0.0
    %4457 = vmatprep.mubr.f32.mxu0 0.0
    %4458 = vmatmul.mubr.f32.gmra.mrb[0].mxu0 %v4391
    %v4459 = vpop.f32.mrb[0].mxu0
    %v4460 = vadd.f32 0.0, %v4459
    %v4461 = vpop.f32.mrb[0].mxu0
    %4462 = vdwg.mxu0
    %4463 = vrot.lane.b32.xlu0 %v3244, 112
    %v4464 = vpop.permute.xlu0 %4463
    %v4467 = vsel %vm759, %v4380, 0
    %4469 = vmatprep.subr.mxu0 0.0
    %4470 = vmatpush1.msra.mxu0 %v4464
    %4471 = vmatprep.subr.mxu0 0.0
    %4472 = vmatpush1.msra.mxu0 0.0
    %4473 = vmatprep.subr.mxu0 0.0
    %4474 = vmatpush1.msra.mxu0 0.0
    %4475 = vmatprep.subr.mxu0 0.0
    %4476 = vmatpush1.msra.mxu0 0.0
    %4477 = vmatprep.subr.mxu0 0.0
    %4478 = vmatpush1.msra.mxu0 0.0
    %4479 = vmatprep.subr.mxu0 0.0
    %4480 = vmatpush1.msra.mxu0 0.0
    %4481 = vmatprep.subr.mxu0 0.0
    %4482 = vmatpush1.msra.mxu0 0.0
    %4483 = vmatprep.subr.mxu0 0.0
    %4484 = vmatpush1.msra.mxu0 0.0
    %4485 = vmatprep.subr.mxu0 0.0
    %4486 = vmatpush1.msra.mxu0 0.0
    %4487 = vmatprep.subr.mxu0 0.0
    %4488 = vmatpush1.msra.mxu0 0.0
    %4489 = vmatprep.subr.mxu0 0.0
    %4490 = vmatpush1.msra.mxu0 0.0
    %4491 = vmatprep.subr.mxu0 0.0
    %4492 = vmatpush1.msra.mxu0 0.0
    %4493 = vmatprep.subr.mxu0 0.0
    %4494 = vmatpush1.msra.mxu0 0.0
    %4495 = vmatprep.subr.mxu0 0.0
    %4496 = vmatpush1.msra.mxu0 0.0
    %4497 = vmatprep.subr.mxu0 0.0
    %4498 = vmatpush1.msra.mxu0 0.0
    %4499 = vmatprep.subr.mxu0 0.0
    %4500 = vmatpush1.msra.mxu0 0.0
    %4501 = vmatprep.subr.mxu0 0.0
    %4502 = vmatpush1.msra.mxu0 0.0
    %4503 = vmatprep.subr.mxu0 0.0
    %4504 = vmatpush1.msra.mxu0 0.0
    %4505 = vmatprep.subr.mxu0 0.0
    %4506 = vmatpush1.msra.mxu0 0.0
    %4507 = vmatprep.subr.mxu0 0.0
    %4508 = vmatpush1.msra.mxu0 0.0
    %4509 = vmatprep.subr.mxu0 0.0
    %4510 = vmatpush1.msra.mxu0 0.0
    %4511 = vmatprep.subr.mxu0 0.0
    %4512 = vmatpush1.msra.mxu0 0.0
    %4513 = vmatprep.subr.mxu0 0.0
    %4514 = vmatpush1.msra.mxu0 0.0
    %4515 = vmatprep.subr.mxu0 0.0
    %4516 = vmatpush1.msra.mxu0 0.0
    %4517 = vmatprep.subr.mxu0 0.0
    %4518 = vmatpush1.msra.mxu0 0.0
    %4519 = vmatprep.subr.mxu0 0.0
    %4520 = vmatpush1.msra.mxu0 0.0
    %4521 = vmatprep.subr.mxu0 0.0
    %4522 = vmatpush1.msra.mxu0 0.0
    %4523 = vmatprep.subr.mxu0 0.0
    %4524 = vmatpush1.msra.mxu0 0.0
    %4525 = vmatprep.subr.mxu0 0.0
    %4526 = vmatpush1.msra.mxu0 0.0
    %4527 = vmatprep.subr.mxu0 0.0
    %4528 = vmatpush1.msra.mxu0 0.0
    %4529 = vmatprep.subr.mxu0 0.0
    %4530 = vmatpush1.msra.mxu0 0.0
    %4531 = vmatprep.subr.mxu0 0.0
    %4532 = vmatpush1.msra.mxu0 0.0
    %4533 = vmatprep.mubr.f32.mxu0 0.0
    %4534 = vmatmul.mubr.f32.gmra.mrb[0].mxu0 %v4467
    %v4535 = vpop.f32.mrb[0].mxu0
    %v4536 = vadd.f32 0.0, %v4535
    %v4537 = vpop.f32.mrb[0].mxu0
    %4538 = vdwg.mxu0
    %4539 = vrot.lane.b32.xlu0 %v3314, 112
    %v4540 = vpop.permute.xlu0 %4539
    %v4543 = vsel %vm759, %v4381, 0
    %4545 = vmatprep.subr.mxu0 0.0
    %4546 = vmatpush1.msra.mxu0 %v4540
    %4547 = vmatprep.subr.mxu0 0.0
    %4548 = vmatpush1.msra.mxu0 0.0
    %4549 = vmatprep.subr.mxu0 0.0
    %4550 = vmatpush1.msra.mxu0 0.0
    %4551 = vmatprep.subr.mxu0 0.0
    %4552 = vmatpush1.msra.mxu0 0.0
    %4553 = vmatprep.subr.mxu0 0.0
    %4554 = vmatpush1.msra.mxu0 0.0
    %4555 = vmatprep.subr.mxu0 0.0
    %4556 = vmatpush1.msra.mxu0 0.0
    %4557 = vmatprep.subr.mxu0 0.0
    %4558 = vmatpush1.msra.mxu0 0.0
    %4559 = vmatprep.subr.mxu0 0.0
    %4560 = vmatpush1.msra.mxu0 0.0
    %4561 = vmatprep.subr.mxu0 0.0
    %4562 = vmatpush1.msra.mxu0 0.0
    %4563 = vmatprep.subr.mxu0 0.0
    %4564 = vmatpush1.msra.mxu0 0.0
    %4565 = vmatprep.subr.mxu0 0.0
    %4566 = vmatpush1.msra.mxu0 0.0
    %4567 = vmatprep.subr.mxu0 0.0
    %4568 = vmatpush1.msra.mxu0 0.0
    %4569 = vmatprep.subr.mxu0 0.0
    %4570 = vmatpush1.msra.mxu0 0.0
    %4571 = vmatprep.subr.mxu0 0.0
    %4572 = vmatpush1.msra.mxu0 0.0
    %4573 = vmatprep.subr.mxu0 0.0
    %4574 = vmatpush1.msra.mxu0 0.0
    %4575 = vmatprep.subr.mxu0 0.0
    %4576 = vmatpush1.msra.mxu0 0.0
    %4577 = vmatprep.subr.mxu0 0.0
    %4578 = vmatpush1.msra.mxu0 0.0
    %4579 = vmatprep.subr.mxu0 0.0
    %4580 = vmatpush1.msra.mxu0 0.0
    %4581 = vmatprep.subr.mxu0 0.0
    %4582 = vmatpush1.msra.mxu0 0.0
    %4583 = vmatprep.subr.mxu0 0.0
    %4584 = vmatpush1.msra.mxu0 0.0
    %4585 = vmatprep.subr.mxu0 0.0
    %4586 = vmatpush1.msra.mxu0 0.0
    %4587 = vmatprep.subr.mxu0 0.0
    %4588 = vmatpush1.msra.mxu0 0.0
    %4589 = vmatprep.subr.mxu0 0.0
    %4590 = vmatpush1.msra.mxu0 0.0
    %4591 = vmatprep.subr.mxu0 0.0
    %4592 = vmatpush1.msra.mxu0 0.0
    %4593 = vmatprep.subr.mxu0 0.0
    %4594 = vmatpush1.msra.mxu0 0.0
    %4595 = vmatprep.subr.mxu0 0.0
    %4596 = vmatpush1.msra.mxu0 0.0
    %4597 = vmatprep.subr.mxu0 0.0
    %4598 = vmatpush1.msra.mxu0 0.0
    %4599 = vmatprep.subr.mxu0 0.0
    %4600 = vmatpush1.msra.mxu0 0.0
    %4601 = vmatprep.subr.mxu0 0.0
    %4602 = vmatpush1.msra.mxu0 0.0
    %4603 = vmatprep.subr.mxu0 0.0
    %4604 = vmatpush1.msra.mxu0 0.0
    %4605 = vmatprep.subr.mxu0 0.0
    %4606 = vmatpush1.msra.mxu0 0.0
    %4607 = vmatprep.subr.mxu0 0.0
    %4608 = vmatpush1.msra.mxu0 0.0
    %4609 = vmatprep.mubr.f32.mxu0 0.0
    %4610 = vmatmul.mubr.f32.gmra.mrb[0].mxu0 %v4543
    %v4611 = vpop.f32.mrb[0].mxu0
    %v4612 = vadd.f32 0.0, %v4611
    %v4613 = vpop.f32.mrb[0].mxu0
    %4614 = vdwg.mxu0
    %4615 = vrot.lane.b32.xlu0 %v3384, 112
    %v4616 = vpop.permute.xlu0 %4615
    %v4619 = vsel %vm759, %v4382, 0
    %4621 = vmatprep.subr.mxu0 0.0
    %4622 = vmatpush1.msra.mxu0 %v4616
    %4623 = vmatprep.subr.mxu0 0.0
    %4624 = vmatpush1.msra.mxu0 0.0
    %4625 = vmatprep.subr.mxu0 0.0
    %4626 = vmatpush1.msra.mxu0 0.0
    %4627 = vmatprep.subr.mxu0 0.0
    %4628 = vmatpush1.msra.mxu0 0.0
    %4629 = vmatprep.subr.mxu0 0.0
    %4630 = vmatpush1.msra.mxu0 0.0
    %4631 = vmatprep.subr.mxu0 0.0
    %4632 = vmatpush1.msra.mxu0 0.0
    %4633 = vmatprep.subr.mxu0 0.0
    %4634 = vmatpush1.msra.mxu0 0.0
    %4635 = vmatprep.subr.mxu0 0.0
    %4636 = vmatpush1.msra.mxu0 0.0
    %4637 = vmatprep.subr.mxu0 0.0
    %4638 = vmatpush1.msra.mxu0 0.0
    %4639 = vmatprep.subr.mxu0 0.0
    %4640 = vmatpush1.msra.mxu0 0.0
    %4641 = vmatprep.subr.mxu0 0.0
    %4642 = vmatpush1.msra.mxu0 0.0
    %4643 = vmatprep.subr.mxu0 0.0
    %4644 = vmatpush1.msra.mxu0 0.0
    %4645 = vmatprep.subr.mxu0 0.0
    %4646 = vmatpush1.msra.mxu0 0.0
    %4647 = vmatprep.subr.mxu0 0.0
    %4648 = vmatpush1.msra.mxu0 0.0
    %4649 = vmatprep.subr.mxu0 0.0
    %4650 = vmatpush1.msra.mxu0 0.0
    %4651 = vmatprep.subr.mxu0 0.0
    %4652 = vmatpush1.msra.mxu0 0.0
    %4653 = vmatprep.subr.mxu0 0.0
    %4654 = vmatpush1.msra.mxu0 0.0
    %4655 = vmatprep.subr.mxu0 0.0
    %4656 = vmatpush1.msra.mxu0 0.0
    %4657 = vmatprep.subr.mxu0 0.0
    %4658 = vmatpush1.msra.mxu0 0.0
    %4659 = vmatprep.subr.mxu0 0.0
    %4660 = vmatpush1.msra.mxu0 0.0
    %4661 = vmatprep.subr.mxu0 0.0
    %4662 = vmatpush1.msra.mxu0 0.0
    %4663 = vmatprep.subr.mxu0 0.0
    %4664 = vmatpush1.msra.mxu0 0.0
    %4665 = vmatprep.subr.mxu0 0.0
    %4666 = vmatpush1.msra.mxu0 0.0
    %4667 = vmatprep.subr.mxu0 0.0
    %4668 = vmatpush1.msra.mxu0 0.0
    %4669 = vmatprep.subr.mxu0 0.0
    %4670 = vmatpush1.msra.mxu0 0.0
    %4671 = vmatprep.subr.mxu0 0.0
    %4672 = vmatpush1.msra.mxu0 0.0
    %4673 = vmatprep.subr.mxu0 0.0
    %4674 = vmatpush1.msra.mxu0 0.0
    %4675 = vmatprep.subr.mxu0 0.0
    %4676 = vmatpush1.msra.mxu0 0.0
    %4677 = vmatprep.subr.mxu0 0.0
    %4678 = vmatpush1.msra.mxu0 0.0
    %4679 = vmatprep.subr.mxu0 0.0
    %4680 = vmatpush1.msra.mxu0 0.0
    %4681 = vmatprep.subr.mxu0 0.0
    %4682 = vmatpush1.msra.mxu0 0.0
    %4683 = vmatprep.subr.mxu0 0.0
    %4684 = vmatpush1.msra.mxu0 0.0
    %4685 = vmatprep.mubr.f32.mxu0 0.0
    %4686 = vmatmul.mubr.f32.gmra.mrb[0].mxu0 %v4619
    %v4687 = vpop.f32.mrb[0].mxu0
    %v4688 = vadd.f32 0.0, %v4687
    %v4689 = vpop.f32.mrb[0].mxu0
    %4690 = vdwg.mxu0
    %4691 = vrot.lane.b32.xlu0 %v3454, 112
    %v4692 = vpop.permute.xlu0 %4691
    %v4695 = vsel %vm759, %v4383, 0
    %4697 = vmatprep.subr.mxu0 0.0
    %4698 = vmatpush1.msra.mxu0 %v4692
    %4699 = vmatprep.subr.mxu0 0.0
    %4700 = vmatpush1.msra.mxu0 0.0
    %4701 = vmatprep.subr.mxu0 0.0
    %4702 = vmatpush1.msra.mxu0 0.0
    %4703 = vmatprep.subr.mxu0 0.0
    %4704 = vmatpush1.msra.mxu0 0.0
    %4705 = vmatprep.subr.mxu0 0.0
    %4706 = vmatpush1.msra.mxu0 0.0
    %4707 = vmatprep.subr.mxu0 0.0
    %4708 = vmatpush1.msra.mxu0 0.0
    %4709 = vmatprep.subr.mxu0 0.0
    %4710 = vmatpush1.msra.mxu0 0.0
    %4711 = vmatprep.subr.mxu0 0.0
    %4712 = vmatpush1.msra.mxu0 0.0
    %4713 = vmatprep.subr.mxu0 0.0
    %4714 = vmatpush1.msra.mxu0 0.0
    %4715 = vmatprep.subr.mxu0 0.0
    %4716 = vmatpush1.msra.mxu0 0.0
    %4717 = vmatprep.subr.mxu0 0.0
    %4718 = vmatpush1.msra.mxu0 0.0
    %4719 = vmatprep.subr.mxu0 0.0
    %4720 = vmatpush1.msra.mxu0 0.0
    %4721 = vmatprep.subr.mxu0 0.0
    %4722 = vmatpush1.msra.mxu0 0.0
    %4723 = vmatprep.subr.mxu0 0.0
    %4724 = vmatpush1.msra.mxu0 0.0
    %4725 = vmatprep.subr.mxu0 0.0
    %4726 = vmatpush1.msra.mxu0 0.0
    %4727 = vmatprep.subr.mxu0 0.0
    %4728 = vmatpush1.msra.mxu0 0.0
    %4729 = vmatprep.subr.mxu0 0.0
    %4730 = vmatpush1.msra.mxu0 0.0
    %4731 = vmatprep.subr.mxu0 0.0
    %4732 = vmatpush1.msra.mxu0 0.0
    %4733 = vmatprep.subr.mxu0 0.0
    %4734 = vmatpush1.msra.mxu0 0.0
    %4735 = vmatprep.subr.mxu0 0.0
    %4736 = vmatpush1.msra.mxu0 0.0
    %4737 = vmatprep.subr.mxu0 0.0
    %4738 = vmatpush1.msra.mxu0 0.0
    %4739 = vmatprep.subr.mxu0 0.0
    %4740 = vmatpush1.msra.mxu0 0.0
    %4741 = vmatprep.subr.mxu0 0.0
    %4742 = vmatpush1.msra.mxu0 0.0
    %4743 = vmatprep.subr.mxu0 0.0
    %4744 = vmatpush1.msra.mxu0 0.0
    %4745 = vmatprep.subr.mxu0 0.0
    %4746 = vmatpush1.msra.mxu0 0.0
    %4747 = vmatprep.subr.mxu0 0.0
    %4748 = vmatpush1.msra.mxu0 0.0
    %4749 = vmatprep.subr.mxu0 0.0
    %4750 = vmatpush1.msra.mxu0 0.0
    %4751 = vmatprep.subr.mxu0 0.0
    %4752 = vmatpush1.msra.mxu0 0.0
    %4753 = vmatprep.subr.mxu0 0.0
    %4754 = vmatpush1.msra.mxu0 0.0
    %4755 = vmatprep.subr.mxu0 0.0
    %4756 = vmatpush1.msra.mxu0 0.0
    %4757 = vmatprep.subr.mxu0 0.0
    %4758 = vmatpush1.msra.mxu0 0.0
    %4759 = vmatprep.subr.mxu0 0.0
    %4760 = vmatpush1.msra.mxu0 0.0
    %4761 = vmatprep.mubr.f32.mxu0 0.0
    %4762 = vmatmul.mubr.f32.gmra.mrb[0].mxu0 %v4695
    %v4763 = vpop.f32.mrb[0].mxu0
    %v4764 = vadd.f32 0.0, %v4763
    %v4765 = vpop.f32.mrb[0].mxu0
    %4766 = vdwg.mxu0
    %4767 = vrot.lane.b32.xlu0 %v3524, 112
    %v4768 = vpop.permute.xlu0 %4767
    %v4771 = vsel %vm759, %v4384, 0
    %4773 = vmatprep.subr.mxu0 0.0
    %4774 = vmatpush1.msra.mxu0 %v4768
    %4775 = vmatprep.subr.mxu0 0.0
    %4776 = vmatpush1.msra.mxu0 0.0
    %4777 = vmatprep.subr.mxu0 0.0
    %4778 = vmatpush1.msra.mxu0 0.0
    %4779 = vmatprep.subr.mxu0 0.0
    %4780 = vmatpush1.msra.mxu0 0.0
    %4781 = vmatprep.subr.mxu0 0.0
    %4782 = vmatpush1.msra.mxu0 0.0
    %4783 = vmatprep.subr.mxu0 0.0
    %4784 = vmatpush1.msra.mxu0 0.0
    %4785 = vmatprep.subr.mxu0 0.0
    %4786 = vmatpush1.msra.mxu0 0.0
    %4787 = vmatprep.subr.mxu0 0.0
    %4788 = vmatpush1.msra.mxu0 0.0
    %4789 = vmatprep.subr.mxu0 0.0
    %4790 = vmatpush1.msra.mxu0 0.0
    %4791 = vmatprep.subr.mxu0 0.0
    %4792 = vmatpush1.msra.mxu0 0.0
    %4793 = vmatprep.subr.mxu0 0.0
    %4794 = vmatpush1.msra.mxu0 0.0
    %4795 = vmatprep.subr.mxu0 0.0
    %4796 = vmatpush1.msra.mxu0 0.0
    %4797 = vmatprep.subr.mxu0 0.0
    %4798 = vmatpush1.msra.mxu0 0.0
    %4799 = vmatprep.subr.mxu0 0.0
    %4800 = vmatpush1.msra.mxu0 0.0
    %4801 = vmatprep.subr.mxu0 0.0
    %4802 = vmatpush1.msra.mxu0 0.0
    %4803 = vmatprep.subr.mxu0 0.0
    %4804 = vmatpush1.msra.mxu0 0.0
    %4805 = vmatprep.subr.mxu0 0.0
    %4806 = vmatpush1.msra.mxu0 0.0
    %4807 = vmatprep.subr.mxu0 0.0
    %4808 = vmatpush1.msra.mxu0 0.0
    %4809 = vmatprep.subr.mxu0 0.0
    %4810 = vmatpush1.msra.mxu0 0.0
    %4811 = vmatprep.subr.mxu0 0.0
    %4812 = vmatpush1.msra.mxu0 0.0
    %4813 = vmatprep.subr.mxu0 0.0
    %4814 = vmatpush1.msra.mxu0 0.0
    %4815 = vmatprep.subr.mxu0 0.0
    %4816 = vmatpush1.msra.mxu0 0.0
    %4817 = vmatprep.subr.mxu0 0.0
    %4818 = vmatpush1.msra.mxu0 0.0
    %4819 = vmatprep.subr.mxu0 0.0
    %4820 = vmatpush1.msra.mxu0 0.0
    %4821 = vmatprep.subr.mxu0 0.0
    %4822 = vmatpush1.msra.mxu0 0.0
    %4823 = vmatprep.subr.mxu0 0.0
    %4824 = vmatpush1.msra.mxu0 0.0
    %4825 = vmatprep.subr.mxu0 0.0
    %4826 = vmatpush1.msra.mxu0 0.0
    %4827 = vmatprep.subr.mxu0 0.0
    %4828 = vmatpush1.msra.mxu0 0.0
    %4829 = vmatprep.subr.mxu0 0.0
    %4830 = vmatpush1.msra.mxu0 0.0
    %4831 = vmatprep.subr.mxu0 0.0
    %4832 = vmatpush1.msra.mxu0 0.0
    %4833 = vmatprep.subr.mxu0 0.0
    %4834 = vmatpush1.msra.mxu0 0.0
    %4835 = vmatprep.subr.mxu0 0.0
    %4836 = vmatpush1.msra.mxu0 0.0
    %4837 = vmatprep.mubr.f32.mxu0 0.0
    %4838 = vmatmul.mubr.f32.gmra.mrb[0].mxu0 %v4771
    %v4839 = vpop.f32.mrb[0].mxu0
    %v4840 = vadd.f32 0.0, %v4839
    %v4841 = vpop.f32.mrb[0].mxu0
    %4842 = vdwg.mxu0
    %4843 = vrot.lane.b32.xlu0 %v3594, 112
    %v4844 = vpop.permute.xlu0 %4843
    %v4847 = vsel %vm759, %v4385, 0
    %4849 = vmatprep.subr.mxu0 0.0
    %4850 = vmatpush1.msra.mxu0 %v4844
    %4851 = vmatprep.subr.mxu0 0.0
    %4852 = vmatpush1.msra.mxu0 0.0
    %4853 = vmatprep.subr.mxu0 0.0
    %4854 = vmatpush1.msra.mxu0 0.0
    %4855 = vmatprep.subr.mxu0 0.0
    %4856 = vmatpush1.msra.mxu0 0.0
    %4857 = vmatprep.subr.mxu0 0.0
    %4858 = vmatpush1.msra.mxu0 0.0
    %4859 = vmatprep.subr.mxu0 0.0
    %4860 = vmatpush1.msra.mxu0 0.0
    %4861 = vmatprep.subr.mxu0 0.0
    %4862 = vmatpush1.msra.mxu0 0.0
    %4863 = vmatprep.subr.mxu0 0.0
    %4864 = vmatpush1.msra.mxu0 0.0
    %4865 = vmatprep.subr.mxu0 0.0
    %4866 = vmatpush1.msra.mxu0 0.0
    %4867 = vmatprep.subr.mxu0 0.0
    %4868 = vmatpush1.msra.mxu0 0.0
    %4869 = vmatprep.subr.mxu0 0.0
    %4870 = vmatpush1.msra.mxu0 0.0
    %4871 = vmatprep.subr.mxu0 0.0
    %4872 = vmatpush1.msra.mxu0 0.0
    %4873 = vmatprep.subr.mxu0 0.0
    %4874 = vmatpush1.msra.mxu0 0.0
    %4875 = vmatprep.subr.mxu0 0.0
    %4876 = vmatpush1.msra.mxu0 0.0
    %4877 = vmatprep.subr.mxu0 0.0
    %4878 = vmatpush1.msra.mxu0 0.0
    %4879 = vmatprep.subr.mxu0 0.0
    %4880 = vmatpush1.msra.mxu0 0.0
    %4881 = vmatprep.subr.mxu0 0.0
    %4882 = vmatpush1.msra.mxu0 0.0
    %4883 = vmatprep.subr.mxu0 0.0
    %4884 = vmatpush1.msra.mxu0 0.0
    %4885 = vmatprep.subr.mxu0 0.0
    %4886 = vmatpush1.msra.mxu0 0.0
    %4887 = vmatprep.subr.mxu0 0.0
    %4888 = vmatpush1.msra.mxu0 0.0
    %4889 = vmatprep.subr.mxu0 0.0
    %4890 = vmatpush1.msra.mxu0 0.0
    %4891 = vmatprep.subr.mxu0 0.0
    %4892 = vmatpush1.msra.mxu0 0.0
    %4893 = vmatprep.subr.mxu0 0.0
    %4894 = vmatpush1.msra.mxu0 0.0
    %4895 = vmatprep.subr.mxu0 0.0
    %4896 = vmatpush1.msra.mxu0 0.0
    %4897 = vmatprep.subr.mxu0 0.0
    %4898 = vmatpush1.msra.mxu0 0.0
    %4899 = vmatprep.subr.mxu0 0.0
    %4900 = vmatpush1.msra.mxu0 0.0
    %4901 = vmatprep.subr.mxu0 0.0
    %4902 = vmatpush1.msra.mxu0 0.0
    %4903 = vmatprep.subr.mxu0 0.0
    %4904 = vmatpush1.msra.mxu0 0.0
    %4905 = vmatprep.subr.mxu0 0.0
    %4906 = vmatpush1.msra.mxu0 0.0
    %4907 = vmatprep.subr.mxu0 0.0
    %4908 = vmatpush1.msra.mxu0 0.0
    %4909 = vmatprep.subr.mxu0 0.0
    %4910 = vmatpush1.msra.mxu0 0.0
    %4911 = vmatprep.subr.mxu0 0.0
    %4912 = vmatpush1.msra.mxu0 0.0
    %4913 = vmatprep.mubr.f32.mxu0 0.0
    %4914 = vmatmul.mubr.f32.gmra.mrb[0].mxu0 %v4847
    %v4915 = vpop.f32.mrb[0].mxu0
    %v4916 = vadd.f32 0.0, %v4915
    %v4917 = vpop.f32.mrb[0].mxu0
    %4918 = vdwg.mxu0
    %4919 = vrot.lane.b32.xlu0 %v3664, 112
    %v4920 = vpop.permute.xlu0 %4919
    %v4923 = vsel %vm759, %v4386, 0
    %4925 = vmatprep.subr.mxu0 0.0
    %4926 = vmatpush1.msra.mxu0 %v4920
    %4927 = vmatprep.subr.mxu0 0.0
    %4928 = vmatpush1.msra.mxu0 0.0
    %4929 = vmatprep.subr.mxu0 0.0
    %4930 = vmatpush1.msra.mxu0 0.0
    %4931 = vmatprep.subr.mxu0 0.0
    %4932 = vmatpush1.msra.mxu0 0.0
    %4933 = vmatprep.subr.mxu0 0.0
    %4934 = vmatpush1.msra.mxu0 0.0
    %4935 = vmatprep.subr.mxu0 0.0
    %4936 = vmatpush1.msra.mxu0 0.0
    %4937 = vmatprep.subr.mxu0 0.0
    %4938 = vmatpush1.msra.mxu0 0.0
    %4939 = vmatprep.subr.mxu0 0.0
    %4940 = vmatpush1.msra.mxu0 0.0
    %4941 = vmatprep.subr.mxu0 0.0
    %4942 = vmatpush1.msra.mxu0 0.0
    %4943 = vmatprep.subr.mxu0 0.0
    %4944 = vmatpush1.msra.mxu0 0.0
    %4945 = vmatprep.subr.mxu0 0.0
    %4946 = vmatpush1.msra.mxu0 0.0
    %4947 = vmatprep.subr.mxu0 0.0
    %4948 = vmatpush1.msra.mxu0 0.0
    %4949 = vmatprep.subr.mxu0 0.0
    %4950 = vmatpush1.msra.mxu0 0.0
    %4951 = vmatprep.subr.mxu0 0.0
    %4952 = vmatpush1.msra.mxu0 0.0
    %4953 = vmatprep.subr.mxu0 0.0
    %4954 = vmatpush1.msra.mxu0 0.0
    %4955 = vmatprep.subr.mxu0 0.0
    %4956 = vmatpush1.msra.mxu0 0.0
    %4957 = vmatprep.subr.mxu0 0.0
    %4958 = vmatpush1.msra.mxu0 0.0
    %4959 = vmatprep.subr.mxu0 0.0
    %4960 = vmatpush1.msra.mxu0 0.0
    %4961 = vmatprep.subr.mxu0 0.0
    %4962 = vmatpush1.msra.mxu0 0.0
    %4963 = vmatprep.subr.mxu0 0.0
    %4964 = vmatpush1.msra.mxu0 0.0
    %4965 = vmatprep.subr.mxu0 0.0
    %4966 = vmatpush1.msra.mxu0 0.0
    %4967 = vmatprep.subr.mxu0 0.0
    %4968 = vmatpush1.msra.mxu0 0.0
    %4969 = vmatprep.subr.mxu0 0.0
    %4970 = vmatpush1.msra.mxu0 0.0
    %4971 = vmatprep.subr.mxu0 0.0
    %4972 = vmatpush1.msra.mxu0 0.0
    %4973 = vmatprep.subr.mxu0 0.0
    %4974 = vmatpush1.msra.mxu0 0.0
    %4975 = vmatprep.subr.mxu0 0.0
    %4976 = vmatpush1.msra.mxu0 0.0
    %4977 = vmatprep.subr.mxu0 0.0
    %4978 = vmatpush1.msra.mxu0 0.0
    %4979 = vmatprep.subr.mxu0 0.0
    %4980 = vmatpush1.msra.mxu0 0.0
    %4981 = vmatprep.subr.mxu0 0.0
    %4982 = vmatpush1.msra.mxu0 0.0
    %4983 = vmatprep.subr.mxu0 0.0
    %4984 = vmatpush1.msra.mxu0 0.0
    %4985 = vmatprep.subr.mxu0 0.0
    %4986 = vmatpush1.msra.mxu0 0.0
    %4987 = vmatprep.subr.mxu0 0.0
    %4988 = vmatpush1.msra.mxu0 0.0
    %4989 = vmatprep.mubr.f32.mxu0 0.0
    %4990 = vmatmul.mubr.f32.gmra.mrb[0].mxu0 %v4923
    %v4991 = vpop.f32.mrb[0].mxu0
    %v4992 = vadd.f32 0.0, %v4991
    %v4993 = vpop.f32.mrb[0].mxu0
    %4994 = vdwg.mxu0
    %s4995 = scalar_lea.vmem %s5, 64
    %v4996 = vld [vmem:[%s4995] sm:$0xff]
    %v4997 = vld [vmem:[%s4995 + $0x8] sm:$0xff]
    %v4998 = vld [vmem:[%s4995 + $0x10] sm:$0xff]
    %v4999 = vld [vmem:[%s4995 + $0x18] sm:$0xff]
    %v5000 = vld [vmem:[%s4995 + $0x20] sm:$0xff]
    %v5001 = vld [vmem:[%s4995 + $0x28] sm:$0xff]
    %v5002 = vld [vmem:[%s4995 + $0x30] sm:$0xff]
    %v5003 = vld [vmem:[%s4995 + $0x38] sm:$0xff]
    %v5005 = vsel %vm759, %v4460, 0
    %5007 = vmatprep.subr.mxu0 0.0
    %5008 = vmatpush1.msra.mxu0 %v4996
    %5009 = vmatprep.subr.mxu0 0.0
    %5010 = vmatpush1.msra.mxu0 0.0
    %5011 = vmatprep.subr.mxu0 0.0
    %5012 = vmatpush1.msra.mxu0 0.0
    %5013 = vmatprep.subr.mxu0 0.0
    %5014 = vmatpush1.msra.mxu0 0.0
    %5015 = vmatprep.subr.mxu0 0.0
    %5016 = vmatpush1.msra.mxu0 0.0
    %5017 = vmatprep.subr.mxu0 0.0
    %5018 = vmatpush1.msra.mxu0 0.0
    %5019 = vmatprep.subr.mxu0 0.0
    %5020 = vmatpush1.msra.mxu0 0.0
    %5021 = vmatprep.subr.mxu0 0.0
    %5022 = vmatpush1.msra.mxu0 0.0
    %5023 = vmatprep.subr.mxu0 0.0
    %5024 = vmatpush1.msra.mxu0 0.0
    %5025 = vmatprep.subr.mxu0 0.0
    %5026 = vmatpush1.msra.mxu0 0.0
    %5027 = vmatprep.subr.mxu0 0.0
    %5028 = vmatpush1.msra.mxu0 0.0
    %5029 = vmatprep.subr.mxu0 0.0
    %5030 = vmatpush1.msra.mxu0 0.0
    %5031 = vmatprep.subr.mxu0 0.0
    %5032 = vmatpush1.msra.mxu0 0.0
    %5033 = vmatprep.subr.mxu0 0.0
    %5034 = vmatpush1.msra.mxu0 0.0
    %5035 = vmatprep.subr.mxu0 0.0
    %5036 = vmatpush1.msra.mxu0 0.0
    %5037 = vmatprep.subr.mxu0 0.0
    %5038 = vmatpush1.msra.mxu0 0.0
    %5039 = vmatprep.subr.mxu0 0.0
    %5040 = vmatpush1.msra.mxu0 0.0
    %5041 = vmatprep.subr.mxu0 0.0
    %5042 = vmatpush1.msra.mxu0 0.0
    %5043 = vmatprep.subr.mxu0 0.0
    %5044 = vmatpush1.msra.mxu0 0.0
    %5045 = vmatprep.subr.mxu0 0.0
    %5046 = vmatpush1.msra.mxu0 0.0
    %5047 = vmatprep.subr.mxu0 0.0
    %5048 = vmatpush1.msra.mxu0 0.0
    %5049 = vmatprep.subr.mxu0 0.0
    %5050 = vmatpush1.msra.mxu0 0.0
    %5051 = vmatprep.subr.mxu0 0.0
    %5052 = vmatpush1.msra.mxu0 0.0
    %5053 = vmatprep.subr.mxu0 0.0
    %5054 = vmatpush1.msra.mxu0 0.0
    %5055 = vmatprep.subr.mxu0 0.0
    %5056 = vmatpush1.msra.mxu0 0.0
    %5057 = vmatprep.subr.mxu0 0.0
    %5058 = vmatpush1.msra.mxu0 0.0
    %5059 = vmatprep.subr.mxu0 0.0
    %5060 = vmatpush1.msra.mxu0 0.0
    %5061 = vmatprep.subr.mxu0 0.0
    %5062 = vmatpush1.msra.mxu0 0.0
    %5063 = vmatprep.subr.mxu0 0.0
    %5064 = vmatpush1.msra.mxu0 0.0
    %5065 = vmatprep.subr.mxu0 0.0
    %5066 = vmatpush1.msra.mxu0 0.0
    %5067 = vmatprep.subr.mxu0 0.0
    %5068 = vmatpush1.msra.mxu0 0.0
    %5069 = vmatprep.subr.mxu0 0.0
    %5070 = vmatpush1.msra.mxu0 0.0
    %5071 = vmatprep.mubr.f32.mxu0 0.0
    %5072 = vmatmul.mubr.f32.gmra.mrb[0].mxu0 %v5005
    %v5073 = vpop.f32.mrb[0].mxu0
    %v5074 = vadd.f32 0.0, %v5073
    %v5075 = vpop.f32.mrb[0].mxu0
    %5076 = vdwg.mxu0
    %v5078 = vsel %vm759, %v4536, 0
    %5080 = vmatprep.subr.mxu0 0.0
    %5081 = vmatpush1.msra.mxu0 %v4997
    %5082 = vmatprep.subr.mxu0 0.0
    %5083 = vmatpush1.msra.mxu0 0.0
    %5084 = vmatprep.subr.mxu0 0.0
    %5085 = vmatpush1.msra.mxu0 0.0
    %5086 = vmatprep.subr.mxu0 0.0
    %5087 = vmatpush1.msra.mxu0 0.0
    %5088 = vmatprep.subr.mxu0 0.0
    %5089 = vmatpush1.msra.mxu0 0.0
    %5090 = vmatprep.subr.mxu0 0.0
    %5091 = vmatpush1.msra.mxu0 0.0
    %5092 = vmatprep.subr.mxu0 0.0
    %5093 = vmatpush1.msra.mxu0 0.0
    %5094 = vmatprep.subr.mxu0 0.0
    %5095 = vmatpush1.msra.mxu0 0.0
    %5096 = vmatprep.subr.mxu0 0.0
    %5097 = vmatpush1.msra.mxu0 0.0
    %5098 = vmatprep.subr.mxu0 0.0
    %5099 = vmatpush1.msra.mxu0 0.0
    %5100 = vmatprep.subr.mxu0 0.0
    %5101 = vmatpush1.msra.mxu0 0.0
    %5102 = vmatprep.subr.mxu0 0.0
    %5103 = vmatpush1.msra.mxu0 0.0
    %5104 = vmatprep.subr.mxu0 0.0
    %5105 = vmatpush1.msra.mxu0 0.0
    %5106 = vmatprep.subr.mxu0 0.0
    %5107 = vmatpush1.msra.mxu0 0.0
    %5108 = vmatprep.subr.mxu0 0.0
    %5109 = vmatpush1.msra.mxu0 0.0
    %5110 = vmatprep.subr.mxu0 0.0
    %5111 = vmatpush1.msra.mxu0 0.0
    %5112 = vmatprep.subr.mxu0 0.0
    %5113 = vmatpush1.msra.mxu0 0.0
    %5114 = vmatprep.subr.mxu0 0.0
    %5115 = vmatpush1.msra.mxu0 0.0
    %5116 = vmatprep.subr.mxu0 0.0
    %5117 = vmatpush1.msra.mxu0 0.0
    %5118 = vmatprep.subr.mxu0 0.0
    %5119 = vmatpush1.msra.mxu0 0.0
    %5120 = vmatprep.subr.mxu0 0.0
    %5121 = vmatpush1.msra.mxu0 0.0
    %5122 = vmatprep.subr.mxu0 0.0
    %5123 = vmatpush1.msra.mxu0 0.0
    %5124 = vmatprep.subr.mxu0 0.0
    %5125 = vmatpush1.msra.mxu0 0.0
    %5126 = vmatprep.subr.mxu0 0.0
    %5127 = vmatpush1.msra.mxu0 0.0
    %5128 = vmatprep.subr.mxu0 0.0
    %5129 = vmatpush1.msra.mxu0 0.0
    %5130 = vmatprep.subr.mxu0 0.0
    %5131 = vmatpush1.msra.mxu0 0.0
    %5132 = vmatprep.subr.mxu0 0.0
    %5133 = vmatpush1.msra.mxu0 0.0
    %5134 = vmatprep.subr.mxu0 0.0
    %5135 = vmatpush1.msra.mxu0 0.0
    %5136 = vmatprep.subr.mxu0 0.0
    %5137 = vmatpush1.msra.mxu0 0.0
    %5138 = vmatprep.subr.mxu0 0.0
    %5139 = vmatpush1.msra.mxu0 0.0
    %5140 = vmatprep.subr.mxu0 0.0
    %5141 = vmatpush1.msra.mxu0 0.0
    %5142 = vmatprep.subr.mxu0 0.0
    %5143 = vmatpush1.msra.mxu0 0.0
    %5144 = vmatprep.mubr.f32.mxu0 0.0
    %5145 = vmatmul.mubr.f32.gmra.mrb[0].mxu0 %v5078
    %v5146 = vpop.f32.mrb[0].mxu0
    %v5147 = vadd.f32 0.0, %v5146
    %v5148 = vpop.f32.mrb[0].mxu0
    %5149 = vdwg.mxu0
    %v5151 = vsel %vm759, %v4612, 0
    %5153 = vmatprep.subr.mxu0 0.0
    %5154 = vmatpush1.msra.mxu0 %v4998
    %5155 = vmatprep.subr.mxu0 0.0
    %5156 = vmatpush1.msra.mxu0 0.0
    %5157 = vmatprep.subr.mxu0 0.0
    %5158 = vmatpush1.msra.mxu0 0.0
    %5159 = vmatprep.subr.mxu0 0.0
    %5160 = vmatpush1.msra.mxu0 0.0
    %5161 = vmatprep.subr.mxu0 0.0
    %5162 = vmatpush1.msra.mxu0 0.0
    %5163 = vmatprep.subr.mxu0 0.0
    %5164 = vmatpush1.msra.mxu0 0.0
    %5165 = vmatprep.subr.mxu0 0.0
    %5166 = vmatpush1.msra.mxu0 0.0
    %5167 = vmatprep.subr.mxu0 0.0
    %5168 = vmatpush1.msra.mxu0 0.0
    %5169 = vmatprep.subr.mxu0 0.0
    %5170 = vmatpush1.msra.mxu0 0.0
    %5171 = vmatprep.subr.mxu0 0.0
    %5172 = vmatpush1.msra.mxu0 0.0
    %5173 = vmatprep.subr.mxu0 0.0
    %5174 = vmatpush1.msra.mxu0 0.0
    %5175 = vmatprep.subr.mxu0 0.0
    %5176 = vmatpush1.msra.mxu0 0.0
    %5177 = vmatprep.subr.mxu0 0.0
    %5178 = vmatpush1.msra.mxu0 0.0
    %5179 = vmatprep.subr.mxu0 0.0
    %5180 = vmatpush1.msra.mxu0 0.0
    %5181 = vmatprep.subr.mxu0 0.0
    %5182 = vmatpush1.msra.mxu0 0.0
    %5183 = vmatprep.subr.mxu0 0.0
    %5184 = vmatpush1.msra.mxu0 0.0
    %5185 = vmatprep.subr.mxu0 0.0
    %5186 = vmatpush1.msra.mxu0 0.0
    %5187 = vmatprep.subr.mxu0 0.0
    %5188 = vmatpush1.msra.mxu0 0.0
    %5189 = vmatprep.subr.mxu0 0.0
    %5190 = vmatpush1.msra.mxu0 0.0
    %5191 = vmatprep.subr.mxu0 0.0
    %5192 = vmatpush1.msra.mxu0 0.0
    %5193 = vmatprep.subr.mxu0 0.0
    %5194 = vmatpush1.msra.mxu0 0.0
    %5195 = vmatprep.subr.mxu0 0.0
    %5196 = vmatpush1.msra.mxu0 0.0
    %5197 = vmatprep.subr.mxu0 0.0
    %5198 = vmatpush1.msra.mxu0 0.0
    %5199 = vmatprep.subr.mxu0 0.0
    %5200 = vmatpush1.msra.mxu0 0.0
    %5201 = vmatprep.subr.mxu0 0.0
    %5202 = vmatpush1.msra.mxu0 0.0
    %5203 = vmatprep.subr.mxu0 0.0
    %5204 = vmatpush1.msra.mxu0 0.0
    %5205 = vmatprep.subr.mxu0 0.0
    %5206 = vmatpush1.msra.mxu0 0.0
    %5207 = vmatprep.subr.mxu0 0.0
    %5208 = vmatpush1.msra.mxu0 0.0
    %5209 = vmatprep.subr.mxu0 0.0
    %5210 = vmatpush1.msra.mxu0 0.0
    %5211 = vmatprep.subr.mxu0 0.0
    %5212 = vmatpush1.msra.mxu0 0.0
    %5213 = vmatprep.subr.mxu0 0.0
    %5214 = vmatpush1.msra.mxu0 0.0
    %5215 = vmatprep.subr.mxu0 0.0
    %5216 = vmatpush1.msra.mxu0 0.0
    %5217 = vmatprep.mubr.f32.mxu0 0.0
    %5218 = vmatmul.mubr.f32.gmra.mrb[0].mxu0 %v5151
    %v5219 = vpop.f32.mrb[0].mxu0
    %v5220 = vadd.f32 0.0, %v5219
    %v5221 = vpop.f32.mrb[0].mxu0
    %5222 = vdwg.mxu0
    %v5224 = vsel %vm759, %v4688, 0
    %5226 = vmatprep.subr.mxu0 0.0
    %5227 = vmatpush1.msra.mxu0 %v4999
    %5228 = vmatprep.subr.mxu0 0.0
    %5229 = vmatpush1.msra.mxu0 0.0
    %5230 = vmatprep.subr.mxu0 0.0
    %5231 = vmatpush1.msra.mxu0 0.0
    %5232 = vmatprep.subr.mxu0 0.0
    %5233 = vmatpush1.msra.mxu0 0.0
    %5234 = vmatprep.subr.mxu0 0.0
    %5235 = vmatpush1.msra.mxu0 0.0
    %5236 = vmatprep.subr.mxu0 0.0
    %5237 = vmatpush1.msra.mxu0 0.0
    %5238 = vmatprep.subr.mxu0 0.0
    %5239 = vmatpush1.msra.mxu0 0.0
    %5240 = vmatprep.subr.mxu0 0.0
    %5241 = vmatpush1.msra.mxu0 0.0
    %5242 = vmatprep.subr.mxu0 0.0
    %5243 = vmatpush1.msra.mxu0 0.0
    %5244 = vmatprep.subr.mxu0 0.0
    %5245 = vmatpush1.msra.mxu0 0.0
    %5246 = vmatprep.subr.mxu0 0.0
    %5247 = vmatpush1.msra.mxu0 0.0
    %5248 = vmatprep.subr.mxu0 0.0
    %5249 = vmatpush1.msra.mxu0 0.0
    %5250 = vmatprep.subr.mxu0 0.0
    %5251 = vmatpush1.msra.mxu0 0.0
    %5252 = vmatprep.subr.mxu0 0.0
    %5253 = vmatpush1.msra.mxu0 0.0
    %5254 = vmatprep.subr.mxu0 0.0
    %5255 = vmatpush1.msra.mxu0 0.0
    %5256 = vmatprep.subr.mxu0 0.0
    %5257 = vmatpush1.msra.mxu0 0.0
    %5258 = vmatprep.subr.mxu0 0.0
    %5259 = vmatpush1.msra.mxu0 0.0
    %5260 = vmatprep.subr.mxu0 0.0
    %5261 = vmatpush1.msra.mxu0 0.0
    %5262 = vmatprep.subr.mxu0 0.0
    %5263 = vmatpush1.msra.mxu0 0.0
    %5264 = vmatprep.subr.mxu0 0.0
    %5265 = vmatpush1.msra.mxu0 0.0
    %5266 = vmatprep.subr.mxu0 0.0
    %5267 = vmatpush1.msra.mxu0 0.0
    %5268 = vmatprep.subr.mxu0 0.0
    %5269 = vmatpush1.msra.mxu0 0.0
    %5270 = vmatprep.subr.mxu0 0.0
    %5271 = vmatpush1.msra.mxu0 0.0
    %5272 = vmatprep.subr.mxu0 0.0
    %5273 = vmatpush1.msra.mxu0 0.0
    %5274 = vmatprep.subr.mxu0 0.0
    %5275 = vmatpush1.msra.mxu0 0.0
    %5276 = vmatprep.subr.mxu0 0.0
    %5277 = vmatpush1.msra.mxu0 0.0
    %5278 = vmatprep.subr.mxu0 0.0
    %5279 = vmatpush1.msra.mxu0 0.0
    %5280 = vmatprep.subr.mxu0 0.0
    %5281 = vmatpush1.msra.mxu0 0.0
    %5282 = vmatprep.subr.mxu0 0.0
    %5283 = vmatpush1.msra.mxu0 0.0
    %5284 = vmatprep.subr.mxu0 0.0
    %5285 = vmatpush1.msra.mxu0 0.0
    %5286 = vmatprep.subr.mxu0 0.0
    %5287 = vmatpush1.msra.mxu0 0.0
    %5288 = vmatprep.subr.mxu0 0.0
    %5289 = vmatpush1.msra.mxu0 0.0
    %5290 = vmatprep.mubr.f32.mxu0 0.0
    %5291 = vmatmul.mubr.f32.gmra.mrb[0].mxu0 %v5224
    %v5292 = vpop.f32.mrb[0].mxu0
    %v5293 = vadd.f32 0.0, %v5292
    %v5294 = vpop.f32.mrb[0].mxu0
    %5295 = vdwg.mxu0
    %v5297 = vsel %vm759, %v4764, 0
    %5299 = vmatprep.subr.mxu0 0.0
    %5300 = vmatpush1.msra.mxu0 %v5000
    %5301 = vmatprep.subr.mxu0 0.0
    %5302 = vmatpush1.msra.mxu0 0.0
    %5303 = vmatprep.subr.mxu0 0.0
    %5304 = vmatpush1.msra.mxu0 0.0
    %5305 = vmatprep.subr.mxu0 0.0
    %5306 = vmatpush1.msra.mxu0 0.0
    %5307 = vmatprep.subr.mxu0 0.0
    %5308 = vmatpush1.msra.mxu0 0.0
    %5309 = vmatprep.subr.mxu0 0.0
    %5310 = vmatpush1.msra.mxu0 0.0
    %5311 = vmatprep.subr.mxu0 0.0
    %5312 = vmatpush1.msra.mxu0 0.0
    %5313 = vmatprep.subr.mxu0 0.0
    %5314 = vmatpush1.msra.mxu0 0.0
    %5315 = vmatprep.subr.mxu0 0.0
    %5316 = vmatpush1.msra.mxu0 0.0
    %5317 = vmatprep.subr.mxu0 0.0
    %5318 = vmatpush1.msra.mxu0 0.0
    %5319 = vmatprep.subr.mxu0 0.0
    %5320 = vmatpush1.msra.mxu0 0.0
    %5321 = vmatprep.subr.mxu0 0.0
    %5322 = vmatpush1.msra.mxu0 0.0
    %5323 = vmatprep.subr.mxu0 0.0
    %5324 = vmatpush1.msra.mxu0 0.0
    %5325 = vmatprep.subr.mxu0 0.0
    %5326 = vmatpush1.msra.mxu0 0.0
    %5327 = vmatprep.subr.mxu0 0.0
    %5328 = vmatpush1.msra.mxu0 0.0
    %5329 = vmatprep.subr.mxu0 0.0
    %5330 = vmatpush1.msra.mxu0 0.0
    %5331 = vmatprep.subr.mxu0 0.0
    %5332 = vmatpush1.msra.mxu0 0.0
    %5333 = vmatprep.subr.mxu0 0.0
    %5334 = vmatpush1.msra.mxu0 0.0
    %5335 = vmatprep.subr.mxu0 0.0
    %5336 = vmatpush1.msra.mxu0 0.0
    %5337 = vmatprep.subr.mxu0 0.0
    %5338 = vmatpush1.msra.mxu0 0.0
    %5339 = vmatprep.subr.mxu0 0.0
    %5340 = vmatpush1.msra.mxu0 0.0
    %5341 = vmatprep.subr.mxu0 0.0
    %5342 = vmatpush1.msra.mxu0 0.0
    %5343 = vmatprep.subr.mxu0 0.0
    %5344 = vmatpush1.msra.mxu0 0.0
    %5345 = vmatprep.subr.mxu0 0.0
    %5346 = vmatpush1.msra.mxu0 0.0
    %5347 = vmatprep.subr.mxu0 0.0
    %5348 = vmatpush1.msra.mxu0 0.0
    %5349 = vmatprep.subr.mxu0 0.0
    %5350 = vmatpush1.msra.mxu0 0.0
    %5351 = vmatprep.subr.mxu0 0.0
    %5352 = vmatpush1.msra.mxu0 0.0
    %5353 = vmatprep.subr.mxu0 0.0
    %5354 = vmatpush1.msra.mxu0 0.0
    %5355 = vmatprep.subr.mxu0 0.0
    %5356 = vmatpush1.msra.mxu0 0.0
    %5357 = vmatprep.subr.mxu0 0.0
    %5358 = vmatpush1.msra.mxu0 0.0
    %5359 = vmatprep.subr.mxu0 0.0
    %5360 = vmatpush1.msra.mxu0 0.0
    %5361 = vmatprep.subr.mxu0 0.0
    %5362 = vmatpush1.msra.mxu0 0.0
    %5363 = vmatprep.mubr.f32.mxu0 0.0
    %5364 = vmatmul.mubr.f32.gmra.mrb[0].mxu0 %v5297
    %v5365 = vpop.f32.mrb[0].mxu0
    %v5366 = vadd.f32 0.0, %v5365
    %v5367 = vpop.f32.mrb[0].mxu0
    %5368 = vdwg.mxu0
    %v5370 = vsel %vm759, %v4840, 0
    %5372 = vmatprep.subr.mxu0 0.0
    %5373 = vmatpush1.msra.mxu0 %v5001
    %5374 = vmatprep.subr.mxu0 0.0
    %5375 = vmatpush1.msra.mxu0 0.0
    %5376 = vmatprep.subr.mxu0 0.0
    %5377 = vmatpush1.msra.mxu0 0.0
    %5378 = vmatprep.subr.mxu0 0.0
    %5379 = vmatpush1.msra.mxu0 0.0
    %5380 = vmatprep.subr.mxu0 0.0
    %5381 = vmatpush1.msra.mxu0 0.0
    %5382 = vmatprep.subr.mxu0 0.0
    %5383 = vmatpush1.msra.mxu0 0.0
    %5384 = vmatprep.subr.mxu0 0.0
    %5385 = vmatpush1.msra.mxu0 0.0
    %5386 = vmatprep.subr.mxu0 0.0
    %5387 = vmatpush1.msra.mxu0 0.0
    %5388 = vmatprep.subr.mxu0 0.0
    %5389 = vmatpush1.msra.mxu0 0.0
    %5390 = vmatprep.subr.mxu0 0.0
    %5391 = vmatpush1.msra.mxu0 0.0
    %5392 = vmatprep.subr.mxu0 0.0
    %5393 = vmatpush1.msra.mxu0 0.0
    %5394 = vmatprep.subr.mxu0 0.0
    %5395 = vmatpush1.msra.mxu0 0.0
    %5396 = vmatprep.subr.mxu0 0.0
    %5397 = vmatpush1.msra.mxu0 0.0
    %5398 = vmatprep.subr.mxu0 0.0
    %5399 = vmatpush1.msra.mxu0 0.0
    %5400 = vmatprep.subr.mxu0 0.0
    %5401 = vmatpush1.msra.mxu0 0.0
    %5402 = vmatprep.subr.mxu0 0.0
    %5403 = vmatpush1.msra.mxu0 0.0
    %5404 = vmatprep.subr.mxu0 0.0
    %5405 = vmatpush1.msra.mxu0 0.0
    %5406 = vmatprep.subr.mxu0 0.0
    %5407 = vmatpush1.msra.mxu0 0.0
    %5408 = vmatprep.subr.mxu0 0.0
    %5409 = vmatpush1.msra.mxu0 0.0
    %5410 = vmatprep.subr.mxu0 0.0
    %5411 = vmatpush1.msra.mxu0 0.0
    %5412 = vmatprep.subr.mxu0 0.0
    %5413 = vmatpush1.msra.mxu0 0.0
    %5414 = vmatprep.subr.mxu0 0.0
    %5415 = vmatpush1.msra.mxu0 0.0
    %5416 = vmatprep.subr.mxu0 0.0
    %5417 = vmatpush1.msra.mxu0 0.0
    %5418 = vmatprep.subr.mxu0 0.0
    %5419 = vmatpush1.msra.mxu0 0.0
    %5420 = vmatprep.subr.mxu0 0.0
    %5421 = vmatpush1.msra.mxu0 0.0
    %5422 = vmatprep.subr.mxu0 0.0
    %5423 = vmatpush1.msra.mxu0 0.0
    %5424 = vmatprep.subr.mxu0 0.0
    %5425 = vmatpush1.msra.mxu0 0.0
    %5426 = vmatprep.subr.mxu0 0.0
    %5427 = vmatpush1.msra.mxu0 0.0
    %5428 = vmatprep.subr.mxu0 0.0
    %5429 = vmatpush1.msra.mxu0 0.0
    %5430 = vmatprep.subr.mxu0 0.0
    %5431 = vmatpush1.msra.mxu0 0.0
    %5432 = vmatprep.subr.mxu0 0.0
    %5433 = vmatpush1.msra.mxu0 0.0
    %5434 = vmatprep.subr.mxu0 0.0
    %5435 = vmatpush1.msra.mxu0 0.0
    %5436 = vmatprep.mubr.f32.mxu0 0.0
    %5437 = vmatmul.mubr.f32.gmra.mrb[0].mxu0 %v5370
    %v5438 = vpop.f32.mrb[0].mxu0
    %v5439 = vadd.f32 0.0, %v5438
    %v5440 = vpop.f32.mrb[0].mxu0
    %5441 = vdwg.mxu0
    %v5443 = vsel %vm759, %v4916, 0
    %5445 = vmatprep.subr.mxu0 0.0
    %5446 = vmatpush1.msra.mxu0 %v5002
    %5447 = vmatprep.subr.mxu0 0.0
    %5448 = vmatpush1.msra.mxu0 0.0
    %5449 = vmatprep.subr.mxu0 0.0
    %5450 = vmatpush1.msra.mxu0 0.0
    %5451 = vmatprep.subr.mxu0 0.0
    %5452 = vmatpush1.msra.mxu0 0.0
    %5453 = vmatprep.subr.mxu0 0.0
    %5454 = vmatpush1.msra.mxu0 0.0
    %5455 = vmatprep.subr.mxu0 0.0
    %5456 = vmatpush1.msra.mxu0 0.0
    %5457 = vmatprep.subr.mxu0 0.0
    %5458 = vmatpush1.msra.mxu0 0.0
    %5459 = vmatprep.subr.mxu0 0.0
    %5460 = vmatpush1.msra.mxu0 0.0
    %5461 = vmatprep.subr.mxu0 0.0
    %5462 = vmatpush1.msra.mxu0 0.0
    %5463 = vmatprep.subr.mxu0 0.0
    %5464 = vmatpush1.msra.mxu0 0.0
    %5465 = vmatprep.subr.mxu0 0.0
    %5466 = vmatpush1.msra.mxu0 0.0
    %5467 = vmatprep.subr.mxu0 0.0
    %5468 = vmatpush1.msra.mxu0 0.0
    %5469 = vmatprep.subr.mxu0 0.0
    %5470 = vmatpush1.msra.mxu0 0.0
    %5471 = vmatprep.subr.mxu0 0.0
    %5472 = vmatpush1.msra.mxu0 0.0
    %5473 = vmatprep.subr.mxu0 0.0
    %5474 = vmatpush1.msra.mxu0 0.0
    %5475 = vmatprep.subr.mxu0 0.0
    %5476 = vmatpush1.msra.mxu0 0.0
    %5477 = vmatprep.subr.mxu0 0.0
    %5478 = vmatpush1.msra.mxu0 0.0
    %5479 = vmatprep.subr.mxu0 0.0
    %5480 = vmatpush1.msra.mxu0 0.0
    %5481 = vmatprep.subr.mxu0 0.0
    %5482 = vmatpush1.msra.mxu0 0.0
    %5483 = vmatprep.subr.mxu0 0.0
    %5484 = vmatpush1.msra.mxu0 0.0
    %5485 = vmatprep.subr.mxu0 0.0
    %5486 = vmatpush1.msra.mxu0 0.0
    %5487 = vmatprep.subr.mxu0 0.0
    %5488 = vmatpush1.msra.mxu0 0.0
    %5489 = vmatprep.subr.mxu0 0.0
    %5490 = vmatpush1.msra.mxu0 0.0
    %5491 = vmatprep.subr.mxu0 0.0
    %5492 = vmatpush1.msra.mxu0 0.0
    %5493 = vmatprep.subr.mxu0 0.0
    %5494 = vmatpush1.msra.mxu0 0.0
    %5495 = vmatprep.subr.mxu0 0.0
    %5496 = vmatpush1.msra.mxu0 0.0
    %5497 = vmatprep.subr.mxu0 0.0
    %5498 = vmatpush1.msra.mxu0 0.0
    %5499 = vmatprep.subr.mxu0 0.0
    %5500 = vmatpush1.msra.mxu0 0.0
    %5501 = vmatprep.subr.mxu0 0.0
    %5502 = vmatpush1.msra.mxu0 0.0
    %5503 = vmatprep.subr.mxu0 0.0
    %5504 = vmatpush1.msra.mxu0 0.0
    %5505 = vmatprep.subr.mxu0 0.0
    %5506 = vmatpush1.msra.mxu0 0.0
    %5507 = vmatprep.subr.mxu0 0.0
    %5508 = vmatpush1.msra.mxu0 0.0
    %5509 = vmatprep.mubr.f32.mxu0 0.0
    %5510 = vmatmul.mubr.f32.gmra.mrb[0].mxu0 %v5443
    %v5511 = vpop.f32.mrb[0].mxu0
    %v5512 = vadd.f32 0.0, %v5511
    %v5513 = vpop.f32.mrb[0].mxu0
    %5514 = vdwg.mxu0
    %v5516 = vsel %vm759, %v4992, 0
    %5518 = vmatprep.subr.mxu0 0.0
    %5519 = vmatpush1.msra.mxu0 %v5003
    %5520 = vmatprep.subr.mxu0 0.0
    %5521 = vmatpush1.msra.mxu0 0.0
    %5522 = vmatprep.subr.mxu0 0.0
    %5523 = vmatpush1.msra.mxu0 0.0
    %5524 = vmatprep.subr.mxu0 0.0
    %5525 = vmatpush1.msra.mxu0 0.0
    %5526 = vmatprep.subr.mxu0 0.0
    %5527 = vmatpush1.msra.mxu0 0.0
    %5528 = vmatprep.subr.mxu0 0.0
    %5529 = vmatpush1.msra.mxu0 0.0
    %5530 = vmatprep.subr.mxu0 0.0
    %5531 = vmatpush1.msra.mxu0 0.0
    %5532 = vmatprep.subr.mxu0 0.0
    %5533 = vmatpush1.msra.mxu0 0.0
    %5534 = vmatprep.subr.mxu0 0.0
    %5535 = vmatpush1.msra.mxu0 0.0
    %5536 = vmatprep.subr.mxu0 0.0
    %5537 = vmatpush1.msra.mxu0 0.0
    %5538 = vmatprep.subr.mxu0 0.0
    %5539 = vmatpush1.msra.mxu0 0.0
    %5540 = vmatprep.subr.mxu0 0.0
    %5541 = vmatpush1.msra.mxu0 0.0
    %5542 = vmatprep.subr.mxu0 0.0
    %5543 = vmatpush1.msra.mxu0 0.0
    %5544 = vmatprep.subr.mxu0 0.0
    %5545 = vmatpush1.msra.mxu0 0.0
    %5546 = vmatprep.subr.mxu0 0.0
    %5547 = vmatpush1.msra.mxu0 0.0
    %5548 = vmatprep.subr.mxu0 0.0
    %5549 = vmatpush1.msra.mxu0 0.0
    %5550 = vmatprep.subr.mxu0 0.0
    %5551 = vmatpush1.msra.mxu0 0.0
    %5552 = vmatprep.subr.mxu0 0.0
    %5553 = vmatpush1.msra.mxu0 0.0
    %5554 = vmatprep.subr.mxu0 0.0
    %5555 = vmatpush1.msra.mxu0 0.0
    %5556 = vmatprep.subr.mxu0 0.0
    %5557 = vmatpush1.msra.mxu0 0.0
    %5558 = vmatprep.subr.mxu0 0.0
    %5559 = vmatpush1.msra.mxu0 0.0
    %5560 = vmatprep.subr.mxu0 0.0
    %5561 = vmatpush1.msra.mxu0 0.0
    %5562 = vmatprep.subr.mxu0 0.0
    %5563 = vmatpush1.msra.mxu0 0.0
    %5564 = vmatprep.subr.mxu0 0.0
    %5565 = vmatpush1.msra.mxu0 0.0
    %5566 = vmatprep.subr.mxu0 0.0
    %5567 = vmatpush1.msra.mxu0 0.0
    %5568 = vmatprep.subr.mxu0 0.0
    %5569 = vmatpush1.msra.mxu0 0.0
    %5570 = vmatprep.subr.mxu0 0.0
    %5571 = vmatpush1.msra.mxu0 0.0
    %5572 = vmatprep.subr.mxu0 0.0
    %5573 = vmatpush1.msra.mxu0 0.0
    %5574 = vmatprep.subr.mxu0 0.0
    %5575 = vmatpush1.msra.mxu0 0.0
    %5576 = vmatprep.subr.mxu0 0.0
    %5577 = vmatpush1.msra.mxu0 0.0
    %5578 = vmatprep.subr.mxu0 0.0
    %5579 = vmatpush1.msra.mxu0 0.0
    %5580 = vmatprep.subr.mxu0 0.0
    %5581 = vmatpush1.msra.mxu0 0.0
    %5582 = vmatprep.mubr.f32.mxu0 0.0
    %5583 = vmatmul.mubr.f32.gmra.mrb[0].mxu0 %v5516
    %v5584 = vpop.f32.mrb[0].mxu0
    %v5585 = vadd.f32 0.0, %v5584
    %v5586 = vpop.f32.mrb[0].mxu0
    %5587 = vdwg.mxu0
    %v5588 = vsel %vm45, %v5074, 0.0
    %v5589 = vsel %vm45, %v5220, 0.0
    %v5590 = vadd.f32 %v5588, %v5589
    %v5591 = vsel %vm45, %v5366, 0.0
    %v5592 = vadd.f32 %v5590, %v5591
    %v5593 = vsel %vm45, %v5512, 0.0
    %v5594 = vadd.f32 %v5592, %v5593
    %v5595 = vsel %vm45, %v5147, 0.0
    %v5596 = vsel %vm45, %v5293, 0.0
    %v5597 = vadd.f32 %v5595, %v5596
    %v5598 = vsel %vm45, %v5439, 0.0
    %v5599 = vadd.f32 %v5597, %v5598
    %v5600 = vsel %vm45, %v5585, 0.0
    %v5601 = vadd.f32 %v5599, %v5600
    %v5602 = vlaneseq
    %v5603 = vshrl.u32 %v5602, 7
    %v5604 = vsub.s32 0, %v5603
    %v5605 = vrot.slane %v3010, %v5604
    %v5606 = vadd.f32 %v5594, %v5605
    %v5607 = vadd.f32 %v5601, %v5605
    %v5608 = vadd.f32 %v2991, %v5606
    %v5609 = vadd.f32 %v2992, %v5607
    %v5610 = vsel %vm45, %v5608, 0.0
    %5611 = vadd.xlane.f32.xlu0 %v5610
    %v5612 = vpop.xlane.xlu0 %5611
    %v5613 = vsel %vm45, %v5609, 0.0
    %5614 = vadd.xlane.f32.xlu0 %v5613
    %v5615 = vpop.xlane.xlu0 %5614
    %v5616 = vmul.f32 %v5612, %v52
    %v5617 = vmul.f32 %v5615, %v52
    %v5618 = vsub.f32 %v5608, %v5616
    %v5619 = vsub.f32 %v5609, %v5617
    %v5620 = vmul.f32 %v5618, %v5618
    %v5621 = vmul.f32 %v5619, %v5619
    %v5622 = vsel %vm45, %v5620, 0.0
    %5623 = vadd.xlane.f32.xlu0 %v5622
    %v5624 = vpop.xlane.xlu0 %5623
    %v5625 = vsel %vm45, %v5621, 0.0
    %5626 = vadd.xlane.f32.xlu0 %v5625
    %v5627 = vpop.xlane.xlu0 %5626
    %v5628 = vmul.f32 %v5624, %v52
    %v5629 = vmul.f32 %v5627, %v52
    %v5630 = vadd.f32 %v5628, 1e-12
    %v5631 = vadd.f32 %v5629, 1e-12
    %v5632 = vrsqrt.pop %v5630
    %v5633 = vrsqrt.pop %v5631
    %v5634 = vmul.f32 %v5618, %v5632
    %v5635 = vmul.f32 %v5619, %v5633
    %v5636 = vlaneseq
    %v5637 = vshrl.u32 %v5636, 7
    %v5638 = vsub.s32 1, %v5637
    %v5639 = vrot.slane %v3010, %v5638
    %v5640 = vmul.f32 %v5634, %v5639
    %v5641 = vmul.f32 %v5635, %v5639
    %v5642 = vlaneseq
    %v5643 = vshrl.u32 %v5642, 7
    %v5644 = vsub.s32 2, %v5643
    %v5645 = vrot.slane %v3010, %v5644
    %v5646 = vadd.f32 %v5640, %v5645
    %v5647 = vadd.f32 %v5641, %v5645
    %s5648 = scalar_lea.vmem %s7, 32
    %v5649 = vld [vmem:[%s5648] sm:$0xff]
    %v5650 = vld [vmem:[%s5648 + $0x8] sm:$0xff]
    %v5651 = vld [vmem:[%s5648 + $0x10] sm:$0xff]
    %v5652 = vld [vmem:[%s5648 + $0x18] sm:$0xff]
    %s5653 = scalar_lea.vmem %s8, 1
    %v5654 = vld [vmem:[%s5653] sm:$0x1]
    %v5656 = vlaneseq
    %v5657 = vshrl.u32 %v5656, 7
    %v5658 = vsub.s32 0, %v5657
    %v5659 = vrot.slane %v5654, %v5658
    %v5662 = vsel %vm45, %v5646, 0
    %v5665 = vsel %vm45, %v5647, 0
    %5667 = vmatprep.subr.mxu0 0.0
    %5668 = vmatpush1.msra.mxu0 %v5649
    %5669 = vmatprep.subr.mxu0 0.0
    %5670 = vmatpush1.msra.mxu0 %v5650
    %5671 = vmatprep.subr.mxu0 0.0
    %5672 = vmatpush1.msra.mxu0 %v5651
    %5673 = vmatprep.subr.mxu0 0.0
    %5674 = vmatpush1.msra.mxu0 %v5652
    %5675 = vmatprep.subr.mxu0 0.0
    %5676 = vmatpush1.msra.mxu0 0.0
    %5677 = vmatprep.subr.mxu0 0.0
    %5678 = vmatpush1.msra.mxu0 0.0
    %5679 = vmatprep.subr.mxu0 0.0
    %5680 = vmatpush1.msra.mxu0 0.0
    %5681 = vmatprep.subr.mxu0 0.0
    %5682 = vmatpush1.msra.mxu0 0.0
    %5683 = vmatprep.subr.mxu0 0.0
    %5684 = vmatpush1.msra.mxu0 0.0
    %5685 = vmatprep.subr.mxu0 0.0
    %5686 = vmatpush1.msra.mxu0 0.0
    %5687 = vmatprep.subr.mxu0 0.0
    %5688 = vmatpush1.msra.mxu0 0.0
    %5689 = vmatprep.subr.mxu0 0.0
    %5690 = vmatpush1.msra.mxu0 0.0
    %5691 = vmatprep.subr.mxu0 0.0
    %5692 = vmatpush1.msra.mxu0 0.0
    %5693 = vmatprep.subr.mxu0 0.0
    %5694 = vmatpush1.msra.mxu0 0.0
    %5695 = vmatprep.subr.mxu0 0.0
    %5696 = vmatpush1.msra.mxu0 0.0
    %5697 = vmatprep.subr.mxu0 0.0
    %5698 = vmatpush1.msra.mxu0 0.0
    %5699 = vmatprep.subr.mxu0 0.0
    %5700 = vmatpush1.msra.mxu0 0.0
    %5701 = vmatprep.subr.mxu0 0.0
    %5702 = vmatpush1.msra.mxu0 0.0
    %5703 = vmatprep.subr.mxu0 0.0
    %5704 = vmatpush1.msra.mxu0 0.0
    %5705 = vmatprep.subr.mxu0 0.0
    %5706 = vmatpush1.msra.mxu0 0.0
    %5707 = vmatprep.subr.mxu0 0.0
    %5708 = vmatpush1.msra.mxu0 0.0
    %5709 = vmatprep.subr.mxu0 0.0
    %5710 = vmatpush1.msra.mxu0 0.0
    %5711 = vmatprep.subr.mxu0 0.0
    %5712 = vmatpush1.msra.mxu0 0.0
    %5713 = vmatprep.subr.mxu0 0.0
    %5714 = vmatpush1.msra.mxu0 0.0
    %5715 = vmatprep.subr.mxu0 0.0
    %5716 = vmatpush1.msra.mxu0 0.0
    %5717 = vmatprep.subr.mxu0 0.0
    %5718 = vmatpush1.msra.mxu0 0.0
    %5719 = vmatprep.subr.mxu0 0.0
    %5720 = vmatpush1.msra.mxu0 0.0
    %5721 = vmatprep.subr.mxu0 0.0
    %5722 = vmatpush1.msra.mxu0 0.0
    %5723 = vmatprep.subr.mxu0 0.0
    %5724 = vmatpush1.msra.mxu0 0.0
    %5725 = vmatprep.subr.mxu0 0.0
    %5726 = vmatpush1.msra.mxu0 0.0
    %5727 = vmatprep.subr.mxu0 0.0
    %5728 = vmatpush1.msra.mxu0 0.0
    %5729 = vmatprep.subr.mxu0 0.0
    %5730 = vmatpush1.msra.mxu0 0.0
    %5731 = vmatprep.mubr.f32.mxu0 0.0
    %5732 = vmatmul.mubr.f32.gmra.mrb[0].mxu0 %v5662
    %v5733 = vpop.f32.mrb[0].mxu0
    %v5734 = vadd.f32 %v5659, %v5733
    %v5735 = vpop.f32.mrb[0].mxu0
    %5736 = vmatprep.mubr.f32.mxu0 0.0
    %5737 = vmatmul.mubr.f32.gmra.mrb[0].mxu0 %v5665
    %v5738 = vpop.f32.mrb[0].mxu0
    %v5739 = vadd.f32 %v5659, %v5738
    %v5740 = vpop.f32.mrb[0].mxu0
    %5741 = vdwg.mxu0
    %v5742 = vmul.f32 %v5734, 0.5
    %v5743 = vmul.f32 %v5739, 0.5
    %v5744 = vmul.f32 %v5734, 0.044715
    %v5745 = vmul.f32 %v5739, 0.044715
    %v5746 = vmul.f32 %v5744, %v5734
    %v5747 = vmul.f32 %v5745, %v5739
    %v5748 = vmul.f32 %v5746, %v5734
    %v5749 = vmul.f32 %v5747, %v5739
    %v5750 = vadd.f32 %v5734, %v5748
    %v5751 = vadd.f32 %v5739, %v5749
    %v5752 = vmul.f32 %v5750, 0.7978846
    %v5753 = vmul.f32 %v5751, 0.7978846
    %v5754 = vtanh.pop %v5752
    %v5755 = vtanh.pop %v5753
    %v5756 = vadd.f32 %v5754, 1.0
    %v5757 = vadd.f32 %v5755, 1.0
    %v5758 = vmul.f32 %v5742, %v5756
    %v5759 = vmul.f32 %v5743, %v5757
    %s5760 = scalar_lea.vmem %s9, 64
    %v5761 = vld [vmem:[%s5760] sm:$0xff]
    %v5762 = vld [vmem:[%s5760 + $0x8] sm:$0xff]
    %v5763 = vld [vmem:[%s5760 + $0x10] sm:$0xff]
    %v5764 = vld [vmem:[%s5760 + $0x18] sm:$0xff]
    %v5765 = vld [vmem:[%s5760 + $0x20] sm:$0xff]
    %v5766 = vld [vmem:[%s5760 + $0x28] sm:$0xff]
    %v5767 = vld [vmem:[%s5760 + $0x30] sm:$0xff]
    %v5768 = vld [vmem:[%s5760 + $0x38] sm:$0xff]
    %v5769 = vlaneseq
    %v5770 = vshrl.u32 %v5769, 7
    %v5771 = vsub.s32 3, %v5770
    %v5772 = vrot.slane %v3010, %v5771
    %v5774 = vsel %vm2871, %v5758, 0
    %v5777 = vsel %vm2871, %v5759, 0
    %5779 = vmatprep.subr.mxu0 0.0
    %5780 = vmatpush1.msra.mxu0 %v5761
    %5781 = vmatprep.subr.mxu0 0.0
    %5782 = vmatpush1.msra.mxu0 %v5762
    %5783 = vmatprep.subr.mxu0 0.0
    %5784 = vmatpush1.msra.mxu0 %v5763
    %5785 = vmatprep.subr.mxu0 0.0
    %5786 = vmatpush1.msra.mxu0 %v5764
    %5787 = vmatprep.subr.mxu0 0.0
    %5788 = vmatpush1.msra.mxu0 %v5765
    %5789 = vmatprep.subr.mxu0 0.0
    %5790 = vmatpush1.msra.mxu0 %v5766
    %5791 = vmatprep.subr.mxu0 0.0
    %5792 = vmatpush1.msra.mxu0 %v5767
    %5793 = vmatprep.subr.mxu0 0.0
    %5794 = vmatpush1.msra.mxu0 %v5768
    %5795 = vmatprep.subr.mxu0 0.0
    %5796 = vmatpush1.msra.mxu0 0.0
    %5797 = vmatprep.subr.mxu0 0.0
    %5798 = vmatpush1.msra.mxu0 0.0
    %5799 = vmatprep.subr.mxu0 0.0
    %5800 = vmatpush1.msra.mxu0 0.0
    %5801 = vmatprep.subr.mxu0 0.0
    %5802 = vmatpush1.msra.mxu0 0.0
    %5803 = vmatprep.subr.mxu0 0.0
    %5804 = vmatpush1.msra.mxu0 0.0
    %5805 = vmatprep.subr.mxu0 0.0
    %5806 = vmatpush1.msra.mxu0 0.0
    %5807 = vmatprep.subr.mxu0 0.0
    %5808 = vmatpush1.msra.mxu0 0.0
    %5809 = vmatprep.subr.mxu0 0.0
    %5810 = vmatpush1.msra.mxu0 0.0
    %5811 = vmatprep.subr.mxu0 0.0
    %5812 = vmatpush1.msra.mxu0 0.0
    %5813 = vmatprep.subr.mxu0 0.0
    %5814 = vmatpush1.msra.mxu0 0.0
    %5815 = vmatprep.subr.mxu0 0.0
    %5816 = vmatpush1.msra.mxu0 0.0
    %5817 = vmatprep.subr.mxu0 0.0
    %5818 = vmatpush1.msra.mxu0 0.0
    %5819 = vmatprep.subr.mxu0 0.0
    %5820 = vmatpush1.msra.mxu0 0.0
    %5821 = vmatprep.subr.mxu0 0.0
    %5822 = vmatpush1.msra.mxu0 0.0
    %5823 = vmatprep.subr.mxu0 0.0
    %5824 = vmatpush1.msra.mxu0 0.0
    %5825 = vmatprep.subr.mxu0 0.0
    %5826 = vmatpush1.msra.mxu0 0.0
    %5827 = vmatprep.subr.mxu0 0.0
    %5828 = vmatpush1.msra.mxu0 0.0
    %5829 = vmatprep.subr.mxu0 0.0
    %5830 = vmatpush1.msra.mxu0 0.0
    %5831 = vmatprep.subr.mxu0 0.0
    %5832 = vmatpush1.msra.mxu0 0.0
    %5833 = vmatprep.subr.mxu0 0.0
    %5834 = vmatpush1.msra.mxu0 0.0
    %5835 = vmatprep.subr.mxu0 0.0
    %5836 = vmatpush1.msra.mxu0 0.0
    %5837 = vmatprep.subr.mxu0 0.0
    %5838 = vmatpush1.msra.mxu0 0.0
    %5839 = vmatprep.subr.mxu0 0.0
    %5840 = vmatpush1.msra.mxu0 0.0
    %5841 = vmatprep.subr.mxu0 0.0
    %5842 = vmatpush1.msra.mxu0 0.0
    %5843 = vmatprep.mubr.f32.mxu0 0.0
    %5844 = vmatmul.mubr.f32.gmra.mrb[0].mxu0 %v5774
    %v5845 = vpop.f32.mrb[0].mxu0
    %v5846 = vadd.f32 %v5772, %v5845
    %v5847 = vpop.f32.mrb[0].mxu0
    %5848 = vmatprep.mubr.f32.mxu0 0.0
    %5849 = vmatmul.mubr.f32.gmra.mrb[0].mxu0 %v5777
    %v5850 = vpop.f32.mrb[0].mxu0
    %v5851 = vadd.f32 %v5772, %v5850
    %v5852 = vpop.f32.mrb[0].mxu0
    %5853 = vdwg.mxu0
    %v5854 = vadd.f32 %v5646, %v5846
    %v5855 = vadd.f32 %v5647, %v5851
    %v5856 = vsel %vm45, %v5854, 0.0
    %5857 = vadd.xlane.f32.xlu0 %v5856
    %v5858 = vpop.xlane.xlu0 %5857
    %v5859 = vsel %vm45, %v5855, 0.0
    %5860 = vadd.xlane.f32.xlu0 %v5859
    %v5861 = vpop.xlane.xlu0 %5860
    %v5862 = vmul.f32 %v5858, %v52
    %v5863 = vmul.f32 %v5861, %v52
    %v5864 = vsub.f32 %v5854, %v5862
    %v5865 = vsub.f32 %v5855, %v5863
    %v5866 = vmul.f32 %v5864, %v5864
    %v5867 = vmul.f32 %v5865, %v5865
    %v5868 = vsel %vm45, %v5866, 0.0
    %5869 = vadd.xlane.f32.xlu0 %v5868
    %v5870 = vpop.xlane.xlu0 %5869
    %v5871 = vsel %vm45, %v5867, 0.0
    %5872 = vadd.xlane.f32.xlu0 %v5871
    %v5873 = vpop.xlane.xlu0 %5872
    %v5874 = vmul.f32 %v5870, %v52
    %v5875 = vmul.f32 %v5873, %v52
    %v5876 = vadd.f32 %v5874, 1e-12
    %v5877 = vadd.f32 %v5875, 1e-12
    %v5878 = vrsqrt.pop %v5876
    %v5879 = vrsqrt.pop %v5877
    %v5880 = vmul.f32 %v5864, %v5878
    %v5881 = vmul.f32 %v5865, %v5879
    %v5882 = vlaneseq
    %v5883 = vshrl.u32 %v5882, 7
    %v5884 = vsub.s32 4, %v5883
    %v5885 = vrot.slane %v3010, %v5884
    %v5886 = vmul.f32 %v5880, %v5885
    %v5887 = vmul.f32 %v5881, %v5885
    %v5888 = vlaneseq
    %v5889 = vshrl.u32 %v5888, 7
    %v5890 = vsub.s32 5, %v5889
    %v5891 = vrot.slane %v3010, %v5890
    %v5892 = vadd.f32 %v5886, %v5891
    %v5893 = vadd.f32 %v5887, %v5891
    %v5894 = vsel %vm45, %v5892, 0.0
    %v5895 = vrot.slane %v5894, 4
    %v5896 = vadd.f32 %v5894, %v5895
    %v5897 = vrot.slane %v5896, 2
    %v5898 = vadd.f32 %v5896, %v5897
    %v5899 = vrot.slane %v5898, 1
    %v5900 = vadd.f32 %v5898, %v5899
    %v5901 = vsel %vm45, %v5893, 0.0
    %v5902 = vrot.slane %v5901, 4
    %v5903 = vadd.f32 %v5901, %v5902
    %v5904 = vrot.slane %v5903, 2
    %v5905 = vadd.f32 %v5903, %v5904
    %v5906 = vrot.slane %v5905, 1
    %v5907 = vadd.f32 %v5905, %v5906
    %v5908 = vadd.f32 %v3007, %v5900
    %v5909 = vadd.f32 %v3008, %v5907
    %s5910 = scalar_lea.vmem %s6, 16
    %v5911 = vld [vmem:[%s5910] sm:$0x3f]
    %s5912 = scalar_lea.vmem %s3, 512
    %v5913 = vld [vmem:[%s5912] sm:$0xff]
    %v5914 = vld [vmem:[%s5912 + $0x8] sm:$0xff]
    %v5915 = vld [vmem:[%s5912 + $0x10] sm:$0xff]
    %v5916 = vld [vmem:[%s5912 + $0x18] sm:$0xff]
    %v5917 = vld [vmem:[%s5912 + $0x20] sm:$0xff]
    %v5918 = vld [vmem:[%s5912 + $0x28] sm:$0xff]
    %v5919 = vld [vmem:[%s5912 + $0x30] sm:$0xff]
    %v5920 = vld [vmem:[%s5912 + $0x38] sm:$0xff]
    %v5921 = vld [vmem:[%s5912 + $0x40] sm:$0xff]
    %v5922 = vld [vmem:[%s5912 + $0x48] sm:$0xff]
    %v5923 = vld [vmem:[%s5912 + $0x50] sm:$0xff]
    %v5924 = vld [vmem:[%s5912 + $0x58] sm:$0xff]
    %v5925 = vld [vmem:[%s5912 + $0x60] sm:$0xff]
    %v5926 = vld [vmem:[%s5912 + $0x68] sm:$0xff]
    %v5927 = vld [vmem:[%s5912 + $0x70] sm:$0xff]
    %v5928 = vld [vmem:[%s5912 + $0x78] sm:$0xff]
    %v5929 = vld [vmem:[%s5912 + $0x80] sm:$0xff]
    %v5930 = vld [vmem:[%s5912 + $0x88] sm:$0xff]
    %v5931 = vld [vmem:[%s5912 + $0x90] sm:$0xff]
    %v5932 = vld [vmem:[%s5912 + $0x98] sm:$0xff]
    %v5933 = vld [vmem:[%s5912 + $0xa0] sm:$0xff]
    %v5934 = vld [vmem:[%s5912 + $0xa8] sm:$0xff]
    %v5935 = vld [vmem:[%s5912 + $0xb0] sm:$0xff]
    %v5936 = vld [vmem:[%s5912 + $0xb8] sm:$0xff]
    %v5937 = vld [vmem:[%s5912 + $0xc0] sm:$0xff]
    %v5938 = vld [vmem:[%s5912 + $0xc8] sm:$0xff]
    %v5939 = vld [vmem:[%s5912 + $0xd0] sm:$0xff]
    %v5940 = vld [vmem:[%s5912 + $0xd8] sm:$0xff]
    %v5941 = vld [vmem:[%s5912 + $0xe0] sm:$0xff]
    %v5942 = vld [vmem:[%s5912 + $0xe8] sm:$0xff]
    %v5943 = vld [vmem:[%s5912 + $0xf0] sm:$0xff]
    %v5944 = vld [vmem:[%s5912 + $0xf8] sm:$0xff]
    %s5945 = scalar_lea.vmem %s4, 16
    %v5946 = vld [vmem:[%s5945] sm:$0x1]
    %v5947 = vld [vmem:[%s5945 + $0x1] sm:$0x1]
    %v5948 = vld [vmem:[%s5945 + $0x2] sm:$0x1]
    %v5949 = vld [vmem:[%s5945 + $0x3] sm:$0x1]
    %v5950 = vld [vmem:[%s5945 + $0x4] sm:$0x1]
    %v5951 = vld [vmem:[%s5945 + $0x5] sm:$0x1]
    %v5952 = vld [vmem:[%s5945 + $0x6] sm:$0x1]
    %v5953 = vld [vmem:[%s5945 + $0x7] sm:$0x1]
    %v5962 = vlaneseq
    %v5963 = vshrl.u32 %v5962, 7
    %v5964 = vsub.s32 0, %v5963
    %v5965 = vrot.slane %v5946, %v5964
    %v5966 = vlaneseq
    %v5967 = vshrl.u32 %v5966, 7
    %v5968 = vsub.s32 0, %v5967
    %v5969 = vrot.slane %v5947, %v5968
    %v5970 = vlaneseq
    %v5971 = vshrl.u32 %v5970, 7
    %v5972 = vsub.s32 0, %v5971
    %v5973 = vrot.slane %v5948, %v5972
    %v5974 = vlaneseq
    %v5975 = vshrl.u32 %v5974, 7
    %v5976 = vsub.s32 0, %v5975
    %v5977 = vrot.slane %v5949, %v5976
    %v5978 = vlaneseq
    %v5979 = vshrl.u32 %v5978, 7
    %v5980 = vsub.s32 0, %v5979
    %v5981 = vrot.slane %v5950, %v5980
    %v5982 = vlaneseq
    %v5983 = vshrl.u32 %v5982, 7
    %v5984 = vsub.s32 0, %v5983
    %v5985 = vrot.slane %v5951, %v5984
    %v5986 = vlaneseq
    %v5987 = vshrl.u32 %v5986, 7
    %v5988 = vsub.s32 0, %v5987
    %v5989 = vrot.slane %v5952, %v5988
    %v5990 = vlaneseq
    %v5991 = vshrl.u32 %v5990, 7
    %v5992 = vsub.s32 0, %v5991
    %v5993 = vrot.slane %v5953, %v5992
    %v6003 = vsel %vm45, %v5892, 0
    %6005 = vmatprep.subr.mxu0 0.0
    %6006 = vmatpush1.msra.mxu0 %v5913
    %6007 = vmatprep.subr.mxu0 0.0
    %6008 = vmatpush1.msra.mxu0 %v5914
    %6009 = vmatprep.subr.mxu0 0.0
    %6010 = vmatpush1.msra.mxu0 %v5915
    %6011 = vmatprep.subr.mxu0 0.0
    %6012 = vmatpush1.msra.mxu0 %v5916
    %6013 = vmatprep.subr.mxu0 0.0
    %6014 = vmatpush1.msra.mxu0 0.0
    %6015 = vmatprep.subr.mxu0 0.0
    %6016 = vmatpush1.msra.mxu0 0.0
    %6017 = vmatprep.subr.mxu0 0.0
    %6018 = vmatpush1.msra.mxu0 0.0
    %6019 = vmatprep.subr.mxu0 0.0
    %6020 = vmatpush1.msra.mxu0 0.0
    %6021 = vmatprep.subr.mxu0 0.0
    %6022 = vmatpush1.msra.mxu0 0.0
    %6023 = vmatprep.subr.mxu0 0.0
    %6024 = vmatpush1.msra.mxu0 0.0
    %6025 = vmatprep.subr.mxu0 0.0
    %6026 = vmatpush1.msra.mxu0 0.0
    %6027 = vmatprep.subr.mxu0 0.0
    %6028 = vmatpush1.msra.mxu0 0.0
    %6029 = vmatprep.subr.mxu0 0.0
    %6030 = vmatpush1.msra.mxu0 0.0
    %6031 = vmatprep.subr.mxu0 0.0
    %6032 = vmatpush1.msra.mxu0 0.0
    %6033 = vmatprep.subr.mxu0 0.0
    %6034 = vmatpush1.msra.mxu0 0.0
    %6035 = vmatprep.subr.mxu0 0.0
    %6036 = vmatpush1.msra.mxu0 0.0
    %6037 = vmatprep.subr.mxu0 0.0
    %6038 = vmatpush1.msra.mxu0 0.0
    %6039 = vmatprep.subr.mxu0 0.0
    %6040 = vmatpush1.msra.mxu0 0.0
    %6041 = vmatprep.subr.mxu0 0.0
    %6042 = vmatpush1.msra.mxu0 0.0
    %6043 = vmatprep.subr.mxu0 0.0
    %6044 = vmatpush1.msra.mxu0 0.0
    %6045 = vmatprep.subr.mxu0 0.0
    %6046 = vmatpush1.msra.mxu0 0.0
    %6047 = vmatprep.subr.mxu0 0.0
    %6048 = vmatpush1.msra.mxu0 0.0
    %6049 = vmatprep.subr.mxu0 0.0
    %6050 = vmatpush1.msra.mxu0 0.0
    %6051 = vmatprep.subr.mxu0 0.0
    %6052 = vmatpush1.msra.mxu0 0.0
    %6053 = vmatprep.subr.mxu0 0.0
    %6054 = vmatpush1.msra.mxu0 0.0
    %6055 = vmatprep.subr.mxu0 0.0
    %6056 = vmatpush1.msra.mxu0 0.0
    %6057 = vmatprep.subr.mxu0 0.0
    %6058 = vmatpush1.msra.mxu0 0.0
    %6059 = vmatprep.subr.mxu0 0.0
    %6060 = vmatpush1.msra.mxu0 0.0
    %6061 = vmatprep.subr.mxu0 0.0
    %6062 = vmatpush1.msra.mxu0 0.0
    %6063 = vmatprep.subr.mxu0 0.0
    %6064 = vmatpush1.msra.mxu0 0.0
    %6065 = vmatprep.subr.mxu0 0.0
    %6066 = vmatpush1.msra.mxu0 0.0
    %6067 = vmatprep.subr.mxu0 0.0
    %6068 = vmatpush1.msra.mxu0 0.0
    %6069 = vmatprep.mubr.f32.mxu0 0.0
    %6070 = vmatmul.mubr.f32.gmra.mrb[0].mxu0 %v6003
    %v6071 = vpop.f32.mrb[0].mxu0
    %v6072 = vadd.f32 %v5965, %v6071
    %v6073 = vpop.f32.mrb[0].mxu0
    %6074 = vdwg.mxu0
    %v6076 = vsel %vm45, %v5893, 0
    %6078 = vmatprep.subr.mxu0 0.0
    %6079 = vmatpush1.msra.mxu0 %v5917
    %6080 = vmatprep.subr.mxu0 0.0
    %6081 = vmatpush1.msra.mxu0 %v5918
    %6082 = vmatprep.subr.mxu0 0.0
    %6083 = vmatpush1.msra.mxu0 %v5919
    %6084 = vmatprep.subr.mxu0 0.0
    %6085 = vmatpush1.msra.mxu0 %v5920
    %6086 = vmatprep.subr.mxu0 0.0
    %6087 = vmatpush1.msra.mxu0 0.0
    %6088 = vmatprep.subr.mxu0 0.0
    %6089 = vmatpush1.msra.mxu0 0.0
    %6090 = vmatprep.subr.mxu0 0.0
    %6091 = vmatpush1.msra.mxu0 0.0
    %6092 = vmatprep.subr.mxu0 0.0
    %6093 = vmatpush1.msra.mxu0 0.0
    %6094 = vmatprep.subr.mxu0 0.0
    %6095 = vmatpush1.msra.mxu0 0.0
    %6096 = vmatprep.subr.mxu0 0.0
    %6097 = vmatpush1.msra.mxu0 0.0
    %6098 = vmatprep.subr.mxu0 0.0
    %6099 = vmatpush1.msra.mxu0 0.0
    %6100 = vmatprep.subr.mxu0 0.0
    %6101 = vmatpush1.msra.mxu0 0.0
    %6102 = vmatprep.subr.mxu0 0.0
    %6103 = vmatpush1.msra.mxu0 0.0
    %6104 = vmatprep.subr.mxu0 0.0
    %6105 = vmatpush1.msra.mxu0 0.0
    %6106 = vmatprep.subr.mxu0 0.0
    %6107 = vmatpush1.msra.mxu0 0.0
    %6108 = vmatprep.subr.mxu0 0.0
    %6109 = vmatpush1.msra.mxu0 0.0
    %6110 = vmatprep.subr.mxu0 0.0
    %6111 = vmatpush1.msra.mxu0 0.0
    %6112 = vmatprep.subr.mxu0 0.0
    %6113 = vmatpush1.msra.mxu0 0.0
    %6114 = vmatprep.subr.mxu0 0.0
    %6115 = vmatpush1.msra.mxu0 0.0
    %6116 = vmatprep.subr.mxu0 0.0
    %6117 = vmatpush1.msra.mxu0 0.0
    %6118 = vmatprep.subr.mxu0 0.0
    %6119 = vmatpush1.msra.mxu0 0.0
    %6120 = vmatprep.subr.mxu0 0.0
    %6121 = vmatpush1.msra.mxu0 0.0
    %6122 = vmatprep.subr.mxu0 0.0
    %6123 = vmatpush1.msra.mxu0 0.0
    %6124 = vmatprep.subr.mxu0 0.0
    %6125 = vmatpush1.msra.mxu0 0.0
    %6126 = vmatprep.subr.mxu0 0.0
    %6127 = vmatpush1.msra.mxu0 0.0
    %6128 = vmatprep.subr.mxu0 0.0
    %6129 = vmatpush1.msra.mxu0 0.0
    %6130 = vmatprep.subr.mxu0 0.0
    %6131 = vmatpush1.msra.mxu0 0.0
    %6132 = vmatprep.subr.mxu0 0.0
    %6133 = vmatpush1.msra.mxu0 0.0
    %6134 = vmatprep.subr.mxu0 0.0
    %6135 = vmatpush1.msra.mxu0 0.0
    %6136 = vmatprep.subr.mxu0 0.0
    %6137 = vmatpush1.msra.mxu0 0.0
    %6138 = vmatprep.subr.mxu0 0.0
    %6139 = vmatpush1.msra.mxu0 0.0
    %6140 = vmatprep.subr.mxu0 0.0
    %6141 = vmatpush1.msra.mxu0 0.0
    %6142 = vmatprep.mubr.f32.mxu0 0.0
    %6143 = vmatmul.mubr.f32.gmra.mrb[0].mxu0 %v6076
    %v6144 = vpop.f32.mrb[0].mxu0
    %v6145 = vadd.f32 %v5969, %v6144
    %v6146 = vpop.f32.mrb[0].mxu0
    %6147 = vdwg.mxu0
    %6148 = vmatprep.subr.mxu0 0.0
    %6149 = vmatpush1.msra.mxu0 %v5921
    %6150 = vmatprep.subr.mxu0 0.0
    %6151 = vmatpush1.msra.mxu0 %v5922
    %6152 = vmatprep.subr.mxu0 0.0
    %6153 = vmatpush1.msra.mxu0 %v5923
    %6154 = vmatprep.subr.mxu0 0.0
    %6155 = vmatpush1.msra.mxu0 %v5924
    %6156 = vmatprep.subr.mxu0 0.0
    %6157 = vmatpush1.msra.mxu0 0.0
    %6158 = vmatprep.subr.mxu0 0.0
    %6159 = vmatpush1.msra.mxu0 0.0
    %6160 = vmatprep.subr.mxu0 0.0
    %6161 = vmatpush1.msra.mxu0 0.0
    %6162 = vmatprep.subr.mxu0 0.0
    %6163 = vmatpush1.msra.mxu0 0.0
    %6164 = vmatprep.subr.mxu0 0.0
    %6165 = vmatpush1.msra.mxu0 0.0
    %6166 = vmatprep.subr.mxu0 0.0
    %6167 = vmatpush1.msra.mxu0 0.0
    %6168 = vmatprep.subr.mxu0 0.0
    %6169 = vmatpush1.msra.mxu0 0.0
    %6170 = vmatprep.subr.mxu0 0.0
    %6171 = vmatpush1.msra.mxu0 0.0
    %6172 = vmatprep.subr.mxu0 0.0
    %6173 = vmatpush1.msra.mxu0 0.0
    %6174 = vmatprep.subr.mxu0 0.0
    %6175 = vmatpush1.msra.mxu0 0.0
    %6176 = vmatprep.subr.mxu0 0.0
    %6177 = vmatpush1.msra.mxu0 0.0
    %6178 = vmatprep.subr.mxu0 0.0
    %6179 = vmatpush1.msra.mxu0 0.0
    %6180 = vmatprep.subr.mxu0 0.0
    %6181 = vmatpush1.msra.mxu0 0.0
    %6182 = vmatprep.subr.mxu0 0.0
    %6183 = vmatpush1.msra.mxu0 0.0
    %6184 = vmatprep.subr.mxu0 0.0
    %6185 = vmatpush1.msra.mxu0 0.0
    %6186 = vmatprep.subr.mxu0 0.0
    %6187 = vmatpush1.msra.mxu0 0.0
    %6188 = vmatprep.subr.mxu0 0.0
    %6189 = vmatpush1.msra.mxu0 0.0
    %6190 = vmatprep.subr.mxu0 0.0
    %6191 = vmatpush1.msra.mxu0 0.0
    %6192 = vmatprep.subr.mxu0 0.0
    %6193 = vmatpush1.msra.mxu0 0.0
    %6194 = vmatprep.subr.mxu0 0.0
    %6195 = vmatpush1.msra.mxu0 0.0
    %6196 = vmatprep.subr.mxu0 0.0
    %6197 = vmatpush1.msra.mxu0 0.0
    %6198 = vmatprep.subr.mxu0 0.0
    %6199 = vmatpush1.msra.mxu0 0.0
    %6200 = vmatprep.subr.mxu0 0.0
    %6201 = vmatpush1.msra.mxu0 0.0
    %6202 = vmatprep.subr.mxu0 0.0
    %6203 = vmatpush1.msra.mxu0 0.0
    %6204 = vmatprep.subr.mxu0 0.0
    %6205 = vmatpush1.msra.mxu0 0.0
    %6206 = vmatprep.subr.mxu0 0.0
    %6207 = vmatpush1.msra.mxu0 0.0
    %6208 = vmatprep.subr.mxu0 0.0
    %6209 = vmatpush1.msra.mxu0 0.0
    %6210 = vmatprep.subr.mxu0 0.0
    %6211 = vmatpush1.msra.mxu0 0.0
    %6212 = vmatprep.mubr.f32.mxu0 0.0
    %6213 = vmatmul.mubr.f32.gmra.mrb[0].mxu0 %v6003
    %v6214 = vpop.f32.mrb[0].mxu0
    %v6215 = vadd.f32 %v5973, %v6214
    %v6216 = vpop.f32.mrb[0].mxu0
    %6217 = vdwg.mxu0
    %6218 = vmatprep.subr.mxu0 0.0
    %6219 = vmatpush1.msra.mxu0 %v5925
    %6220 = vmatprep.subr.mxu0 0.0
    %6221 = vmatpush1.msra.mxu0 %v5926
    %6222 = vmatprep.subr.mxu0 0.0
    %6223 = vmatpush1.msra.mxu0 %v5927
    %6224 = vmatprep.subr.mxu0 0.0
    %6225 = vmatpush1.msra.mxu0 %v5928
    %6226 = vmatprep.subr.mxu0 0.0
    %6227 = vmatpush1.msra.mxu0 0.0
    %6228 = vmatprep.subr.mxu0 0.0
    %6229 = vmatpush1.msra.mxu0 0.0
    %6230 = vmatprep.subr.mxu0 0.0
    %6231 = vmatpush1.msra.mxu0 0.0
    %6232 = vmatprep.subr.mxu0 0.0
    %6233 = vmatpush1.msra.mxu0 0.0
    %6234 = vmatprep.subr.mxu0 0.0
    %6235 = vmatpush1.msra.mxu0 0.0
    %6236 = vmatprep.subr.mxu0 0.0
    %6237 = vmatpush1.msra.mxu0 0.0
    %6238 = vmatprep.subr.mxu0 0.0
    %6239 = vmatpush1.msra.mxu0 0.0
    %6240 = vmatprep.subr.mxu0 0.0
    %6241 = vmatpush1.msra.mxu0 0.0
    %6242 = vmatprep.subr.mxu0 0.0
    %6243 = vmatpush1.msra.mxu0 0.0
    %6244 = vmatprep.subr.mxu0 0.0
    %6245 = vmatpush1.msra.mxu0 0.0
    %6246 = vmatprep.subr.mxu0 0.0
    %6247 = vmatpush1.msra.mxu0 0.0
    %6248 = vmatprep.subr.mxu0 0.0
    %6249 = vmatpush1.msra.mxu0 0.0
    %6250 = vmatprep.subr.mxu0 0.0
    %6251 = vmatpush1.msra.mxu0 0.0
    %6252 = vmatprep.subr.mxu0 0.0
    %6253 = vmatpush1.msra.mxu0 0.0
    %6254 = vmatprep.subr.mxu0 0.0
    %6255 = vmatpush1.msra.mxu0 0.0
    %6256 = vmatprep.subr.mxu0 0.0
    %6257 = vmatpush1.msra.mxu0 0.0
    %6258 = vmatprep.subr.mxu0 0.0
    %6259 = vmatpush1.msra.mxu0 0.0
    %6260 = vmatprep.subr.mxu0 0.0
    %6261 = vmatpush1.msra.mxu0 0.0
    %6262 = vmatprep.subr.mxu0 0.0
    %6263 = vmatpush1.msra.mxu0 0.0
    %6264 = vmatprep.subr.mxu0 0.0
    %6265 = vmatpush1.msra.mxu0 0.0
    %6266 = vmatprep.subr.mxu0 0.0
    %6267 = vmatpush1.msra.mxu0 0.0
    %6268 = vmatprep.subr.mxu0 0.0
    %6269 = vmatpush1.msra.mxu0 0.0
    %6270 = vmatprep.subr.mxu0 0.0
    %6271 = vmatpush1.msra.mxu0 0.0
    %6272 = vmatprep.subr.mxu0 0.0
    %6273 = vmatpush1.msra.mxu0 0.0
    %6274 = vmatprep.subr.mxu0 0.0
    %6275 = vmatpush1.msra.mxu0 0.0
    %6276 = vmatprep.subr.mxu0 0.0
    %6277 = vmatpush1.msra.mxu0 0.0
    %6278 = vmatprep.subr.mxu0 0.0
    %6279 = vmatpush1.msra.mxu0 0.0
    %6280 = vmatprep.subr.mxu0 0.0
    %6281 = vmatpush1.msra.mxu0 0.0
    %6282 = vmatprep.mubr.f32.mxu0 0.0
    %6283 = vmatmul.mubr.f32.gmra.mrb[0].mxu0 %v6076
    %v6284 = vpop.f32.mrb[0].mxu0
    %v6285 = vadd.f32 %v5977, %v6284
    %v6286 = vpop.f32.mrb[0].mxu0
    %6287 = vdwg.mxu0
    %6288 = vmatprep.subr.mxu0 0.0
    %6289 = vmatpush1.msra.mxu0 %v5929
    %6290 = vmatprep.subr.mxu0 0.0
    %6291 = vmatpush1.msra.mxu0 %v5930
    %6292 = vmatprep.subr.mxu0 0.0
    %6293 = vmatpush1.msra.mxu0 %v5931
    %6294 = vmatprep.subr.mxu0 0.0
    %6295 = vmatpush1.msra.mxu0 %v5932
    %6296 = vmatprep.subr.mxu0 0.0
    %6297 = vmatpush1.msra.mxu0 0.0
    %6298 = vmatprep.subr.mxu0 0.0
    %6299 = vmatpush1.msra.mxu0 0.0
    %6300 = vmatprep.subr.mxu0 0.0
    %6301 = vmatpush1.msra.mxu0 0.0
    %6302 = vmatprep.subr.mxu0 0.0
    %6303 = vmatpush1.msra.mxu0 0.0
    %6304 = vmatprep.subr.mxu0 0.0
    %6305 = vmatpush1.msra.mxu0 0.0
    %6306 = vmatprep.subr.mxu0 0.0
    %6307 = vmatpush1.msra.mxu0 0.0
    %6308 = vmatprep.subr.mxu0 0.0
    %6309 = vmatpush1.msra.mxu0 0.0
    %6310 = vmatprep.subr.mxu0 0.0
    %6311 = vmatpush1.msra.mxu0 0.0
    %6312 = vmatprep.subr.mxu0 0.0
    %6313 = vmatpush1.msra.mxu0 0.0
    %6314 = vmatprep.subr.mxu0 0.0
    %6315 = vmatpush1.msra.mxu0 0.0
    %6316 = vmatprep.subr.mxu0 0.0
    %6317 = vmatpush1.msra.mxu0 0.0
    %6318 = vmatprep.subr.mxu0 0.0
    %6319 = vmatpush1.msra.mxu0 0.0
    %6320 = vmatprep.subr.mxu0 0.0
    %6321 = vmatpush1.msra.mxu0 0.0
    %6322 = vmatprep.subr.mxu0 0.0
    %6323 = vmatpush1.msra.mxu0 0.0
    %6324 = vmatprep.subr.mxu0 0.0
    %6325 = vmatpush1.msra.mxu0 0.0
    %6326 = vmatprep.subr.mxu0 0.0
    %6327 = vmatpush1.msra.mxu0 0.0
    %6328 = vmatprep.subr.mxu0 0.0
    %6329 = vmatpush1.msra.mxu0 0.0
    %6330 = vmatprep.subr.mxu0 0.0
    %6331 = vmatpush1.msra.mxu0 0.0
    %6332 = vmatprep.subr.mxu0 0.0
    %6333 = vmatpush1.msra.mxu0 0.0
    %6334 = vmatprep.subr.mxu0 0.0
    %6335 = vmatpush1.msra.mxu0 0.0
    %6336 = vmatprep.subr.mxu0 0.0
    %6337 = vmatpush1.msra.mxu0 0.0
    %6338 = vmatprep.subr.mxu0 0.0
    %6339 = vmatpush1.msra.mxu0 0.0
    %6340 = vmatprep.subr.mxu0 0.0
    %6341 = vmatpush1.msra.mxu0 0.0
    %6342 = vmatprep.subr.mxu0 0.0
    %6343 = vmatpush1.msra.mxu0 0.0
    %6344 = vmatprep.subr.mxu0 0.0
    %6345 = vmatpush1.msra.mxu0 0.0
    %6346 = vmatprep.subr.mxu0 0.0
    %6347 = vmatpush1.msra.mxu0 0.0
    %6348 = vmatprep.subr.mxu0 0.0
    %6349 = vmatpush1.msra.mxu0 0.0
    %6350 = vmatprep.subr.mxu0 0.0
    %6351 = vmatpush1.msra.mxu0 0.0
    %6352 = vmatprep.mubr.f32.mxu0 0.0
    %6353 = vmatmul.mubr.f32.gmra.mrb[0].mxu0 %v6003
    %v6354 = vpop.f32.mrb[0].mxu0
    %v6355 = vadd.f32 %v5981, %v6354
    %v6356 = vpop.f32.mrb[0].mxu0
    %6357 = vdwg.mxu0
    %6358 = vmatprep.subr.mxu0 0.0
    %6359 = vmatpush1.msra.mxu0 %v5933
    %6360 = vmatprep.subr.mxu0 0.0
    %6361 = vmatpush1.msra.mxu0 %v5934
    %6362 = vmatprep.subr.mxu0 0.0
    %6363 = vmatpush1.msra.mxu0 %v5935
    %6364 = vmatprep.subr.mxu0 0.0
    %6365 = vmatpush1.msra.mxu0 %v5936
    %6366 = vmatprep.subr.mxu0 0.0
    %6367 = vmatpush1.msra.mxu0 0.0
    %6368 = vmatprep.subr.mxu0 0.0
    %6369 = vmatpush1.msra.mxu0 0.0
    %6370 = vmatprep.subr.mxu0 0.0
    %6371 = vmatpush1.msra.mxu0 0.0
    %6372 = vmatprep.subr.mxu0 0.0
    %6373 = vmatpush1.msra.mxu0 0.0
    %6374 = vmatprep.subr.mxu0 0.0
    %6375 = vmatpush1.msra.mxu0 0.0
    %6376 = vmatprep.subr.mxu0 0.0
    %6377 = vmatpush1.msra.mxu0 0.0
    %6378 = vmatprep.subr.mxu0 0.0
    %6379 = vmatpush1.msra.mxu0 0.0
    %6380 = vmatprep.subr.mxu0 0.0
    %6381 = vmatpush1.msra.mxu0 0.0
    %6382 = vmatprep.subr.mxu0 0.0
    %6383 = vmatpush1.msra.mxu0 0.0
    %6384 = vmatprep.subr.mxu0 0.0
    %6385 = vmatpush1.msra.mxu0 0.0
    %6386 = vmatprep.subr.mxu0 0.0
    %6387 = vmatpush1.msra.mxu0 0.0
    %6388 = vmatprep.subr.mxu0 0.0
    %6389 = vmatpush1.msra.mxu0 0.0
    %6390 = vmatprep.subr.mxu0 0.0
    %6391 = vmatpush1.msra.mxu0 0.0
    %6392 = vmatprep.subr.mxu0 0.0
    %6393 = vmatpush1.msra.mxu0 0.0
    %6394 = vmatprep.subr.mxu0 0.0
    %6395 = vmatpush1.msra.mxu0 0.0
    %6396 = vmatprep.subr.mxu0 0.0
    %6397 = vmatpush1.msra.mxu0 0.0
    %6398 = vmatprep.subr.mxu0 0.0
    %6399 = vmatpush1.msra.mxu0 0.0
    %6400 = vmatprep.subr.mxu0 0.0
    %6401 = vmatpush1.msra.mxu0 0.0
    %6402 = vmatprep.subr.mxu0 0.0
    %6403 = vmatpush1.msra.mxu0 0.0
    %6404 = vmatprep.subr.mxu0 0.0
    %6405 = vmatpush1.msra.mxu0 0.0
    %6406 = vmatprep.subr.mxu0 0.0
    %6407 = vmatpush1.msra.mxu0 0.0
    %6408 = vmatprep.subr.mxu0 0.0
    %6409 = vmatpush1.msra.mxu0 0.0
    %6410 = vmatprep.subr.mxu0 0.0
    %6411 = vmatpush1.msra.mxu0 0.0
    %6412 = vmatprep.subr.mxu0 0.0
    %6413 = vmatpush1.msra.mxu0 0.0
    %6414 = vmatprep.subr.mxu0 0.0
    %6415 = vmatpush1.msra.mxu0 0.0
    %6416 = vmatprep.subr.mxu0 0.0
    %6417 = vmatpush1.msra.mxu0 0.0
    %6418 = vmatprep.subr.mxu0 0.0
    %6419 = vmatpush1.msra.mxu0 0.0
    %6420 = vmatprep.subr.mxu0 0.0
    %6421 = vmatpush1.msra.mxu0 0.0
    %6422 = vmatprep.mubr.f32.mxu0 0.0
    %6423 = vmatmul.mubr.f32.gmra.mrb[0].mxu0 %v6076
    %v6424 = vpop.f32.mrb[0].mxu0
    %v6425 = vadd.f32 %v5985, %v6424
    %v6426 = vpop.f32.mrb[0].mxu0
    %6427 = vdwg.mxu0
    %6428 = vmatprep.subr.mxu0 0.0
    %6429 = vmatpush1.msra.mxu0 %v5937
    %6430 = vmatprep.subr.mxu0 0.0
    %6431 = vmatpush1.msra.mxu0 %v5938
    %6432 = vmatprep.subr.mxu0 0.0
    %6433 = vmatpush1.msra.mxu0 %v5939
    %6434 = vmatprep.subr.mxu0 0.0
    %6435 = vmatpush1.msra.mxu0 %v5940
    %6436 = vmatprep.subr.mxu0 0.0
    %6437 = vmatpush1.msra.mxu0 0.0
    %6438 = vmatprep.subr.mxu0 0.0
    %6439 = vmatpush1.msra.mxu0 0.0
    %6440 = vmatprep.subr.mxu0 0.0
    %6441 = vmatpush1.msra.mxu0 0.0
    %6442 = vmatprep.subr.mxu0 0.0
    %6443 = vmatpush1.msra.mxu0 0.0
    %6444 = vmatprep.subr.mxu0 0.0
    %6445 = vmatpush1.msra.mxu0 0.0
    %6446 = vmatprep.subr.mxu0 0.0
    %6447 = vmatpush1.msra.mxu0 0.0
    %6448 = vmatprep.subr.mxu0 0.0
    %6449 = vmatpush1.msra.mxu0 0.0
    %6450 = vmatprep.subr.mxu0 0.0
    %6451 = vmatpush1.msra.mxu0 0.0
    %6452 = vmatprep.subr.mxu0 0.0
    %6453 = vmatpush1.msra.mxu0 0.0
    %6454 = vmatprep.subr.mxu0 0.0
    %6455 = vmatpush1.msra.mxu0 0.0
    %6456 = vmatprep.subr.mxu0 0.0
    %6457 = vmatpush1.msra.mxu0 0.0
    %6458 = vmatprep.subr.mxu0 0.0
    %6459 = vmatpush1.msra.mxu0 0.0
    %6460 = vmatprep.subr.mxu0 0.0
    %6461 = vmatpush1.msra.mxu0 0.0
    %6462 = vmatprep.subr.mxu0 0.0
    %6463 = vmatpush1.msra.mxu0 0.0
    %6464 = vmatprep.subr.mxu0 0.0
    %6465 = vmatpush1.msra.mxu0 0.0
    %6466 = vmatprep.subr.mxu0 0.0
    %6467 = vmatpush1.msra.mxu0 0.0
    %6468 = vmatprep.subr.mxu0 0.0
    %6469 = vmatpush1.msra.mxu0 0.0
    %6470 = vmatprep.subr.mxu0 0.0
    %6471 = vmatpush1.msra.mxu0 0.0
    %6472 = vmatprep.subr.mxu0 0.0
    %6473 = vmatpush1.msra.mxu0 0.0
    %6474 = vmatprep.subr.mxu0 0.0
    %6475 = vmatpush1.msra.mxu0 0.0
    %6476 = vmatprep.subr.mxu0 0.0
    %6477 = vmatpush1.msra.mxu0 0.0
    %6478 = vmatprep.subr.mxu0 0.0
    %6479 = vmatpush1.msra.mxu0 0.0
    %6480 = vmatprep.subr.mxu0 0.0
    %6481 = vmatpush1.msra.mxu0 0.0
    %6482 = vmatprep.subr.mxu0 0.0
    %6483 = vmatpush1.msra.mxu0 0.0
    %6484 = vmatprep.subr.mxu0 0.0
    %6485 = vmatpush1.msra.mxu0 0.0
    %6486 = vmatprep.subr.mxu0 0.0
    %6487 = vmatpush1.msra.mxu0 0.0
    %6488 = vmatprep.subr.mxu0 0.0
    %6489 = vmatpush1.msra.mxu0 0.0
    %6490 = vmatprep.subr.mxu0 0.0
    %6491 = vmatpush1.msra.mxu0 0.0
    %6492 = vmatprep.mubr.f32.mxu0 0.0
    %6493 = vmatmul.mubr.f32.gmra.mrb[0].mxu0 %v6003
    %v6494 = vpop.f32.mrb[0].mxu0
    %v6495 = vadd.f32 %v5989, %v6494
    %v6496 = vpop.f32.mrb[0].mxu0
    %6497 = vdwg.mxu0
    %6498 = vmatprep.subr.mxu0 0.0
    %6499 = vmatpush1.msra.mxu0 %v5941
    %6500 = vmatprep.subr.mxu0 0.0
    %6501 = vmatpush1.msra.mxu0 %v5942
    %6502 = vmatprep.subr.mxu0 0.0
    %6503 = vmatpush1.msra.mxu0 %v5943
    %6504 = vmatprep.subr.mxu0 0.0
    %6505 = vmatpush1.msra.mxu0 %v5944
    %6506 = vmatprep.subr.mxu0 0.0
    %6507 = vmatpush1.msra.mxu0 0.0
    %6508 = vmatprep.subr.mxu0 0.0
    %6509 = vmatpush1.msra.mxu0 0.0
    %6510 = vmatprep.subr.mxu0 0.0
    %6511 = vmatpush1.msra.mxu0 0.0
    %6512 = vmatprep.subr.mxu0 0.0
    %6513 = vmatpush1.msra.mxu0 0.0
    %6514 = vmatprep.subr.mxu0 0.0
    %6515 = vmatpush1.msra.mxu0 0.0
    %6516 = vmatprep.subr.mxu0 0.0
    %6517 = vmatpush1.msra.mxu0 0.0
    %6518 = vmatprep.subr.mxu0 0.0
    %6519 = vmatpush1.msra.mxu0 0.0
    %6520 = vmatprep.subr.mxu0 0.0
    %6521 = vmatpush1.msra.mxu0 0.0
    %6522 = vmatprep.subr.mxu0 0.0
    %6523 = vmatpush1.msra.mxu0 0.0
    %6524 = vmatprep.subr.mxu0 0.0
    %6525 = vmatpush1.msra.mxu0 0.0
    %6526 = vmatprep.subr.mxu0 0.0
    %6527 = vmatpush1.msra.mxu0 0.0
    %6528 = vmatprep.subr.mxu0 0.0
    %6529 = vmatpush1.msra.mxu0 0.0
    %6530 = vmatprep.subr.mxu0 0.0
    %6531 = vmatpush1.msra.mxu0 0.0
    %6532 = vmatprep.subr.mxu0 0.0
    %6533 = vmatpush1.msra.mxu0 0.0
    %6534 = vmatprep.subr.mxu0 0.0
    %6535 = vmatpush1.msra.mxu0 0.0
    %6536 = vmatprep.subr.mxu0 0.0
    %6537 = vmatpush1.msra.mxu0 0.0
    %6538 = vmatprep.subr.mxu0 0.0
    %6539 = vmatpush1.msra.mxu0 0.0
    %6540 = vmatprep.subr.mxu0 0.0
    %6541 = vmatpush1.msra.mxu0 0.0
    %6542 = vmatprep.subr.mxu0 0.0
    %6543 = vmatpush1.msra.mxu0 0.0
    %6544 = vmatprep.subr.mxu0 0.0
    %6545 = vmatpush1.msra.mxu0 0.0
    %6546 = vmatprep.subr.mxu0 0.0
    %6547 = vmatpush1.msra.mxu0 0.0
    %6548 = vmatprep.subr.mxu0 0.0
    %6549 = vmatpush1.msra.mxu0 0.0
    %6550 = vmatprep.subr.mxu0 0.0
    %6551 = vmatpush1.msra.mxu0 0.0
    %6552 = vmatprep.subr.mxu0 0.0
    %6553 = vmatpush1.msra.mxu0 0.0
    %6554 = vmatprep.subr.mxu0 0.0
    %6555 = vmatpush1.msra.mxu0 0.0
    %6556 = vmatprep.subr.mxu0 0.0
    %6557 = vmatpush1.msra.mxu0 0.0
    %6558 = vmatprep.subr.mxu0 0.0
    %6559 = vmatpush1.msra.mxu0 0.0
    %6560 = vmatprep.subr.mxu0 0.0
    %6561 = vmatpush1.msra.mxu0 0.0
    %6562 = vmatprep.mubr.f32.mxu0 0.0
    %6563 = vmatmul.mubr.f32.gmra.mrb[0].mxu0 %v6076
    %v6564 = vpop.f32.mrb[0].mxu0
    %v6565 = vadd.f32 %v5993, %v6564
    %v6566 = vpop.f32.mrb[0].mxu0
    %6567 = vdwg.mxu0
    %6569 = vrot.lane.b32.xlu0 %v6072, 120
    %v6570 = vpop.permute.xlu0 %6569
    %v6571 = vsel %vm759, %v6072, 0
    %v6573 = vsel %vm759, %v6570, 0
    %6575 = vmatprep.subr.mxu0 0.0
    %6576 = vmatpush1.xpose.msra.mxu0 %v6573
    %6577 = vmatprep.subr.mxu0 0.0
    %6578 = vmatpush1.xpose.msra.mxu0 0.0
    %6579 = vmatprep.subr.mxu0 0.0
    %6580 = vmatpush1.xpose.msra.mxu0 0.0
    %6581 = vmatprep.subr.mxu0 0.0
    %6582 = vmatpush1.xpose.msra.mxu0 0.0
    %6583 = vmatprep.subr.mxu0 0.0
    %6584 = vmatpush1.xpose.msra.mxu0 0.0
    %6585 = vmatprep.subr.mxu0 0.0
    %6586 = vmatpush1.xpose.msra.mxu0 0.0
    %6587 = vmatprep.subr.mxu0 0.0
    %6588 = vmatpush1.xpose.msra.mxu0 0.0
    %6589 = vmatprep.subr.mxu0 0.0
    %6590 = vmatpush1.xpose.msra.mxu0 0.0
    %6591 = vmatprep.subr.mxu0 0.0
    %6592 = vmatpush1.xpose.msra.mxu0 0.0
    %6593 = vmatprep.subr.mxu0 0.0
    %6594 = vmatpush1.xpose.msra.mxu0 0.0
    %6595 = vmatprep.subr.mxu0 0.0
    %6596 = vmatpush1.xpose.msra.mxu0 0.0
    %6597 = vmatprep.subr.mxu0 0.0
    %6598 = vmatpush1.xpose.msra.mxu0 0.0
    %6599 = vmatprep.subr.mxu0 0.0
    %6600 = vmatpush1.xpose.msra.mxu0 0.0
    %6601 = vmatprep.subr.mxu0 0.0
    %6602 = vmatpush1.xpose.msra.mxu0 0.0
    %6603 = vmatprep.subr.mxu0 0.0
    %6604 = vmatpush1.xpose.msra.mxu0 0.0
    %6605 = vmatprep.subr.mxu0 0.0
    %6606 = vmatpush1.xpose.msra.mxu0 0.0
    %6607 = vmatprep.subr.mxu0 0.0
    %6608 = vmatpush1.xpose.msra.mxu0 0.0
    %6609 = vmatprep.subr.mxu0 0.0
    %6610 = vmatpush1.xpose.msra.mxu0 0.0
    %6611 = vmatprep.subr.mxu0 0.0
    %6612 = vmatpush1.xpose.msra.mxu0 0.0
    %6613 = vmatprep.subr.mxu0 0.0
    %6614 = vmatpush1.xpose.msra.mxu0 0.0
    %6615 = vmatprep.subr.mxu0 0.0
    %6616 = vmatpush1.xpose.msra.mxu0 0.0
    %6617 = vmatprep.subr.mxu0 0.0
    %6618 = vmatpush1.xpose.msra.mxu0 0.0
    %6619 = vmatprep.subr.mxu0 0.0
    %6620 = vmatpush1.xpose.msra.mxu0 0.0
    %6621 = vmatprep.subr.mxu0 0.0
    %6622 = vmatpush1.xpose.msra.mxu0 0.0
    %6623 = vmatprep.subr.mxu0 0.0
    %6624 = vmatpush1.xpose.msra.mxu0 0.0
    %6625 = vmatprep.subr.mxu0 0.0
    %6626 = vmatpush1.xpose.msra.mxu0 0.0
    %6627 = vmatprep.subr.mxu0 0.0
    %6628 = vmatpush1.xpose.msra.mxu0 0.0
    %6629 = vmatprep.subr.mxu0 0.0
    %6630 = vmatpush1.xpose.msra.mxu0 0.0
    %6631 = vmatprep.subr.mxu0 0.0
    %6632 = vmatpush1.xpose.msra.mxu0 0.0
    %6633 = vmatprep.subr.mxu0 0.0
    %6634 = vmatpush1.xpose.msra.mxu0 0.0
    %6635 = vmatprep.subr.mxu0 0.0
    %6636 = vmatpush1.xpose.msra.mxu0 0.0
    %6637 = vmatprep.subr.mxu0 0.0
    %6638 = vmatpush1.xpose.msra.mxu0 0.0
    %6639 = vmatprep.mubr.f32.mxu0 0.0
    %6640 = vmatmul.mubr.f32.gmra.mrb[0].mxu0 %v6571
    %v6641 = vpop.f32.mrb[0].mxu0
    %v6642 = vadd.f32 0.0, %v6641
    %v6643 = vpop.f32.mrb[0].mxu0
    %6644 = vdwg.mxu0
    %6646 = vrot.lane.b32.xlu0 %v6145, 120
    %v6647 = vpop.permute.xlu0 %6646
    %v6648 = vsel %vm759, %v6145, 0
    %v6650 = vsel %vm759, %v6647, 0
    %6652 = vmatprep.subr.mxu0 0.0
    %6653 = vmatpush1.xpose.msra.mxu0 %v6650
    %6654 = vmatprep.subr.mxu0 0.0
    %6655 = vmatpush1.xpose.msra.mxu0 0.0
    %6656 = vmatprep.subr.mxu0 0.0
    %6657 = vmatpush1.xpose.msra.mxu0 0.0
    %6658 = vmatprep.subr.mxu0 0.0
    %6659 = vmatpush1.xpose.msra.mxu0 0.0
    %6660 = vmatprep.subr.mxu0 0.0
    %6661 = vmatpush1.xpose.msra.mxu0 0.0
    %6662 = vmatprep.subr.mxu0 0.0
    %6663 = vmatpush1.xpose.msra.mxu0 0.0
    %6664 = vmatprep.subr.mxu0 0.0
    %6665 = vmatpush1.xpose.msra.mxu0 0.0
    %6666 = vmatprep.subr.mxu0 0.0
    %6667 = vmatpush1.xpose.msra.mxu0 0.0
    %6668 = vmatprep.subr.mxu0 0.0
    %6669 = vmatpush1.xpose.msra.mxu0 0.0
    %6670 = vmatprep.subr.mxu0 0.0
    %6671 = vmatpush1.xpose.msra.mxu0 0.0
    %6672 = vmatprep.subr.mxu0 0.0
    %6673 = vmatpush1.xpose.msra.mxu0 0.0
    %6674 = vmatprep.subr.mxu0 0.0
    %6675 = vmatpush1.xpose.msra.mxu0 0.0
    %6676 = vmatprep.subr.mxu0 0.0
    %6677 = vmatpush1.xpose.msra.mxu0 0.0
    %6678 = vmatprep.subr.mxu0 0.0
    %6679 = vmatpush1.xpose.msra.mxu0 0.0
    %6680 = vmatprep.subr.mxu0 0.0
    %6681 = vmatpush1.xpose.msra.mxu0 0.0
    %6682 = vmatprep.subr.mxu0 0.0
    %6683 = vmatpush1.xpose.msra.mxu0 0.0
    %6684 = vmatprep.subr.mxu0 0.0
    %6685 = vmatpush1.xpose.msra.mxu0 0.0
    %6686 = vmatprep.subr.mxu0 0.0
    %6687 = vmatpush1.xpose.msra.mxu0 0.0
    %6688 = vmatprep.subr.mxu0 0.0
    %6689 = vmatpush1.xpose.msra.mxu0 0.0
    %6690 = vmatprep.subr.mxu0 0.0
    %6691 = vmatpush1.xpose.msra.mxu0 0.0
    %6692 = vmatprep.subr.mxu0 0.0
    %6693 = vmatpush1.xpose.msra.mxu0 0.0
    %6694 = vmatprep.subr.mxu0 0.0
    %6695 = vmatpush1.xpose.msra.mxu0 0.0
    %6696 = vmatprep.subr.mxu0 0.0
    %6697 = vmatpush1.xpose.msra.mxu0 0.0
    %6698 = vmatprep.subr.mxu0 0.0
    %6699 = vmatpush1.xpose.msra.mxu0 0.0
    %6700 = vmatprep.subr.mxu0 0.0
    %6701 = vmatpush1.xpose.msra.mxu0 0.0
    %6702 = vmatprep.subr.mxu0 0.0
    %6703 = vmatpush1.xpose.msra.mxu0 0.0
    %6704 = vmatprep.subr.mxu0 0.0
    %6705 = vmatpush1.xpose.msra.mxu0 0.0
    %6706 = vmatprep.subr.mxu0 0.0
    %6707 = vmatpush1.xpose.msra.mxu0 0.0
    %6708 = vmatprep.subr.mxu0 0.0
    %6709 = vmatpush1.xpose.msra.mxu0 0.0
    %6710 = vmatprep.subr.mxu0 0.0
    %6711 = vmatpush1.xpose.msra.mxu0 0.0
    %6712 = vmatprep.subr.mxu0 0.0
    %6713 = vmatpush1.xpose.msra.mxu0 0.0
    %6714 = vmatprep.subr.mxu0 0.0
    %6715 = vmatpush1.xpose.msra.mxu0 0.0
    %6716 = vmatprep.mubr.f32.mxu0 0.0
    %6717 = vmatmul.mubr.f32.gmra.mrb[0].mxu0 %v6648
    %v6718 = vpop.f32.mrb[0].mxu0
    %v6719 = vadd.f32 0.0, %v6718
    %v6720 = vpop.f32.mrb[0].mxu0
    %6721 = vdwg.mxu0
    %6723 = vrot.lane.b32.xlu0 %v6215, 120
    %v6724 = vpop.permute.xlu0 %6723
    %v6725 = vsel %vm759, %v6215, 0
    %v6727 = vsel %vm759, %v6724, 0
    %6729 = vmatprep.subr.mxu0 0.0
    %6730 = vmatpush1.xpose.msra.mxu0 %v6727
    %6731 = vmatprep.subr.mxu0 0.0
    %6732 = vmatpush1.xpose.msra.mxu0 0.0
    %6733 = vmatprep.subr.mxu0 0.0
    %6734 = vmatpush1.xpose.msra.mxu0 0.0
    %6735 = vmatprep.subr.mxu0 0.0
    %6736 = vmatpush1.xpose.msra.mxu0 0.0
    %6737 = vmatprep.subr.mxu0 0.0
    %6738 = vmatpush1.xpose.msra.mxu0 0.0
    %6739 = vmatprep.subr.mxu0 0.0
    %6740 = vmatpush1.xpose.msra.mxu0 0.0
    %6741 = vmatprep.subr.mxu0 0.0
    %6742 = vmatpush1.xpose.msra.mxu0 0.0
    %6743 = vmatprep.subr.mxu0 0.0
    %6744 = vmatpush1.xpose.msra.mxu0 0.0
    %6745 = vmatprep.subr.mxu0 0.0
    %6746 = vmatpush1.xpose.msra.mxu0 0.0
    %6747 = vmatprep.subr.mxu0 0.0
    %6748 = vmatpush1.xpose.msra.mxu0 0.0
    %6749 = vmatprep.subr.mxu0 0.0
    %6750 = vmatpush1.xpose.msra.mxu0 0.0
    %6751 = vmatprep.subr.mxu0 0.0
    %6752 = vmatpush1.xpose.msra.mxu0 0.0
    %6753 = vmatprep.subr.mxu0 0.0
    %6754 = vmatpush1.xpose.msra.mxu0 0.0
    %6755 = vmatprep.subr.mxu0 0.0
    %6756 = vmatpush1.xpose.msra.mxu0 0.0
    %6757 = vmatprep.subr.mxu0 0.0
    %6758 = vmatpush1.xpose.msra.mxu0 0.0
    %6759 = vmatprep.subr.mxu0 0.0
    %6760 = vmatpush1.xpose.msra.mxu0 0.0
    %6761 = vmatprep.subr.mxu0 0.0
    %6762 = vmatpush1.xpose.msra.mxu0 0.0
    %6763 = vmatprep.subr.mxu0 0.0
    %6764 = vmatpush1.xpose.msra.mxu0 0.0
    %6765 = vmatprep.subr.mxu0 0.0
    %6766 = vmatpush1.xpose.msra.mxu0 0.0
    %6767 = vmatprep.subr.mxu0 0.0
    %6768 = vmatpush1.xpose.msra.mxu0 0.0
    %6769 = vmatprep.subr.mxu0 0.0
    %6770 = vmatpush1.xpose.msra.mxu0 0.0
    %6771 = vmatprep.subr.mxu0 0.0
    %6772 = vmatpush1.xpose.msra.mxu0 0.0
    %6773 = vmatprep.subr.mxu0 0.0
    %6774 = vmatpush1.xpose.msra.mxu0 0.0
    %6775 = vmatprep.subr.mxu0 0.0
    %6776 = vmatpush1.xpose.msra.mxu0 0.0
    %6777 = vmatprep.subr.mxu0 0.0
    %6778 = vmatpush1.xpose.msra.mxu0 0.0
    %6779 = vmatprep.subr.mxu0 0.0
    %6780 = vmatpush1.xpose.msra.mxu0 0.0
    %6781 = vmatprep.subr.mxu0 0.0
    %6782 = vmatpush1.xpose.msra.mxu0 0.0
    %6783 = vmatprep.subr.mxu0 0.0
    %6784 = vmatpush1.xpose.msra.mxu0 0.0
    %6785 = vmatprep.subr.mxu0 0.0
    %6786 = vmatpush1.xpose.msra.mxu0 0.0
    %6787 = vmatprep.subr.mxu0 0.0
    %6788 = vmatpush1.xpose.msra.mxu0 0.0
    %6789 = vmatprep.subr.mxu0 0.0
    %6790 = vmatpush1.xpose.msra.mxu0 0.0
    %6791 = vmatprep.subr.mxu0 0.0
    %6792 = vmatpush1.xpose.msra.mxu0 0.0
    %6793 = vmatprep.mubr.f32.mxu0 0.0
    %6794 = vmatmul.mubr.f32.gmra.mrb[0].mxu0 %v6725
    %v6795 = vpop.f32.mrb[0].mxu0
    %v6796 = vadd.f32 0.0, %v6795
    %v6797 = vpop.f32.mrb[0].mxu0
    %6798 = vdwg.mxu0
    %6800 = vrot.lane.b32.xlu0 %v6285, 120
    %v6801 = vpop.permute.xlu0 %6800
    %v6802 = vsel %vm759, %v6285, 0
    %v6804 = vsel %vm759, %v6801, 0
    %6806 = vmatprep.subr.mxu0 0.0
    %6807 = vmatpush1.xpose.msra.mxu0 %v6804
    %6808 = vmatprep.subr.mxu0 0.0
    %6809 = vmatpush1.xpose.msra.mxu0 0.0
    %6810 = vmatprep.subr.mxu0 0.0
    %6811 = vmatpush1.xpose.msra.mxu0 0.0
    %6812 = vmatprep.subr.mxu0 0.0
    %6813 = vmatpush1.xpose.msra.mxu0 0.0
    %6814 = vmatprep.subr.mxu0 0.0
    %6815 = vmatpush1.xpose.msra.mxu0 0.0
    %6816 = vmatprep.subr.mxu0 0.0
    %6817 = vmatpush1.xpose.msra.mxu0 0.0
    %6818 = vmatprep.subr.mxu0 0.0
    %6819 = vmatpush1.xpose.msra.mxu0 0.0
    %6820 = vmatprep.subr.mxu0 0.0
    %6821 = vmatpush1.xpose.msra.mxu0 0.0
    %6822 = vmatprep.subr.mxu0 0.0
    %6823 = vmatpush1.xpose.msra.mxu0 0.0
    %6824 = vmatprep.subr.mxu0 0.0
    %6825 = vmatpush1.xpose.msra.mxu0 0.0
    %6826 = vmatprep.subr.mxu0 0.0
    %6827 = vmatpush1.xpose.msra.mxu0 0.0
    %6828 = vmatprep.subr.mxu0 0.0
    %6829 = vmatpush1.xpose.msra.mxu0 0.0
    %6830 = vmatprep.subr.mxu0 0.0
    %6831 = vmatpush1.xpose.msra.mxu0 0.0
    %6832 = vmatprep.subr.mxu0 0.0
    %6833 = vmatpush1.xpose.msra.mxu0 0.0
    %6834 = vmatprep.subr.mxu0 0.0
    %6835 = vmatpush1.xpose.msra.mxu0 0.0
    %6836 = vmatprep.subr.mxu0 0.0
    %6837 = vmatpush1.xpose.msra.mxu0 0.0
    %6838 = vmatprep.subr.mxu0 0.0
    %6839 = vmatpush1.xpose.msra.mxu0 0.0
    %6840 = vmatprep.subr.mxu0 0.0
    %6841 = vmatpush1.xpose.msra.mxu0 0.0
    %6842 = vmatprep.subr.mxu0 0.0
    %6843 = vmatpush1.xpose.msra.mxu0 0.0
    %6844 = vmatprep.subr.mxu0 0.0
    %6845 = vmatpush1.xpose.msra.mxu0 0.0
    %6846 = vmatprep.subr.mxu0 0.0
    %6847 = vmatpush1.xpose.msra.mxu0 0.0
    %6848 = vmatprep.subr.mxu0 0.0
    %6849 = vmatpush1.xpose.msra.mxu0 0.0
    %6850 = vmatprep.subr.mxu0 0.0
    %6851 = vmatpush1.xpose.msra.mxu0 0.0
    %6852 = vmatprep.subr.mxu0 0.0
    %6853 = vmatpush1.xpose.msra.mxu0 0.0
    %6854 = vmatprep.subr.mxu0 0.0
    %6855 = vmatpush1.xpose.msra.mxu0 0.0
    %6856 = vmatprep.subr.mxu0 0.0
    %6857 = vmatpush1.xpose.msra.mxu0 0.0
    %6858 = vmatprep.subr.mxu0 0.0
    %6859 = vmatpush1.xpose.msra.mxu0 0.0
    %6860 = vmatprep.subr.mxu0 0.0
    %6861 = vmatpush1.xpose.msra.mxu0 0.0
    %6862 = vmatprep.subr.mxu0 0.0
    %6863 = vmatpush1.xpose.msra.mxu0 0.0
    %6864 = vmatprep.subr.mxu0 0.0
    %6865 = vmatpush1.xpose.msra.mxu0 0.0
    %6866 = vmatprep.subr.mxu0 0.0
    %6867 = vmatpush1.xpose.msra.mxu0 0.0
    %6868 = vmatprep.subr.mxu0 0.0
    %6869 = vmatpush1.xpose.msra.mxu0 0.0
    %6870 = vmatprep.mubr.f32.mxu0 0.0
    %6871 = vmatmul.mubr.f32.gmra.mrb[0].mxu0 %v6802
    %v6872 = vpop.f32.mrb[0].mxu0
    %v6873 = vadd.f32 0.0, %v6872
    %v6874 = vpop.f32.mrb[0].mxu0
    %6875 = vdwg.mxu0
    %6877 = vrot.lane.b32.xlu0 %v6355, 120
    %v6878 = vpop.permute.xlu0 %6877
    %v6879 = vsel %vm759, %v6355, 0
    %v6881 = vsel %vm759, %v6878, 0
    %6883 = vmatprep.subr.mxu0 0.0
    %6884 = vmatpush1.xpose.msra.mxu0 %v6881
    %6885 = vmatprep.subr.mxu0 0.0
    %6886 = vmatpush1.xpose.msra.mxu0 0.0
    %6887 = vmatprep.subr.mxu0 0.0
    %6888 = vmatpush1.xpose.msra.mxu0 0.0
    %6889 = vmatprep.subr.mxu0 0.0
    %6890 = vmatpush1.xpose.msra.mxu0 0.0
    %6891 = vmatprep.subr.mxu0 0.0
    %6892 = vmatpush1.xpose.msra.mxu0 0.0
    %6893 = vmatprep.subr.mxu0 0.0
    %6894 = vmatpush1.xpose.msra.mxu0 0.0
    %6895 = vmatprep.subr.mxu0 0.0
    %6896 = vmatpush1.xpose.msra.mxu0 0.0
    %6897 = vmatprep.subr.mxu0 0.0
    %6898 = vmatpush1.xpose.msra.mxu0 0.0
    %6899 = vmatprep.subr.mxu0 0.0
    %6900 = vmatpush1.xpose.msra.mxu0 0.0
    %6901 = vmatprep.subr.mxu0 0.0
    %6902 = vmatpush1.xpose.msra.mxu0 0.0
    %6903 = vmatprep.subr.mxu0 0.0
    %6904 = vmatpush1.xpose.msra.mxu0 0.0
    %6905 = vmatprep.subr.mxu0 0.0
    %6906 = vmatpush1.xpose.msra.mxu0 0.0
    %6907 = vmatprep.subr.mxu0 0.0
    %6908 = vmatpush1.xpose.msra.mxu0 0.0
    %6909 = vmatprep.subr.mxu0 0.0
    %6910 = vmatpush1.xpose.msra.mxu0 0.0
    %6911 = vmatprep.subr.mxu0 0.0
    %6912 = vmatpush1.xpose.msra.mxu0 0.0
    %6913 = vmatprep.subr.mxu0 0.0
    %6914 = vmatpush1.xpose.msra.mxu0 0.0
    %6915 = vmatprep.subr.mxu0 0.0
    %6916 = vmatpush1.xpose.msra.mxu0 0.0
    %6917 = vmatprep.subr.mxu0 0.0
    %6918 = vmatpush1.xpose.msra.mxu0 0.0
    %6919 = vmatprep.subr.mxu0 0.0
    %6920 = vmatpush1.xpose.msra.mxu0 0.0
    %6921 = vmatprep.subr.mxu0 0.0
    %6922 = vmatpush1.xpose.msra.mxu0 0.0
    %6923 = vmatprep.subr.mxu0 0.0
    %6924 = vmatpush1.xpose.msra.mxu0 0.0
    %6925 = vmatprep.subr.mxu0 0.0
    %6926 = vmatpush1.xpose.msra.mxu0 0.0
    %6927 = vmatprep.subr.mxu0 0.0
    %6928 = vmatpush1.xpose.msra.mxu0 0.0
    %6929 = vmatprep.subr.mxu0 0.0
    %6930 = vmatpush1.xpose.msra.mxu0 0.0
    %6931 = vmatprep.subr.mxu0 0.0
    %6932 = vmatpush1.xpose.msra.mxu0 0.0
    %6933 = vmatprep.subr.mxu0 0.0
    %6934 = vmatpush1.xpose.msra.mxu0 0.0
    %6935 = vmatprep.subr.mxu0 0.0
    %6936 = vmatpush1.xpose.msra.mxu0 0.0
    %6937 = vmatprep.subr.mxu0 0.0
    %6938 = vmatpush1.xpose.msra.mxu0 0.0
    %6939 = vmatprep.subr.mxu0 0.0
    %6940 = vmatpush1.xpose.msra.mxu0 0.0
    %6941 = vmatprep.subr.mxu0 0.0
    %6942 = vmatpush1.xpose.msra.mxu0 0.0
    %6943 = vmatprep.subr.mxu0 0.0
    %6944 = vmatpush1.xpose.msra.mxu0 0.0
    %6945 = vmatprep.subr.mxu0 0.0
    %6946 = vmatpush1.xpose.msra.mxu0 0.0
    %6947 = vmatprep.mubr.f32.mxu0 0.0
    %6948 = vmatmul.mubr.f32.gmra.mrb[0].mxu0 %v6879
    %v6949 = vpop.f32.mrb[0].mxu0
    %v6950 = vadd.f32 0.0, %v6949
    %v6951 = vpop.f32.mrb[0].mxu0
    %6952 = vdwg.mxu0
    %6954 = vrot.lane.b32.xlu0 %v6425, 120
    %v6955 = vpop.permute.xlu0 %6954
    %v6956 = vsel %vm759, %v6425, 0
    %v6958 = vsel %vm759, %v6955, 0
    %6960 = vmatprep.subr.mxu0 0.0
    %6961 = vmatpush1.xpose.msra.mxu0 %v6958
    %6962 = vmatprep.subr.mxu0 0.0
    %6963 = vmatpush1.xpose.msra.mxu0 0.0
    %6964 = vmatprep.subr.mxu0 0.0
    %6965 = vmatpush1.xpose.msra.mxu0 0.0
    %6966 = vmatprep.subr.mxu0 0.0
    %6967 = vmatpush1.xpose.msra.mxu0 0.0
    %6968 = vmatprep.subr.mxu0 0.0
    %6969 = vmatpush1.xpose.msra.mxu0 0.0
    %6970 = vmatprep.subr.mxu0 0.0
    %6971 = vmatpush1.xpose.msra.mxu0 0.0
    %6972 = vmatprep.subr.mxu0 0.0
    %6973 = vmatpush1.xpose.msra.mxu0 0.0
    %6974 = vmatprep.subr.mxu0 0.0
    %6975 = vmatpush1.xpose.msra.mxu0 0.0
    %6976 = vmatprep.subr.mxu0 0.0
    %6977 = vmatpush1.xpose.msra.mxu0 0.0
    %6978 = vmatprep.subr.mxu0 0.0
    %6979 = vmatpush1.xpose.msra.mxu0 0.0
    %6980 = vmatprep.subr.mxu0 0.0
    %6981 = vmatpush1.xpose.msra.mxu0 0.0
    %6982 = vmatprep.subr.mxu0 0.0
    %6983 = vmatpush1.xpose.msra.mxu0 0.0
    %6984 = vmatprep.subr.mxu0 0.0
    %6985 = vmatpush1.xpose.msra.mxu0 0.0
    %6986 = vmatprep.subr.mxu0 0.0
    %6987 = vmatpush1.xpose.msra.mxu0 0.0
    %6988 = vmatprep.subr.mxu0 0.0
    %6989 = vmatpush1.xpose.msra.mxu0 0.0
    %6990 = vmatprep.subr.mxu0 0.0
    %6991 = vmatpush1.xpose.msra.mxu0 0.0
    %6992 = vmatprep.subr.mxu0 0.0
    %6993 = vmatpush1.xpose.msra.mxu0 0.0
    %6994 = vmatprep.subr.mxu0 0.0
    %6995 = vmatpush1.xpose.msra.mxu0 0.0
    %6996 = vmatprep.subr.mxu0 0.0
    %6997 = vmatpush1.xpose.msra.mxu0 0.0
    %6998 = vmatprep.subr.mxu0 0.0
    %6999 = vmatpush1.xpose.msra.mxu0 0.0
    %7000 = vmatprep.subr.mxu0 0.0
    %7001 = vmatpush1.xpose.msra.mxu0 0.0
    %7002 = vmatprep.subr.mxu0 0.0
    %7003 = vmatpush1.xpose.msra.mxu0 0.0
    %7004 = vmatprep.subr.mxu0 0.0
    %7005 = vmatpush1.xpose.msra.mxu0 0.0
    %7006 = vmatprep.subr.mxu0 0.0
    %7007 = vmatpush1.xpose.msra.mxu0 0.0
    %7008 = vmatprep.subr.mxu0 0.0
    %7009 = vmatpush1.xpose.msra.mxu0 0.0
    %7010 = vmatprep.subr.mxu0 0.0
    %7011 = vmatpush1.xpose.msra.mxu0 0.0
    %7012 = vmatprep.subr.mxu0 0.0
    %7013 = vmatpush1.xpose.msra.mxu0 0.0
    %7014 = vmatprep.subr.mxu0 0.0
    %7015 = vmatpush1.xpose.msra.mxu0 0.0
    %7016 = vmatprep.subr.mxu0 0.0
    %7017 = vmatpush1.xpose.msra.mxu0 0.0
    %7018 = vmatprep.subr.mxu0 0.0
    %7019 = vmatpush1.xpose.msra.mxu0 0.0
    %7020 = vmatprep.subr.mxu0 0.0
    %7021 = vmatpush1.xpose.msra.mxu0 0.0
    %7022 = vmatprep.subr.mxu0 0.0
    %7023 = vmatpush1.xpose.msra.mxu0 0.0
    %7024 = vmatprep.mubr.f32.mxu0 0.0
    %7025 = vmatmul.mubr.f32.gmra.mrb[0].mxu0 %v6956
    %v7026 = vpop.f32.mrb[0].mxu0
    %v7027 = vadd.f32 0.0, %v7026
    %v7028 = vpop.f32.mrb[0].mxu0
    %7029 = vdwg.mxu0
    %7031 = vrot.lane.b32.xlu0 %v6495, 120
    %v7032 = vpop.permute.xlu0 %7031
    %v7033 = vsel %vm759, %v6495, 0
    %v7035 = vsel %vm759, %v7032, 0
    %7037 = vmatprep.subr.mxu0 0.0
    %7038 = vmatpush1.xpose.msra.mxu0 %v7035
    %7039 = vmatprep.subr.mxu0 0.0
    %7040 = vmatpush1.xpose.msra.mxu0 0.0
    %7041 = vmatprep.subr.mxu0 0.0
    %7042 = vmatpush1.xpose.msra.mxu0 0.0
    %7043 = vmatprep.subr.mxu0 0.0
    %7044 = vmatpush1.xpose.msra.mxu0 0.0
    %7045 = vmatprep.subr.mxu0 0.0
    %7046 = vmatpush1.xpose.msra.mxu0 0.0
    %7047 = vmatprep.subr.mxu0 0.0
    %7048 = vmatpush1.xpose.msra.mxu0 0.0
    %7049 = vmatprep.subr.mxu0 0.0
    %7050 = vmatpush1.xpose.msra.mxu0 0.0
    %7051 = vmatprep.subr.mxu0 0.0
    %7052 = vmatpush1.xpose.msra.mxu0 0.0
    %7053 = vmatprep.subr.mxu0 0.0
    %7054 = vmatpush1.xpose.msra.mxu0 0.0
    %7055 = vmatprep.subr.mxu0 0.0
    %7056 = vmatpush1.xpose.msra.mxu0 0.0
    %7057 = vmatprep.subr.mxu0 0.0
    %7058 = vmatpush1.xpose.msra.mxu0 0.0
    %7059 = vmatprep.subr.mxu0 0.0
    %7060 = vmatpush1.xpose.msra.mxu0 0.0
    %7061 = vmatprep.subr.mxu0 0.0
    %7062 = vmatpush1.xpose.msra.mxu0 0.0
    %7063 = vmatprep.subr.mxu0 0.0
    %7064 = vmatpush1.xpose.msra.mxu0 0.0
    %7065 = vmatprep.subr.mxu0 0.0
    %7066 = vmatpush1.xpose.msra.mxu0 0.0
    %7067 = vmatprep.subr.mxu0 0.0
    %7068 = vmatpush1.xpose.msra.mxu0 0.0
    %7069 = vmatprep.subr.mxu0 0.0
    %7070 = vmatpush1.xpose.msra.mxu0 0.0
    %7071 = vmatprep.subr.mxu0 0.0
    %7072 = vmatpush1.xpose.msra.mxu0 0.0
    %7073 = vmatprep.subr.mxu0 0.0
    %7074 = vmatpush1.xpose.msra.mxu0 0.0
    %7075 = vmatprep.subr.mxu0 0.0
    %7076 = vmatpush1.xpose.msra.mxu0 0.0
    %7077 = vmatprep.subr.mxu0 0.0
    %7078 = vmatpush1.xpose.msra.mxu0 0.0
    %7079 = vmatprep.subr.mxu0 0.0
    %7080 = vmatpush1.xpose.msra.mxu0 0.0
    %7081 = vmatprep.subr.mxu0 0.0
    %7082 = vmatpush1.xpose.msra.mxu0 0.0
    %7083 = vmatprep.subr.mxu0 0.0
    %7084 = vmatpush1.xpose.msra.mxu0 0.0
    %7085 = vmatprep.subr.mxu0 0.0
    %7086 = vmatpush1.xpose.msra.mxu0 0.0
    %7087 = vmatprep.subr.mxu0 0.0
    %7088 = vmatpush1.xpose.msra.mxu0 0.0
    %7089 = vmatprep.subr.mxu0 0.0
    %7090 = vmatpush1.xpose.msra.mxu0 0.0
    %7091 = vmatprep.subr.mxu0 0.0
    %7092 = vmatpush1.xpose.msra.mxu0 0.0
    %7093 = vmatprep.subr.mxu0 0.0
    %7094 = vmatpush1.xpose.msra.mxu0 0.0
    %7095 = vmatprep.subr.mxu0 0.0
    %7096 = vmatpush1.xpose.msra.mxu0 0.0
    %7097 = vmatprep.subr.mxu0 0.0
    %7098 = vmatpush1.xpose.msra.mxu0 0.0
    %7099 = vmatprep.subr.mxu0 0.0
    %7100 = vmatpush1.xpose.msra.mxu0 0.0
    %7101 = vmatprep.mubr.f32.mxu0 0.0
    %7102 = vmatmul.mubr.f32.gmra.mrb[0].mxu0 %v7033
    %v7103 = vpop.f32.mrb[0].mxu0
    %v7104 = vadd.f32 0.0, %v7103
    %v7105 = vpop.f32.mrb[0].mxu0
    %7106 = vdwg.mxu0
    %7108 = vrot.lane.b32.xlu0 %v6565, 120
    %v7109 = vpop.permute.xlu0 %7108
    %v7110 = vsel %vm759, %v6565, 0
    %v7112 = vsel %vm759, %v7109, 0
    %7114 = vmatprep.subr.mxu0 0.0
    %7115 = vmatpush1.xpose.msra.mxu0 %v7112
    %7116 = vmatprep.subr.mxu0 0.0
    %7117 = vmatpush1.xpose.msra.mxu0 0.0
    %7118 = vmatprep.subr.mxu0 0.0
    %7119 = vmatpush1.xpose.msra.mxu0 0.0
    %7120 = vmatprep.subr.mxu0 0.0
    %7121 = vmatpush1.xpose.msra.mxu0 0.0
    %7122 = vmatprep.subr.mxu0 0.0
    %7123 = vmatpush1.xpose.msra.mxu0 0.0
    %7124 = vmatprep.subr.mxu0 0.0
    %7125 = vmatpush1.xpose.msra.mxu0 0.0
    %7126 = vmatprep.subr.mxu0 0.0
    %7127 = vmatpush1.xpose.msra.mxu0 0.0
    %7128 = vmatprep.subr.mxu0 0.0
    %7129 = vmatpush1.xpose.msra.mxu0 0.0
    %7130 = vmatprep.subr.mxu0 0.0
    %7131 = vmatpush1.xpose.msra.mxu0 0.0
    %7132 = vmatprep.subr.mxu0 0.0
    %7133 = vmatpush1.xpose.msra.mxu0 0.0
    %7134 = vmatprep.subr.mxu0 0.0
    %7135 = vmatpush1.xpose.msra.mxu0 0.0
    %7136 = vmatprep.subr.mxu0 0.0
    %7137 = vmatpush1.xpose.msra.mxu0 0.0
    %7138 = vmatprep.subr.mxu0 0.0
    %7139 = vmatpush1.xpose.msra.mxu0 0.0
    %7140 = vmatprep.subr.mxu0 0.0
    %7141 = vmatpush1.xpose.msra.mxu0 0.0
    %7142 = vmatprep.subr.mxu0 0.0
    %7143 = vmatpush1.xpose.msra.mxu0 0.0
    %7144 = vmatprep.subr.mxu0 0.0
    %7145 = vmatpush1.xpose.msra.mxu0 0.0
    %7146 = vmatprep.subr.mxu0 0.0
    %7147 = vmatpush1.xpose.msra.mxu0 0.0
    %7148 = vmatprep.subr.mxu0 0.0
    %7149 = vmatpush1.xpose.msra.mxu0 0.0
    %7150 = vmatprep.subr.mxu0 0.0
    %7151 = vmatpush1.xpose.msra.mxu0 0.0
    %7152 = vmatprep.subr.mxu0 0.0
    %7153 = vmatpush1.xpose.msra.mxu0 0.0
    %7154 = vmatprep.subr.mxu0 0.0
    %7155 = vmatpush1.xpose.msra.mxu0 0.0
    %7156 = vmatprep.subr.mxu0 0.0
    %7157 = vmatpush1.xpose.msra.mxu0 0.0
    %7158 = vmatprep.subr.mxu0 0.0
    %7159 = vmatpush1.xpose.msra.mxu0 0.0
    %7160 = vmatprep.subr.mxu0 0.0
    %7161 = vmatpush1.xpose.msra.mxu0 0.0
    %7162 = vmatprep.subr.mxu0 0.0
    %7163 = vmatpush1.xpose.msra.mxu0 0.0
    %7164 = vmatprep.subr.mxu0 0.0
    %7165 = vmatpush1.xpose.msra.mxu0 0.0
    %7166 = vmatprep.subr.mxu0 0.0
    %7167 = vmatpush1.xpose.msra.mxu0 0.0
    %7168 = vmatprep.subr.mxu0 0.0
    %7169 = vmatpush1.xpose.msra.mxu0 0.0
    %7170 = vmatprep.subr.mxu0 0.0
    %7171 = vmatpush1.xpose.msra.mxu0 0.0
    %7172 = vmatprep.subr.mxu0 0.0
    %7173 = vmatpush1.xpose.msra.mxu0 0.0
    %7174 = vmatprep.subr.mxu0 0.0
    %7175 = vmatpush1.xpose.msra.mxu0 0.0
    %7176 = vmatprep.subr.mxu0 0.0
    %7177 = vmatpush1.xpose.msra.mxu0 0.0
    %7178 = vmatprep.mubr.f32.mxu0 0.0
    %7179 = vmatmul.mubr.f32.gmra.mrb[0].mxu0 %v7110
    %v7180 = vpop.f32.mrb[0].mxu0
    %v7181 = vadd.f32 0.0, %v7180
    %v7182 = vpop.f32.mrb[0].mxu0
    %7183 = vdwg.mxu0
    %v7184 = vmul.f32 %v6642, 0.35355338
    %v7185 = vmul.f32 %v6719, 0.35355338
    %v7186 = vmul.f32 %v6796, 0.35355338
    %v7187 = vmul.f32 %v6873, 0.35355338
    %v7188 = vmul.f32 %v6950, 0.35355338
    %v7189 = vmul.f32 %v7027, 0.35355338
    %v7190 = vmul.f32 %v7104, 0.35355338
    %v7191 = vmul.f32 %v7181, 0.35355338
    %v7192 = vadd.f32 %v7184, %v1386
    %v7193 = vadd.f32 %v7185, %v1390
    %v7194 = vadd.f32 %v7186, %v1386
    %v7195 = vadd.f32 %v7187, %v1390
    %v7196 = vadd.f32 %v7188, %v1386
    %v7197 = vadd.f32 %v7189, %v1390
    %v7198 = vadd.f32 %v7190, %v1386
    %v7199 = vadd.f32 %v7191, %v1390
    %v7200 = vsel %vm759, %v7192, -inf
    %7201 = vmax.xlane.f32.xlu0 %v7200
    %v7202 = vpop.xlane.xlu0 %7201
    %v7203 = vsel %vm759, %v7193, -inf
    %7204 = vmax.xlane.f32.xlu0 %v7203
    %v7205 = vpop.xlane.xlu0 %7204
    %v7206 = vsel %vm759, %v7194, -inf
    %7207 = vmax.xlane.f32.xlu0 %v7206
    %v7208 = vpop.xlane.xlu0 %7207
    %v7209 = vsel %vm759, %v7195, -inf
    %7210 = vmax.xlane.f32.xlu0 %v7209
    %v7211 = vpop.xlane.xlu0 %7210
    %v7212 = vsel %vm759, %v7196, -inf
    %7213 = vmax.xlane.f32.xlu0 %v7212
    %v7214 = vpop.xlane.xlu0 %7213
    %v7215 = vsel %vm759, %v7197, -inf
    %7216 = vmax.xlane.f32.xlu0 %v7215
    %v7217 = vpop.xlane.xlu0 %7216
    %v7218 = vsel %vm759, %v7198, -inf
    %7219 = vmax.xlane.f32.xlu0 %v7218
    %v7220 = vpop.xlane.xlu0 %7219
    %v7221 = vsel %vm759, %v7199, -inf
    %7222 = vmax.xlane.f32.xlu0 %v7221
    %v7223 = vpop.xlane.xlu0 %7222
    %v7224 = vsub.f32 %v7192, %v7202
    %v7225 = vsub.f32 %v7193, %v7205
    %v7226 = vsub.f32 %v7194, %v7208
    %v7227 = vsub.f32 %v7195, %v7211
    %v7228 = vsub.f32 %v7196, %v7214
    %v7229 = vsub.f32 %v7197, %v7217
    %v7230 = vsub.f32 %v7198, %v7220
    %v7231 = vsub.f32 %v7199, %v7223
    %v7232 = vmul.f32 %v7224, 1.442695
    %v7233 = vpow.pop %v7232
    %v7234 = vmul.f32 %v7225, 1.442695
    %v7235 = vpow.pop %v7234
    %v7236 = vmul.f32 %v7226, 1.442695
    %v7237 = vpow.pop %v7236
    %v7238 = vmul.f32 %v7227, 1.442695
    %v7239 = vpow.pop %v7238
    %v7240 = vmul.f32 %v7228, 1.442695
    %v7241 = vpow.pop %v7240
    %v7242 = vmul.f32 %v7229, 1.442695
    %v7243 = vpow.pop %v7242
    %v7244 = vmul.f32 %v7230, 1.442695
    %v7245 = vpow.pop %v7244
    %v7246 = vmul.f32 %v7231, 1.442695
    %v7247 = vpow.pop %v7246
    %v7248 = vsel %vm759, %v7233, 0.0
    %7249 = vadd.xlane.f32.xlu0 %v7248
    %v7250 = vpop.xlane.xlu0 %7249
    %v7251 = vsel %vm759, %v7235, 0.0
    %7252 = vadd.xlane.f32.xlu0 %v7251
    %v7253 = vpop.xlane.xlu0 %7252
    %v7254 = vsel %vm759, %v7237, 0.0
    %7255 = vadd.xlane.f32.xlu0 %v7254
    %v7256 = vpop.xlane.xlu0 %7255
    %v7257 = vsel %vm759, %v7239, 0.0
    %7258 = vadd.xlane.f32.xlu0 %v7257
    %v7259 = vpop.xlane.xlu0 %7258
    %v7260 = vsel %vm759, %v7241, 0.0
    %7261 = vadd.xlane.f32.xlu0 %v7260
    %v7262 = vpop.xlane.xlu0 %7261
    %v7263 = vsel %vm759, %v7243, 0.0
    %7264 = vadd.xlane.f32.xlu0 %v7263
    %v7265 = vpop.xlane.xlu0 %7264
    %v7266 = vsel %vm759, %v7245, 0.0
    %7267 = vadd.xlane.f32.xlu0 %v7266
    %v7268 = vpop.xlane.xlu0 %7267
    %v7269 = vsel %vm759, %v7247, 0.0
    %7270 = vadd.xlane.f32.xlu0 %v7269
    %v7271 = vpop.xlane.xlu0 %7270
    %v7272 = vrcp.pop %v7250
    %v7273 = vrcp.pop %v7253
    %v7274 = vrcp.pop %v7256
    %v7275 = vrcp.pop %v7259
    %v7276 = vrcp.pop %v7262
    %v7277 = vrcp.pop %v7265
    %v7278 = vrcp.pop %v7268
    %v7279 = vrcp.pop %v7271
    %v7280 = vmul.f32 %v7233, %v7272
    %v7281 = vmul.f32 %v7235, %v7273
    %v7282 = vmul.f32 %v7237, %v7274
    %v7283 = vmul.f32 %v7239, %v7275
    %v7284 = vmul.f32 %v7241, %v7276
    %v7285 = vmul.f32 %v7243, %v7277
    %v7286 = vmul.f32 %v7245, %v7278
    %v7287 = vmul.f32 %v7247, %v7279
    %7288 = vrot.lane.b32.xlu0 %v6072, 112
    %v7289 = vpop.permute.xlu0 %7288
    %v7292 = vsel %vm759, %v7280, 0
    %7294 = vmatprep.subr.mxu0 0.0
    %7295 = vmatpush1.msra.mxu0 %v7289
    %7296 = vmatprep.subr.mxu0 0.0
    %7297 = vmatpush1.msra.mxu0 0.0
    %7298 = vmatprep.subr.mxu0 0.0
    %7299 = vmatpush1.msra.mxu0 0.0
    %7300 = vmatprep.subr.mxu0 0.0
    %7301 = vmatpush1.msra.mxu0 0.0
    %7302 = vmatprep.subr.mxu0 0.0
    %7303 = vmatpush1.msra.mxu0 0.0
    %7304 = vmatprep.subr.mxu0 0.0
    %7305 = vmatpush1.msra.mxu0 0.0
    %7306 = vmatprep.subr.mxu0 0.0
    %7307 = vmatpush1.msra.mxu0 0.0
    %7308 = vmatprep.subr.mxu0 0.0
    %7309 = vmatpush1.msra.mxu0 0.0
    %7310 = vmatprep.subr.mxu0 0.0
    %7311 = vmatpush1.msra.mxu0 0.0
    %7312 = vmatprep.subr.mxu0 0.0
    %7313 = vmatpush1.msra.mxu0 0.0
    %7314 = vmatprep.subr.mxu0 0.0
    %7315 = vmatpush1.msra.mxu0 0.0
    %7316 = vmatprep.subr.mxu0 0.0
    %7317 = vmatpush1.msra.mxu0 0.0
    %7318 = vmatprep.subr.mxu0 0.0
    %7319 = vmatpush1.msra.mxu0 0.0
    %7320 = vmatprep.subr.mxu0 0.0
    %7321 = vmatpush1.msra.mxu0 0.0
    %7322 = vmatprep.subr.mxu0 0.0
    %7323 = vmatpush1.msra.mxu0 0.0
    %7324 = vmatprep.subr.mxu0 0.0
    %7325 = vmatpush1.msra.mxu0 0.0
    %7326 = vmatprep.subr.mxu0 0.0
    %7327 = vmatpush1.msra.mxu0 0.0
    %7328 = vmatprep.subr.mxu0 0.0
    %7329 = vmatpush1.msra.mxu0 0.0
    %7330 = vmatprep.subr.mxu0 0.0
    %7331 = vmatpush1.msra.mxu0 0.0
    %7332 = vmatprep.subr.mxu0 0.0
    %7333 = vmatpush1.msra.mxu0 0.0
    %7334 = vmatprep.subr.mxu0 0.0
    %7335 = vmatpush1.msra.mxu0 0.0
    %7336 = vmatprep.subr.mxu0 0.0
    %7337 = vmatpush1.msra.mxu0 0.0
    %7338 = vmatprep.subr.mxu0 0.0
    %7339 = vmatpush1.msra.mxu0 0.0
    %7340 = vmatprep.subr.mxu0 0.0
    %7341 = vmatpush1.msra.mxu0 0.0
    %7342 = vmatprep.subr.mxu0 0.0
    %7343 = vmatpush1.msra.mxu0 0.0
    %7344 = vmatprep.subr.mxu0 0.0
    %7345 = vmatpush1.msra.mxu0 0.0
    %7346 = vmatprep.subr.mxu0 0.0
    %7347 = vmatpush1.msra.mxu0 0.0
    %7348 = vmatprep.subr.mxu0 0.0
    %7349 = vmatpush1.msra.mxu0 0.0
    %7350 = vmatprep.subr.mxu0 0.0
    %7351 = vmatpush1.msra.mxu0 0.0
    %7352 = vmatprep.subr.mxu0 0.0
    %7353 = vmatpush1.msra.mxu0 0.0
    %7354 = vmatprep.subr.mxu0 0.0
    %7355 = vmatpush1.msra.mxu0 0.0
    %7356 = vmatprep.subr.mxu0 0.0
    %7357 = vmatpush1.msra.mxu0 0.0
    %7358 = vmatprep.mubr.f32.mxu0 0.0
    %7359 = vmatmul.mubr.f32.gmra.mrb[0].mxu0 %v7292
    %v7360 = vpop.f32.mrb[0].mxu0
    %v7361 = vadd.f32 0.0, %v7360
    %v7362 = vpop.f32.mrb[0].mxu0
    %7363 = vdwg.mxu0
    %7364 = vrot.lane.b32.xlu0 %v6145, 112
    %v7365 = vpop.permute.xlu0 %7364
    %v7368 = vsel %vm759, %v7281, 0
    %7370 = vmatprep.subr.mxu0 0.0
    %7371 = vmatpush1.msra.mxu0 %v7365
    %7372 = vmatprep.subr.mxu0 0.0
    %7373 = vmatpush1.msra.mxu0 0.0
    %7374 = vmatprep.subr.mxu0 0.0
    %7375 = vmatpush1.msra.mxu0 0.0
    %7376 = vmatprep.subr.mxu0 0.0
    %7377 = vmatpush1.msra.mxu0 0.0
    %7378 = vmatprep.subr.mxu0 0.0
    %7379 = vmatpush1.msra.mxu0 0.0
    %7380 = vmatprep.subr.mxu0 0.0
    %7381 = vmatpush1.msra.mxu0 0.0
    %7382 = vmatprep.subr.mxu0 0.0
    %7383 = vmatpush1.msra.mxu0 0.0
    %7384 = vmatprep.subr.mxu0 0.0
    %7385 = vmatpush1.msra.mxu0 0.0
    %7386 = vmatprep.subr.mxu0 0.0
    %7387 = vmatpush1.msra.mxu0 0.0
    %7388 = vmatprep.subr.mxu0 0.0
    %7389 = vmatpush1.msra.mxu0 0.0
    %7390 = vmatprep.subr.mxu0 0.0
    %7391 = vmatpush1.msra.mxu0 0.0
    %7392 = vmatprep.subr.mxu0 0.0
    %7393 = vmatpush1.msra.mxu0 0.0
    %7394 = vmatprep.subr.mxu0 0.0
    %7395 = vmatpush1.msra.mxu0 0.0
    %7396 = vmatprep.subr.mxu0 0.0
    %7397 = vmatpush1.msra.mxu0 0.0
    %7398 = vmatprep.subr.mxu0 0.0
    %7399 = vmatpush1.msra.mxu0 0.0
    %7400 = vmatprep.subr.mxu0 0.0
    %7401 = vmatpush1.msra.mxu0 0.0
    %7402 = vmatprep.subr.mxu0 0.0
    %7403 = vmatpush1.msra.mxu0 0.0
    %7404 = vmatprep.subr.mxu0 0.0
    %7405 = vmatpush1.msra.mxu0 0.0
    %7406 = vmatprep.subr.mxu0 0.0
    %7407 = vmatpush1.msra.mxu0 0.0
    %7408 = vmatprep.subr.mxu0 0.0
    %7409 = vmatpush1.msra.mxu0 0.0
    %7410 = vmatprep.subr.mxu0 0.0
    %7411 = vmatpush1.msra.mxu0 0.0
    %7412 = vmatprep.subr.mxu0 0.0
    %7413 = vmatpush1.msra.mxu0 0.0
    %7414 = vmatprep.subr.mxu0 0.0
    %7415 = vmatpush1.msra.mxu0 0.0
    %7416 = vmatprep.subr.mxu0 0.0
    %7417 = vmatpush1.msra.mxu0 0.0
    %7418 = vmatprep.subr.mxu0 0.0
    %7419 = vmatpush1.msra.mxu0 0.0
    %7420 = vmatprep.subr.mxu0 0.0
    %7421 = vmatpush1.msra.mxu0 0.0
    %7422 = vmatprep.subr.mxu0 0.0
    %7423 = vmatpush1.msra.mxu0 0.0
    %7424 = vmatprep.subr.mxu0 0.0
    %7425 = vmatpush1.msra.mxu0 0.0
    %7426 = vmatprep.subr.mxu0 0.0
    %7427 = vmatpush1.msra.mxu0 0.0
    %7428 = vmatprep.subr.mxu0 0.0
    %7429 = vmatpush1.msra.mxu0 0.0
    %7430 = vmatprep.subr.mxu0 0.0
    %7431 = vmatpush1.msra.mxu0 0.0
    %7432 = vmatprep.subr.mxu0 0.0
    %7433 = vmatpush1.msra.mxu0 0.0
    %7434 = vmatprep.mubr.f32.mxu0 0.0
    %7435 = vmatmul.mubr.f32.gmra.mrb[0].mxu0 %v7368
    %v7436 = vpop.f32.mrb[0].mxu0
    %v7437 = vadd.f32 0.0, %v7436
    %v7438 = vpop.f32.mrb[0].mxu0
    %7439 = vdwg.mxu0
    %7440 = vrot.lane.b32.xlu0 %v6215, 112
    %v7441 = vpop.permute.xlu0 %7440
    %v7444 = vsel %vm759, %v7282, 0
    %7446 = vmatprep.subr.mxu0 0.0
    %7447 = vmatpush1.msra.mxu0 %v7441
    %7448 = vmatprep.subr.mxu0 0.0
    %7449 = vmatpush1.msra.mxu0 0.0
    %7450 = vmatprep.subr.mxu0 0.0
    %7451 = vmatpush1.msra.mxu0 0.0
    %7452 = vmatprep.subr.mxu0 0.0
    %7453 = vmatpush1.msra.mxu0 0.0
    %7454 = vmatprep.subr.mxu0 0.0
    %7455 = vmatpush1.msra.mxu0 0.0
    %7456 = vmatprep.subr.mxu0 0.0
    %7457 = vmatpush1.msra.mxu0 0.0
    %7458 = vmatprep.subr.mxu0 0.0
    %7459 = vmatpush1.msra.mxu0 0.0
    %7460 = vmatprep.subr.mxu0 0.0
    %7461 = vmatpush1.msra.mxu0 0.0
    %7462 = vmatprep.subr.mxu0 0.0
    %7463 = vmatpush1.msra.mxu0 0.0
    %7464 = vmatprep.subr.mxu0 0.0
    %7465 = vmatpush1.msra.mxu0 0.0
    %7466 = vmatprep.subr.mxu0 0.0
    %7467 = vmatpush1.msra.mxu0 0.0
    %7468 = vmatprep.subr.mxu0 0.0
    %7469 = vmatpush1.msra.mxu0 0.0
    %7470 = vmatprep.subr.mxu0 0.0
    %7471 = vmatpush1.msra.mxu0 0.0
    %7472 = vmatprep.subr.mxu0 0.0
    %7473 = vmatpush1.msra.mxu0 0.0
    %7474 = vmatprep.subr.mxu0 0.0
    %7475 = vmatpush1.msra.mxu0 0.0
    %7476 = vmatprep.subr.mxu0 0.0
    %7477 = vmatpush1.msra.mxu0 0.0
    %7478 = vmatprep.subr.mxu0 0.0
    %7479 = vmatpush1.msra.mxu0 0.0
    %7480 = vmatprep.subr.mxu0 0.0
    %7481 = vmatpush1.msra.mxu0 0.0
    %7482 = vmatprep.subr.mxu0 0.0
    %7483 = vmatpush1.msra.mxu0 0.0
    %7484 = vmatprep.subr.mxu0 0.0
    %7485 = vmatpush1.msra.mxu0 0.0
    %7486 = vmatprep.subr.mxu0 0.0
    %7487 = vmatpush1.msra.mxu0 0.0
    %7488 = vmatprep.subr.mxu0 0.0
    %7489 = vmatpush1.msra.mxu0 0.0
    %7490 = vmatprep.subr.mxu0 0.0
    %7491 = vmatpush1.msra.mxu0 0.0
    %7492 = vmatprep.subr.mxu0 0.0
    %7493 = vmatpush1.msra.mxu0 0.0
    %7494 = vmatprep.subr.mxu0 0.0
    %7495 = vmatpush1.msra.mxu0 0.0
    %7496 = vmatprep.subr.mxu0 0.0
    %7497 = vmatpush1.msra.mxu0 0.0
    %7498 = vmatprep.subr.mxu0 0.0
    %7499 = vmatpush1.msra.mxu0 0.0
    %7500 = vmatprep.subr.mxu0 0.0
    %7501 = vmatpush1.msra.mxu0 0.0
    %7502 = vmatprep.subr.mxu0 0.0
    %7503 = vmatpush1.msra.mxu0 0.0
    %7504 = vmatprep.subr.mxu0 0.0
    %7505 = vmatpush1.msra.mxu0 0.0
    %7506 = vmatprep.subr.mxu0 0.0
    %7507 = vmatpush1.msra.mxu0 0.0
    %7508 = vmatprep.subr.mxu0 0.0
    %7509 = vmatpush1.msra.mxu0 0.0
    %7510 = vmatprep.mubr.f32.mxu0 0.0
    %7511 = vmatmul.mubr.f32.gmra.mrb[0].mxu0 %v7444
    %v7512 = vpop.f32.mrb[0].mxu0
    %v7513 = vadd.f32 0.0, %v7512
    %v7514 = vpop.f32.mrb[0].mxu0
    %7515 = vdwg.mxu0
    %7516 = vrot.lane.b32.xlu0 %v6285, 112
    %v7517 = vpop.permute.xlu0 %7516
    %v7520 = vsel %vm759, %v7283, 0
    %7522 = vmatprep.subr.mxu0 0.0
    %7523 = vmatpush1.msra.mxu0 %v7517
    %7524 = vmatprep.subr.mxu0 0.0
    %7525 = vmatpush1.msra.mxu0 0.0
    %7526 = vmatprep.subr.mxu0 0.0
    %7527 = vmatpush1.msra.mxu0 0.0
    %7528 = vmatprep.subr.mxu0 0.0
    %7529 = vmatpush1.msra.mxu0 0.0
    %7530 = vmatprep.subr.mxu0 0.0
    %7531 = vmatpush1.msra.mxu0 0.0
    %7532 = vmatprep.subr.mxu0 0.0
    %7533 = vmatpush1.msra.mxu0 0.0
    %7534 = vmatprep.subr.mxu0 0.0
    %7535 = vmatpush1.msra.mxu0 0.0
    %7536 = vmatprep.subr.mxu0 0.0
    %7537 = vmatpush1.msra.mxu0 0.0
    %7538 = vmatprep.subr.mxu0 0.0
    %7539 = vmatpush1.msra.mxu0 0.0
    %7540 = vmatprep.subr.mxu0 0.0
    %7541 = vmatpush1.msra.mxu0 0.0
    %7542 = vmatprep.subr.mxu0 0.0
    %7543 = vmatpush1.msra.mxu0 0.0
    %7544 = vmatprep.subr.mxu0 0.0
    %7545 = vmatpush1.msra.mxu0 0.0
    %7546 = vmatprep.subr.mxu0 0.0
    %7547 = vmatpush1.msra.mxu0 0.0
    %7548 = vmatprep.subr.mxu0 0.0
    %7549 = vmatpush1.msra.mxu0 0.0
    %7550 = vmatprep.subr.mxu0 0.0
    %7551 = vmatpush1.msra.mxu0 0.0
    %7552 = vmatprep.subr.mxu0 0.0
    %7553 = vmatpush1.msra.mxu0 0.0
    %7554 = vmatprep.subr.mxu0 0.0
    %7555 = vmatpush1.msra.mxu0 0.0
    %7556 = vmatprep.subr.mxu0 0.0
    %7557 = vmatpush1.msra.mxu0 0.0
    %7558 = vmatprep.subr.mxu0 0.0
    %7559 = vmatpush1.msra.mxu0 0.0
    %7560 = vmatprep.subr.mxu0 0.0
    %7561 = vmatpush1.msra.mxu0 0.0
    %7562 = vmatprep.subr.mxu0 0.0
    %7563 = vmatpush1.msra.mxu0 0.0
    %7564 = vmatprep.subr.mxu0 0.0
    %7565 = vmatpush1.msra.mxu0 0.0
    %7566 = vmatprep.subr.mxu0 0.0
    %7567 = vmatpush1.msra.mxu0 0.0
    %7568 = vmatprep.subr.mxu0 0.0
    %7569 = vmatpush1.msra.mxu0 0.0
    %7570 = vmatprep.subr.mxu0 0.0
    %7571 = vmatpush1.msra.mxu0 0.0
    %7572 = vmatprep.subr.mxu0 0.0
    %7573 = vmatpush1.msra.mxu0 0.0
    %7574 = vmatprep.subr.mxu0 0.0
    %7575 = vmatpush1.msra.mxu0 0.0
    %7576 = vmatprep.subr.mxu0 0.0
    %7577 = vmatpush1.msra.mxu0 0.0
    %7578 = vmatprep.subr.mxu0 0.0
    %7579 = vmatpush1.msra.mxu0 0.0
    %7580 = vmatprep.subr.mxu0 0.0
    %7581 = vmatpush1.msra.mxu0 0.0
    %7582 = vmatprep.subr.mxu0 0.0
    %7583 = vmatpush1.msra.mxu0 0.0
    %7584 = vmatprep.subr.mxu0 0.0
    %7585 = vmatpush1.msra.mxu0 0.0
    %7586 = vmatprep.mubr.f32.mxu0 0.0
    %7587 = vmatmul.mubr.f32.gmra.mrb[0].mxu0 %v7520
    %v7588 = vpop.f32.mrb[0].mxu0
    %v7589 = vadd.f32 0.0, %v7588
    %v7590 = vpop.f32.mrb[0].mxu0
    %7591 = vdwg.mxu0
    %7592 = vrot.lane.b32.xlu0 %v6355, 112
    %v7593 = vpop.permute.xlu0 %7592
    %v7596 = vsel %vm759, %v7284, 0
    %7598 = vmatprep.subr.mxu0 0.0
    %7599 = vmatpush1.msra.mxu0 %v7593
    %7600 = vmatprep.subr.mxu0 0.0
    %7601 = vmatpush1.msra.mxu0 0.0
    %7602 = vmatprep.subr.mxu0 0.0
    %7603 = vmatpush1.msra.mxu0 0.0
    %7604 = vmatprep.subr.mxu0 0.0
    %7605 = vmatpush1.msra.mxu0 0.0
    %7606 = vmatprep.subr.mxu0 0.0
    %7607 = vmatpush1.msra.mxu0 0.0
    %7608 = vmatprep.subr.mxu0 0.0
    %7609 = vmatpush1.msra.mxu0 0.0
    %7610 = vmatprep.subr.mxu0 0.0
    %7611 = vmatpush1.msra.mxu0 0.0
    %7612 = vmatprep.subr.mxu0 0.0
    %7613 = vmatpush1.msra.mxu0 0.0
    %7614 = vmatprep.subr.mxu0 0.0
    %7615 = vmatpush1.msra.mxu0 0.0
    %7616 = vmatprep.subr.mxu0 0.0
    %7617 = vmatpush1.msra.mxu0 0.0
    %7618 = vmatprep.subr.mxu0 0.0
    %7619 = vmatpush1.msra.mxu0 0.0
    %7620 = vmatprep.subr.mxu0 0.0
    %7621 = vmatpush1.msra.mxu0 0.0
    %7622 = vmatprep.subr.mxu0 0.0
    %7623 = vmatpush1.msra.mxu0 0.0
    %7624 = vmatprep.subr.mxu0 0.0
    %7625 = vmatpush1.msra.mxu0 0.0
    %7626 = vmatprep.subr.mxu0 0.0
    %7627 = vmatpush1.msra.mxu0 0.0
    %7628 = vmatprep.subr.mxu0 0.0
    %7629 = vmatpush1.msra.mxu0 0.0
    %7630 = vmatprep.subr.mxu0 0.0
    %7631 = vmatpush1.msra.mxu0 0.0
    %7632 = vmatprep.subr.mxu0 0.0
    %7633 = vmatpush1.msra.mxu0 0.0
    %7634 = vmatprep.subr.mxu0 0.0
    %7635 = vmatpush1.msra.mxu0 0.0
    %7636 = vmatprep.subr.mxu0 0.0
    %7637 = vmatpush1.msra.mxu0 0.0
    %7638 = vmatprep.subr.mxu0 0.0
    %7639 = vmatpush1.msra.mxu0 0.0
    %7640 = vmatprep.subr.mxu0 0.0
    %7641 = vmatpush1.msra.mxu0 0.0
    %7642 = vmatprep.subr.mxu0 0.0
    %7643 = vmatpush1.msra.mxu0 0.0
    %7644 = vmatprep.subr.mxu0 0.0
    %7645 = vmatpush1.msra.mxu0 0.0
    %7646 = vmatprep.subr.mxu0 0.0
    %7647 = vmatpush1.msra.mxu0 0.0
    %7648 = vmatprep.subr.mxu0 0.0
    %7649 = vmatpush1.msra.mxu0 0.0
    %7650 = vmatprep.subr.mxu0 0.0
    %7651 = vmatpush1.msra.mxu0 0.0
    %7652 = vmatprep.subr.mxu0 0.0
    %7653 = vmatpush1.msra.mxu0 0.0
    %7654 = vmatprep.subr.mxu0 0.0
    %7655 = vmatpush1.msra.mxu0 0.0
    %7656 = vmatprep.subr.mxu0 0.0
    %7657 = vmatpush1.msra.mxu0 0.0
    %7658 = vmatprep.subr.mxu0 0.0
    %7659 = vmatpush1.msra.mxu0 0.0
    %7660 = vmatprep.subr.mxu0 0.0
    %7661 = vmatpush1.msra.mxu0 0.0
    %7662 = vmatprep.mubr.f32.mxu0 0.0
    %7663 = vmatmul.mubr.f32.gmra.mrb[0].mxu0 %v7596
    %v7664 = vpop.f32.mrb[0].mxu0
    %v7665 = vadd.f32 0.0, %v7664
    %v7666 = vpop.f32.mrb[0].mxu0
    %7667 = vdwg.mxu0
    %7668 = vrot.lane.b32.xlu0 %v6425, 112
    %v7669 = vpop.permute.xlu0 %7668
    %v7672 = vsel %vm759, %v7285, 0
    %7674 = vmatprep.subr.mxu0 0.0
    %7675 = vmatpush1.msra.mxu0 %v7669
    %7676 = vmatprep.subr.mxu0 0.0
    %7677 = vmatpush1.msra.mxu0 0.0
    %7678 = vmatprep.subr.mxu0 0.0
    %7679 = vmatpush1.msra.mxu0 0.0
    %7680 = vmatprep.subr.mxu0 0.0
    %7681 = vmatpush1.msra.mxu0 0.0
    %7682 = vmatprep.subr.mxu0 0.0
    %7683 = vmatpush1.msra.mxu0 0.0
    %7684 = vmatprep.subr.mxu0 0.0
    %7685 = vmatpush1.msra.mxu0 0.0
    %7686 = vmatprep.subr.mxu0 0.0
    %7687 = vmatpush1.msra.mxu0 0.0
    %7688 = vmatprep.subr.mxu0 0.0
    %7689 = vmatpush1.msra.mxu0 0.0
    %7690 = vmatprep.subr.mxu0 0.0
    %7691 = vmatpush1.msra.mxu0 0.0
    %7692 = vmatprep.subr.mxu0 0.0
    %7693 = vmatpush1.msra.mxu0 0.0
    %7694 = vmatprep.subr.mxu0 0.0
    %7695 = vmatpush1.msra.mxu0 0.0
    %7696 = vmatprep.subr.mxu0 0.0
    %7697 = vmatpush1.msra.mxu0 0.0
    %7698 = vmatprep.subr.mxu0 0.0
    %7699 = vmatpush1.msra.mxu0 0.0
    %7700 = vmatprep.subr.mxu0 0.0
    %7701 = vmatpush1.msra.mxu0 0.0
    %7702 = vmatprep.subr.mxu0 0.0
    %7703 = vmatpush1.msra.mxu0 0.0
    %7704 = vmatprep.subr.mxu0 0.0
    %7705 = vmatpush1.msra.mxu0 0.0
    %7706 = vmatprep.subr.mxu0 0.0
    %7707 = vmatpush1.msra.mxu0 0.0
    %7708 = vmatprep.subr.mxu0 0.0
    %7709 = vmatpush1.msra.mxu0 0.0
    %7710 = vmatprep.subr.mxu0 0.0
    %7711 = vmatpush1.msra.mxu0 0.0
    %7712 = vmatprep.subr.mxu0 0.0
    %7713 = vmatpush1.msra.mxu0 0.0
    %7714 = vmatprep.subr.mxu0 0.0
    %7715 = vmatpush1.msra.mxu0 0.0
    %7716 = vmatprep.subr.mxu0 0.0
    %7717 = vmatpush1.msra.mxu0 0.0
    %7718 = vmatprep.subr.mxu0 0.0
    %7719 = vmatpush1.msra.mxu0 0.0
    %7720 = vmatprep.subr.mxu0 0.0
    %7721 = vmatpush1.msra.mxu0 0.0
    %7722 = vmatprep.subr.mxu0 0.0
    %7723 = vmatpush1.msra.mxu0 0.0
    %7724 = vmatprep.subr.mxu0 0.0
    %7725 = vmatpush1.msra.mxu0 0.0
    %7726 = vmatprep.subr.mxu0 0.0
    %7727 = vmatpush1.msra.mxu0 0.0
    %7728 = vmatprep.subr.mxu0 0.0
    %7729 = vmatpush1.msra.mxu0 0.0
    %7730 = vmatprep.subr.mxu0 0.0
    %7731 = vmatpush1.msra.mxu0 0.0
    %7732 = vmatprep.subr.mxu0 0.0
    %7733 = vmatpush1.msra.mxu0 0.0
    %7734 = vmatprep.subr.mxu0 0.0
    %7735 = vmatpush1.msra.mxu0 0.0
    %7736 = vmatprep.subr.mxu0 0.0
    %7737 = vmatpush1.msra.mxu0 0.0
    %7738 = vmatprep.mubr.f32.mxu0 0.0
    %7739 = vmatmul.mubr.f32.gmra.mrb[0].mxu0 %v7672
    %v7740 = vpop.f32.mrb[0].mxu0
    %v7741 = vadd.f32 0.0, %v7740
    %v7742 = vpop.f32.mrb[0].mxu0
    %7743 = vdwg.mxu0
    %7744 = vrot.lane.b32.xlu0 %v6495, 112
    %v7745 = vpop.permute.xlu0 %7744
    %v7748 = vsel %vm759, %v7286, 0
    %7750 = vmatprep.subr.mxu0 0.0
    %7751 = vmatpush1.msra.mxu0 %v7745
    %7752 = vmatprep.subr.mxu0 0.0
    %7753 = vmatpush1.msra.mxu0 0.0
    %7754 = vmatprep.subr.mxu0 0.0
    %7755 = vmatpush1.msra.mxu0 0.0
    %7756 = vmatprep.subr.mxu0 0.0
    %7757 = vmatpush1.msra.mxu0 0.0
    %7758 = vmatprep.subr.mxu0 0.0
    %7759 = vmatpush1.msra.mxu0 0.0
    %7760 = vmatprep.subr.mxu0 0.0
    %7761 = vmatpush1.msra.mxu0 0.0
    %7762 = vmatprep.subr.mxu0 0.0
    %7763 = vmatpush1.msra.mxu0 0.0
    %7764 = vmatprep.subr.mxu0 0.0
    %7765 = vmatpush1.msra.mxu0 0.0
    %7766 = vmatprep.subr.mxu0 0.0
    %7767 = vmatpush1.msra.mxu0 0.0
    %7768 = vmatprep.subr.mxu0 0.0
    %7769 = vmatpush1.msra.mxu0 0.0
    %7770 = vmatprep.subr.mxu0 0.0
    %7771 = vmatpush1.msra.mxu0 0.0
    %7772 = vmatprep.subr.mxu0 0.0
    %7773 = vmatpush1.msra.mxu0 0.0
    %7774 = vmatprep.subr.mxu0 0.0
    %7775 = vmatpush1.msra.mxu0 0.0
    %7776 = vmatprep.subr.mxu0 0.0
    %7777 = vmatpush1.msra.mxu0 0.0
    %7778 = vmatprep.subr.mxu0 0.0
    %7779 = vmatpush1.msra.mxu0 0.0
    %7780 = vmatprep.subr.mxu0 0.0
    %7781 = vmatpush1.msra.mxu0 0.0
    %7782 = vmatprep.subr.mxu0 0.0
    %7783 = vmatpush1.msra.mxu0 0.0
    %7784 = vmatprep.subr.mxu0 0.0
    %7785 = vmatpush1.msra.mxu0 0.0
    %7786 = vmatprep.subr.mxu0 0.0
    %7787 = vmatpush1.msra.mxu0 0.0
    %7788 = vmatprep.subr.mxu0 0.0
    %7789 = vmatpush1.msra.mxu0 0.0
    %7790 = vmatprep.subr.mxu0 0.0
    %7791 = vmatpush1.msra.mxu0 0.0
    %7792 = vmatprep.subr.mxu0 0.0
    %7793 = vmatpush1.msra.mxu0 0.0
    %7794 = vmatprep.subr.mxu0 0.0
    %7795 = vmatpush1.msra.mxu0 0.0
    %7796 = vmatprep.subr.mxu0 0.0
    %7797 = vmatpush1.msra.mxu0 0.0
    %7798 = vmatprep.subr.mxu0 0.0
    %7799 = vmatpush1.msra.mxu0 0.0
    %7800 = vmatprep.subr.mxu0 0.0
    %7801 = vmatpush1.msra.mxu0 0.0
    %7802 = vmatprep.subr.mxu0 0.0
    %7803 = vmatpush1.msra.mxu0 0.0
    %7804 = vmatprep.subr.mxu0 0.0
    %7805 = vmatpush1.msra.mxu0 0.0
    %7806 = vmatprep.subr.mxu0 0.0
    %7807 = vmatpush1.msra.mxu0 0.0
    %7808 = vmatprep.subr.mxu0 0.0
    %7809 = vmatpush1.msra.mxu0 0.0
    %7810 = vmatprep.subr.mxu0 0.0
    %7811 = vmatpush1.msra.mxu0 0.0
    %7812 = vmatprep.subr.mxu0 0.0
    %7813 = vmatpush1.msra.mxu0 0.0
    %7814 = vmatprep.mubr.f32.mxu0 0.0
    %7815 = vmatmul.mubr.f32.gmra.mrb[0].mxu0 %v7748
    %v7816 = vpop.f32.mrb[0].mxu0
    %v7817 = vadd.f32 0.0, %v7816
    %v7818 = vpop.f32.mrb[0].mxu0
    %7819 = vdwg.mxu0
    %7820 = vrot.lane.b32.xlu0 %v6565, 112
    %v7821 = vpop.permute.xlu0 %7820
    %v7824 = vsel %vm759, %v7287, 0
    %7826 = vmatprep.subr.mxu0 0.0
    %7827 = vmatpush1.msra.mxu0 %v7821
    %7828 = vmatprep.subr.mxu0 0.0
    %7829 = vmatpush1.msra.mxu0 0.0
    %7830 = vmatprep.subr.mxu0 0.0
    %7831 = vmatpush1.msra.mxu0 0.0
    %7832 = vmatprep.subr.mxu0 0.0
    %7833 = vmatpush1.msra.mxu0 0.0
    %7834 = vmatprep.subr.mxu0 0.0
    %7835 = vmatpush1.msra.mxu0 0.0
    %7836 = vmatprep.subr.mxu0 0.0
    %7837 = vmatpush1.msra.mxu0 0.0
    %7838 = vmatprep.subr.mxu0 0.0
    %7839 = vmatpush1.msra.mxu0 0.0
    %7840 = vmatprep.subr.mxu0 0.0
    %7841 = vmatpush1.msra.mxu0 0.0
    %7842 = vmatprep.subr.mxu0 0.0
    %7843 = vmatpush1.msra.mxu0 0.0
    %7844 = vmatprep.subr.mxu0 0.0
    %7845 = vmatpush1.msra.mxu0 0.0
    %7846 = vmatprep.subr.mxu0 0.0
    %7847 = vmatpush1.msra.mxu0 0.0
    %7848 = vmatprep.subr.mxu0 0.0
    %7849 = vmatpush1.msra.mxu0 0.0
    %7850 = vmatprep.subr.mxu0 0.0
    %7851 = vmatpush1.msra.mxu0 0.0
    %7852 = vmatprep.subr.mxu0 0.0
    %7853 = vmatpush1.msra.mxu0 0.0
    %7854 = vmatprep.subr.mxu0 0.0
    %7855 = vmatpush1.msra.mxu0 0.0
    %7856 = vmatprep.subr.mxu0 0.0
    %7857 = vmatpush1.msra.mxu0 0.0
    %7858 = vmatprep.subr.mxu0 0.0
    %7859 = vmatpush1.msra.mxu0 0.0
    %7860 = vmatprep.subr.mxu0 0.0
    %7861 = vmatpush1.msra.mxu0 0.0
    %7862 = vmatprep.subr.mxu0 0.0
    %7863 = vmatpush1.msra.mxu0 0.0
    %7864 = vmatprep.subr.mxu0 0.0
    %7865 = vmatpush1.msra.mxu0 0.0
    %7866 = vmatprep.subr.mxu0 0.0
    %7867 = vmatpush1.msra.mxu0 0.0
    %7868 = vmatprep.subr.mxu0 0.0
    %7869 = vmatpush1.msra.mxu0 0.0
    %7870 = vmatprep.subr.mxu0 0.0
    %7871 = vmatpush1.msra.mxu0 0.0
    %7872 = vmatprep.subr.mxu0 0.0
    %7873 = vmatpush1.msra.mxu0 0.0
    %7874 = vmatprep.subr.mxu0 0.0
    %7875 = vmatpush1.msra.mxu0 0.0
    %7876 = vmatprep.subr.mxu0 0.0
    %7877 = vmatpush1.msra.mxu0 0.0
    %7878 = vmatprep.subr.mxu0 0.0
    %7879 = vmatpush1.msra.mxu0 0.0
    %7880 = vmatprep.subr.mxu0 0.0
    %7881 = vmatpush1.msra.mxu0 0.0
    %7882 = vmatprep.subr.mxu0 0.0
    %7883 = vmatpush1.msra.mxu0 0.0
    %7884 = vmatprep.subr.mxu0 0.0
    %7885 = vmatpush1.msra.mxu0 0.0
    %7886 = vmatprep.subr.mxu0 0.0
    %7887 = vmatpush1.msra.mxu0 0.0
    %7888 = vmatprep.subr.mxu0 0.0
    %7889 = vmatpush1.msra.mxu0 0.0
    %7890 = vmatprep.mubr.f32.mxu0 0.0
    %7891 = vmatmul.mubr.f32.gmra.mrb[0].mxu0 %v7824
    %v7892 = vpop.f32.mrb[0].mxu0
    %v7893 = vadd.f32 0.0, %v7892
    %v7894 = vpop.f32.mrb[0].mxu0
    %7895 = vdwg.mxu0
    %s7896 = scalar_lea.vmem %s5, 128
    %v7897 = vld [vmem:[%s7896] sm:$0xff]
    %v7898 = vld [vmem:[%s7896 + $0x8] sm:$0xff]
    %v7899 = vld [vmem:[%s7896 + $0x10] sm:$0xff]
    %v7900 = vld [vmem:[%s7896 + $0x18] sm:$0xff]
    %v7901 = vld [vmem:[%s7896 + $0x20] sm:$0xff]
    %v7902 = vld [vmem:[%s7896 + $0x28] sm:$0xff]
    %v7903 = vld [vmem:[%s7896 + $0x30] sm:$0xff]
    %v7904 = vld [vmem:[%s7896 + $0x38] sm:$0xff]
    %v7906 = vsel %vm759, %v7361, 0
    %7908 = vmatprep.subr.mxu0 0.0
    %7909 = vmatpush1.msra.mxu0 %v7897
    %7910 = vmatprep.subr.mxu0 0.0
    %7911 = vmatpush1.msra.mxu0 0.0
    %7912 = vmatprep.subr.mxu0 0.0
    %7913 = vmatpush1.msra.mxu0 0.0
    %7914 = vmatprep.subr.mxu0 0.0
    %7915 = vmatpush1.msra.mxu0 0.0
    %7916 = vmatprep.subr.mxu0 0.0
    %7917 = vmatpush1.msra.mxu0 0.0
    %7918 = vmatprep.subr.mxu0 0.0
    %7919 = vmatpush1.msra.mxu0 0.0
    %7920 = vmatprep.subr.mxu0 0.0
    %7921 = vmatpush1.msra.mxu0 0.0
    %7922 = vmatprep.subr.mxu0 0.0
    %7923 = vmatpush1.msra.mxu0 0.0
    %7924 = vmatprep.subr.mxu0 0.0
    %7925 = vmatpush1.msra.mxu0 0.0
    %7926 = vmatprep.subr.mxu0 0.0
    %7927 = vmatpush1.msra.mxu0 0.0
    %7928 = vmatprep.subr.mxu0 0.0
    %7929 = vmatpush1.msra.mxu0 0.0
    %7930 = vmatprep.subr.mxu0 0.0
    %7931 = vmatpush1.msra.mxu0 0.0
    %7932 = vmatprep.subr.mxu0 0.0
    %7933 = vmatpush1.msra.mxu0 0.0
    %7934 = vmatprep.subr.mxu0 0.0
    %7935 = vmatpush1.msra.mxu0 0.0
    %7936 = vmatprep.subr.mxu0 0.0
    %7937 = vmatpush1.msra.mxu0 0.0
    %7938 = vmatprep.subr.mxu0 0.0
    %7939 = vmatpush1.msra.mxu0 0.0
    %7940 = vmatprep.subr.mxu0 0.0
    %7941 = vmatpush1.msra.mxu0 0.0
    %7942 = vmatprep.subr.mxu0 0.0
    %7943 = vmatpush1.msra.mxu0 0.0
    %7944 = vmatprep.subr.mxu0 0.0
    %7945 = vmatpush1.msra.mxu0 0.0
    %7946 = vmatprep.subr.mxu0 0.0
    %7947 = vmatpush1.msra.mxu0 0.0
    %7948 = vmatprep.subr.mxu0 0.0
    %7949 = vmatpush1.msra.mxu0 0.0
    %7950 = vmatprep.subr.mxu0 0.0
    %7951 = vmatpush1.msra.mxu0 0.0
    %7952 = vmatprep.subr.mxu0 0.0
    %7953 = vmatpush1.msra.mxu0 0.0
    %7954 = vmatprep.subr.mxu0 0.0
    %7955 = vmatpush1.msra.mxu0 0.0
    %7956 = vmatprep.subr.mxu0 0.0
    %7957 = vmatpush1.msra.mxu0 0.0
    %7958 = vmatprep.subr.mxu0 0.0
    %7959 = vmatpush1.msra.mxu0 0.0
    %7960 = vmatprep.subr.mxu0 0.0
    %7961 = vmatpush1.msra.mxu0 0.0
    %7962 = vmatprep.subr.mxu0 0.0
    %7963 = vmatpush1.msra.mxu0 0.0
    %7964 = vmatprep.subr.mxu0 0.0
    %7965 = vmatpush1.msra.mxu0 0.0
    %7966 = vmatprep.subr.mxu0 0.0
    %7967 = vmatpush1.msra.mxu0 0.0
    %7968 = vmatprep.subr.mxu0 0.0
    %7969 = vmatpush1.msra.mxu0 0.0
    %7970 = vmatprep.subr.mxu0 0.0
    %7971 = vmatpush1.msra.mxu0 0.0
    %7972 = vmatprep.mubr.f32.mxu0 0.0
    %7973 = vmatmul.mubr.f32.gmra.mrb[0].mxu0 %v7906
    %v7974 = vpop.f32.mrb[0].mxu0
    %v7975 = vadd.f32 0.0, %v7974
    %v7976 = vpop.f32.mrb[0].mxu0
    %7977 = vdwg.mxu0
    %v7979 = vsel %vm759, %v7437, 0
    %7981 = vmatprep.subr.mxu0 0.0
    %7982 = vmatpush1.msra.mxu0 %v7898
    %7983 = vmatprep.subr.mxu0 0.0
    %7984 = vmatpush1.msra.mxu0 0.0
    %7985 = vmatprep.subr.mxu0 0.0
    %7986 = vmatpush1.msra.mxu0 0.0
    %7987 = vmatprep.subr.mxu0 0.0
    %7988 = vmatpush1.msra.mxu0 0.0
    %7989 = vmatprep.subr.mxu0 0.0
    %7990 = vmatpush1.msra.mxu0 0.0
    %7991 = vmatprep.subr.mxu0 0.0
    %7992 = vmatpush1.msra.mxu0 0.0
    %7993 = vmatprep.subr.mxu0 0.0
    %7994 = vmatpush1.msra.mxu0 0.0
    %7995 = vmatprep.subr.mxu0 0.0
    %7996 = vmatpush1.msra.mxu0 0.0
    %7997 = vmatprep.subr.mxu0 0.0
    %7998 = vmatpush1.msra.mxu0 0.0
    %7999 = vmatprep.subr.mxu0 0.0
    %8000 = vmatpush1.msra.mxu0 0.0
    %8001 = vmatprep.subr.mxu0 0.0
    %8002 = vmatpush1.msra.mxu0 0.0
    %8003 = vmatprep.subr.mxu0 0.0
    %8004 = vmatpush1.msra.mxu0 0.0
    %8005 = vmatprep.subr.mxu0 0.0
    %8006 = vmatpush1.msra.mxu0 0.0
    %8007 = vmatprep.subr.mxu0 0.0
    %8008 = vmatpush1.msra.mxu0 0.0
    %8009 = vmatprep.subr.mxu0 0.0
    %8010 = vmatpush1.msra.mxu0 0.0
    %8011 = vmatprep.subr.mxu0 0.0
    %8012 = vmatpush1.msra.mxu0 0.0
    %8013 = vmatprep.subr.mxu0 0.0
    %8014 = vmatpush1.msra.mxu0 0.0
    %8015 = vmatprep.subr.mxu0 0.0
    %8016 = vmatpush1.msra.mxu0 0.0
    %8017 = vmatprep.subr.mxu0 0.0
    %8018 = vmatpush1.msra.mxu0 0.0
    %8019 = vmatprep.subr.mxu0 0.0
    %8020 = vmatpush1.msra.mxu0 0.0
    %8021 = vmatprep.subr.mxu0 0.0
    %8022 = vmatpush1.msra.mxu0 0.0
    %8023 = vmatprep.subr.mxu0 0.0
    %8024 = vmatpush1.msra.mxu0 0.0
    %8025 = vmatprep.subr.mxu0 0.0
    %8026 = vmatpush1.msra.mxu0 0.0
    %8027 = vmatprep.subr.mxu0 0.0
    %8028 = vmatpush1.msra.mxu0 0.0
    %8029 = vmatprep.subr.mxu0 0.0
    %8030 = vmatpush1.msra.mxu0 0.0
    %8031 = vmatprep.subr.mxu0 0.0
    %8032 = vmatpush1.msra.mxu0 0.0
    %8033 = vmatprep.subr.mxu0 0.0
    %8034 = vmatpush1.msra.mxu0 0.0
    %8035 = vmatprep.subr.mxu0 0.0
    %8036 = vmatpush1.msra.mxu0 0.0
    %8037 = vmatprep.subr.mxu0 0.0
    %8038 = vmatpush1.msra.mxu0 0.0
    %8039 = vmatprep.subr.mxu0 0.0
    %8040 = vmatpush1.msra.mxu0 0.0
    %8041 = vmatprep.subr.mxu0 0.0
    %8042 = vmatpush1.msra.mxu0 0.0
    %8043 = vmatprep.subr.mxu0 0.0
    %8044 = vmatpush1.msra.mxu0 0.0
    %8045 = vmatprep.mubr.f32.mxu0 0.0
    %8046 = vmatmul.mubr.f32.gmra.mrb[0].mxu0 %v7979
    %v8047 = vpop.f32.mrb[0].mxu0
    %v8048 = vadd.f32 0.0, %v8047
    %v8049 = vpop.f32.mrb[0].mxu0
    %8050 = vdwg.mxu0
    %v8052 = vsel %vm759, %v7513, 0
    %8054 = vmatprep.subr.mxu0 0.0
    %8055 = vmatpush1.msra.mxu0 %v7899
    %8056 = vmatprep.subr.mxu0 0.0
    %8057 = vmatpush1.msra.mxu0 0.0
    %8058 = vmatprep.subr.mxu0 0.0
    %8059 = vmatpush1.msra.mxu0 0.0
    %8060 = vmatprep.subr.mxu0 0.0
    %8061 = vmatpush1.msra.mxu0 0.0
    %8062 = vmatprep.subr.mxu0 0.0
    %8063 = vmatpush1.msra.mxu0 0.0
    %8064 = vmatprep.subr.mxu0 0.0
    %8065 = vmatpush1.msra.mxu0 0.0
    %8066 = vmatprep.subr.mxu0 0.0
    %8067 = vmatpush1.msra.mxu0 0.0
    %8068 = vmatprep.subr.mxu0 0.0
    %8069 = vmatpush1.msra.mxu0 0.0
    %8070 = vmatprep.subr.mxu0 0.0
    %8071 = vmatpush1.msra.mxu0 0.0
    %8072 = vmatprep.subr.mxu0 0.0
    %8073 = vmatpush1.msra.mxu0 0.0
    %8074 = vmatprep.subr.mxu0 0.0
    %8075 = vmatpush1.msra.mxu0 0.0
    %8076 = vmatprep.subr.mxu0 0.0
    %8077 = vmatpush1.msra.mxu0 0.0
    %8078 = vmatprep.subr.mxu0 0.0
    %8079 = vmatpush1.msra.mxu0 0.0
    %8080 = vmatprep.subr.mxu0 0.0
    %8081 = vmatpush1.msra.mxu0 0.0
    %8082 = vmatprep.subr.mxu0 0.0
    %8083 = vmatpush1.msra.mxu0 0.0
    %8084 = vmatprep.subr.mxu0 0.0
    %8085 = vmatpush1.msra.mxu0 0.0
    %8086 = vmatprep.subr.mxu0 0.0
    %8087 = vmatpush1.msra.mxu0 0.0
    %8088 = vmatprep.subr.mxu0 0.0
    %8089 = vmatpush1.msra.mxu0 0.0
    %8090 = vmatprep.subr.mxu0 0.0
    %8091 = vmatpush1.msra.mxu0 0.0
    %8092 = vmatprep.subr.mxu0 0.0
    %8093 = vmatpush1.msra.mxu0 0.0
    %8094 = vmatprep.subr.mxu0 0.0
    %8095 = vmatpush1.msra.mxu0 0.0
    %8096 = vmatprep.subr.mxu0 0.0
    %8097 = vmatpush1.msra.mxu0 0.0
    %8098 = vmatprep.subr.mxu0 0.0
    %8099 = vmatpush1.msra.mxu0 0.0
    %8100 = vmatprep.subr.mxu0 0.0
    %8101 = vmatpush1.msra.mxu0 0.0
    %8102 = vmatprep.subr.mxu0 0.0
    %8103 = vmatpush1.msra.mxu0 0.0
    %8104 = vmatprep.subr.mxu0 0.0
    %8105 = vmatpush1.msra.mxu0 0.0
    %8106 = vmatprep.subr.mxu0 0.0
    %8107 = vmatpush1.msra.mxu0 0.0
    %8108 = vmatprep.subr.mxu0 0.0
    %8109 = vmatpush1.msra.mxu0 0.0
    %8110 = vmatprep.subr.mxu0 0.0
    %8111 = vmatpush1.msra.mxu0 0.0
    %8112 = vmatprep.subr.mxu0 0.0
    %8113 = vmatpush1.msra.mxu0 0.0
    %8114 = vmatprep.subr.mxu0 0.0
    %8115 = vmatpush1.msra.mxu0 0.0
    %8116 = vmatprep.subr.mxu0 0.0
    %8117 = vmatpush1.msra.mxu0 0.0
    %8118 = vmatprep.mubr.f32.mxu0 0.0
    %8119 = vmatmul.mubr.f32.gmra.mrb[0].mxu0 %v8052
    %v8120 = vpop.f32.mrb[0].mxu0
    %v8121 = vadd.f32 0.0, %v8120
    %v8122 = vpop.f32.mrb[0].mxu0
    %8123 = vdwg.mxu0
    %v8125 = vsel %vm759, %v7589, 0
    %8127 = vmatprep.subr.mxu0 0.0
    %8128 = vmatpush1.msra.mxu0 %v7900
    %8129 = vmatprep.subr.mxu0 0.0
    %8130 = vmatpush1.msra.mxu0 0.0
    %8131 = vmatprep.subr.mxu0 0.0
    %8132 = vmatpush1.msra.mxu0 0.0
    %8133 = vmatprep.subr.mxu0 0.0
    %8134 = vmatpush1.msra.mxu0 0.0
    %8135 = vmatprep.subr.mxu0 0.0
    %8136 = vmatpush1.msra.mxu0 0.0
    %8137 = vmatprep.subr.mxu0 0.0
    %8138 = vmatpush1.msra.mxu0 0.0
    %8139 = vmatprep.subr.mxu0 0.0
    %8140 = vmatpush1.msra.mxu0 0.0
    %8141 = vmatprep.subr.mxu0 0.0
    %8142 = vmatpush1.msra.mxu0 0.0
    %8143 = vmatprep.subr.mxu0 0.0
    %8144 = vmatpush1.msra.mxu0 0.0
    %8145 = vmatprep.subr.mxu0 0.0
    %8146 = vmatpush1.msra.mxu0 0.0
    %8147 = vmatprep.subr.mxu0 0.0
    %8148 = vmatpush1.msra.mxu0 0.0
    %8149 = vmatprep.subr.mxu0 0.0
    %8150 = vmatpush1.msra.mxu0 0.0
    %8151 = vmatprep.subr.mxu0 0.0
    %8152 = vmatpush1.msra.mxu0 0.0
    %8153 = vmatprep.subr.mxu0 0.0
    %8154 = vmatpush1.msra.mxu0 0.0
    %8155 = vmatprep.subr.mxu0 0.0
    %8156 = vmatpush1.msra.mxu0 0.0
    %8157 = vmatprep.subr.mxu0 0.0
    %8158 = vmatpush1.msra.mxu0 0.0
    %8159 = vmatprep.subr.mxu0 0.0
    %8160 = vmatpush1.msra.mxu0 0.0
    %8161 = vmatprep.subr.mxu0 0.0
    %8162 = vmatpush1.msra.mxu0 0.0
    %8163 = vmatprep.subr.mxu0 0.0
    %8164 = vmatpush1.msra.mxu0 0.0
    %8165 = vmatprep.subr.mxu0 0.0
    %8166 = vmatpush1.msra.mxu0 0.0
    %8167 = vmatprep.subr.mxu0 0.0
    %8168 = vmatpush1.msra.mxu0 0.0
    %8169 = vmatprep.subr.mxu0 0.0
    %8170 = vmatpush1.msra.mxu0 0.0
    %8171 = vmatprep.subr.mxu0 0.0
    %8172 = vmatpush1.msra.mxu0 0.0
    %8173 = vmatprep.subr.mxu0 0.0
    %8174 = vmatpush1.msra.mxu0 0.0
    %8175 = vmatprep.subr.mxu0 0.0
    %8176 = vmatpush1.msra.mxu0 0.0
    %8177 = vmatprep.subr.mxu0 0.0
    %8178 = vmatpush1.msra.mxu0 0.0
    %8179 = vmatprep.subr.mxu0 0.0
    %8180 = vmatpush1.msra.mxu0 0.0
    %8181 = vmatprep.subr.mxu0 0.0
    %8182 = vmatpush1.msra.mxu0 0.0
    %8183 = vmatprep.subr.mxu0 0.0
    %8184 = vmatpush1.msra.mxu0 0.0
    %8185 = vmatprep.subr.mxu0 0.0
    %8186 = vmatpush1.msra.mxu0 0.0
    %8187 = vmatprep.subr.mxu0 0.0
    %8188 = vmatpush1.msra.mxu0 0.0
    %8189 = vmatprep.subr.mxu0 0.0
    %8190 = vmatpush1.msra.mxu0 0.0
    %8191 = vmatprep.mubr.f32.mxu0 0.0
    %8192 = vmatmul.mubr.f32.gmra.mrb[0].mxu0 %v8125
    %v8193 = vpop.f32.mrb[0].mxu0
    %v8194 = vadd.f32 0.0, %v8193
    %v8195 = vpop.f32.mrb[0].mxu0
    %8196 = vdwg.mxu0
    %v8198 = vsel %vm759, %v7665, 0
    %8200 = vmatprep.subr.mxu0 0.0
    %8201 = vmatpush1.msra.mxu0 %v7901
    %8202 = vmatprep.subr.mxu0 0.0
    %8203 = vmatpush1.msra.mxu0 0.0
    %8204 = vmatprep.subr.mxu0 0.0
    %8205 = vmatpush1.msra.mxu0 0.0
    %8206 = vmatprep.subr.mxu0 0.0
    %8207 = vmatpush1.msra.mxu0 0.0
    %8208 = vmatprep.subr.mxu0 0.0
    %8209 = vmatpush1.msra.mxu0 0.0
    %8210 = vmatprep.subr.mxu0 0.0
    %8211 = vmatpush1.msra.mxu0 0.0
    %8212 = vmatprep.subr.mxu0 0.0
    %8213 = vmatpush1.msra.mxu0 0.0
    %8214 = vmatprep.subr.mxu0 0.0
    %8215 = vmatpush1.msra.mxu0 0.0
    %8216 = vmatprep.subr.mxu0 0.0
    %8217 = vmatpush1.msra.mxu0 0.0
    %8218 = vmatprep.subr.mxu0 0.0
    %8219 = vmatpush1.msra.mxu0 0.0
    %8220 = vmatprep.subr.mxu0 0.0
    %8221 = vmatpush1.msra.mxu0 0.0
    %8222 = vmatprep.subr.mxu0 0.0
    %8223 = vmatpush1.msra.mxu0 0.0
    %8224 = vmatprep.subr.mxu0 0.0
    %8225 = vmatpush1.msra.mxu0 0.0
    %8226 = vmatprep.subr.mxu0 0.0
    %8227 = vmatpush1.msra.mxu0 0.0
    %8228 = vmatprep.subr.mxu0 0.0
    %8229 = vmatpush1.msra.mxu0 0.0
    %8230 = vmatprep.subr.mxu0 0.0
    %8231 = vmatpush1.msra.mxu0 0.0
    %8232 = vmatprep.subr.mxu0 0.0
    %8233 = vmatpush1.msra.mxu0 0.0
    %8234 = vmatprep.subr.mxu0 0.0
    %8235 = vmatpush1.msra.mxu0 0.0
    %8236 = vmatprep.subr.mxu0 0.0
    %8237 = vmatpush1.msra.mxu0 0.0
    %8238 = vmatprep.subr.mxu0 0.0
    %8239 = vmatpush1.msra.mxu0 0.0
    %8240 = vmatprep.subr.mxu0 0.0
    %8241 = vmatpush1.msra.mxu0 0.0
    %8242 = vmatprep.subr.mxu0 0.0
    %8243 = vmatpush1.msra.mxu0 0.0
    %8244 = vmatprep.subr.mxu0 0.0
    %8245 = vmatpush1.msra.mxu0 0.0
    %8246 = vmatprep.subr.mxu0 0.0
    %8247 = vmatpush1.msra.mxu0 0.0
    %8248 = vmatprep.subr.mxu0 0.0
    %8249 = vmatpush1.msra.mxu0 0.0
    %8250 = vmatprep.subr.mxu0 0.0
    %8251 = vmatpush1.msra.mxu0 0.0
    %8252 = vmatprep.subr.mxu0 0.0
    %8253 = vmatpush1.msra.mxu0 0.0
    %8254 = vmatprep.subr.mxu0 0.0
    %8255 = vmatpush1.msra.mxu0 0.0
    %8256 = vmatprep.subr.mxu0 0.0
    %8257 = vmatpush1.msra.mxu0 0.0
    %8258 = vmatprep.subr.mxu0 0.0
    %8259 = vmatpush1.msra.mxu0 0.0
    %8260 = vmatprep.subr.mxu0 0.0
    %8261 = vmatpush1.msra.mxu0 0.0
    %8262 = vmatprep.subr.mxu0 0.0
    %8263 = vmatpush1.msra.mxu0 0.0
    %8264 = vmatprep.mubr.f32.mxu0 0.0
    %8265 = vmatmul.mubr.f32.gmra.mrb[0].mxu0 %v8198
    %v8266 = vpop.f32.mrb[0].mxu0
    %v8267 = vadd.f32 0.0, %v8266
    %v8268 = vpop.f32.mrb[0].mxu0
    %8269 = vdwg.mxu0
    %v8271 = vsel %vm759, %v7741, 0
    %8273 = vmatprep.subr.mxu0 0.0
    %8274 = vmatpush1.msra.mxu0 %v7902
    %8275 = vmatprep.subr.mxu0 0.0
    %8276 = vmatpush1.msra.mxu0 0.0
    %8277 = vmatprep.subr.mxu0 0.0
    %8278 = vmatpush1.msra.mxu0 0.0
    %8279 = vmatprep.subr.mxu0 0.0
    %8280 = vmatpush1.msra.mxu0 0.0
    %8281 = vmatprep.subr.mxu0 0.0
    %8282 = vmatpush1.msra.mxu0 0.0
    %8283 = vmatprep.subr.mxu0 0.0
    %8284 = vmatpush1.msra.mxu0 0.0
    %8285 = vmatprep.subr.mxu0 0.0
    %8286 = vmatpush1.msra.mxu0 0.0
    %8287 = vmatprep.subr.mxu0 0.0
    %8288 = vmatpush1.msra.mxu0 0.0
    %8289 = vmatprep.subr.mxu0 0.0
    %8290 = vmatpush1.msra.mxu0 0.0
    %8291 = vmatprep.subr.mxu0 0.0
    %8292 = vmatpush1.msra.mxu0 0.0
    %8293 = vmatprep.subr.mxu0 0.0
    %8294 = vmatpush1.msra.mxu0 0.0
    %8295 = vmatprep.subr.mxu0 0.0
    %8296 = vmatpush1.msra.mxu0 0.0
    %8297 = vmatprep.subr.mxu0 0.0
    %8298 = vmatpush1.msra.mxu0 0.0
    %8299 = vmatprep.subr.mxu0 0.0
    %8300 = vmatpush1.msra.mxu0 0.0
    %8301 = vmatprep.subr.mxu0 0.0
    %8302 = vmatpush1.msra.mxu0 0.0
    %8303 = vmatprep.subr.mxu0 0.0
    %8304 = vmatpush1.msra.mxu0 0.0
    %8305 = vmatprep.subr.mxu0 0.0
    %8306 = vmatpush1.msra.mxu0 0.0
    %8307 = vmatprep.subr.mxu0 0.0
    %8308 = vmatpush1.msra.mxu0 0.0
    %8309 = vmatprep.subr.mxu0 0.0
    %8310 = vmatpush1.msra.mxu0 0.0
    %8311 = vmatprep.subr.mxu0 0.0
    %8312 = vmatpush1.msra.mxu0 0.0
    %8313 = vmatprep.subr.mxu0 0.0
    %8314 = vmatpush1.msra.mxu0 0.0
    %8315 = vmatprep.subr.mxu0 0.0
    %8316 = vmatpush1.msra.mxu0 0.0
    %8317 = vmatprep.subr.mxu0 0.0
    %8318 = vmatpush1.msra.mxu0 0.0
    %8319 = vmatprep.subr.mxu0 0.0
    %8320 = vmatpush1.msra.mxu0 0.0
    %8321 = vmatprep.subr.mxu0 0.0
    %8322 = vmatpush1.msra.mxu0 0.0
    %8323 = vmatprep.subr.mxu0 0.0
    %8324 = vmatpush1.msra.mxu0 0.0
    %8325 = vmatprep.subr.mxu0 0.0
    %8326 = vmatpush1.msra.mxu0 0.0
    %8327 = vmatprep.subr.mxu0 0.0
    %8328 = vmatpush1.msra.mxu0 0.0
    %8329 = vmatprep.subr.mxu0 0.0
    %8330 = vmatpush1.msra.mxu0 0.0
    %8331 = vmatprep.subr.mxu0 0.0
    %8332 = vmatpush1.msra.mxu0 0.0
    %8333 = vmatprep.subr.mxu0 0.0
    %8334 = vmatpush1.msra.mxu0 0.0
    %8335 = vmatprep.subr.mxu0 0.0
    %8336 = vmatpush1.msra.mxu0 0.0
    %8337 = vmatprep.mubr.f32.mxu0 0.0
    %8338 = vmatmul.mubr.f32.gmra.mrb[0].mxu0 %v8271
    %v8339 = vpop.f32.mrb[0].mxu0
    %v8340 = vadd.f32 0.0, %v8339
    %v8341 = vpop.f32.mrb[0].mxu0
    %8342 = vdwg.mxu0
    %v8344 = vsel %vm759, %v7817, 0
    %8346 = vmatprep.subr.mxu0 0.0
    %8347 = vmatpush1.msra.mxu0 %v7903
    %8348 = vmatprep.subr.mxu0 0.0
    %8349 = vmatpush1.msra.mxu0 0.0
    %8350 = vmatprep.subr.mxu0 0.0
    %8351 = vmatpush1.msra.mxu0 0.0
    %8352 = vmatprep.subr.mxu0 0.0
    %8353 = vmatpush1.msra.mxu0 0.0
    %8354 = vmatprep.subr.mxu0 0.0
    %8355 = vmatpush1.msra.mxu0 0.0
    %8356 = vmatprep.subr.mxu0 0.0
    %8357 = vmatpush1.msra.mxu0 0.0
    %8358 = vmatprep.subr.mxu0 0.0
    %8359 = vmatpush1.msra.mxu0 0.0
    %8360 = vmatprep.subr.mxu0 0.0
    %8361 = vmatpush1.msra.mxu0 0.0
    %8362 = vmatprep.subr.mxu0 0.0
    %8363 = vmatpush1.msra.mxu0 0.0
    %8364 = vmatprep.subr.mxu0 0.0
    %8365 = vmatpush1.msra.mxu0 0.0
    %8366 = vmatprep.subr.mxu0 0.0
    %8367 = vmatpush1.msra.mxu0 0.0
    %8368 = vmatprep.subr.mxu0 0.0
    %8369 = vmatpush1.msra.mxu0 0.0
    %8370 = vmatprep.subr.mxu0 0.0
    %8371 = vmatpush1.msra.mxu0 0.0
    %8372 = vmatprep.subr.mxu0 0.0
    %8373 = vmatpush1.msra.mxu0 0.0
    %8374 = vmatprep.subr.mxu0 0.0
    %8375 = vmatpush1.msra.mxu0 0.0
    %8376 = vmatprep.subr.mxu0 0.0
    %8377 = vmatpush1.msra.mxu0 0.0
    %8378 = vmatprep.subr.mxu0 0.0
    %8379 = vmatpush1.msra.mxu0 0.0
    %8380 = vmatprep.subr.mxu0 0.0
    %8381 = vmatpush1.msra.mxu0 0.0
    %8382 = vmatprep.subr.mxu0 0.0
    %8383 = vmatpush1.msra.mxu0 0.0
    %8384 = vmatprep.subr.mxu0 0.0
    %8385 = vmatpush1.msra.mxu0 0.0
    %8386 = vmatprep.subr.mxu0 0.0
    %8387 = vmatpush1.msra.mxu0 0.0
    %8388 = vmatprep.subr.mxu0 0.0
    %8389 = vmatpush1.msra.mxu0 0.0
    %8390 = vmatprep.subr.mxu0 0.0
    %8391 = vmatpush1.msra.mxu0 0.0
    %8392 = vmatprep.subr.mxu0 0.0
    %8393 = vmatpush1.msra.mxu0 0.0
    %8394 = vmatprep.subr.mxu0 0.0
    %8395 = vmatpush1.msra.mxu0 0.0
    %8396 = vmatprep.subr.mxu0 0.0
    %8397 = vmatpush1.msra.mxu0 0.0
    %8398 = vmatprep.subr.mxu0 0.0
    %8399 = vmatpush1.msra.mxu0 0.0
    %8400 = vmatprep.subr.mxu0 0.0
    %8401 = vmatpush1.msra.mxu0 0.0
    %8402 = vmatprep.subr.mxu0 0.0
    %8403 = vmatpush1.msra.mxu0 0.0
    %8404 = vmatprep.subr.mxu0 0.0
    %8405 = vmatpush1.msra.mxu0 0.0
    %8406 = vmatprep.subr.mxu0 0.0
    %8407 = vmatpush1.msra.mxu0 0.0
    %8408 = vmatprep.subr.mxu0 0.0
    %8409 = vmatpush1.msra.mxu0 0.0
    %8410 = vmatprep.mubr.f32.mxu0 0.0
    %8411 = vmatmul.mubr.f32.gmra.mrb[0].mxu0 %v8344
    %v8412 = vpop.f32.mrb[0].mxu0
    %v8413 = vadd.f32 0.0, %v8412
    %v8414 = vpop.f32.mrb[0].mxu0
    %8415 = vdwg.mxu0
    %v8417 = vsel %vm759, %v7893, 0
    %8419 = vmatprep.subr.mxu0 0.0
    %8420 = vmatpush1.msra.mxu0 %v7904
    %8421 = vmatprep.subr.mxu0 0.0
    %8422 = vmatpush1.msra.mxu0 0.0
    %8423 = vmatprep.subr.mxu0 0.0
    %8424 = vmatpush1.msra.mxu0 0.0
    %8425 = vmatprep.subr.mxu0 0.0
    %8426 = vmatpush1.msra.mxu0 0.0
    %8427 = vmatprep.subr.mxu0 0.0
    %8428 = vmatpush1.msra.mxu0 0.0
    %8429 = vmatprep.subr.mxu0 0.0
    %8430 = vmatpush1.msra.mxu0 0.0
    %8431 = vmatprep.subr.mxu0 0.0
    %8432 = vmatpush1.msra.mxu0 0.0
    %8433 = vmatprep.subr.mxu0 0.0
    %8434 = vmatpush1.msra.mxu0 0.0
    %8435 = vmatprep.subr.mxu0 0.0
    %8436 = vmatpush1.msra.mxu0 0.0
    %8437 = vmatprep.subr.mxu0 0.0
    %8438 = vmatpush1.msra.mxu0 0.0
    %8439 = vmatprep.subr.mxu0 0.0
    %8440 = vmatpush1.msra.mxu0 0.0
    %8441 = vmatprep.subr.mxu0 0.0
    %8442 = vmatpush1.msra.mxu0 0.0
    %8443 = vmatprep.subr.mxu0 0.0
    %8444 = vmatpush1.msra.mxu0 0.0
    %8445 = vmatprep.subr.mxu0 0.0
    %8446 = vmatpush1.msra.mxu0 0.0
    %8447 = vmatprep.subr.mxu0 0.0
    %8448 = vmatpush1.msra.mxu0 0.0
    %8449 = vmatprep.subr.mxu0 0.0
    %8450 = vmatpush1.msra.mxu0 0.0
    %8451 = vmatprep.subr.mxu0 0.0
    %8452 = vmatpush1.msra.mxu0 0.0
    %8453 = vmatprep.subr.mxu0 0.0
    %8454 = vmatpush1.msra.mxu0 0.0
    %8455 = vmatprep.subr.mxu0 0.0
    %8456 = vmatpush1.msra.mxu0 0.0
    %8457 = vmatprep.subr.mxu0 0.0
    %8458 = vmatpush1.msra.mxu0 0.0
    %8459 = vmatprep.subr.mxu0 0.0
    %8460 = vmatpush1.msra.mxu0 0.0
    %8461 = vmatprep.subr.mxu0 0.0
    %8462 = vmatpush1.msra.mxu0 0.0
    %8463 = vmatprep.subr.mxu0 0.0
    %8464 = vmatpush1.msra.mxu0 0.0
    %8465 = vmatprep.subr.mxu0 0.0
    %8466 = vmatpush1.msra.mxu0 0.0
    %8467 = vmatprep.subr.mxu0 0.0
    %8468 = vmatpush1.msra.mxu0 0.0
    %8469 = vmatprep.subr.mxu0 0.0
    %8470 = vmatpush1.msra.mxu0 0.0
    %8471 = vmatprep.subr.mxu0 0.0
    %8472 = vmatpush1.msra.mxu0 0.0
    %8473 = vmatprep.subr.mxu0 0.0
    %8474 = vmatpush1.msra.mxu0 0.0
    %8475 = vmatprep.subr.mxu0 0.0
    %8476 = vmatpush1.msra.mxu0 0.0
    %8477 = vmatprep.subr.mxu0 0.0
    %8478 = vmatpush1.msra.mxu0 0.0
    %8479 = vmatprep.subr.mxu0 0.0
    %8480 = vmatpush1.msra.mxu0 0.0
    %8481 = vmatprep.subr.mxu0 0.0
    %8482 = vmatpush1.msra.mxu0 0.0
    %8483 = vmatprep.mubr.f32.mxu0 0.0
    %8484 = vmatmul.mubr.f32.gmra.mrb[0].mxu0 %v8417
    %v8485 = vpop.f32.mrb[0].mxu0
    %v8486 = vadd.f32 0.0, %v8485
    %v8487 = vpop.f32.mrb[0].mxu0
    %8488 = vdwg.mxu0
    %v8489 = vsel %vm45, %v7975, 0.0
    %v8490 = vsel %vm45, %v8121, 0.0
    %v8491 = vadd.f32 %v8489, %v8490
    %v8492 = vsel %vm45, %v8267, 0.0
    %v8493 = vadd.f32 %v8491, %v8492
    %v8494 = vsel %vm45, %v8413, 0.0
    %v8495 = vadd.f32 %v8493, %v8494
    %v8496 = vsel %vm45, %v8048, 0.0
    %v8497 = vsel %vm45, %v8194, 0.0
    %v8498 = vadd.f32 %v8496, %v8497
    %v8499 = vsel %vm45, %v8340, 0.0
    %v8500 = vadd.f32 %v8498, %v8499
    %v8501 = vsel %vm45, %v8486, 0.0
    %v8502 = vadd.f32 %v8500, %v8501
    %v8503 = vlaneseq
    %v8504 = vshrl.u32 %v8503, 7
    %v8505 = vsub.s32 0, %v8504
    %v8506 = vrot.slane %v5911, %v8505
    %v8507 = vadd.f32 %v8495, %v8506
    %v8508 = vadd.f32 %v8502, %v8506
    %v8509 = vadd.f32 %v5892, %v8507
    %v8510 = vadd.f32 %v5893, %v8508
    %v8511 = vsel %vm45, %v8509, 0.0
    %8512 = vadd.xlane.f32.xlu0 %v8511
    %v8513 = vpop.xlane.xlu0 %8512
    %v8514 = vsel %vm45, %v8510, 0.0
    %8515 = vadd.xlane.f32.xlu0 %v8514
    %v8516 = vpop.xlane.xlu0 %8515
    %v8517 = vmul.f32 %v8513, %v52
    %v8518 = vmul.f32 %v8516, %v52
    %v8519 = vsub.f32 %v8509, %v8517
    %v8520 = vsub.f32 %v8510, %v8518
    %v8521 = vmul.f32 %v8519, %v8519
    %v8522 = vmul.f32 %v8520, %v8520
    %v8523 = vsel %vm45, %v8521, 0.0
    %8524 = vadd.xlane.f32.xlu0 %v8523
    %v8525 = vpop.xlane.xlu0 %8524
    %v8526 = vsel %vm45, %v8522, 0.0
    %8527 = vadd.xlane.f32.xlu0 %v8526
    %v8528 = vpop.xlane.xlu0 %8527
    %v8529 = vmul.f32 %v8525, %v52
    %v8530 = vmul.f32 %v8528, %v52
    %v8531 = vadd.f32 %v8529, 1e-12
    %v8532 = vadd.f32 %v8530, 1e-12
    %v8533 = vrsqrt.pop %v8531
    %v8534 = vrsqrt.pop %v8532
    %v8535 = vmul.f32 %v8519, %v8533
    %v8536 = vmul.f32 %v8520, %v8534
    %v8537 = vlaneseq
    %v8538 = vshrl.u32 %v8537, 7
    %v8539 = vsub.s32 1, %v8538
    %v8540 = vrot.slane %v5911, %v8539
    %v8541 = vmul.f32 %v8535, %v8540
    %v8542 = vmul.f32 %v8536, %v8540
    %v8543 = vlaneseq
    %v8544 = vshrl.u32 %v8543, 7
    %v8545 = vsub.s32 2, %v8544
    %v8546 = vrot.slane %v5911, %v8545
    %v8547 = vadd.f32 %v8541, %v8546
    %v8548 = vadd.f32 %v8542, %v8546
    %s8549 = scalar_lea.vmem %s7, 64
    %v8550 = vld [vmem:[%s8549] sm:$0xff]
    %v8551 = vld [vmem:[%s8549 + $0x8] sm:$0xff]
    %v8552 = vld [vmem:[%s8549 + $0x10] sm:$0xff]
    %v8553 = vld [vmem:[%s8549 + $0x18] sm:$0xff]
    %s8554 = scalar_lea.vmem %s8, 2
    %v8555 = vld [vmem:[%s8554] sm:$0x1]
    %v8557 = vlaneseq
    %v8558 = vshrl.u32 %v8557, 7
    %v8559 = vsub.s32 0, %v8558
    %v8560 = vrot.slane %v8555, %v8559
    %v8563 = vsel %vm45, %v8547, 0
    %v8566 = vsel %vm45, %v8548, 0
    %8568 = vmatprep.subr.mxu0 0.0
    %8569 = vmatpush1.msra.mxu0 %v8550
    %8570 = vmatprep.subr.mxu0 0.0
    %8571 = vmatpush1.msra.mxu0 %v8551
    %8572 = vmatprep.subr.mxu0 0.0
    %8573 = vmatpush1.msra.mxu0 %v8552
    %8574 = vmatprep.subr.mxu0 0.0
    %8575 = vmatpush1.msra.mxu0 %v8553
    %8576 = vmatprep.subr.mxu0 0.0
    %8577 = vmatpush1.msra.mxu0 0.0
    %8578 = vmatprep.subr.mxu0 0.0
    %8579 = vmatpush1.msra.mxu0 0.0
    %8580 = vmatprep.subr.mxu0 0.0
    %8581 = vmatpush1.msra.mxu0 0.0
    %8582 = vmatprep.subr.mxu0 0.0
    %8583 = vmatpush1.msra.mxu0 0.0
    %8584 = vmatprep.subr.mxu0 0.0
    %8585 = vmatpush1.msra.mxu0 0.0
    %8586 = vmatprep.subr.mxu0 0.0
    %8587 = vmatpush1.msra.mxu0 0.0
    %8588 = vmatprep.subr.mxu0 0.0
    %8589 = vmatpush1.msra.mxu0 0.0
    %8590 = vmatprep.subr.mxu0 0.0
    %8591 = vmatpush1.msra.mxu0 0.0
    %8592 = vmatprep.subr.mxu0 0.0
    %8593 = vmatpush1.msra.mxu0 0.0
    %8594 = vmatprep.subr.mxu0 0.0
    %8595 = vmatpush1.msra.mxu0 0.0
    %8596 = vmatprep.subr.mxu0 0.0
    %8597 = vmatpush1.msra.mxu0 0.0
    %8598 = vmatprep.subr.mxu0 0.0
    %8599 = vmatpush1.msra.mxu0 0.0
    %8600 = vmatprep.subr.mxu0 0.0
    %8601 = vmatpush1.msra.mxu0 0.0
    %8602 = vmatprep.subr.mxu0 0.0
    %8603 = vmatpush1.msra.mxu0 0.0
    %8604 = vmatprep.subr.mxu0 0.0
    %8605 = vmatpush1.msra.mxu0 0.0
    %8606 = vmatprep.subr.mxu0 0.0
    %8607 = vmatpush1.msra.mxu0 0.0
    %8608 = vmatprep.subr.mxu0 0.0
    %8609 = vmatpush1.msra.mxu0 0.0
    %8610 = vmatprep.subr.mxu0 0.0
    %8611 = vmatpush1.msra.mxu0 0.0
    %8612 = vmatprep.subr.mxu0 0.0
    %8613 = vmatpush1.msra.mxu0 0.0
    %8614 = vmatprep.subr.mxu0 0.0
    %8615 = vmatpush1.msra.mxu0 0.0
    %8616 = vmatprep.subr.mxu0 0.0
    %8617 = vmatpush1.msra.mxu0 0.0
    %8618 = vmatprep.subr.mxu0 0.0
    %8619 = vmatpush1.msra.mxu0 0.0
    %8620 = vmatprep.subr.mxu0 0.0
    %8621 = vmatpush1.msra.mxu0 0.0
    %8622 = vmatprep.subr.mxu0 0.0
    %8623 = vmatpush1.msra.mxu0 0.0
    %8624 = vmatprep.subr.mxu0 0.0
    %8625 = vmatpush1.msra.mxu0 0.0
    %8626 = vmatprep.subr.mxu0 0.0
    %8627 = vmatpush1.msra.mxu0 0.0
    %8628 = vmatprep.subr.mxu0 0.0
    %8629 = vmatpush1.msra.mxu0 0.0
    %8630 = vmatprep.subr.mxu0 0.0
    %8631 = vmatpush1.msra.mxu0 0.0
    %8632 = vmatprep.mubr.f32.mxu0 0.0
    %8633 = vmatmul.mubr.f32.gmra.mrb[0].mxu0 %v8563
    %v8634 = vpop.f32.mrb[0].mxu0
    %v8635 = vadd.f32 %v8560, %v8634
    %v8636 = vpop.f32.mrb[0].mxu0
    %8637 = vmatprep.mubr.f32.mxu0 0.0
    %8638 = vmatmul.mubr.f32.gmra.mrb[0].mxu0 %v8566
    %v8639 = vpop.f32.mrb[0].mxu0
    %v8640 = vadd.f32 %v8560, %v8639
    %v8641 = vpop.f32.mrb[0].mxu0
    %8642 = vdwg.mxu0
    %v8643 = vmul.f32 %v8635, 0.5
    %v8644 = vmul.f32 %v8640, 0.5
    %v8645 = vmul.f32 %v8635, 0.044715
    %v8646 = vmul.f32 %v8640, 0.044715
    %v8647 = vmul.f32 %v8645, %v8635
    %v8648 = vmul.f32 %v8646, %v8640
    %v8649 = vmul.f32 %v8647, %v8635
    %v8650 = vmul.f32 %v8648, %v8640
    %v8651 = vadd.f32 %v8635, %v8649
    %v8652 = vadd.f32 %v8640, %v8650
    %v8653 = vmul.f32 %v8651, 0.7978846
    %v8654 = vmul.f32 %v8652, 0.7978846
    %v8655 = vtanh.pop %v8653
    %v8656 = vtanh.pop %v8654
    %v8657 = vadd.f32 %v8655, 1.0
    %v8658 = vadd.f32 %v8656, 1.0
    %v8659 = vmul.f32 %v8643, %v8657
    %v8660 = vmul.f32 %v8644, %v8658
    %s8661 = scalar_lea.vmem %s9, 128
    %v8662 = vld [vmem:[%s8661] sm:$0xff]
    %v8663 = vld [vmem:[%s8661 + $0x8] sm:$0xff]
    %v8664 = vld [vmem:[%s8661 + $0x10] sm:$0xff]
    %v8665 = vld [vmem:[%s8661 + $0x18] sm:$0xff]
    %v8666 = vld [vmem:[%s8661 + $0x20] sm:$0xff]
    %v8667 = vld [vmem:[%s8661 + $0x28] sm:$0xff]
    %v8668 = vld [vmem:[%s8661 + $0x30] sm:$0xff]
    %v8669 = vld [vmem:[%s8661 + $0x38] sm:$0xff]
    %v8670 = vlaneseq
    %v8671 = vshrl.u32 %v8670, 7
    %v8672 = vsub.s32 3, %v8671
    %v8673 = vrot.slane %v5911, %v8672
    %v8675 = vsel %vm2871, %v8659, 0
    %v8678 = vsel %vm2871, %v8660, 0
    %8680 = vmatprep.subr.mxu0 0.0
    %8681 = vmatpush1.msra.mxu0 %v8662
    %8682 = vmatprep.subr.mxu0 0.0
    %8683 = vmatpush1.msra.mxu0 %v8663
    %8684 = vmatprep.subr.mxu0 0.0
    %8685 = vmatpush1.msra.mxu0 %v8664
    %8686 = vmatprep.subr.mxu0 0.0
    %8687 = vmatpush1.msra.mxu0 %v8665
    %8688 = vmatprep.subr.mxu0 0.0
    %8689 = vmatpush1.msra.mxu0 %v8666
    %8690 = vmatprep.subr.mxu0 0.0
    %8691 = vmatpush1.msra.mxu0 %v8667
    %8692 = vmatprep.subr.mxu0 0.0
    %8693 = vmatpush1.msra.mxu0 %v8668
    %8694 = vmatprep.subr.mxu0 0.0
    %8695 = vmatpush1.msra.mxu0 %v8669
    %8696 = vmatprep.subr.mxu0 0.0
    %8697 = vmatpush1.msra.mxu0 0.0
    %8698 = vmatprep.subr.mxu0 0.0
    %8699 = vmatpush1.msra.mxu0 0.0
    %8700 = vmatprep.subr.mxu0 0.0
    %8701 = vmatpush1.msra.mxu0 0.0
    %8702 = vmatprep.subr.mxu0 0.0
    %8703 = vmatpush1.msra.mxu0 0.0
    %8704 = vmatprep.subr.mxu0 0.0
    %8705 = vmatpush1.msra.mxu0 0.0
    %8706 = vmatprep.subr.mxu0 0.0
    %8707 = vmatpush1.msra.mxu0 0.0
    %8708 = vmatprep.subr.mxu0 0.0
    %8709 = vmatpush1.msra.mxu0 0.0
    %8710 = vmatprep.subr.mxu0 0.0
    %8711 = vmatpush1.msra.mxu0 0.0
    %8712 = vmatprep.subr.mxu0 0.0
    %8713 = vmatpush1.msra.mxu0 0.0
    %8714 = vmatprep.subr.mxu0 0.0
    %8715 = vmatpush1.msra.mxu0 0.0
    %8716 = vmatprep.subr.mxu0 0.0
    %8717 = vmatpush1.msra.mxu0 0.0
    %8718 = vmatprep.subr.mxu0 0.0
    %8719 = vmatpush1.msra.mxu0 0.0
    %8720 = vmatprep.subr.mxu0 0.0
    %8721 = vmatpush1.msra.mxu0 0.0
    %8722 = vmatprep.subr.mxu0 0.0
    %8723 = vmatpush1.msra.mxu0 0.0
    %8724 = vmatprep.subr.mxu0 0.0
    %8725 = vmatpush1.msra.mxu0 0.0
    %8726 = vmatprep.subr.mxu0 0.0
    %8727 = vmatpush1.msra.mxu0 0.0
    %8728 = vmatprep.subr.mxu0 0.0
    %8729 = vmatpush1.msra.mxu0 0.0
    %8730 = vmatprep.subr.mxu0 0.0
    %8731 = vmatpush1.msra.mxu0 0.0
    %8732 = vmatprep.subr.mxu0 0.0
    %8733 = vmatpush1.msra.mxu0 0.0
    %8734 = vmatprep.subr.mxu0 0.0
    %8735 = vmatpush1.msra.mxu0 0.0
    %8736 = vmatprep.subr.mxu0 0.0
    %8737 = vmatpush1.msra.mxu0 0.0
    %8738 = vmatprep.subr.mxu0 0.0
    %8739 = vmatpush1.msra.mxu0 0.0
    %8740 = vmatprep.subr.mxu0 0.0
    %8741 = vmatpush1.msra.mxu0 0.0
    %8742 = vmatprep.subr.mxu0 0.0
    %8743 = vmatpush1.msra.mxu0 0.0
    %8744 = vmatprep.mubr.f32.mxu0 0.0
    %8745 = vmatmul.mubr.f32.gmra.mrb[0].mxu0 %v8675
    %v8746 = vpop.f32.mrb[0].mxu0
    %v8747 = vadd.f32 %v8673, %v8746
    %v8748 = vpop.f32.mrb[0].mxu0
    %8749 = vmatprep.mubr.f32.mxu0 0.0
    %8750 = vmatmul.mubr.f32.gmra.mrb[0].mxu0 %v8678
    %v8751 = vpop.f32.mrb[0].mxu0
    %v8752 = vadd.f32 %v8673, %v8751
    %v8753 = vpop.f32.mrb[0].mxu0
    %8754 = vdwg.mxu0
    %v8755 = vadd.f32 %v8547, %v8747
    %v8756 = vadd.f32 %v8548, %v8752
    %v8757 = vsel %vm45, %v8755, 0.0
    %8758 = vadd.xlane.f32.xlu0 %v8757
    %v8759 = vpop.xlane.xlu0 %8758
    %v8760 = vsel %vm45, %v8756, 0.0
    %8761 = vadd.xlane.f32.xlu0 %v8760
    %v8762 = vpop.xlane.xlu0 %8761
    %v8763 = vmul.f32 %v8759, %v52
    %v8764 = vmul.f32 %v8762, %v52
    %v8765 = vsub.f32 %v8755, %v8763
    %v8766 = vsub.f32 %v8756, %v8764
    %v8767 = vmul.f32 %v8765, %v8765
    %v8768 = vmul.f32 %v8766, %v8766
    %v8769 = vsel %vm45, %v8767, 0.0
    %8770 = vadd.xlane.f32.xlu0 %v8769
    %v8771 = vpop.xlane.xlu0 %8770
    %v8772 = vsel %vm45, %v8768, 0.0
    %8773 = vadd.xlane.f32.xlu0 %v8772
    %v8774 = vpop.xlane.xlu0 %8773
    %v8775 = vmul.f32 %v8771, %v52
    %v8776 = vmul.f32 %v8774, %v52
    %v8777 = vadd.f32 %v8775, 1e-12
    %v8778 = vadd.f32 %v8776, 1e-12
    %v8779 = vrsqrt.pop %v8777
    %v8780 = vrsqrt.pop %v8778
    %v8781 = vmul.f32 %v8765, %v8779
    %v8782 = vmul.f32 %v8766, %v8780
    %v8783 = vlaneseq
    %v8784 = vshrl.u32 %v8783, 7
    %v8785 = vsub.s32 4, %v8784
    %v8786 = vrot.slane %v5911, %v8785
    %v8787 = vmul.f32 %v8781, %v8786
    %v8788 = vmul.f32 %v8782, %v8786
    %v8789 = vlaneseq
    %v8790 = vshrl.u32 %v8789, 7
    %v8791 = vsub.s32 5, %v8790
    %v8792 = vrot.slane %v5911, %v8791
    %v8793 = vadd.f32 %v8787, %v8792
    %v8794 = vadd.f32 %v8788, %v8792
    %v8795 = vsel %vm45, %v8793, 0.0
    %v8796 = vrot.slane %v8795, 4
    %v8797 = vadd.f32 %v8795, %v8796
    %v8798 = vrot.slane %v8797, 2
    %v8799 = vadd.f32 %v8797, %v8798
    %v8800 = vrot.slane %v8799, 1
    %v8801 = vadd.f32 %v8799, %v8800
    %v8802 = vsel %vm45, %v8794, 0.0
    %v8803 = vrot.slane %v8802, 4
    %v8804 = vadd.f32 %v8802, %v8803
    %v8805 = vrot.slane %v8804, 2
    %v8806 = vadd.f32 %v8804, %v8805
    %v8807 = vrot.slane %v8806, 1
    %v8808 = vadd.f32 %v8806, %v8807
    %v8809 = vadd.f32 %v5908, %v8801
    %v8810 = vadd.f32 %v5909, %v8808
    %v8811 = vmul.f32 %v8809, 0.03125
    %v8812 = vmul.f32 %v8810, 0.03125
    %v8813 = vld [vmem:[%s10] sm:$0xff]
    %v8814 = vld [vmem:[%s10 + $0x8] sm:$0xff]
    %v8815 = vld [vmem:[%s10 + $0x10] sm:$0xff]
    %v8816 = vld [vmem:[%s10 + $0x18] sm:$0xff]
    %v8817 = vld [vmem:[%s11] sm:$0x1]
    %v8819 = vlaneseq
    %v8820 = vshrl.u32 %v8819, 7
    %v8821 = vsub.s32 0, %v8820
    %v8822 = vrot.slane %v8817, %v8821
    %vm8826 = vcmask 1041409
    %v8827 = vsel %vm8826, %v8812, %v8811
    %v8828 = vsel %vm45, %v8827, 0
    %8830 = vmatprep.subr.mxu0 0.0
    %8831 = vmatpush1.msra.mxu0 %v8813
    %8832 = vmatprep.subr.mxu0 0.0
    %8833 = vmatpush1.msra.mxu0 %v8814
    %8834 = vmatprep.subr.mxu0 0.0
    %8835 = vmatpush1.msra.mxu0 %v8815
    %8836 = vmatprep.subr.mxu0 0.0
    %8837 = vmatpush1.msra.mxu0 %v8816
    %8838 = vmatprep.subr.mxu0 0.0
    %8839 = vmatpush1.msra.mxu0 0.0
    %8840 = vmatprep.subr.mxu0 0.0
    %8841 = vmatpush1.msra.mxu0 0.0
    %8842 = vmatprep.subr.mxu0 0.0
    %8843 = vmatpush1.msra.mxu0 0.0
    %8844 = vmatprep.subr.mxu0 0.0
    %8845 = vmatpush1.msra.mxu0 0.0
    %8846 = vmatprep.subr.mxu0 0.0
    %8847 = vmatpush1.msra.mxu0 0.0
    %8848 = vmatprep.subr.mxu0 0.0
    %8849 = vmatpush1.msra.mxu0 0.0
    %8850 = vmatprep.subr.mxu0 0.0
    %8851 = vmatpush1.msra.mxu0 0.0
    %8852 = vmatprep.subr.mxu0 0.0
    %8853 = vmatpush1.msra.mxu0 0.0
    %8854 = vmatprep.subr.mxu0 0.0
    %8855 = vmatpush1.msra.mxu0 0.0
    %8856 = vmatprep.subr.mxu0 0.0
    %8857 = vmatpush1.msra.mxu0 0.0
    %8858 = vmatprep.subr.mxu0 0.0
    %8859 = vmatpush1.msra.mxu0 0.0
    %8860 = vmatprep.subr.mxu0 0.0
    %8861 = vmatpush1.msra.mxu0 0.0
    %8862 = vmatprep.subr.mxu0 0.0
    %8863 = vmatpush1.msra.mxu0 0.0
    %8864 = vmatprep.subr.mxu0 0.0
    %8865 = vmatpush1.msra.mxu0 0.0
    %8866 = vmatprep.subr.mxu0 0.0
    %8867 = vmatpush1.msra.mxu0 0.0
    %8868 = vmatprep.subr.mxu0 0.0
    %8869 = vmatpush1.msra.mxu0 0.0
    %8870 = vmatprep.subr.mxu0 0.0
    %8871 = vmatpush1.msra.mxu0 0.0
    %8872 = vmatprep.subr.mxu0 0.0
    %8873 = vmatpush1.msra.mxu0 0.0
    %8874 = vmatprep.subr.mxu0 0.0
    %8875 = vmatpush1.msra.mxu0 0.0
    %8876 = vmatprep.subr.mxu0 0.0
    %8877 = vmatpush1.msra.mxu0 0.0
    %8878 = vmatprep.subr.mxu0 0.0
    %8879 = vmatpush1.msra.mxu0 0.0
    %8880 = vmatprep.subr.mxu0 0.0
    %8881 = vmatpush1.msra.mxu0 0.0
    %8882 = vmatprep.subr.mxu0 0.0
    %8883 = vmatpush1.msra.mxu0 0.0
    %8884 = vmatprep.subr.mxu0 0.0
    %8885 = vmatpush1.msra.mxu0 0.0
    %8886 = vmatprep.subr.mxu0 0.0
    %8887 = vmatpush1.msra.mxu0 0.0
    %8888 = vmatprep.subr.mxu0 0.0
    %8889 = vmatpush1.msra.mxu0 0.0
    %8890 = vmatprep.subr.mxu0 0.0
    %8891 = vmatpush1.msra.mxu0 0.0
    %8892 = vmatprep.subr.mxu0 0.0
    %8893 = vmatpush1.msra.mxu0 0.0
    %8894 = vmatprep.mubr.f32.mxu0 0.0
    %8895 = vmatmul.mubr.f32.gmra.mrb[0].mxu0 %v8828
    %v8896 = vpop.f32.mrb[0].mxu0
    %v8897 = vadd.f32 %v8822, %v8896
    %v8898 = vpop.f32.mrb[0].mxu0
    %8899 = vdwg.mxu0
    %vm8900 = vcmask 33792
    %8901 = vst.msk [vmem:[#allocation2] sm:$0x3] %vm8900, %v8897
    // Predicated region
    $region50: #{bert_forward.1} parent=1 // pred_check
      _
    $region51: #{bert_forward.1} parent=1 // pred_check_branch
      %8903 = sbr.rel (0) target = $region53
    $region52: #{bert_forward.1} parent=1 // pred_region
      %s8905 = ssub.s32 32, 32
      %8906 = vsyncadd [#allocation3], %s8905
      %s8908 = sshll.u32 [#allocation2], 4
      %s8909 = int_to_ptr.vmem [resolvable:$true] %s8908
      %8911 = dma.vmem_to_hbm [thread:$0]  %s8909, 32, %s12, [#allocation3]
    $region53: #{bert_forward.1} parent=1 // pred_fallthru
      _
    // Predicated region
    $region54: #{bert_forward.1} parent=1 // pred_check
      _
    $region55: #{bert_forward.1} parent=1 // pred_check_branch
      %8913 = sbr.rel (0) target = $region57
    $region56: #{bert_forward.1} parent=1 // pred_region
      %8914 = dma.done [#allocation3], 32
    $region57: #{bert_forward.1} parent=1 // pred_fallthru
      _
    %8915 = vsyncpa [#allocation3], 1

</llo_original>
